<compile_context>
chip_gen: v6e
topology: v6e:2x2x1
jax: 0.10.0
libtpu: 0.0.40
codegen_flags: <defaults>
</compile_context>

<pallas_src>
import jax
import jax.numpy as jnp
from jax import lax
from jax.experimental import pallas as pl
from jax.experimental.pallas import tpu as pltpu

NF = 40      # num_filters
K1 = 25      # temporal kernel of first conv
POOL = 75    # avg-pool window (stride 1)
K3 = 30      # classifier conv kernel
DIL = 15     # classifier conv dilation
BN_EPS = 1e-5


def shallownet_kernel(x_ref, wc_ref, beff_ref, p_ref, w3_ref, b3_ref, o_ref,
                      xcol_ref, hcol_ref):
    Bt, Ch, T = x_ref.shape
    T1, T2 = p_ref.shape
    T3 = o_ref.shape[2]
    inv_pool = 1.0 / POOL

    # Constant operands: hoisted out of the per-sample loop; their index maps are
    # constant so the pipeline only DMAs them once.
    wc = wc_ref[...]        # (NF, Ch*K1)  conv1*conv2 weights, BN scale folded in
    beff = beff_ref[...]    # (NF, 1)      conv bias + BN shift folded
    pmat = p_ref[...]       # (T1, T2)     banded 0/1 average-pool matrix
    w3 = w3_ref[...]        # (NC, K3*NF)  dilated classifier weights
    b3 = b3_ref[...]        # (NC, 1)

    for b in range(Bt):                       # small static unroll (Bt <= 4)
        x = x_ref[b]                          # (Ch, T)

        # im2col slab: xcol[k*Ch + c, t] = x[c, k + t]
        for k in range(K1):
            xcol_ref[k * Ch:(k + 1) * Ch, :] = x[:, k:k + T1]

        # Conv1 + Conv2 + BatchNorm(eval) fused into one MXU matmul + affine.
        h2 = jnp.dot(wc, xcol_ref[...],
                     preferred_element_type=jnp.float32) + beff   # (NF, T1)

        # square -> AvgPool2d((1,75), stride 1) as a banded matmul on the MXU.
        s = h2 * h2
        pooled = jnp.dot(s, pmat, preferred_element_type=jnp.float32) * inv_pool

        # log(clamp(., min=1e-6)); Dropout(p=0.5) is identity in eval mode.
        h = jnp.log(jnp.maximum(pooled, 1e-6))                    # (NF, T2)

        # Dilated classifier conv: gather the K3 dilated slices, then ONE matmul.
        for k in range(K3):
            hcol_ref[k * NF:(k + 1) * NF, :] = h[:, DIL * k:DIL * k + T3]
        logits = jnp.dot(w3, hcol_ref[...],
                         preferred_element_type=jnp.float32) + b3  # (NC, T3)

        # LogSoftmax over the class axis (dim=1 in NCHW == axis 0 here).
        m = jnp.max(logits, axis=0, keepdims=True)
        z = logits - m
        lse = jnp.log(jnp.sum(jnp.exp(z), axis=0, keepdims=True))
        o_ref[b] = (z - lse).astype(o_ref.dtype)


def shallownet_dense(x, kparams, max_block_b=4):
    """x: (B, 1, Ch, T) float32 (NCHW).  Returns (B, n_classes, out_size)."""
    wc, beff, w3col, b3 = kparams
    B, _, Ch, T = x.shape
    NC = w3col.shape[0]
    CK = wc.shape[1]
    assert CK == Ch * K1, (CK, Ch, K1)
    T1 = T - (K1 - 1)
    T2 = T1 - (POOL - 1)
    T3 = T2 - DIL * (K3 - 1)
    assert T3 >= 1, "input_time too small for the dilated classifier conv"

    # Banded 0/1 pooling matrix: P[t, u] = 1  iff  u <= t < u + POOL.
    d = (jnp.arange(T1, dtype=jnp.int32)[:, None]
         - jnp.arange(T2, dtype=jnp.int32)[None, :])
    pmat = ((d >= 0) & (d < POOL)).astype(jnp.float32)

    # Samples per grid step: amortizes the ~0.35us per-step overhead while keeping
    # the in-kernel static unroll small.  Pick the largest divisor of B <= 4.
    bt = min(B, max_block_b)
    while B % bt:
        bt -= 1

    x2 = x.reshape(B, Ch, T)
    return pl.pallas_call(
        shallownet_kernel,
        out_shape=jax.ShapeDtypeStruct((B, NC, T3), jnp.float32),
        grid=(B // bt,),
        in_specs=[
            pl.BlockSpec((bt, Ch, T), lambda i: (i, 0, 0)),
            pl.BlockSpec((NF, CK), lambda i: (0, 0)),
            pl.BlockSpec((NF, 1), lambda i: (0, 0)),
            pl.BlockSpec((T1, T2), lambda i: (0, 0)),
            pl.BlockSpec((NC, K3 * NF), lambda i: (0, 0)),
            pl.BlockSpec((NC, 1), lambda i: (0, 0)),
        ],
        out_specs=pl.BlockSpec((bt, NC, T3), lambda i: (i, 0, 0)),
        scratch_shapes=[
            pltpu.VMEM((CK, T1), jnp.float32),       # im2col slab
            pltpu.VMEM((K3 * NF, T3), jnp.float32),  # dilated classifier slab
        ],
        compiler_params=pltpu.CompilerParams(
            dimension_semantics=("parallel",)),       # batch axis is independent
    )(x2, wc, beff, pmat, w3col, b3)


def init_params(key, n_classes, input_ch):
    """Deterministic synthetic parameters, PyTorch shapes."""
    ks = jax.random.split(key, 9)
    W1 = 0.2 * jax.random.normal(ks[0], (NF, 1, 1, K1), jnp.float32)
    b1 = 0.1 * jax.random.normal(ks[1], (NF,), jnp.float32)
    W2 = 0.1 * jax.random.normal(ks[2], (NF, NF, input_ch, 1), jnp.float32)
    gamma = 1.0 + 0.1 * jax.random.normal(ks[3], (NF,), jnp.float32)
    beta = 0.1 * jax.random.normal(ks[4], (NF,), jnp.float32)
    rmean = 0.1 * jax.random.normal(ks[5], (NF,), jnp.float32)
    rvar = 0.5 + jax.random.uniform(ks[6], (NF,), jnp.float32)
    W3 = 0.1 * jax.random.normal(ks[7], (n_classes, NF, 1, K3), jnp.float32)
    b3 = 0.05 * jax.random.normal(ks[8], (n_classes,), jnp.float32)
    return (W1, b1, W2, gamma, beta, rmean, rvar, W3, b3)


def pack_kernel_params(p):
    """Fold PyTorch-shaped params into the fused kernel operands."""
    W1, b1, W2, gamma, beta, rmean, rvar, W3, b3 = p
    n_classes = W3.shape[0]
    ch = W2.shape[2]
    scale = gamma / jnp.sqrt(rvar + BN_EPS)            # (NF,)
    shift = beta - rmean * scale                       # (NF,)
    W2_ = W2[:, :, :, 0]                               # (NF_out, NF_in, Ch)
    W1_ = W1.reshape(NF, K1)                           # (NF_in, K1)
    # Wc[o, k*Ch + c] = scale[o] * sum_i W2[o, i, c] * W1[i, k]
    wc = jnp.einsum('oic,ik->okc', W2_, W1_)           # (NF, K1, Ch)
    wc = (scale[:, None, None] * wc).reshape(NF, K1 * ch)
    # b_eff = scale * (sum_{c,i} W2[o, i, c] * b1[i]) + shift
    beff = scale * jnp.einsum('oic,i->o', W2_, b1) + shift
    # W3col[n, k*NF + f] = W3[n, f, 0, k]  (matches the hcol row order k*NF + f)
    w3col = jnp.transpose(W3[:, :, 0, :], (0, 2, 1)).reshape(n_classes, K3 * NF)
    return (wc, beff.reshape(NF, 1), w3col, b3.reshape(-1, 1))


def reference_forward(x, p):
    """Pure-JAX reference matching the PyTorch eval-mode forward."""
    W1, b1, W2, gamma, beta, rmean, rvar, W3, b3 = p
    dn = ("NCHW", "OIHW", "NCHW")
    h = lax.conv_general_dilated(x, W1, (1, 1), "VALID", dimension_numbers=dn)
    h = h + b1[None, :, None, None]
    h = lax.conv_general_dilated(h, W2, (1, 1), "VALID", dimension_numbers=dn)
    h = (h - rmean[None, :, None, None]) / jnp.sqrt(rvar + BN_EPS)[None, :, None, None]
    h = h * gamma[None, :, None, None] + beta[None, :, None, None]
    h = h * h
    h = lax.reduce_window(h, 0.0, lax.add, (1, 1, 1, POOL), (1, 1, 1, 1), "VALID") / POOL
    h = jnp.log(jnp.maximum(h, 1e-6))
    h = lax.conv_general_dilated(h, W3, (1, 1), "VALID", rhs_dilation=(1, DIL),
                                 dimension_numbers=dn)
    h = h + b3[None, :, None, None]
    h = jax.nn.log_softmax(h, axis=1)
    return h.reshape(x.shape[0], W3.shape[0], -1)


if __name__ == "__main__":
    # The dilated (1,30)/dil-15 conv needs input_time >= 534; use 544 -> out_size = 11.
    n_classes, input_ch, input_time, batch = 3, 4, 544, 2

    key = jax.random.PRNGKey(0)
    pkey, xkey = jax.random.split(key)
    torch_params = init_params(pkey, n_classes, input_ch)
    x = jax.random.normal(xkey, (batch, 1, input_ch, input_time), jnp.float32)

    kparams = pack_kernel_params(torch_params)
    out = jax.block_until_ready(shallownet_dense(x, kparams))

    ref = jax.block_until_ready(reference_forward(x, torch_params))
    assert out.shape == ref.shape == (batch, n_classes, 11), (out.shape, ref.shape)
    max_err = float(jnp.max(jnp.abs(out - ref)))
    if not bool(jnp.allclose(out, ref, rtol=2e-3, atol=2e-3)):
        raise SystemExit(f"mismatch vs reference, max abs err = {max_err:e}")
    print("KERNEL_OK")
</pallas_src>

<mosaic_0001>
module attributes {stable_mosaic.version = 11 : i64} {
  func.func @shallownet_kernel(%arg0: i32, %arg1: memref<2x4x544xf32, #tpu.memory_space<vmem>>, %arg2: memref<40x100xf32, #tpu.memory_space<vmem>>, %arg3: memref<40x1xf32, #tpu.memory_space<vmem>>, %arg4: memref<520x446xf32, #tpu.memory_space<vmem>>, %arg5: memref<3x1200xf32, #tpu.memory_space<vmem>>, %arg6: memref<3x1xf32, #tpu.memory_space<vmem>>, %arg7: memref<2x3x11xf32, #tpu.memory_space<vmem>>, %arg8: memref<100x520xf32, #tpu.memory_space<vmem>>, %arg9: memref<1200x11xf32, #tpu.memory_space<vmem>>) attributes {dimension_semantics = [#tpu.dimension_semantics<parallel>], iteration_bounds = array<i64: 1>, scalar_prefetch = 0 : i64, scratch_operands = 2 : i64, tpu.core_type = #tpu.core_type<tc>, window_params = [{transform_indices = @transform_0, window_bounds = array<i64: 2, 4, 544>}, {pipeline_mode = #tpu.pipeline_mode<synchronous>, transform_indices = @transform_1, window_bounds = array<i64: 40, 100>}, {pipeline_mode = #tpu.pipeline_mode<synchronous>, transform_indices = @transform_2, window_bounds = array<i64: 40, 1>}, {pipeline_mode = #tpu.pipeline_mode<synchronous>, transform_indices = @transform_3, window_bounds = array<i64: 520, 446>}, {pipeline_mode = #tpu.pipeline_mode<synchronous>, transform_indices = @transform_4, window_bounds = array<i64: 3, 1200>}, {pipeline_mode = #tpu.pipeline_mode<synchronous>, transform_indices = @transform_5, window_bounds = array<i64: 3, 1>}, {transform_indices = @transform_6, window_bounds = array<i64: 2, 3, 11>}]} {
    %c0 = arith.constant 0 : index
    %c0_0 = arith.constant 0 : index
    %0 = vector.load %arg2[%c0, %c0_0] : memref<40x100xf32, #tpu.memory_space<vmem>>, vector<40x100xf32>
    %c0_1 = arith.constant 0 : index
    %c0_2 = arith.constant 0 : index
    %1 = vector.load %arg3[%c0_1, %c0_2] : memref<40x1xf32, #tpu.memory_space<vmem>>, vector<40x1xf32>
    %c0_3 = arith.constant 0 : index
    %c0_4 = arith.constant 0 : index
    %2 = vector.load %arg4[%c0_3, %c0_4] : memref<520x446xf32, #tpu.memory_space<vmem>>, vector<520x446xf32>
    %c0_5 = arith.constant 0 : index
    %c0_6 = arith.constant 0 : index
    %3 = vector.load %arg5[%c0_5, %c0_6] : memref<3x1200xf32, #tpu.memory_space<vmem>>, vector<3x1200xf32>
    %c0_7 = arith.constant 0 : index
    %c0_8 = arith.constant 0 : index
    %4 = vector.load %arg6[%c0_7, %c0_8] : memref<3x1xf32, #tpu.memory_space<vmem>>, vector<3x1xf32>
    %c0_9 = arith.constant 0 : index
    %c0_10 = arith.constant 0 : index
    %c0_11 = arith.constant 0 : index
    %5 = vector.load %arg1[%c0_9, %c0_10, %c0_11] : memref<2x4x544xf32, #tpu.memory_space<vmem>>, vector<1x4x544xf32>
    %6 = vector.shape_cast %5 : vector<1x4x544xf32> to vector<4x544xf32>
    %7 = vector.extract_strided_slice %6 {offsets = [0, 0], sizes = [4, 520], strides = [1, 1]} : vector<4x544xf32> to vector<4x520xf32>
    %c0_12 = arith.constant 0 : index
    %c0_13 = arith.constant 0 : index
    %8 = vector.load %arg8[%c0_12, %c0_13] : memref<100x520xf32, #tpu.memory_space<vmem>>, vector<4x520xf32>
    tpu.vector_store %arg8[%c0_12, %c0_13], %7 {strides = array<i32>} : memref<100x520xf32, #tpu.memory_space<vmem>>, vector<4x520xf32>,
    %9 = vector.extract_strided_slice %6 {offsets = [0, 1], sizes = [4, 520], strides = [1, 1]} : vector<4x544xf32> to vector<4x520xf32>
    %c4 = arith.constant 4 : index
    %c0_14 = arith.constant 0 : index
    %10 = vector.load %arg8[%c4, %c0_14] : memref<100x520xf32, #tpu.memory_space<vmem>>, vector<4x520xf32>
    tpu.vector_store %arg8[%c4, %c0_14], %9 {strides = array<i32>} : memref<100x520xf32, #tpu.memory_space<vmem>>, vector<4x520xf32>,
    %11 = vector.extract_strided_slice %6 {offsets = [0, 2], sizes = [4, 520], strides = [1, 1]} : vector<4x544xf32> to vector<4x520xf32>
    %c8 = arith.constant 8 : index
    %c0_15 = arith.constant 0 : index
    %12 = vector.load %arg8[%c8, %c0_15] : memref<100x520xf32, #tpu.memory_space<vmem>>, vector<4x520xf32>
    tpu.vector_store %arg8[%c8, %c0_15], %11 {strides = array<i32>} : memref<100x520xf32, #tpu.memory_space<vmem>>, vector<4x520xf32>,
    %13 = vector.extract_strided_slice %6 {offsets = [0, 3], sizes = [4, 520], strides = [1, 1]} : vector<4x544xf32> to vector<4x520xf32>
    %c12 = arith.constant 12 : index
    %c0_16 = arith.constant 0 : index
    %14 = vector.load %arg8[%c12, %c0_16] : memref<100x520xf32, #tpu.memory_space<vmem>>, vector<4x520xf32>
    tpu.vector_store %arg8[%c12, %c0_16], %13 {strides = array<i32>} : memref<100x520xf32, #tpu.memory_space<vmem>>, vector<4x520xf32>,
    %15 = vector.extract_strided_slice %6 {offsets = [0, 4], sizes = [4, 520], strides = [1, 1]} : vector<4x544xf32> to vector<4x520xf32>
    %c16 = arith.constant 16 : index
    %c0_17 = arith.constant 0 : index
    %16 = vector.load %arg8[%c16, %c0_17] : memref<100x520xf32, #tpu.memory_space<vmem>>, vector<4x520xf32>
    tpu.vector_store %arg8[%c16, %c0_17], %15 {strides = array<i32>} : memref<100x520xf32, #tpu.memory_space<vmem>>, vector<4x520xf32>,
    %17 = vector.extract_strided_slice %6 {offsets = [0, 5], sizes = [4, 520], strides = [1, 1]} : vector<4x544xf32> to vector<4x520xf32>
    %c20 = arith.constant 20 : index
    %c0_18 = arith.constant 0 : index
    %18 = vector.load %arg8[%c20, %c0_18] : memref<100x520xf32, #tpu.memory_space<vmem>>, vector<4x520xf32>
    tpu.vector_store %arg8[%c20, %c0_18], %17 {strides = array<i32>} : memref<100x520xf32, #tpu.memory_space<vmem>>, vector<4x520xf32>,
    %19 = vector.extract_strided_slice %6 {offsets = [0, 6], sizes = [4, 520], strides = [1, 1]} : vector<4x544xf32> to vector<4x520xf32>
    %c24 = arith.constant 24 : index
    %c0_19 = arith.constant 0 : index
    %20 = vector.load %arg8[%c24, %c0_19] : memref<100x520xf32, #tpu.memory_space<vmem>>, vector<4x520xf32>
    tpu.vector_store %arg8[%c24, %c0_19], %19 {strides = array<i32>} : memref<100x520xf32, #tpu.memory_space<vmem>>, vector<4x520xf32>,
    %21 = vector.extract_strided_slice %6 {offsets = [0, 7], sizes = [4, 520], strides = [1, 1]} : vector<4x544xf32> to vector<4x520xf32>
    %c28 = arith.constant 28 : index
    %c0_20 = arith.constant 0 : index
    %22 = vector.load %arg8[%c28, %c0_20] : memref<100x520xf32, #tpu.memory_space<vmem>>, vector<4x520xf32>
    tpu.vector_store %arg8[%c28, %c0_20], %21 {strides = array<i32>} : memref<100x520xf32, #tpu.memory_space<vmem>>, vector<4x520xf32>,
    %23 = vector.extract_strided_slice %6 {offsets = [0, 8], sizes = [4, 520], strides = [1, 1]} : vector<4x544xf32> to vector<4x520xf32>
    %c32 = arith.constant 32 : index
    %c0_21 = arith.constant 0 : index
    %24 = vector.load %arg8[%c32, %c0_21] : memref<100x520xf32, #tpu.memory_space<vmem>>, vector<4x520xf32>
    tpu.vector_store %arg8[%c32, %c0_21], %23 {strides = array<i32>} : memref<100x520xf32, #tpu.memory_space<vmem>>, vector<4x520xf32>,
    %25 = vector.extract_strided_slice %6 {offsets = [0, 9], sizes = [4, 520], strides = [1, 1]} : vector<4x544xf32> to vector<4x520xf32>
    %c36 = arith.constant 36 : index
    %c0_22 = arith.constant 0 : index
    %26 = vector.load %arg8[%c36, %c0_22] : memref<100x520xf32, #tpu.memory_space<vmem>>, vector<4x520xf32>
    tpu.vector_store %arg8[%c36, %c0_22], %25 {strides = array<i32>} : memref<100x520xf32, #tpu.memory_space<vmem>>, vector<4x520xf32>,
    %27 = vector.extract_strided_slice %6 {offsets = [0, 10], sizes = [4, 520], strides = [1, 1]} : vector<4x544xf32> to vector<4x520xf32>
    %c40 = arith.constant 40 : index
    %c0_23 = arith.constant 0 : index
    %28 = vector.load %arg8[%c40, %c0_23] : memref<100x520xf32, #tpu.memory_space<vmem>>, vector<4x520xf32>
    tpu.vector_store %arg8[%c40, %c0_23], %27 {strides = array<i32>} : memref<100x520xf32, #tpu.memory_space<vmem>>, vector<4x520xf32>,
    %29 = vector.extract_strided_slice %6 {offsets = [0, 11], sizes = [4, 520], strides = [1, 1]} : vector<4x544xf32> to vector<4x520xf32>
    %c44 = arith.constant 44 : index
    %c0_24 = arith.constant 0 : index
    %30 = vector.load %arg8[%c44, %c0_24] : memref<100x520xf32, #tpu.memory_space<vmem>>, vector<4x520xf32>
    tpu.vector_store %arg8[%c44, %c0_24], %29 {strides = array<i32>} : memref<100x520xf32, #tpu.memory_space<vmem>>, vector<4x520xf32>,
    %31 = vector.extract_strided_slice %6 {offsets = [0, 12], sizes = [4, 520], strides = [1, 1]} : vector<4x544xf32> to vector<4x520xf32>
    %c48 = arith.constant 48 : index
    %c0_25 = arith.constant 0 : index
    %32 = vector.load %arg8[%c48, %c0_25] : memref<100x520xf32, #tpu.memory_space<vmem>>, vector<4x520xf32>
    tpu.vector_store %arg8[%c48, %c0_25], %31 {strides = array<i32>} : memref<100x520xf32, #tpu.memory_space<vmem>>, vector<4x520xf32>,
    %33 = vector.extract_strided_slice %6 {offsets = [0, 13], sizes = [4, 520], strides = [1, 1]} : vector<4x544xf32> to vector<4x520xf32>
    %c52 = arith.constant 52 : index
    %c0_26 = arith.constant 0 : index
    %34 = vector.load %arg8[%c52, %c0_26] : memref<100x520xf32, #tpu.memory_space<vmem>>, vector<4x520xf32>
    tpu.vector_store %arg8[%c52, %c0_26], %33 {strides = array<i32>} : memref<100x520xf32, #tpu.memory_space<vmem>>, vector<4x520xf32>,
    %35 = vector.extract_strided_slice %6 {offsets = [0, 14], sizes = [4, 520], strides = [1, 1]} : vector<4x544xf32> to vector<4x520xf32>
    %c56 = arith.constant 56 : index
    %c0_27 = arith.constant 0 : index
    %36 = vector.load %arg8[%c56, %c0_27] : memref<100x520xf32, #tpu.memory_space<vmem>>, vector<4x520xf32>
    tpu.vector_store %arg8[%c56, %c0_27], %35 {strides = array<i32>} : memref<100x520xf32, #tpu.memory_space<vmem>>, vector<4x520xf32>,
    %37 = vector.extract_strided_slice %6 {offsets = [0, 15], sizes = [4, 520], strides = [1, 1]} : vector<4x544xf32> to vector<4x520xf32>
    %c60 = arith.constant 60 : index
    %c0_28 = arith.constant 0 : index
    %38 = vector.load %arg8[%c60, %c0_28] : memref<100x520xf32, #tpu.memory_space<vmem>>, vector<4x520xf32>
    tpu.vector_store %arg8[%c60, %c0_28], %37 {strides = array<i32>} : memref<100x520xf32, #tpu.memory_space<vmem>>, vector<4x520xf32>,
    %39 = vector.extract_strided_slice %6 {offsets = [0, 16], sizes = [4, 520], strides = [1, 1]} : vector<4x544xf32> to vector<4x520xf32>
    %c64 = arith.constant 64 : index
    %c0_29 = arith.constant 0 : index
    %40 = vector.load %arg8[%c64, %c0_29] : memref<100x520xf32, #tpu.memory_space<vmem>>, vector<4x520xf32>
    tpu.vector_store %arg8[%c64, %c0_29], %39 {strides = array<i32>} : memref<100x520xf32, #tpu.memory_space<vmem>>, vector<4x520xf32>,
    %41 = vector.extract_strided_slice %6 {offsets = [0, 17], sizes = [4, 520], strides = [1, 1]} : vector<4x544xf32> to vector<4x520xf32>
    %c68 = arith.constant 68 : index
    %c0_30 = arith.constant 0 : index
    %42 = vector.load %arg8[%c68, %c0_30] : memref<100x520xf32, #tpu.memory_space<vmem>>, vector<4x520xf32>
    tpu.vector_store %arg8[%c68, %c0_30], %41 {strides = array<i32>} : memref<100x520xf32, #tpu.memory_space<vmem>>, vector<4x520xf32>,
    %43 = vector.extract_strided_slice %6 {offsets = [0, 18], sizes = [4, 520], strides = [1, 1]} : vector<4x544xf32> to vector<4x520xf32>
    %c72 = arith.constant 72 : index
    %c0_31 = arith.constant 0 : index
    %44 = vector.load %arg8[%c72, %c0_31] : memref<100x520xf32, #tpu.memory_space<vmem>>, vector<4x520xf32>
    tpu.vector_store %arg8[%c72, %c0_31], %43 {strides = array<i32>} : memref<100x520xf32, #tpu.memory_space<vmem>>, vector<4x520xf32>,
    %45 = vector.extract_strided_slice %6 {offsets = [0, 19], sizes = [4, 520], strides = [1, 1]} : vector<4x544xf32> to vector<4x520xf32>
    %c76 = arith.constant 76 : index
    %c0_32 = arith.constant 0 : index
    %46 = vector.load %arg8[%c76, %c0_32] : memref<100x520xf32, #tpu.memory_space<vmem>>, vector<4x520xf32>
    tpu.vector_store %arg8[%c76, %c0_32], %45 {strides = array<i32>} : memref<100x520xf32, #tpu.memory_space<vmem>>, vector<4x520xf32>,
    %47 = vector.extract_strided_slice %6 {offsets = [0, 20], sizes = [4, 520], strides = [1, 1]} : vector<4x544xf32> to vector<4x520xf32>
    %c80 = arith.constant 80 : index
    %c0_33 = arith.constant 0 : index
    %48 = vector.load %arg8[%c80, %c0_33] : memref<100x520xf32, #tpu.memory_space<vmem>>, vector<4x520xf32>
    tpu.vector_store %arg8[%c80, %c0_33], %47 {strides = array<i32>} : memref<100x520xf32, #tpu.memory_space<vmem>>, vector<4x520xf32>,
    %49 = vector.extract_strided_slice %6 {offsets = [0, 21], sizes = [4, 520], strides = [1, 1]} : vector<4x544xf32> to vector<4x520xf32>
    %c84 = arith.constant 84 : index
    %c0_34 = arith.constant 0 : index
    %50 = vector.load %arg8[%c84, %c0_34] : memref<100x520xf32, #tpu.memory_space<vmem>>, vector<4x520xf32>
    tpu.vector_store %arg8[%c84, %c0_34], %49 {strides = array<i32>} : memref<100x520xf32, #tpu.memory_space<vmem>>, vector<4x520xf32>,
    %51 = vector.extract_strided_slice %6 {offsets = [0, 22], sizes = [4, 520], strides = [1, 1]} : vector<4x544xf32> to vector<4x520xf32>
    %c88 = arith.constant 88 : index
    %c0_35 = arith.constant 0 : index
    %52 = vector.load %arg8[%c88, %c0_35] : memref<100x520xf32, #tpu.memory_space<vmem>>, vector<4x520xf32>
    tpu.vector_store %arg8[%c88, %c0_35], %51 {strides = array<i32>} : memref<100x520xf32, #tpu.memory_space<vmem>>, vector<4x520xf32>,
    %53 = vector.extract_strided_slice %6 {offsets = [0, 23], sizes = [4, 520], strides = [1, 1]} : vector<4x544xf32> to vector<4x520xf32>
    %c92 = arith.constant 92 : index
    %c0_36 = arith.constant 0 : index
    %54 = vector.load %arg8[%c92, %c0_36] : memref<100x520xf32, #tpu.memory_space<vmem>>, vector<4x520xf32>
    tpu.vector_store %arg8[%c92, %c0_36], %53 {strides = array<i32>} : memref<100x520xf32, #tpu.memory_space<vmem>>, vector<4x520xf32>,
    %55 = vector.extract_strided_slice %6 {offsets = [0, 24], sizes = [4, 520], strides = [1, 1]} : vector<4x544xf32> to vector<4x520xf32>
    %c96 = arith.constant 96 : index
    %c0_37 = arith.constant 0 : index
    %56 = vector.load %arg8[%c96, %c0_37] : memref<100x520xf32, #tpu.memory_space<vmem>>, vector<4x520xf32>
    tpu.vector_store %arg8[%c96, %c0_37], %55 {strides = array<i32>} : memref<100x520xf32, #tpu.memory_space<vmem>>, vector<4x520xf32>,
    %c0_38 = arith.constant 0 : index
    %c0_39 = arith.constant 0 : index
    %57 = vector.load %arg8[%c0_38, %c0_39] : memref<100x520xf32, #tpu.memory_space<vmem>>, vector<100x520xf32>
    %cst = arith.constant dense<0.000000e+00> : vector<40x520xf32>
    %58 = tpu.matmul %0, %57, %cst {dimension_numbers = #tpu.dot_dimension_numbers<[1], [0], [0], [1], [0, 0, 1, 1], [], []>} : vector<40x100xf32>, vector<100x520xf32>, vector<40x520xf32> -> vector<40x520xf32>
    %59 = vector.broadcast %1 : vector<40x1xf32> to vector<40x520xf32>
    %60 = arith.addf %58, %59 : vector<40x520xf32>
    %61 = arith.mulf %60, %60 : vector<40x520xf32>
    %cst_40 = arith.constant dense<0.000000e+00> : vector<40x446xf32>
    %62 = tpu.matmul %61, %2, %cst_40 {dimension_numbers = #tpu.dot_dimension_numbers<[1], [0], [0], [1], [0, 0, 1, 1], [], []>} : vector<40x520xf32>, vector<520x446xf32>, vector<40x446xf32> -> vector<40x446xf32>
    %cst_41 = arith.constant 0.0133333337 : f32
    %63 = vector.broadcast %cst_41 : f32 to vector<40x446xf32>
    %64 = arith.mulf %62, %63 : vector<40x446xf32>
    %cst_42 = arith.constant 9.99999997E-7 : f32
    %65 = vector.broadcast %cst_42 : f32 to vector<40x446xf32>
    %66 = arith.maximumf %64, %65 : vector<40x446xf32>
    %67 = math.log %66 : vector<40x446xf32>
    %68 = vector.extract_strided_slice %67 {offsets = [0, 0], sizes = [40, 11], strides = [1, 1]} : vector<40x446xf32> to vector<40x11xf32>
    %c0_43 = arith.constant 0 : index
    %c0_44 = arith.constant 0 : index
    %69 = vector.load %arg9[%c0_43, %c0_44] : memref<1200x11xf32, #tpu.memory_space<vmem>>, vector<40x11xf32>
    tpu.vector_store %arg9[%c0_43, %c0_44], %68 {strides = array<i32>} : memref<1200x11xf32, #tpu.memory_space<vmem>>, vector<40x11xf32>,
    %70 = vector.extract_strided_slice %67 {offsets = [0, 15], sizes = [40, 11], strides = [1, 1]} : vector<40x446xf32> to vector<40x11xf32>
    %c40_45 = arith.constant 40 : index
    %c0_46 = arith.constant 0 : index
    %71 = vector.load %arg9[%c40_45, %c0_46] : memref<1200x11xf32, #tpu.memory_space<vmem>>, vector<40x11xf32>
    tpu.vector_store %arg9[%c40_45, %c0_46], %70 {strides = array<i32>} : memref<1200x11xf32, #tpu.memory_space<vmem>>, vector<40x11xf32>,
    %72 = vector.extract_strided_slice %67 {offsets = [0, 30], sizes = [40, 11], strides = [1, 1]} : vector<40x446xf32> to vector<40x11xf32>
    %c80_47 = arith.constant 80 : index
    %c0_48 = arith.constant 0 : index
    %73 = vector.load %arg9[%c80_47, %c0_48] : memref<1200x11xf32, #tpu.memory_space<vmem>>, vector<40x11xf32>
    tpu.vector_store %arg9[%c80_47, %c0_48], %72 {strides = array<i32>} : memref<1200x11xf32, #tpu.memory_space<vmem>>, vector<40x11xf32>,
    %74 = vector.extract_strided_slice %67 {offsets = [0, 45], sizes = [40, 11], strides = [1, 1]} : vector<40x446xf32> to vector<40x11xf32>
    %c120 = arith.constant 120 : index
    %c0_49 = arith.constant 0 : index
    %75 = vector.load %arg9[%c120, %c0_49] : memref<1200x11xf32, #tpu.memory_space<vmem>>, vector<40x11xf32>
    tpu.vector_store %arg9[%c120, %c0_49], %74 {strides = array<i32>} : memref<1200x11xf32, #tpu.memory_space<vmem>>, vector<40x11xf32>,
    %76 = vector.extract_strided_slice %67 {offsets = [0, 60], sizes = [40, 11], strides = [1, 1]} : vector<40x446xf32> to vector<40x11xf32>
    %c160 = arith.constant 160 : index
    %c0_50 = arith.constant 0 : index
    %77 = vector.load %arg9[%c160, %c0_50] : memref<1200x11xf32, #tpu.memory_space<vmem>>, vector<40x11xf32>
    tpu.vector_store %arg9[%c160, %c0_50], %76 {strides = array<i32>} : memref<1200x11xf32, #tpu.memory_space<vmem>>, vector<40x11xf32>,
    %78 = vector.extract_strided_slice %67 {offsets = [0, 75], sizes = [40, 11], strides = [1, 1]} : vector<40x446xf32> to vector<40x11xf32>
    %c200 = arith.constant 200 : index
    %c0_51 = arith.constant 0 : index
    %79 = vector.load %arg9[%c200, %c0_51] : memref<1200x11xf32, #tpu.memory_space<vmem>>, vector<40x11xf32>
    tpu.vector_store %arg9[%c200, %c0_51], %78 {strides = array<i32>} : memref<1200x11xf32, #tpu.memory_space<vmem>>, vector<40x11xf32>,
    %80 = vector.extract_strided_slice %67 {offsets = [0, 90], sizes = [40, 11], strides = [1, 1]} : vector<40x446xf32> to vector<40x11xf32>
    %c240 = arith.constant 240 : index
    %c0_52 = arith.constant 0 : index
    %81 = vector.load %arg9[%c240, %c0_52] : memref<1200x11xf32, #tpu.memory_space<vmem>>, vector<40x11xf32>
    tpu.vector_store %arg9[%c240, %c0_52], %80 {strides = array<i32>} : memref<1200x11xf32, #tpu.memory_space<vmem>>, vector<40x11xf32>,
    %82 = vector.extract_strided_slice %67 {offsets = [0, 105], sizes = [40, 11], strides = [1, 1]} : vector<40x446xf32> to vector<40x11xf32>
    %c280 = arith.constant 280 : index
    %c0_53 = arith.constant 0 : index
    %83 = vector.load %arg9[%c280, %c0_53] : memref<1200x11xf32, #tpu.memory_space<vmem>>, vector<40x11xf32>
    tpu.vector_store %arg9[%c280, %c0_53], %82 {strides = array<i32>} : memref<1200x11xf32, #tpu.memory_space<vmem>>, vector<40x11xf32>,
    %84 = vector.extract_strided_slice %67 {offsets = [0, 120], sizes = [40, 11], strides = [1, 1]} : vector<40x446xf32> to vector<40x11xf32>
    %c320 = arith.constant 320 : index
    %c0_54 = arith.constant 0 : index
    %85 = vector.load %arg9[%c320, %c0_54] : memref<1200x11xf32, #tpu.memory_space<vmem>>, vector<40x11xf32>
    tpu.vector_store %arg9[%c320, %c0_54], %84 {strides = array<i32>} : memref<1200x11xf32, #tpu.memory_space<vmem>>, vector<40x11xf32>,
    %86 = vector.extract_strided_slice %67 {offsets = [0, 135], sizes = [40, 11], strides = [1, 1]} : vector<40x446xf32> to vector<40x11xf32>
    %c360 = arith.constant 360 : index
    %c0_55 = arith.constant 0 : index
    %87 = vector.load %arg9[%c360, %c0_55] : memref<1200x11xf32, #tpu.memory_space<vmem>>, vector<40x11xf32>
    tpu.vector_store %arg9[%c360, %c0_55], %86 {strides = array<i32>} : memref<1200x11xf32, #tpu.memory_space<vmem>>, vector<40x11xf32>,
    %88 = vector.extract_strided_slice %67 {offsets = [0, 150], sizes = [40, 11], strides = [1, 1]} : vector<40x446xf32> to vector<40x11xf32>
    %c400 = arith.constant 400 : index
    %c0_56 = arith.constant 0 : index
    %89 = vector.load %arg9[%c400, %c0_56] : memref<1200x11xf32, #tpu.memory_space<vmem>>, vector<40x11xf32>
    tpu.vector_store %arg9[%c400, %c0_56], %88 {strides = array<i32>} : memref<1200x11xf32, #tpu.memory_space<vmem>>, vector<40x11xf32>,
    %90 = vector.extract_strided_slice %67 {offsets = [0, 165], sizes = [40, 11], strides = [1, 1]} : vector<40x446xf32> to vector<40x11xf32>
    %c440 = arith.constant 440 : index
    %c0_57 = arith.constant 0 : index
    %91 = vector.load %arg9[%c440, %c0_57] : memref<1200x11xf32, #tpu.memory_space<vmem>>, vector<40x11xf32>
    tpu.vector_store %arg9[%c440, %c0_57], %90 {strides = array<i32>} : memref<1200x11xf32, #tpu.memory_space<vmem>>, vector<40x11xf32>,
    %92 = vector.extract_strided_slice %67 {offsets = [0, 180], sizes = [40, 11], strides = [1, 1]} : vector<40x446xf32> to vector<40x11xf32>
    %c480 = arith.constant 480 : index
    %c0_58 = arith.constant 0 : index
    %93 = vector.load %arg9[%c480, %c0_58] : memref<1200x11xf32, #tpu.memory_space<vmem>>, vector<40x11xf32>
    tpu.vector_store %arg9[%c480, %c0_58], %92 {strides = array<i32>} : memref<1200x11xf32, #tpu.memory_space<vmem>>, vector<40x11xf32>,
    %94 = vector.extract_strided_slice %67 {offsets = [0, 195], sizes = [40, 11], strides = [1, 1]} : vector<40x446xf32> to vector<40x11xf32>
    %c520 = arith.constant 520 : index
    %c0_59 = arith.constant 0 : index
    %95 = vector.load %arg9[%c520, %c0_59] : memref<1200x11xf32, #tpu.memory_space<vmem>>, vector<40x11xf32>
    tpu.vector_store %arg9[%c520, %c0_59], %94 {strides = array<i32>} : memref<1200x11xf32, #tpu.memory_space<vmem>>, vector<40x11xf32>,
    %96 = vector.extract_strided_slice %67 {offsets = [0, 210], sizes = [40, 11], strides = [1, 1]} : vector<40x446xf32> to vector<40x11xf32>
    %c560 = arith.constant 560 : index
    %c0_60 = arith.constant 0 : index
    %97 = vector.load %arg9[%c560, %c0_60] : memref<1200x11xf32, #tpu.memory_space<vmem>>, vector<40x11xf32>
    tpu.vector_store %arg9[%c560, %c0_60], %96 {strides = array<i32>} : memref<1200x11xf32, #tpu.memory_space<vmem>>, vector<40x11xf32>,
    %98 = vector.extract_strided_slice %67 {offsets = [0, 225], sizes = [40, 11], strides = [1, 1]} : vector<40x446xf32> to vector<40x11xf32>
    %c600 = arith.constant 600 : index
    %c0_61 = arith.constant 0 : index
    %99 = vector.load %arg9[%c600, %c0_61] : memref<1200x11xf32, #tpu.memory_space<vmem>>, vector<40x11xf32>
    tpu.vector_store %arg9[%c600, %c0_61], %98 {strides = array<i32>} : memref<1200x11xf32, #tpu.memory_space<vmem>>, vector<40x11xf32>,
    %100 = vector.extract_strided_slice %67 {offsets = [0, 240], sizes = [40, 11], strides = [1, 1]} : vector<40x446xf32> to vector<40x11xf32>
    %c640 = arith.constant 640 : index
    %c0_62 = arith.constant 0 : index
    %101 = vector.load %arg9[%c640, %c0_62] : memref<1200x11xf32, #tpu.memory_space<vmem>>, vector<40x11xf32>
    tpu.vector_store %arg9[%c640, %c0_62], %100 {strides = array<i32>} : memref<1200x11xf32, #tpu.memory_space<vmem>>, vector<40x11xf32>,
    %102 = vector.extract_strided_slice %67 {offsets = [0, 255], sizes = [40, 11], strides = [1, 1]} : vector<40x446xf32> to vector<40x11xf32>
    %c680 = arith.constant 680 : index
    %c0_63 = arith.constant 0 : index
    %103 = vector.load %arg9[%c680, %c0_63] : memref<1200x11xf32, #tpu.memory_space<vmem>>, vector<40x11xf32>
    tpu.vector_store %arg9[%c680, %c0_63], %102 {strides = array<i32>} : memref<1200x11xf32, #tpu.memory_space<vmem>>, vector<40x11xf32>,
    %104 = vector.extract_strided_slice %67 {offsets = [0, 270], sizes = [40, 11], strides = [1, 1]} : vector<40x446xf32> to vector<40x11xf32>
    %c720 = arith.constant 720 : index
    %c0_64 = arith.constant 0 : index
    %105 = vector.load %arg9[%c720, %c0_64] : memref<1200x11xf32, #tpu.memory_space<vmem>>, vector<40x11xf32>
    tpu.vector_store %arg9[%c720, %c0_64], %104 {strides = array<i32>} : memref<1200x11xf32, #tpu.memory_space<vmem>>, vector<40x11xf32>,
    %106 = vector.extract_strided_slice %67 {offsets = [0, 285], sizes = [40, 11], strides = [1, 1]} : vector<40x446xf32> to vector<40x11xf32>
    %c760 = arith.constant 760 : index
    %c0_65 = arith.constant 0 : index
    %107 = vector.load %arg9[%c760, %c0_65] : memref<1200x11xf32, #tpu.memory_space<vmem>>, vector<40x11xf32>
    tpu.vector_store %arg9[%c760, %c0_65], %106 {strides = array<i32>} : memref<1200x11xf32, #tpu.memory_space<vmem>>, vector<40x11xf32>,
    %108 = vector.extract_strided_slice %67 {offsets = [0, 300], sizes = [40, 11], strides = [1, 1]} : vector<40x446xf32> to vector<40x11xf32>
    %c800 = arith.constant 800 : index
    %c0_66 = arith.constant 0 : index
    %109 = vector.load %arg9[%c800, %c0_66] : memref<1200x11xf32, #tpu.memory_space<vmem>>, vector<40x11xf32>
    tpu.vector_store %arg9[%c800, %c0_66], %108 {strides = array<i32>} : memref<1200x11xf32, #tpu.memory_space<vmem>>, vector<40x11xf32>,
    %110 = vector.extract_strided_slice %67 {offsets = [0, 315], sizes = [40, 11], strides = [1, 1]} : vector<40x446xf32> to vector<40x11xf32>
    %c840 = arith.constant 840 : index
    %c0_67 = arith.constant 0 : index
    %111 = vector.load %arg9[%c840, %c0_67] : memref<1200x11xf32, #tpu.memory_space<vmem>>, vector<40x11xf32>
    tpu.vector_store %arg9[%c840, %c0_67], %110 {strides = array<i32>} : memref<1200x11xf32, #tpu.memory_space<vmem>>, vector<40x11xf32>,
    %112 = vector.extract_strided_slice %67 {offsets = [0, 330], sizes = [40, 11], strides = [1, 1]} : vector<40x446xf32> to vector<40x11xf32>
    %c880 = arith.constant 880 : index
    %c0_68 = arith.constant 0 : index
    %113 = vector.load %arg9[%c880, %c0_68] : memref<1200x11xf32, #tpu.memory_space<vmem>>, vector<40x11xf32>
    tpu.vector_store %arg9[%c880, %c0_68], %112 {strides = array<i32>} : memref<1200x11xf32, #tpu.memory_space<vmem>>, vector<40x11xf32>,
    %114 = vector.extract_strided_slice %67 {offsets = [0, 345], sizes = [40, 11], strides = [1, 1]} : vector<40x446xf32> to vector<40x11xf32>
    %c920 = arith.constant 920 : index
    %c0_69 = arith.constant 0 : index
    %115 = vector.load %arg9[%c920, %c0_69] : memref<1200x11xf32, #tpu.memory_space<vmem>>, vector<40x11xf32>
    tpu.vector_store %arg9[%c920, %c0_69], %114 {strides = array<i32>} : memref<1200x11xf32, #tpu.memory_space<vmem>>, vector<40x11xf32>,
    %116 = vector.extract_strided_slice %67 {offsets = [0, 360], sizes = [40, 11], strides = [1, 1]} : vector<40x446xf32> to vector<40x11xf32>
    %c960 = arith.constant 960 : index
    %c0_70 = arith.constant 0 : index
    %117 = vector.load %arg9[%c960, %c0_70] : memref<1200x11xf32, #tpu.memory_space<vmem>>, vector<40x11xf32>
    tpu.vector_store %arg9[%c960, %c0_70], %116 {strides = array<i32>} : memref<1200x11xf32, #tpu.memory_space<vmem>>, vector<40x11xf32>,
    %118 = vector.extract_strided_slice %67 {offsets = [0, 375], sizes = [40, 11], strides = [1, 1]} : vector<40x446xf32> to vector<40x11xf32>
    %c1000 = arith.constant 1000 : index
    %c0_71 = arith.constant 0 : index
    %119 = vector.load %arg9[%c1000, %c0_71] : memref<1200x11xf32, #tpu.memory_space<vmem>>, vector<40x11xf32>
    tpu.vector_store %arg9[%c1000, %c0_71], %118 {strides = array<i32>} : memref<1200x11xf32, #tpu.memory_space<vmem>>, vector<40x11xf32>,
    %120 = vector.extract_strided_slice %67 {offsets = [0, 390], sizes = [40, 11], strides = [1, 1]} : vector<40x446xf32> to vector<40x11xf32>
    %c1040 = arith.constant 1040 : index
    %c0_72 = arith.constant 0 : index
    %121 = vector.load %arg9[%c1040, %c0_72] : memref<1200x11xf32, #tpu.memory_space<vmem>>, vector<40x11xf32>
    tpu.vector_store %arg9[%c1040, %c0_72], %120 {strides = array<i32>} : memref<1200x11xf32, #tpu.memory_space<vmem>>, vector<40x11xf32>,
    %122 = vector.extract_strided_slice %67 {offsets = [0, 405], sizes = [40, 11], strides = [1, 1]} : vector<40x446xf32> to vector<40x11xf32>
    %c1080 = arith.constant 1080 : index
    %c0_73 = arith.constant 0 : index
    %123 = vector.load %arg9[%c1080, %c0_73] : memref<1200x11xf32, #tpu.memory_space<vmem>>, vector<40x11xf32>
    tpu.vector_store %arg9[%c1080, %c0_73], %122 {strides = array<i32>} : memref<1200x11xf32, #tpu.memory_space<vmem>>, vector<40x11xf32>,
    %124 = vector.extract_strided_slice %67 {offsets = [0, 420], sizes = [40, 11], strides = [1, 1]} : vector<40x446xf32> to vector<40x11xf32>
    %c1120 = arith.constant 1120 : index
    %c0_74 = arith.constant 0 : index
    %125 = vector.load %arg9[%c1120, %c0_74] : memref<1200x11xf32, #tpu.memory_space<vmem>>, vector<40x11xf32>
    tpu.vector_store %arg9[%c1120, %c0_74], %124 {strides = array<i32>} : memref<1200x11xf32, #tpu.memory_space<vmem>>, vector<40x11xf32>,
    %126 = vector.extract_strided_slice %67 {offsets = [0, 435], sizes = [40, 11], strides = [1, 1]} : vector<40x446xf32> to vector<40x11xf32>
    %c1160 = arith.constant 1160 : index
    %c0_75 = arith.constant 0 : index
    %127 = vector.load %arg9[%c1160, %c0_75] : memref<1200x11xf32, #tpu.memory_space<vmem>>, vector<40x11xf32>
    tpu.vector_store %arg9[%c1160, %c0_75], %126 {strides = array<i32>} : memref<1200x11xf32, #tpu.memory_space<vmem>>, vector<40x11xf32>,
    %c0_76 = arith.constant 0 : index
    %c0_77 = arith.constant 0 : index
    %128 = vector.load %arg9[%c0_76, %c0_77] : memref<1200x11xf32, #tpu.memory_space<vmem>>, vector<1200x11xf32>
    %cst_78 = arith.constant dense<0.000000e+00> : vector<3x11xf32>
    %129 = tpu.matmul %3, %128, %cst_78 {dimension_numbers = #tpu.dot_dimension_numbers<[1], [0], [0], [1], [0, 0, 1, 1], [], []>} : vector<3x1200xf32>, vector<1200x11xf32>, vector<3x11xf32> -> vector<3x11xf32>
    %130 = vector.broadcast %4 : vector<3x1xf32> to vector<3x11xf32>
    %131 = arith.addf %129, %130 : vector<3x11xf32>
    %cst_79 = arith.constant dense<0xFF800000> : vector<11xf32>
    %132 = vector.multi_reduction <maximumf>, %131, %cst_79 [0] : vector<3x11xf32> to vector<11xf32>
    %133 = vector.shape_cast %132 : vector<11xf32> to vector<1x11xf32>
    %134 = vector.broadcast %133 : vector<1x11xf32> to vector<3x11xf32>
    %135 = arith.subf %131, %134 : vector<3x11xf32>
    %136 = math.exp %135 : vector<3x11xf32>
    %cst_80 = arith.constant dense<0.000000e+00> : vector<11xf32>
    %137 = vector.multi_reduction <add>, %136, %cst_80 [0] : vector<3x11xf32> to vector<11xf32>
    %138 = vector.shape_cast %137 : vector<11xf32> to vector<1x11xf32>
    %139 = math.log %138 : vector<1x11xf32>
    %140 = vector.broadcast %139 : vector<1x11xf32> to vector<3x11xf32>
    %141 = arith.subf %135, %140 : vector<3x11xf32>
    %c0_81 = arith.constant 0 : index
    %c0_82 = arith.constant 0 : index
    %c0_83 = arith.constant 0 : index
    %142 = vector.load %arg7[%c0_81, %c0_82, %c0_83] : memref<2x3x11xf32, #tpu.memory_space<vmem>>, vector<1x3x11xf32>
    %143 = vector.shape_cast %142 : vector<1x3x11xf32> to vector<3x11xf32>
    %144 = vector.shape_cast %141 : vector<3x11xf32> to vector<1x3x11xf32>
    tpu.vector_store %arg7[%c0_81, %c0_82, %c0_83], %144 {strides = array<i32>} : memref<2x3x11xf32, #tpu.memory_space<vmem>>, vector<1x3x11xf32>,
    %c1 = arith.constant 1 : index
    %c0_84 = arith.constant 0 : index
    %c0_85 = arith.constant 0 : index
    %145 = vector.load %arg1[%c1, %c0_84, %c0_85] : memref<2x4x544xf32, #tpu.memory_space<vmem>>, vector<1x4x544xf32>
    %146 = vector.shape_cast %145 : vector<1x4x544xf32> to vector<4x544xf32>
    %147 = vector.extract_strided_slice %146 {offsets = [0, 0], sizes = [4, 520], strides = [1, 1]} : vector<4x544xf32> to vector<4x520xf32>
    %c0_86 = arith.constant 0 : index
    %c0_87 = arith.constant 0 : index
    %148 = vector.load %arg8[%c0_86, %c0_87] : memref<100x520xf32, #tpu.memory_space<vmem>>, vector<4x520xf32>
    tpu.vector_store %arg8[%c0_86, %c0_87], %147 {strides = array<i32>} : memref<100x520xf32, #tpu.memory_space<vmem>>, vector<4x520xf32>,
    %149 = vector.extract_strided_slice %146 {offsets = [0, 1], sizes = [4, 520], strides = [1, 1]} : vector<4x544xf32> to vector<4x520xf32>
    %c4_88 = arith.constant 4 : index
    %c0_89 = arith.constant 0 : index
    %150 = vector.load %arg8[%c4_88, %c0_89] : memref<100x520xf32, #tpu.memory_space<vmem>>, vector<4x520xf32>
    tpu.vector_store %arg8[%c4_88, %c0_89], %149 {strides = array<i32>} : memref<100x520xf32, #tpu.memory_space<vmem>>, vector<4x520xf32>,
    %151 = vector.extract_strided_slice %146 {offsets = [0, 2], sizes = [4, 520], strides = [1, 1]} : vector<4x544xf32> to vector<4x520xf32>
    %c8_90 = arith.constant 8 : index
    %c0_91 = arith.constant 0 : index
    %152 = vector.load %arg8[%c8_90, %c0_91] : memref<100x520xf32, #tpu.memory_space<vmem>>, vector<4x520xf32>
    tpu.vector_store %arg8[%c8_90, %c0_91], %151 {strides = array<i32>} : memref<100x520xf32, #tpu.memory_space<vmem>>, vector<4x520xf32>,
    %153 = vector.extract_strided_slice %146 {offsets = [0, 3], sizes = [4, 520], strides = [1, 1]} : vector<4x544xf32> to vector<4x520xf32>
    %c12_92 = arith.constant 12 : index
    %c0_93 = arith.constant 0 : index
    %154 = vector.load %arg8[%c12_92, %c0_93] : memref<100x520xf32, #tpu.memory_space<vmem>>, vector<4x520xf32>
    tpu.vector_store %arg8[%c12_92, %c0_93], %153 {strides = array<i32>} : memref<100x520xf32, #tpu.memory_space<vmem>>, vector<4x520xf32>,
    %155 = vector.extract_strided_slice %146 {offsets = [0, 4], sizes = [4, 520], strides = [1, 1]} : vector<4x544xf32> to vector<4x520xf32>
    %c16_94 = arith.constant 16 : index
    %c0_95 = arith.constant 0 : index
    %156 = vector.load %arg8[%c16_94, %c0_95] : memref<100x520xf32, #tpu.memory_space<vmem>>, vector<4x520xf32>
    tpu.vector_store %arg8[%c16_94, %c0_95], %155 {strides = array<i32>} : memref<100x520xf32, #tpu.memory_space<vmem>>, vector<4x520xf32>,
    %157 = vector.extract_strided_slice %146 {offsets = [0, 5], sizes = [4, 520], strides = [1, 1]} : vector<4x544xf32> to vector<4x520xf32>
    %c20_96 = arith.constant 20 : index
    %c0_97 = arith.constant 0 : index
    %158 = vector.load %arg8[%c20_96, %c0_97] : memref<100x520xf32, #tpu.memory_space<vmem>>, vector<4x520xf32>
    tpu.vector_store %arg8[%c20_96, %c0_97], %157 {strides = array<i32>} : memref<100x520xf32, #tpu.memory_space<vmem>>, vector<4x520xf32>,
    %159 = vector.extract_strided_slice %146 {offsets = [0, 6], sizes = [4, 520], strides = [1, 1]} : vector<4x544xf32> to vector<4x520xf32>
    %c24_98 = arith.constant 24 : index
    %c0_99 = arith.constant 0 : index
    %160 = vector.load %arg8[%c24_98, %c0_99] : memref<100x520xf32, #tpu.memory_space<vmem>>, vector<4x520xf32>
    tpu.vector_store %arg8[%c24_98, %c0_99], %159 {strides = array<i32>} : memref<100x520xf32, #tpu.memory_space<vmem>>, vector<4x520xf32>,
    %161 = vector.extract_strided_slice %146 {offsets = [0, 7], sizes = [4, 520], strides = [1, 1]} : vector<4x544xf32> to vector<4x520xf32>
    %c28_100 = arith.constant 28 : index
    %c0_101 = arith.constant 0 : index
    %162 = vector.load %arg8[%c28_100, %c0_101] : memref<100x520xf32, #tpu.memory_space<vmem>>, vector<4x520xf32>
    tpu.vector_store %arg8[%c28_100, %c0_101], %161 {strides = array<i32>} : memref<100x520xf32, #tpu.memory_space<vmem>>, vector<4x520xf32>,
    %163 = vector.extract_strided_slice %146 {offsets = [0, 8], sizes = [4, 520], strides = [1, 1]} : vector<4x544xf32> to vector<4x520xf32>
    %c32_102 = arith.constant 32 : index
    %c0_103 = arith.constant 0 : index
    %164 = vector.load %arg8[%c32_102, %c0_103] : memref<100x520xf32, #tpu.memory_space<vmem>>, vector<4x520xf32>
    tpu.vector_store %arg8[%c32_102, %c0_103], %163 {strides = array<i32>} : memref<100x520xf32, #tpu.memory_space<vmem>>, vector<4x520xf32>,
    %165 = vector.extract_strided_slice %146 {offsets = [0, 9], sizes = [4, 520], strides = [1, 1]} : vector<4x544xf32> to vector<4x520xf32>
    %c36_104 = arith.constant 36 : index
    %c0_105 = arith.constant 0 : index
    %166 = vector.load %arg8[%c36_104, %c0_105] : memref<100x520xf32, #tpu.memory_space<vmem>>, vector<4x520xf32>
    tpu.vector_store %arg8[%c36_104, %c0_105], %165 {strides = array<i32>} : memref<100x520xf32, #tpu.memory_space<vmem>>, vector<4x520xf32>,
    %167 = vector.extract_strided_slice %146 {offsets = [0, 10], sizes = [4, 520], strides = [1, 1]} : vector<4x544xf32> to vector<4x520xf32>
    %c40_106 = arith.constant 40 : index
    %c0_107 = arith.constant 0 : index
    %168 = vector.load %arg8[%c40_106, %c0_107] : memref<100x520xf32, #tpu.memory_space<vmem>>, vector<4x520xf32>
    tpu.vector_store %arg8[%c40_106, %c0_107], %167 {strides = array<i32>} : memref<100x520xf32, #tpu.memory_space<vmem>>, vector<4x520xf32>,
    %169 = vector.extract_strided_slice %146 {offsets = [0, 11], sizes = [4, 520], strides = [1, 1]} : vector<4x544xf32> to vector<4x520xf32>
    %c44_108 = arith.constant 44 : index
    %c0_109 = arith.constant 0 : index
    %170 = vector.load %arg8[%c44_108, %c0_109] : memref<100x520xf32, #tpu.memory_space<vmem>>, vector<4x520xf32>
    tpu.vector_store %arg8[%c44_108, %c0_109], %169 {strides = array<i32>} : memref<100x520xf32, #tpu.memory_space<vmem>>, vector<4x520xf32>,
    %171 = vector.extract_strided_slice %146 {offsets = [0, 12], sizes = [4, 520], strides = [1, 1]} : vector<4x544xf32> to vector<4x520xf32>
    %c48_110 = arith.constant 48 : index
    %c0_111 = arith.constant 0 : index
    %172 = vector.load %arg8[%c48_110, %c0_111] : memref<100x520xf32, #tpu.memory_space<vmem>>, vector<4x520xf32>
    tpu.vector_store %arg8[%c48_110, %c0_111], %171 {strides = array<i32>} : memref<100x520xf32, #tpu.memory_space<vmem>>, vector<4x520xf32>,
    %173 = vector.extract_strided_slice %146 {offsets = [0, 13], sizes = [4, 520], strides = [1, 1]} : vector<4x544xf32> to vector<4x520xf32>
    %c52_112 = arith.constant 52 : index
    %c0_113 = arith.constant 0 : index
    %174 = vector.load %arg8[%c52_112, %c0_113] : memref<100x520xf32, #tpu.memory_space<vmem>>, vector<4x520xf32>
    tpu.vector_store %arg8[%c52_112, %c0_113], %173 {strides = array<i32>} : memref<100x520xf32, #tpu.memory_space<vmem>>, vector<4x520xf32>,
    %175 = vector.extract_strided_slice %146 {offsets = [0, 14], sizes = [4, 520], strides = [1, 1]} : vector<4x544xf32> to vector<4x520xf32>
    %c56_114 = arith.constant 56 : index
    %c0_115 = arith.constant 0 : index
    %176 = vector.load %arg8[%c56_114, %c0_115] : memref<100x520xf32, #tpu.memory_space<vmem>>, vector<4x520xf32>
    tpu.vector_store %arg8[%c56_114, %c0_115], %175 {strides = array<i32>} : memref<100x520xf32, #tpu.memory_space<vmem>>, vector<4x520xf32>,
    %177 = vector.extract_strided_slice %146 {offsets = [0, 15], sizes = [4, 520], strides = [1, 1]} : vector<4x544xf32> to vector<4x520xf32>
    %c60_116 = arith.constant 60 : index
    %c0_117 = arith.constant 0 : index
    %178 = vector.load %arg8[%c60_116, %c0_117] : memref<100x520xf32, #tpu.memory_space<vmem>>, vector<4x520xf32>
    tpu.vector_store %arg8[%c60_116, %c0_117], %177 {strides = array<i32>} : memref<100x520xf32, #tpu.memory_space<vmem>>, vector<4x520xf32>,
    %179 = vector.extract_strided_slice %146 {offsets = [0, 16], sizes = [4, 520], strides = [1, 1]} : vector<4x544xf32> to vector<4x520xf32>
    %c64_118 = arith.constant 64 : index
    %c0_119 = arith.constant 0 : index
    %180 = vector.load %arg8[%c64_118, %c0_119] : memref<100x520xf32, #tpu.memory_space<vmem>>, vector<4x520xf32>
    tpu.vector_store %arg8[%c64_118, %c0_119], %179 {strides = array<i32>} : memref<100x520xf32, #tpu.memory_space<vmem>>, vector<4x520xf32>,
    %181 = vector.extract_strided_slice %146 {offsets = [0, 17], sizes = [4, 520], strides = [1, 1]} : vector<4x544xf32> to vector<4x520xf32>
    %c68_120 = arith.constant 68 : index
    %c0_121 = arith.constant 0 : index
    %182 = vector.load %arg8[%c68_120, %c0_121] : memref<100x520xf32, #tpu.memory_space<vmem>>, vector<4x520xf32>
    tpu.vector_store %arg8[%c68_120, %c0_121], %181 {strides = array<i32>} : memref<100x520xf32, #tpu.memory_space<vmem>>, vector<4x520xf32>,
    %183 = vector.extract_strided_slice %146 {offsets = [0, 18], sizes = [4, 520], strides = [1, 1]} : vector<4x544xf32> to vector<4x520xf32>
    %c72_122 = arith.constant 72 : index
    %c0_123 = arith.constant 0 : index
    %184 = vector.load %arg8[%c72_122, %c0_123] : memref<100x520xf32, #tpu.memory_space<vmem>>, vector<4x520xf32>
    tpu.vector_store %arg8[%c72_122, %c0_123], %183 {strides = array<i32>} : memref<100x520xf32, #tpu.memory_space<vmem>>, vector<4x520xf32>,
    %185 = vector.extract_strided_slice %146 {offsets = [0, 19], sizes = [4, 520], strides = [1, 1]} : vector<4x544xf32> to vector<4x520xf32>
    %c76_124 = arith.constant 76 : index
    %c0_125 = arith.constant 0 : index
    %186 = vector.load %arg8[%c76_124, %c0_125] : memref<100x520xf32, #tpu.memory_space<vmem>>, vector<4x520xf32>
    tpu.vector_store %arg8[%c76_124, %c0_125], %185 {strides = array<i32>} : memref<100x520xf32, #tpu.memory_space<vmem>>, vector<4x520xf32>,
    %187 = vector.extract_strided_slice %146 {offsets = [0, 20], sizes = [4, 520], strides = [1, 1]} : vector<4x544xf32> to vector<4x520xf32>
    %c80_126 = arith.constant 80 : index
    %c0_127 = arith.constant 0 : index
    %188 = vector.load %arg8[%c80_126, %c0_127] : memref<100x520xf32, #tpu.memory_space<vmem>>, vector<4x520xf32>
    tpu.vector_store %arg8[%c80_126, %c0_127], %187 {strides = array<i32>} : memref<100x520xf32, #tpu.memory_space<vmem>>, vector<4x520xf32>,
    %189 = vector.extract_strided_slice %146 {offsets = [0, 21], sizes = [4, 520], strides = [1, 1]} : vector<4x544xf32> to vector<4x520xf32>
    %c84_128 = arith.constant 84 : index
    %c0_129 = arith.constant 0 : index
    %190 = vector.load %arg8[%c84_128, %c0_129] : memref<100x520xf32, #tpu.memory_space<vmem>>, vector<4x520xf32>
    tpu.vector_store %arg8[%c84_128, %c0_129], %189 {strides = array<i32>} : memref<100x520xf32, #tpu.memory_space<vmem>>, vector<4x520xf32>,
    %191 = vector.extract_strided_slice %146 {offsets = [0, 22], sizes = [4, 520], strides = [1, 1]} : vector<4x544xf32> to vector<4x520xf32>
    %c88_130 = arith.constant 88 : index
    %c0_131 = arith.constant 0 : index
    %192 = vector.load %arg8[%c88_130, %c0_131] : memref<100x520xf32, #tpu.memory_space<vmem>>, vector<4x520xf32>
    tpu.vector_store %arg8[%c88_130, %c0_131], %191 {strides = array<i32>} : memref<100x520xf32, #tpu.memory_space<vmem>>, vector<4x520xf32>,
    %193 = vector.extract_strided_slice %146 {offsets = [0, 23], sizes = [4, 520], strides = [1, 1]} : vector<4x544xf32> to vector<4x520xf32>
    %c92_132 = arith.constant 92 : index
    %c0_133 = arith.constant 0 : index
    %194 = vector.load %arg8[%c92_132, %c0_133] : memref<100x520xf32, #tpu.memory_space<vmem>>, vector<4x520xf32>
    tpu.vector_store %arg8[%c92_132, %c0_133], %193 {strides = array<i32>} : memref<100x520xf32, #tpu.memory_space<vmem>>, vector<4x520xf32>,
    %195 = vector.extract_strided_slice %146 {offsets = [0, 24], sizes = [4, 520], strides = [1, 1]} : vector<4x544xf32> to vector<4x520xf32>
    %c96_134 = arith.constant 96 : index
    %c0_135 = arith.constant 0 : index
    %196 = vector.load %arg8[%c96_134, %c0_135] : memref<100x520xf32, #tpu.memory_space<vmem>>, vector<4x520xf32>
    tpu.vector_store %arg8[%c96_134, %c0_135], %195 {strides = array<i32>} : memref<100x520xf32, #tpu.memory_space<vmem>>, vector<4x520xf32>,
    %c0_136 = arith.constant 0 : index
    %c0_137 = arith.constant 0 : index
    %197 = vector.load %arg8[%c0_136, %c0_137] : memref<100x520xf32, #tpu.memory_space<vmem>>, vector<100x520xf32>
    %cst_138 = arith.constant dense<0.000000e+00> : vector<40x520xf32>
    %198 = tpu.matmul %0, %197, %cst_138 {dimension_numbers = #tpu.dot_dimension_numbers<[1], [0], [0], [1], [0, 0, 1, 1], [], []>} : vector<40x100xf32>, vector<100x520xf32>, vector<40x520xf32> -> vector<40x520xf32>
    %199 = vector.broadcast %1 : vector<40x1xf32> to vector<40x520xf32>
    %200 = arith.addf %198, %199 : vector<40x520xf32>
    %201 = arith.mulf %200, %200 : vector<40x520xf32>
    %cst_139 = arith.constant dense<0.000000e+00> : vector<40x446xf32>
    %202 = tpu.matmul %201, %2, %cst_139 {dimension_numbers = #tpu.dot_dimension_numbers<[1], [0], [0], [1], [0, 0, 1, 1], [], []>} : vector<40x520xf32>, vector<520x446xf32>, vector<40x446xf32> -> vector<40x446xf32>
    %cst_140 = arith.constant 0.0133333337 : f32
    %203 = vector.broadcast %cst_140 : f32 to vector<40x446xf32>
    %204 = arith.mulf %202, %203 : vector<40x446xf32>
    %cst_141 = arith.constant 9.99999997E-7 : f32
    %205 = vector.broadcast %cst_141 : f32 to vector<40x446xf32>
    %206 = arith.maximumf %204, %205 : vector<40x446xf32>
    %207 = math.log %206 : vector<40x446xf32>
    %208 = vector.extract_strided_slice %207 {offsets = [0, 0], sizes = [40, 11], strides = [1, 1]} : vector<40x446xf32> to vector<40x11xf32>
    %c0_142 = arith.constant 0 : index
    %c0_143 = arith.constant 0 : index
    %209 = vector.load %arg9[%c0_142, %c0_143] : memref<1200x11xf32, #tpu.memory_space<vmem>>, vector<40x11xf32>
    tpu.vector_store %arg9[%c0_142, %c0_143], %208 {strides = array<i32>} : memref<1200x11xf32, #tpu.memory_space<vmem>>, vector<40x11xf32>,
    %210 = vector.extract_strided_slice %207 {offsets = [0, 15], sizes = [40, 11], strides = [1, 1]} : vector<40x446xf32> to vector<40x11xf32>
    %c40_144 = arith.constant 40 : index
    %c0_145 = arith.constant 0 : index
    %211 = vector.load %arg9[%c40_144, %c0_145] : memref<1200x11xf32, #tpu.memory_space<vmem>>, vector<40x11xf32>
    tpu.vector_store %arg9[%c40_144, %c0_145], %210 {strides = array<i32>} : memref<1200x11xf32, #tpu.memory_space<vmem>>, vector<40x11xf32>,
    %212 = vector.extract_strided_slice %207 {offsets = [0, 30], sizes = [40, 11], strides = [1, 1]} : vector<40x446xf32> to vector<40x11xf32>
    %c80_146 = arith.constant 80 : index
    %c0_147 = arith.constant 0 : index
    %213 = vector.load %arg9[%c80_146, %c0_147] : memref<1200x11xf32, #tpu.memory_space<vmem>>, vector<40x11xf32>
    tpu.vector_store %arg9[%c80_146, %c0_147], %212 {strides = array<i32>} : memref<1200x11xf32, #tpu.memory_space<vmem>>, vector<40x11xf32>,
    %214 = vector.extract_strided_slice %207 {offsets = [0, 45], sizes = [40, 11], strides = [1, 1]} : vector<40x446xf32> to vector<40x11xf32>
    %c120_148 = arith.constant 120 : index
    %c0_149 = arith.constant 0 : index
    %215 = vector.load %arg9[%c120_148, %c0_149] : memref<1200x11xf32, #tpu.memory_space<vmem>>, vector<40x11xf32>
    tpu.vector_store %arg9[%c120_148, %c0_149], %214 {strides = array<i32>} : memref<1200x11xf32, #tpu.memory_space<vmem>>, vector<40x11xf32>,
    %216 = vector.extract_strided_slice %207 {offsets = [0, 60], sizes = [40, 11], strides = [1, 1]} : vector<40x446xf32> to vector<40x11xf32>
    %c160_150 = arith.constant 160 : index
    %c0_151 = arith.constant 0 : index
    %217 = vector.load %arg9[%c160_150, %c0_151] : memref<1200x11xf32, #tpu.memory_space<vmem>>, vector<40x11xf32>
    tpu.vector_store %arg9[%c160_150, %c0_151], %216 {strides = array<i32>} : memref<1200x11xf32, #tpu.memory_space<vmem>>, vector<40x11xf32>,
    %218 = vector.extract_strided_slice %207 {offsets = [0, 75], sizes = [40, 11], strides = [1, 1]} : vector<40x446xf32> to vector<40x11xf32>
    %c200_152 = arith.constant 200 : index
    %c0_153 = arith.constant 0 : index
    %219 = vector.load %arg9[%c200_152, %c0_153] : memref<1200x11xf32, #tpu.memory_space<vmem>>, vector<40x11xf32>
    tpu.vector_store %arg9[%c200_152, %c0_153], %218 {strides = array<i32>} : memref<1200x11xf32, #tpu.memory_space<vmem>>, vector<40x11xf32>,
    %220 = vector.extract_strided_slice %207 {offsets = [0, 90], sizes = [40, 11], strides = [1, 1]} : vector<40x446xf32> to vector<40x11xf32>
    %c240_154 = arith.constant 240 : index
    %c0_155 = arith.constant 0 : index
    %221 = vector.load %arg9[%c240_154, %c0_155] : memref<1200x11xf32, #tpu.memory_space<vmem>>, vector<40x11xf32>
    tpu.vector_store %arg9[%c240_154, %c0_155], %220 {strides = array<i32>} : memref<1200x11xf32, #tpu.memory_space<vmem>>, vector<40x11xf32>,
    %222 = vector.extract_strided_slice %207 {offsets = [0, 105], sizes = [40, 11], strides = [1, 1]} : vector<40x446xf32> to vector<40x11xf32>
    %c280_156 = arith.constant 280 : index
    %c0_157 = arith.constant 0 : index
    %223 = vector.load %arg9[%c280_156, %c0_157] : memref<1200x11xf32, #tpu.memory_space<vmem>>, vector<40x11xf32>
    tpu.vector_store %arg9[%c280_156, %c0_157], %222 {strides = array<i32>} : memref<1200x11xf32, #tpu.memory_space<vmem>>, vector<40x11xf32>,
    %224 = vector.extract_strided_slice %207 {offsets = [0, 120], sizes = [40, 11], strides = [1, 1]} : vector<40x446xf32> to vector<40x11xf32>
    %c320_158 = arith.constant 320 : index
    %c0_159 = arith.constant 0 : index
    %225 = vector.load %arg9[%c320_158, %c0_159] : memref<1200x11xf32, #tpu.memory_space<vmem>>, vector<40x11xf32>
    tpu.vector_store %arg9[%c320_158, %c0_159], %224 {strides = array<i32>} : memref<1200x11xf32, #tpu.memory_space<vmem>>, vector<40x11xf32>,
    %226 = vector.extract_strided_slice %207 {offsets = [0, 135], sizes = [40, 11], strides = [1, 1]} : vector<40x446xf32> to vector<40x11xf32>
    %c360_160 = arith.constant 360 : index
    %c0_161 = arith.constant 0 : index
    %227 = vector.load %arg9[%c360_160, %c0_161] : memref<1200x11xf32, #tpu.memory_space<vmem>>, vector<40x11xf32>
    tpu.vector_store %arg9[%c360_160, %c0_161], %226 {strides = array<i32>} : memref<1200x11xf32, #tpu.memory_space<vmem>>, vector<40x11xf32>,
    %228 = vector.extract_strided_slice %207 {offsets = [0, 150], sizes = [40, 11], strides = [1, 1]} : vector<40x446xf32> to vector<40x11xf32>
    %c400_162 = arith.constant 400 : index
    %c0_163 = arith.constant 0 : index
    %229 = vector.load %arg9[%c400_162, %c0_163] : memref<1200x11xf32, #tpu.memory_space<vmem>>, vector<40x11xf32>
    tpu.vector_store %arg9[%c400_162, %c0_163], %228 {strides = array<i32>} : memref<1200x11xf32, #tpu.memory_space<vmem>>, vector<40x11xf32>,
    %230 = vector.extract_strided_slice %207 {offsets = [0, 165], sizes = [40, 11], strides = [1, 1]} : vector<40x446xf32> to vector<40x11xf32>
    %c440_164 = arith.constant 440 : index
    %c0_165 = arith.constant 0 : index
    %231 = vector.load %arg9[%c440_164, %c0_165] : memref<1200x11xf32, #tpu.memory_space<vmem>>, vector<40x11xf32>
    tpu.vector_store %arg9[%c440_164, %c0_165], %230 {strides = array<i32>} : memref<1200x11xf32, #tpu.memory_space<vmem>>, vector<40x11xf32>,
    %232 = vector.extract_strided_slice %207 {offsets = [0, 180], sizes = [40, 11], strides = [1, 1]} : vector<40x446xf32> to vector<40x11xf32>
    %c480_166 = arith.constant 480 : index
    %c0_167 = arith.constant 0 : index
    %233 = vector.load %arg9[%c480_166, %c0_167] : memref<1200x11xf32, #tpu.memory_space<vmem>>, vector<40x11xf32>
    tpu.vector_store %arg9[%c480_166, %c0_167], %232 {strides = array<i32>} : memref<1200x11xf32, #tpu.memory_space<vmem>>, vector<40x11xf32>,
    %234 = vector.extract_strided_slice %207 {offsets = [0, 195], sizes = [40, 11], strides = [1, 1]} : vector<40x446xf32> to vector<40x11xf32>
    %c520_168 = arith.constant 520 : index
    %c0_169 = arith.constant 0 : index
    %235 = vector.load %arg9[%c520_168, %c0_169] : memref<1200x11xf32, #tpu.memory_space<vmem>>, vector<40x11xf32>
    tpu.vector_store %arg9[%c520_168, %c0_169], %234 {strides = array<i32>} : memref<1200x11xf32, #tpu.memory_space<vmem>>, vector<40x11xf32>,
    %236 = vector.extract_strided_slice %207 {offsets = [0, 210], sizes = [40, 11], strides = [1, 1]} : vector<40x446xf32> to vector<40x11xf32>
    %c560_170 = arith.constant 560 : index
    %c0_171 = arith.constant 0 : index
    %237 = vector.load %arg9[%c560_170, %c0_171] : memref<1200x11xf32, #tpu.memory_space<vmem>>, vector<40x11xf32>
    tpu.vector_store %arg9[%c560_170, %c0_171], %236 {strides = array<i32>} : memref<1200x11xf32, #tpu.memory_space<vmem>>, vector<40x11xf32>,
    %238 = vector.extract_strided_slice %207 {offsets = [0, 225], sizes = [40, 11], strides = [1, 1]} : vector<40x446xf32> to vector<40x11xf32>
    %c600_172 = arith.constant 600 : index
    %c0_173 = arith.constant 0 : index
    %239 = vector.load %arg9[%c600_172, %c0_173] : memref<1200x11xf32, #tpu.memory_space<vmem>>, vector<40x11xf32>
    tpu.vector_store %arg9[%c600_172, %c0_173], %238 {strides = array<i32>} : memref<1200x11xf32, #tpu.memory_space<vmem>>, vector<40x11xf32>,
    %240 = vector.extract_strided_slice %207 {offsets = [0, 240], sizes = [40, 11], strides = [1, 1]} : vector<40x446xf32> to vector<40x11xf32>
    %c640_174 = arith.constant 640 : index
    %c0_175 = arith.constant 0 : index
    %241 = vector.load %arg9[%c640_174, %c0_175] : memref<1200x11xf32, #tpu.memory_space<vmem>>, vector<40x11xf32>
    tpu.vector_store %arg9[%c640_174, %c0_175], %240 {strides = array<i32>} : memref<1200x11xf32, #tpu.memory_space<vmem>>, vector<40x11xf32>,
    %242 = vector.extract_strided_slice %207 {offsets = [0, 255], sizes = [40, 11], strides = [1, 1]} : vector<40x446xf32> to vector<40x11xf32>
    %c680_176 = arith.constant 680 : index
    %c0_177 = arith.constant 0 : index
    %243 = vector.load %arg9[%c680_176, %c0_177] : memref<1200x11xf32, #tpu.memory_space<vmem>>, vector<40x11xf32>
    tpu.vector_store %arg9[%c680_176, %c0_177], %242 {strides = array<i32>} : memref<1200x11xf32, #tpu.memory_space<vmem>>, vector<40x11xf32>,
    %244 = vector.extract_strided_slice %207 {offsets = [0, 270], sizes = [40, 11], strides = [1, 1]} : vector<40x446xf32> to vector<40x11xf32>
    %c720_178 = arith.constant 720 : index
    %c0_179 = arith.constant 0 : index
    %245 = vector.load %arg9[%c720_178, %c0_179] : memref<1200x11xf32, #tpu.memory_space<vmem>>, vector<40x11xf32>
    tpu.vector_store %arg9[%c720_178, %c0_179], %244 {strides = array<i32>} : memref<1200x11xf32, #tpu.memory_space<vmem>>, vector<40x11xf32>,
    %246 = vector.extract_strided_slice %207 {offsets = [0, 285], sizes = [40, 11], strides = [1, 1]} : vector<40x446xf32> to vector<40x11xf32>
    %c760_180 = arith.constant 760 : index
    %c0_181 = arith.constant 0 : index
    %247 = vector.load %arg9[%c760_180, %c0_181] : memref<1200x11xf32, #tpu.memory_space<vmem>>, vector<40x11xf32>
    tpu.vector_store %arg9[%c760_180, %c0_181], %246 {strides = array<i32>} : memref<1200x11xf32, #tpu.memory_space<vmem>>, vector<40x11xf32>,
    %248 = vector.extract_strided_slice %207 {offsets = [0, 300], sizes = [40, 11], strides = [1, 1]} : vector<40x446xf32> to vector<40x11xf32>
    %c800_182 = arith.constant 800 : index
    %c0_183 = arith.constant 0 : index
    %249 = vector.load %arg9[%c800_182, %c0_183] : memref<1200x11xf32, #tpu.memory_space<vmem>>, vector<40x11xf32>
    tpu.vector_store %arg9[%c800_182, %c0_183], %248 {strides = array<i32>} : memref<1200x11xf32, #tpu.memory_space<vmem>>, vector<40x11xf32>,
    %250 = vector.extract_strided_slice %207 {offsets = [0, 315], sizes = [40, 11], strides = [1, 1]} : vector<40x446xf32> to vector<40x11xf32>
    %c840_184 = arith.constant 840 : index
    %c0_185 = arith.constant 0 : index
    %251 = vector.load %arg9[%c840_184, %c0_185] : memref<1200x11xf32, #tpu.memory_space<vmem>>, vector<40x11xf32>
    tpu.vector_store %arg9[%c840_184, %c0_185], %250 {strides = array<i32>} : memref<1200x11xf32, #tpu.memory_space<vmem>>, vector<40x11xf32>,
    %252 = vector.extract_strided_slice %207 {offsets = [0, 330], sizes = [40, 11], strides = [1, 1]} : vector<40x446xf32> to vector<40x11xf32>
    %c880_186 = arith.constant 880 : index
    %c0_187 = arith.constant 0 : index
    %253 = vector.load %arg9[%c880_186, %c0_187] : memref<1200x11xf32, #tpu.memory_space<vmem>>, vector<40x11xf32>
    tpu.vector_store %arg9[%c880_186, %c0_187], %252 {strides = array<i32>} : memref<1200x11xf32, #tpu.memory_space<vmem>>, vector<40x11xf32>,
    %254 = vector.extract_strided_slice %207 {offsets = [0, 345], sizes = [40, 11], strides = [1, 1]} : vector<40x446xf32> to vector<40x11xf32>
    %c920_188 = arith.constant 920 : index
    %c0_189 = arith.constant 0 : index
    %255 = vector.load %arg9[%c920_188, %c0_189] : memref<1200x11xf32, #tpu.memory_space<vmem>>, vector<40x11xf32>
    tpu.vector_store %arg9[%c920_188, %c0_189], %254 {strides = array<i32>} : memref<1200x11xf32, #tpu.memory_space<vmem>>, vector<40x11xf32>,
    %256 = vector.extract_strided_slice %207 {offsets = [0, 360], sizes = [40, 11], strides = [1, 1]} : vector<40x446xf32> to vector<40x11xf32>
    %c960_190 = arith.constant 960 : index
    %c0_191 = arith.constant 0 : index
    %257 = vector.load %arg9[%c960_190, %c0_191] : memref<1200x11xf32, #tpu.memory_space<vmem>>, vector<40x11xf32>
    tpu.vector_store %arg9[%c960_190, %c0_191], %256 {strides = array<i32>} : memref<1200x11xf32, #tpu.memory_space<vmem>>, vector<40x11xf32>,
    %258 = vector.extract_strided_slice %207 {offsets = [0, 375], sizes = [40, 11], strides = [1, 1]} : vector<40x446xf32> to vector<40x11xf32>
    %c1000_192 = arith.constant 1000 : index
    %c0_193 = arith.constant 0 : index
    %259 = vector.load %arg9[%c1000_192, %c0_193] : memref<1200x11xf32, #tpu.memory_space<vmem>>, vector<40x11xf32>
    tpu.vector_store %arg9[%c1000_192, %c0_193], %258 {strides = array<i32>} : memref<1200x11xf32, #tpu.memory_space<vmem>>, vector<40x11xf32>,
    %260 = vector.extract_strided_slice %207 {offsets = [0, 390], sizes = [40, 11], strides = [1, 1]} : vector<40x446xf32> to vector<40x11xf32>
    %c1040_194 = arith.constant 1040 : index
    %c0_195 = arith.constant 0 : index
    %261 = vector.load %arg9[%c1040_194, %c0_195] : memref<1200x11xf32, #tpu.memory_space<vmem>>, vector<40x11xf32>
    tpu.vector_store %arg9[%c1040_194, %c0_195], %260 {strides = array<i32>} : memref<1200x11xf32, #tpu.memory_space<vmem>>, vector<40x11xf32>,
    %262 = vector.extract_strided_slice %207 {offsets = [0, 405], sizes = [40, 11], strides = [1, 1]} : vector<40x446xf32> to vector<40x11xf32>
    %c1080_196 = arith.constant 1080 : index
    %c0_197 = arith.constant 0 : index
    %263 = vector.load %arg9[%c1080_196, %c0_197] : memref<1200x11xf32, #tpu.memory_space<vmem>>, vector<40x11xf32>
    tpu.vector_store %arg9[%c1080_196, %c0_197], %262 {strides = array<i32>} : memref<1200x11xf32, #tpu.memory_space<vmem>>, vector<40x11xf32>,
    %264 = vector.extract_strided_slice %207 {offsets = [0, 420], sizes = [40, 11], strides = [1, 1]} : vector<40x446xf32> to vector<40x11xf32>
    %c1120_198 = arith.constant 1120 : index
    %c0_199 = arith.constant 0 : index
    %265 = vector.load %arg9[%c1120_198, %c0_199] : memref<1200x11xf32, #tpu.memory_space<vmem>>, vector<40x11xf32>
    tpu.vector_store %arg9[%c1120_198, %c0_199], %264 {strides = array<i32>} : memref<1200x11xf32, #tpu.memory_space<vmem>>, vector<40x11xf32>,
    %266 = vector.extract_strided_slice %207 {offsets = [0, 435], sizes = [40, 11], strides = [1, 1]} : vector<40x446xf32> to vector<40x11xf32>
    %c1160_200 = arith.constant 1160 : index
    %c0_201 = arith.constant 0 : index
    %267 = vector.load %arg9[%c1160_200, %c0_201] : memref<1200x11xf32, #tpu.memory_space<vmem>>, vector<40x11xf32>
    tpu.vector_store %arg9[%c1160_200, %c0_201], %266 {strides = array<i32>} : memref<1200x11xf32, #tpu.memory_space<vmem>>, vector<40x11xf32>,
    %c0_202 = arith.constant 0 : index
    %c0_203 = arith.constant 0 : index
    %268 = vector.load %arg9[%c0_202, %c0_203] : memref<1200x11xf32, #tpu.memory_space<vmem>>, vector<1200x11xf32>
    %cst_204 = arith.constant dense<0.000000e+00> : vector<3x11xf32>
    %269 = tpu.matmul %3, %268, %cst_204 {dimension_numbers = #tpu.dot_dimension_numbers<[1], [0], [0], [1], [0, 0, 1, 1], [], []>} : vector<3x1200xf32>, vector<1200x11xf32>, vector<3x11xf32> -> vector<3x11xf32>
    %270 = vector.broadcast %4 : vector<3x1xf32> to vector<3x11xf32>
    %271 = arith.addf %269, %270 : vector<3x11xf32>
    %cst_205 = arith.constant dense<0xFF800000> : vector<11xf32>
    %272 = vector.multi_reduction <maximumf>, %271, %cst_205 [0] : vector<3x11xf32> to vector<11xf32>
    %273 = vector.shape_cast %272 : vector<11xf32> to vector<1x11xf32>
    %274 = vector.broadcast %273 : vector<1x11xf32> to vector<3x11xf32>
    %275 = arith.subf %271, %274 : vector<3x11xf32>
    %276 = math.exp %275 : vector<3x11xf32>
    %cst_206 = arith.constant dense<0.000000e+00> : vector<11xf32>
    %277 = vector.multi_reduction <add>, %276, %cst_206 [0] : vector<3x11xf32> to vector<11xf32>
    %278 = vector.shape_cast %277 : vector<11xf32> to vector<1x11xf32>
    %279 = math.log %278 : vector<1x11xf32>
    %280 = vector.broadcast %279 : vector<1x11xf32> to vector<3x11xf32>
    %281 = arith.subf %275, %280 : vector<3x11xf32>
    %c1_207 = arith.constant 1 : index
    %c0_208 = arith.constant 0 : index
    %c0_209 = arith.constant 0 : index
    %282 = vector.load %arg7[%c1_207, %c0_208, %c0_209] : memref<2x3x11xf32, #tpu.memory_space<vmem>>, vector<1x3x11xf32>
    %283 = vector.shape_cast %282 : vector<1x3x11xf32> to vector<3x11xf32>
    %284 = vector.shape_cast %281 : vector<3x11xf32> to vector<1x3x11xf32>
    tpu.vector_store %arg7[%c1_207, %c0_208, %c0_209], %284 {strides = array<i32>} : memref<2x3x11xf32, #tpu.memory_space<vmem>>, vector<1x3x11xf32>,
    return
  }
  func.func @transform_0(%arg0: i32) -> (i32, i32, i32) {
    %c0_i32 = arith.constant 0 : i32
    %c0_i32_0 = arith.constant 0 : i32
    %c0_i32_1 = arith.constant 0 : i32
    return %arg0, %c0_i32, %c0_i32_0 : i32, i32, i32
  }
  func.func @transform_1(%arg0: i32) -> (i32, i32) {
    %c0_i32 = arith.constant 0 : i32
    %c0_i32_0 = arith.constant 0 : i32
    %c0_i32_1 = arith.constant 0 : i32
    return %c0_i32, %c0_i32_0 : i32, i32
  }
  func.func @transform_2(%arg0: i32) -> (i32, i32) {
    %c0_i32 = arith.constant 0 : i32
    %c0_i32_0 = arith.constant 0 : i32
    %c0_i32_1 = arith.constant 0 : i32
    return %c0_i32, %c0_i32_0 : i32, i32
  }
  func.func @transform_3(%arg0: i32) -> (i32, i32) {
    %c0_i32 = arith.constant 0 : i32
    %c0_i32_0 = arith.constant 0 : i32
    %c0_i32_1 = arith.constant 0 : i32
    return %c0_i32, %c0_i32_0 : i32, i32
  }
  func.func @transform_4(%arg0: i32) -> (i32, i32) {
    %c0_i32 = arith.constant 0 : i32
    %c0_i32_0 = arith.constant 0 : i32
    %c0_i32_1 = arith.constant 0 : i32
    return %c0_i32, %c0_i32_0 : i32, i32
  }
  func.func @transform_5(%arg0: i32) -> (i32, i32) {
    %c0_i32 = arith.constant 0 : i32
    %c0_i32_0 = arith.constant 0 : i32
    %c0_i32_1 = arith.constant 0 : i32
    return %c0_i32, %c0_i32_0 : i32, i32
  }
  func.func @transform_6(%arg0: i32) -> (i32, i32, i32) {
    %c0_i32 = arith.constant 0 : i32
    %c0_i32_0 = arith.constant 0 : i32
    %c0_i32_1 = arith.constant 0 : i32
    return %arg0, %c0_i32, %c0_i32_0 : i32, i32, i32
  }
}

</mosaic_0001>

<llo_original>
// kernel: tpu_custom_call.1
$region0: #{tpu_custom_call.1}
  #allocation0 [shape = 'u32[]', space=smem, size = 0x4, offset = 0x4, fixed_abs, tag = 'smem constant byte address 0x4 - core index']
  #allocation1 [shape = 'u32[144,128]{1,0:T(1,128)}', space=vmem, size = 0x12000, scoped, tag = 'internal scratch']
  #allocation2 [shape = 'f32[100,520]{1,0:T(8,128)}', space=vmem, size = 0x41000, scoped, tag = 'scratch operand']
  #allocation3 [shape = 'f32[1200,11]{1,0:T(8,128)}', space=vmem, size = 0x96000, scoped, tag = 'scratch operand']
  %s0 = inlined_call_operand.hbm [shape: f32[2,4,544], index: 0, kind: input, shape index: {}]
  %s1 = inlined_call_operand.hbm [shape: f32[40,100], index: 1, kind: input, shape index: {}]
  %s2 = inlined_call_operand.vmem [shape: f32[40,1], index: 2, kind: input, shape index: {}]
  %s3 = inlined_call_operand.hbm [shape: f32[520,446], index: 3, kind: input, shape index: {}]
  %s4 = inlined_call_operand.hbm [shape: f32[3,1200], index: 4, kind: input, shape index: {}]
  %s5 = inlined_call_operand.vmem [shape: f32[3,1], index: 5, kind: input, shape index: {}]
  %s6 = inlined_call_operand.vmem [shape: f32[2,3,11], index: 6, kind: output, shape index: {}]
  %s7 = sld [smem:[#allocation0]]
  $region50: #{tpu_custom_call.1} parent=0
    _
  %s9 = ssub.s32 1, %s7
  %s10 = scalar_select 0, %s9, %s7
  $region1: #{tpu_custom_call.1} parent=0
    #allocation4 [shape = 'u8[20480]{0}', space=vmem, size = 0x5000, scoped, tag = 'input window, operand 0, single buffered']
    #allocation5 [shape = 's32[1]{0}', space=sflag, size = 0x4, scoped, tag = 'scoped memory for tpu_custom_call.1']
    #allocation6 [shape = 'u8[20480]{0}', space=vmem, size = 0x5000, scoped, tag = 'input window, operand 1, single buffered']
    #allocation7 [shape = 's32[1]{0}', space=sflag, size = 0x4, scoped, tag = 'scoped memory for tpu_custom_call.1']
    #allocation8 [shape = 'u8[1064960]{0}', space=vmem, size = 0x104000, scoped, tag = 'input window, operand 3, single buffered']
    #allocation9 [shape = 'u8[20480]{0}', space=vmem, size = 0x5000, scoped, tag = 'input window, operand 4, single buffered']
    #allocation10 [shape = 's32[1]{0}', space=sflag, size = 0x4, scoped, tag = 'scoped memory for tpu_custom_call.1']
    %11 = vsyncpa [#allocation5], 0
    %12 = vsyncpa [#allocation7], 0
    %13 = vsyncpa [#allocation10], 0
    // Predicated region
    $region2: #{tpu_custom_call.1} parent=1 // pred_check
      _
    $region3: #{tpu_custom_call.1} parent=1 // pred_check_branch
      %15 = sbr.rel (0) target = $region5
    $region4: #{tpu_custom_call.1} parent=1 // pred_region
      %s17 = ssub.s32 640, 640
      %18 = vsyncadd [#allocation5], %s17
      %s19 = sshll.u32 [#allocation4], 4
      %s20 = int_to_ptr.vmem [resolvable:$true] %s19
      %25 = dma.hbm_to_vmem [thread:$0]  %s0, 640, %s20, [#allocation5], 320, 320, 20
    $region5: #{tpu_custom_call.1} parent=1 // pred_fallthru
      _
    // Predicated region
    $region6: #{tpu_custom_call.1} parent=1 // pred_check
      _
    $region7: #{tpu_custom_call.1} parent=1 // pred_check_branch
      %27 = sbr.rel (0) target = $region9
    $region8: #{tpu_custom_call.1} parent=1 // pred_region
      %s29 = ssub.s32 640, 640
      %30 = vsyncadd [#allocation7], %s29
      %s31 = sshll.u32 [#allocation6], 4
      %s32 = int_to_ptr.vmem [resolvable:$true] %s31
      %37 = dma.hbm_to_vmem [thread:$0]  %s1, 640, %s32, [#allocation7], 128, 128, 8
    $region9: #{tpu_custom_call.1} parent=1 // pred_fallthru
      _
    // Predicated region
    $region10: #{tpu_custom_call.1} parent=1 // pred_check
      _
    $region11: #{tpu_custom_call.1} parent=1 // pred_check_branch
      %39 = sbr.rel (0) target = $region13
    $region12: #{tpu_custom_call.1} parent=1 // pred_region
      _
    $region13: #{tpu_custom_call.1} parent=1 // pred_fallthru
      _
    // Predicated region
    $region14: #{tpu_custom_call.1} parent=1 // pred_check
      _
    $region15: #{tpu_custom_call.1} parent=1 // pred_check_branch
      %41 = sbr.rel (0) target = $region17
    $region16: #{tpu_custom_call.1} parent=1 // pred_region
      %s43 = ssub.s32 33280, 33280
      %44 = vsyncadd [#allocation7], %s43
      %s45 = sshll.u32 [#allocation8], 4
      %s46 = int_to_ptr.vmem [resolvable:$true] %s45
      %51 = dma.hbm_to_vmem [thread:$0]  %s3, 33280, %s46, [#allocation7], 512, 512, 32
    $region17: #{tpu_custom_call.1} parent=1 // pred_fallthru
      _
    // Predicated region
    $region18: #{tpu_custom_call.1} parent=1 // pred_check
      _
    $region19: #{tpu_custom_call.1} parent=1 // pred_check_branch
      %53 = sbr.rel (0) target = $region21
    $region20: #{tpu_custom_call.1} parent=1 // pred_region
      %s55 = ssub.s32 640, 640
      %56 = vsyncadd [#allocation10], %s55
      %s58 = sshll.u32 [#allocation9], 4
      %s59 = int_to_ptr.vmem [resolvable:$true] %s58
      %61 = dma.hbm_to_vmem [thread:$0]  %s4, 640, %s59, [#allocation10]
    $region21: #{tpu_custom_call.1} parent=1 // pred_fallthru
      _
    // Predicated region
    $region22: #{tpu_custom_call.1} parent=1 // pred_check
      _
    $region23: #{tpu_custom_call.1} parent=1 // pred_check_branch
      %63 = sbr.rel (0) target = $region25
    $region24: #{tpu_custom_call.1} parent=1 // pred_region
      _
    $region25: #{tpu_custom_call.1} parent=1 // pred_fallthru
      _
    // Predicated region
    $region26: #{tpu_custom_call.1} parent=1 // pred_check
      _
    $region27: #{tpu_custom_call.1} parent=1 // pred_check_branch
      %65 = sbr.rel (0) target = $region29
    $region28: #{tpu_custom_call.1} parent=1 // pred_region
      %66 = dma.done [#allocation5], 640
    $region29: #{tpu_custom_call.1} parent=1 // pred_fallthru
      _
    // Predicated region
    $region30: #{tpu_custom_call.1} parent=1 // pred_check
      _
    $region31: #{tpu_custom_call.1} parent=1 // pred_check_branch
      %68 = sbr.rel (0) target = $region33
    $region32: #{tpu_custom_call.1} parent=1 // pred_region
      %69 = dma.done [#allocation7], 640
    $region33: #{tpu_custom_call.1} parent=1 // pred_fallthru
      _
    // Predicated region
    $region34: #{tpu_custom_call.1} parent=1 // pred_check
      _
    $region35: #{tpu_custom_call.1} parent=1 // pred_check_branch
      %71 = sbr.rel (0) target = $region37
    $region36: #{tpu_custom_call.1} parent=1 // pred_region
      %72 = dma.done [#allocation7], 33280
    $region37: #{tpu_custom_call.1} parent=1 // pred_fallthru
      _
    // Predicated region
    $region38: #{tpu_custom_call.1} parent=1 // pred_check
      _
    $region39: #{tpu_custom_call.1} parent=1 // pred_check_branch
      %74 = sbr.rel (0) target = $region41
    $region40: #{tpu_custom_call.1} parent=1 // pred_region
      %75 = dma.done [#allocation10], 640
    $region41: #{tpu_custom_call.1} parent=1 // pred_fallthru
      _
    %v76 = vld [vmem:[#allocation6] sm:$0xff]
    %v77 = vld [vmem:[#allocation6 + $0x8] sm:$0xff]
    %v78 = vld [vmem:[#allocation6 + $0x10] sm:$0xff]
    %v79 = vld [vmem:[#allocation6 + $0x18] sm:$0xff]
    %v80 = vld [vmem:[#allocation6 + $0x20] sm:$0xff]
    %v81 = vld [vmem:[%s2] sm:$0xff]
    %v82 = vld [vmem:[%s2 + $0x8] sm:$0xff]
    %v83 = vld [vmem:[%s2 + $0x10] sm:$0xff]
    %v84 = vld [vmem:[%s2 + $0x18] sm:$0xff]
    %v85 = vld [vmem:[%s2 + $0x20] sm:$0xff]
    %v86 = vld [vmem:[#allocation8] sm:$0xff]
    %v87 = vld [vmem:[#allocation8 + $0x8] sm:$0xff]
    %v88 = vld [vmem:[#allocation8 + $0x10] sm:$0xff]
    %v89 = vld [vmem:[#allocation8 + $0x18] sm:$0xff]
    %v90 = vld [vmem:[#allocation8 + $0x20] sm:$0xff]
    %v91 = vld [vmem:[#allocation8 + $0x28] sm:$0xff]
    %v92 = vld [vmem:[#allocation8 + $0x30] sm:$0xff]
    %v93 = vld [vmem:[#allocation8 + $0x38] sm:$0xff]
    %v94 = vld [vmem:[#allocation8 + $0x40] sm:$0xff]
    %v95 = vld [vmem:[#allocation8 + $0x48] sm:$0xff]
    %v96 = vld [vmem:[#allocation8 + $0x50] sm:$0xff]
    %v97 = vld [vmem:[#allocation8 + $0x58] sm:$0xff]
    %v98 = vld [vmem:[#allocation8 + $0x60] sm:$0xff]
    %v99 = vld [vmem:[#allocation8 + $0x68] sm:$0xff]
    %v100 = vld [vmem:[#allocation8 + $0x70] sm:$0xff]
    %v101 = vld [vmem:[#allocation8 + $0x78] sm:$0xff]
    %v102 = vld [vmem:[#allocation8 + $0x80] sm:$0xff]
    %v103 = vld [vmem:[#allocation8 + $0x88] sm:$0xff]
    %v104 = vld [vmem:[#allocation8 + $0x90] sm:$0xff]
    %v105 = vld [vmem:[#allocation8 + $0x98] sm:$0xff]
    %v106 = vld [vmem:[#allocation8 + $0xa0] sm:$0xff]
    %v107 = vld [vmem:[#allocation8 + $0xa8] sm:$0xff]
    %v108 = vld [vmem:[#allocation8 + $0xb0] sm:$0xff]
    %v109 = vld [vmem:[#allocation8 + $0xb8] sm:$0xff]
    %v110 = vld [vmem:[#allocation8 + $0xc0] sm:$0xff]
    %v111 = vld [vmem:[#allocation8 + $0xc8] sm:$0xff]
    %v112 = vld [vmem:[#allocation8 + $0xd0] sm:$0xff]
    %v113 = vld [vmem:[#allocation8 + $0xd8] sm:$0xff]
    %v114 = vld [vmem:[#allocation8 + $0xe0] sm:$0xff]
    %v115 = vld [vmem:[#allocation8 + $0xe8] sm:$0xff]
    %v116 = vld [vmem:[#allocation8 + $0xf0] sm:$0xff]
    %v117 = vld [vmem:[#allocation8 + $0xf8] sm:$0xff]
    %v118 = vld [vmem:[#allocation8 + $0x100] sm:$0xff]
    %v119 = vld [vmem:[#allocation8 + $0x108] sm:$0xff]
    %v120 = vld [vmem:[#allocation8 + $0x110] sm:$0xff]
    %v121 = vld [vmem:[#allocation8 + $0x118] sm:$0xff]
    %v122 = vld [vmem:[#allocation8 + $0x120] sm:$0xff]
    %v123 = vld [vmem:[#allocation8 + $0x128] sm:$0xff]
    %v124 = vld [vmem:[#allocation8 + $0x130] sm:$0xff]
    %v125 = vld [vmem:[#allocation8 + $0x138] sm:$0xff]
    %v126 = vld [vmem:[#allocation8 + $0x140] sm:$0xff]
    %v127 = vld [vmem:[#allocation8 + $0x148] sm:$0xff]
    %v128 = vld [vmem:[#allocation8 + $0x150] sm:$0xff]
    %v129 = vld [vmem:[#allocation8 + $0x158] sm:$0xff]
    %v130 = vld [vmem:[#allocation8 + $0x160] sm:$0xff]
    %v131 = vld [vmem:[#allocation8 + $0x168] sm:$0xff]
    %v132 = vld [vmem:[#allocation8 + $0x170] sm:$0xff]
    %v133 = vld [vmem:[#allocation8 + $0x178] sm:$0xff]
    %v134 = vld [vmem:[#allocation8 + $0x180] sm:$0xff]
    %v135 = vld [vmem:[#allocation8 + $0x188] sm:$0xff]
    %v136 = vld [vmem:[#allocation8 + $0x190] sm:$0xff]
    %v137 = vld [vmem:[#allocation8 + $0x198] sm:$0xff]
    %v138 = vld [vmem:[#allocation8 + $0x1a0] sm:$0xff]
    %v139 = vld [vmem:[#allocation8 + $0x1a8] sm:$0xff]
    %v140 = vld [vmem:[#allocation8 + $0x1b0] sm:$0xff]
    %v141 = vld [vmem:[#allocation8 + $0x1b8] sm:$0xff]
    %v142 = vld [vmem:[#allocation8 + $0x1c0] sm:$0xff]
    %v143 = vld [vmem:[#allocation8 + $0x1c8] sm:$0xff]
    %v144 = vld [vmem:[#allocation8 + $0x1d0] sm:$0xff]
    %v145 = vld [vmem:[#allocation8 + $0x1d8] sm:$0xff]
    %v146 = vld [vmem:[#allocation8 + $0x1e0] sm:$0xff]
    %v147 = vld [vmem:[#allocation8 + $0x1e8] sm:$0xff]
    %v148 = vld [vmem:[#allocation8 + $0x1f0] sm:$0xff]
    %v149 = vld [vmem:[#allocation8 + $0x1f8] sm:$0xff]
    %v150 = vld [vmem:[#allocation8 + $0x200] sm:$0xff]
    %v151 = vld [vmem:[#allocation8 + $0x208] sm:$0xff]
    %v152 = vld [vmem:[#allocation8 + $0x210] sm:$0xff]
    %v153 = vld [vmem:[#allocation8 + $0x218] sm:$0xff]
    %v154 = vld [vmem:[#allocation8 + $0x220] sm:$0xff]
    %v155 = vld [vmem:[#allocation8 + $0x228] sm:$0xff]
    %v156 = vld [vmem:[#allocation8 + $0x230] sm:$0xff]
    %v157 = vld [vmem:[#allocation8 + $0x238] sm:$0xff]
    %v158 = vld [vmem:[#allocation8 + $0x240] sm:$0xff]
    %v159 = vld [vmem:[#allocation8 + $0x248] sm:$0xff]
    %v160 = vld [vmem:[#allocation8 + $0x250] sm:$0xff]
    %v161 = vld [vmem:[#allocation8 + $0x258] sm:$0xff]
    %v162 = vld [vmem:[#allocation8 + $0x260] sm:$0xff]
    %v163 = vld [vmem:[#allocation8 + $0x268] sm:$0xff]
    %v164 = vld [vmem:[#allocation8 + $0x270] sm:$0xff]
    %v165 = vld [vmem:[#allocation8 + $0x278] sm:$0xff]
    %v166 = vld [vmem:[#allocation8 + $0x280] sm:$0xff]
    %v167 = vld [vmem:[#allocation8 + $0x288] sm:$0xff]
    %v168 = vld [vmem:[#allocation8 + $0x290] sm:$0xff]
    %v169 = vld [vmem:[#allocation8 + $0x298] sm:$0xff]
    %v170 = vld [vmem:[#allocation8 + $0x2a0] sm:$0xff]
    %v171 = vld [vmem:[#allocation8 + $0x2a8] sm:$0xff]
    %v172 = vld [vmem:[#allocation8 + $0x2b0] sm:$0xff]
    %v173 = vld [vmem:[#allocation8 + $0x2b8] sm:$0xff]
    %v174 = vld [vmem:[#allocation8 + $0x2c0] sm:$0xff]
    %v175 = vld [vmem:[#allocation8 + $0x2c8] sm:$0xff]
    %v176 = vld [vmem:[#allocation8 + $0x2d0] sm:$0xff]
    %v177 = vld [vmem:[#allocation8 + $0x2d8] sm:$0xff]
    %v178 = vld [vmem:[#allocation8 + $0x2e0] sm:$0xff]
    %v179 = vld [vmem:[#allocation8 + $0x2e8] sm:$0xff]
    %v180 = vld [vmem:[#allocation8 + $0x2f0] sm:$0xff]
    %v181 = vld [vmem:[#allocation8 + $0x2f8] sm:$0xff]
    %v182 = vld [vmem:[#allocation8 + $0x300] sm:$0xff]
    %v183 = vld [vmem:[#allocation8 + $0x308] sm:$0xff]
    %v184 = vld [vmem:[#allocation8 + $0x310] sm:$0xff]
    %v185 = vld [vmem:[#allocation8 + $0x318] sm:$0xff]
    %v186 = vld [vmem:[#allocation8 + $0x320] sm:$0xff]
    %v187 = vld [vmem:[#allocation8 + $0x328] sm:$0xff]
    %v188 = vld [vmem:[#allocation8 + $0x330] sm:$0xff]
    %v189 = vld [vmem:[#allocation8 + $0x338] sm:$0xff]
    %v190 = vld [vmem:[#allocation8 + $0x340] sm:$0xff]
    %v191 = vld [vmem:[#allocation8 + $0x348] sm:$0xff]
    %v192 = vld [vmem:[#allocation8 + $0x350] sm:$0xff]
    %v193 = vld [vmem:[#allocation8 + $0x358] sm:$0xff]
    %v194 = vld [vmem:[#allocation8 + $0x360] sm:$0xff]
    %v195 = vld [vmem:[#allocation8 + $0x368] sm:$0xff]
    %v196 = vld [vmem:[#allocation8 + $0x370] sm:$0xff]
    %v197 = vld [vmem:[#allocation8 + $0x378] sm:$0xff]
    %v198 = vld [vmem:[#allocation8 + $0x380] sm:$0xff]
    %v199 = vld [vmem:[#allocation8 + $0x388] sm:$0xff]
    %v200 = vld [vmem:[#allocation8 + $0x390] sm:$0xff]
    %v201 = vld [vmem:[#allocation8 + $0x398] sm:$0xff]
    %v202 = vld [vmem:[#allocation8 + $0x3a0] sm:$0xff]
    %v203 = vld [vmem:[#allocation8 + $0x3a8] sm:$0xff]
    %v204 = vld [vmem:[#allocation8 + $0x3b0] sm:$0xff]
    %v205 = vld [vmem:[#allocation8 + $0x3b8] sm:$0xff]
    %v206 = vld [vmem:[#allocation8 + $0x3c0] sm:$0xff]
    %v207 = vld [vmem:[#allocation8 + $0x3c8] sm:$0xff]
    %v208 = vld [vmem:[#allocation8 + $0x3d0] sm:$0xff]
    %v209 = vld [vmem:[#allocation8 + $0x3d8] sm:$0xff]
    %v210 = vld [vmem:[#allocation8 + $0x3e0] sm:$0xff]
    %v211 = vld [vmem:[#allocation8 + $0x3e8] sm:$0xff]
    %v212 = vld [vmem:[#allocation8 + $0x3f0] sm:$0xff]
    %v213 = vld [vmem:[#allocation8 + $0x3f8] sm:$0xff]
    %v214 = vld [vmem:[#allocation8 + $0x400] sm:$0xff]
    %v215 = vld [vmem:[#allocation8 + $0x408] sm:$0xff]
    %v216 = vld [vmem:[#allocation8 + $0x410] sm:$0xff]
    %v217 = vld [vmem:[#allocation8 + $0x418] sm:$0xff]
    %v218 = vld [vmem:[#allocation8 + $0x420] sm:$0xff]
    %v219 = vld [vmem:[#allocation8 + $0x428] sm:$0xff]
    %v220 = vld [vmem:[#allocation8 + $0x430] sm:$0xff]
    %v221 = vld [vmem:[#allocation8 + $0x438] sm:$0xff]
    %v222 = vld [vmem:[#allocation8 + $0x440] sm:$0xff]
    %v223 = vld [vmem:[#allocation8 + $0x448] sm:$0xff]
    %v224 = vld [vmem:[#allocation8 + $0x450] sm:$0xff]
    %v225 = vld [vmem:[#allocation8 + $0x458] sm:$0xff]
    %v226 = vld [vmem:[#allocation8 + $0x460] sm:$0xff]
    %v227 = vld [vmem:[#allocation8 + $0x468] sm:$0xff]
    %v228 = vld [vmem:[#allocation8 + $0x470] sm:$0xff]
    %v229 = vld [vmem:[#allocation8 + $0x478] sm:$0xff]
    %v230 = vld [vmem:[#allocation8 + $0x480] sm:$0xff]
    %v231 = vld [vmem:[#allocation8 + $0x488] sm:$0xff]
    %v232 = vld [vmem:[#allocation8 + $0x490] sm:$0xff]
    %v233 = vld [vmem:[#allocation8 + $0x498] sm:$0xff]
    %v234 = vld [vmem:[#allocation8 + $0x4a0] sm:$0xff]
    %v235 = vld [vmem:[#allocation8 + $0x4a8] sm:$0xff]
    %v236 = vld [vmem:[#allocation8 + $0x4b0] sm:$0xff]
    %v237 = vld [vmem:[#allocation8 + $0x4b8] sm:$0xff]
    %v238 = vld [vmem:[#allocation8 + $0x4c0] sm:$0xff]
    %v239 = vld [vmem:[#allocation8 + $0x4c8] sm:$0xff]
    %v240 = vld [vmem:[#allocation8 + $0x4d0] sm:$0xff]
    %v241 = vld [vmem:[#allocation8 + $0x4d8] sm:$0xff]
    %v242 = vld [vmem:[#allocation8 + $0x4e0] sm:$0xff]
    %v243 = vld [vmem:[#allocation8 + $0x4e8] sm:$0xff]
    %v244 = vld [vmem:[#allocation8 + $0x4f0] sm:$0xff]
    %v245 = vld [vmem:[#allocation8 + $0x4f8] sm:$0xff]
    %v246 = vld [vmem:[#allocation8 + $0x500] sm:$0xff]
    %v247 = vld [vmem:[#allocation8 + $0x508] sm:$0xff]
    %v248 = vld [vmem:[#allocation8 + $0x510] sm:$0xff]
    %v249 = vld [vmem:[#allocation8 + $0x518] sm:$0xff]
    %v250 = vld [vmem:[#allocation8 + $0x520] sm:$0xff]
    %v251 = vld [vmem:[#allocation8 + $0x528] sm:$0xff]
    %v252 = vld [vmem:[#allocation8 + $0x530] sm:$0xff]
    %v253 = vld [vmem:[#allocation8 + $0x538] sm:$0xff]
    %v254 = vld [vmem:[#allocation8 + $0x540] sm:$0xff]
    %v255 = vld [vmem:[#allocation8 + $0x548] sm:$0xff]
    %v256 = vld [vmem:[#allocation8 + $0x550] sm:$0xff]
    %v257 = vld [vmem:[#allocation8 + $0x558] sm:$0xff]
    %v258 = vld [vmem:[#allocation8 + $0x560] sm:$0xff]
    %v259 = vld [vmem:[#allocation8 + $0x568] sm:$0xff]
    %v260 = vld [vmem:[#allocation8 + $0x570] sm:$0xff]
    %v261 = vld [vmem:[#allocation8 + $0x578] sm:$0xff]
    %v262 = vld [vmem:[#allocation8 + $0x580] sm:$0xff]
    %v263 = vld [vmem:[#allocation8 + $0x588] sm:$0xff]
    %v264 = vld [vmem:[#allocation8 + $0x590] sm:$0xff]
    %v265 = vld [vmem:[#allocation8 + $0x598] sm:$0xff]
    %v266 = vld [vmem:[#allocation8 + $0x5a0] sm:$0xff]
    %v267 = vld [vmem:[#allocation8 + $0x5a8] sm:$0xff]
    %v268 = vld [vmem:[#allocation8 + $0x5b0] sm:$0xff]
    %v269 = vld [vmem:[#allocation8 + $0x5b8] sm:$0xff]
    %v270 = vld [vmem:[#allocation8 + $0x5c0] sm:$0xff]
    %v271 = vld [vmem:[#allocation8 + $0x5c8] sm:$0xff]
    %v272 = vld [vmem:[#allocation8 + $0x5d0] sm:$0xff]
    %v273 = vld [vmem:[#allocation8 + $0x5d8] sm:$0xff]
    %v274 = vld [vmem:[#allocation8 + $0x5e0] sm:$0xff]
    %v275 = vld [vmem:[#allocation8 + $0x5e8] sm:$0xff]
    %v276 = vld [vmem:[#allocation8 + $0x5f0] sm:$0xff]
    %v277 = vld [vmem:[#allocation8 + $0x5f8] sm:$0xff]
    %v278 = vld [vmem:[#allocation8 + $0x600] sm:$0xff]
    %v279 = vld [vmem:[#allocation8 + $0x608] sm:$0xff]
    %v280 = vld [vmem:[#allocation8 + $0x610] sm:$0xff]
    %v281 = vld [vmem:[#allocation8 + $0x618] sm:$0xff]
    %v282 = vld [vmem:[#allocation8 + $0x620] sm:$0xff]
    %v283 = vld [vmem:[#allocation8 + $0x628] sm:$0xff]
    %v284 = vld [vmem:[#allocation8 + $0x630] sm:$0xff]
    %v285 = vld [vmem:[#allocation8 + $0x638] sm:$0xff]
    %v286 = vld [vmem:[#allocation8 + $0x640] sm:$0xff]
    %v287 = vld [vmem:[#allocation8 + $0x648] sm:$0xff]
    %v288 = vld [vmem:[#allocation8 + $0x650] sm:$0xff]
    %v289 = vld [vmem:[#allocation8 + $0x658] sm:$0xff]
    %v290 = vld [vmem:[#allocation8 + $0x660] sm:$0xff]
    %v291 = vld [vmem:[#allocation8 + $0x668] sm:$0xff]
    %v292 = vld [vmem:[#allocation8 + $0x670] sm:$0xff]
    %v293 = vld [vmem:[#allocation8 + $0x678] sm:$0xff]
    %v294 = vld [vmem:[#allocation8 + $0x680] sm:$0xff]
    %v295 = vld [vmem:[#allocation8 + $0x688] sm:$0xff]
    %v296 = vld [vmem:[#allocation8 + $0x690] sm:$0xff]
    %v297 = vld [vmem:[#allocation8 + $0x698] sm:$0xff]
    %v298 = vld [vmem:[#allocation8 + $0x6a0] sm:$0xff]
    %v299 = vld [vmem:[#allocation8 + $0x6a8] sm:$0xff]
    %v300 = vld [vmem:[#allocation8 + $0x6b0] sm:$0xff]
    %v301 = vld [vmem:[#allocation8 + $0x6b8] sm:$0xff]
    %v302 = vld [vmem:[#allocation8 + $0x6c0] sm:$0xff]
    %v303 = vld [vmem:[#allocation8 + $0x6c8] sm:$0xff]
    %v304 = vld [vmem:[#allocation8 + $0x6d0] sm:$0xff]
    %v305 = vld [vmem:[#allocation8 + $0x6d8] sm:$0xff]
    %v306 = vld [vmem:[#allocation8 + $0x6e0] sm:$0xff]
    %v307 = vld [vmem:[#allocation8 + $0x6e8] sm:$0xff]
    %v308 = vld [vmem:[#allocation8 + $0x6f0] sm:$0xff]
    %v309 = vld [vmem:[#allocation8 + $0x6f8] sm:$0xff]
    %v310 = vld [vmem:[#allocation8 + $0x700] sm:$0xff]
    %v311 = vld [vmem:[#allocation8 + $0x708] sm:$0xff]
    %v312 = vld [vmem:[#allocation8 + $0x710] sm:$0xff]
    %v313 = vld [vmem:[#allocation8 + $0x718] sm:$0xff]
    %v314 = vld [vmem:[#allocation8 + $0x720] sm:$0xff]
    %v315 = vld [vmem:[#allocation8 + $0x728] sm:$0xff]
    %v316 = vld [vmem:[#allocation8 + $0x730] sm:$0xff]
    %v317 = vld [vmem:[#allocation8 + $0x738] sm:$0xff]
    %v318 = vld [vmem:[#allocation8 + $0x740] sm:$0xff]
    %v319 = vld [vmem:[#allocation8 + $0x748] sm:$0xff]
    %v320 = vld [vmem:[#allocation8 + $0x750] sm:$0xff]
    %v321 = vld [vmem:[#allocation8 + $0x758] sm:$0xff]
    %v322 = vld [vmem:[#allocation8 + $0x760] sm:$0xff]
    %v323 = vld [vmem:[#allocation8 + $0x768] sm:$0xff]
    %v324 = vld [vmem:[#allocation8 + $0x770] sm:$0xff]
    %v325 = vld [vmem:[#allocation8 + $0x778] sm:$0xff]
    %v326 = vld [vmem:[#allocation8 + $0x780] sm:$0xff]
    %v327 = vld [vmem:[#allocation8 + $0x788] sm:$0xff]
    %v328 = vld [vmem:[#allocation8 + $0x790] sm:$0xff]
    %v329 = vld [vmem:[#allocation8 + $0x798] sm:$0xff]
    %v330 = vld [vmem:[#allocation8 + $0x7a0] sm:$0xff]
    %v331 = vld [vmem:[#allocation8 + $0x7a8] sm:$0xff]
    %v332 = vld [vmem:[#allocation8 + $0x7b0] sm:$0xff]
    %v333 = vld [vmem:[#allocation8 + $0x7b8] sm:$0xff]
    %v334 = vld [vmem:[#allocation8 + $0x7c0] sm:$0xff]
    %v335 = vld [vmem:[#allocation8 + $0x7c8] sm:$0xff]
    %v336 = vld [vmem:[#allocation8 + $0x7d0] sm:$0xff]
    %v337 = vld [vmem:[#allocation8 + $0x7d8] sm:$0xff]
    %v338 = vld [vmem:[#allocation8 + $0x7e0] sm:$0xff]
    %v339 = vld [vmem:[#allocation8 + $0x7e8] sm:$0xff]
    %v340 = vld [vmem:[#allocation8 + $0x7f0] sm:$0xff]
    %v341 = vld [vmem:[#allocation8 + $0x7f8] sm:$0xff]
    %v342 = vld [vmem:[#allocation8 + $0x800] sm:$0xff]
    %v343 = vld [vmem:[#allocation8 + $0x808] sm:$0xff]
    %v344 = vld [vmem:[#allocation8 + $0x810] sm:$0xff]
    %v345 = vld [vmem:[#allocation8 + $0x818] sm:$0xff]
    %v346 = vld [vmem:[#allocation9] sm:$0x77]
    %v347 = vld [vmem:[#allocation9 + $0x8] sm:$0x77]
    %v348 = vld [vmem:[#allocation9 + $0x10] sm:$0x77]
    %v349 = vld [vmem:[#allocation9 + $0x18] sm:$0x77]
    %v350 = vld [vmem:[#allocation9 + $0x20] sm:$0x77]
    %v351 = vld [vmem:[%s5] sm:$0x7]
    %v352 = vld [vmem:[#allocation4] sm:$0xff]
    %v353 = vld [vmem:[#allocation4 + $0x8] sm:$0xff]
    %v354 = vld [vmem:[#allocation4 + $0x10] sm:$0xf]
    %v358 = vcombine.high %v352, %v352
    %v359 = vcombine.high %v353, %v353
    %362 = vst [vmem:[#allocation2] sm:$0xf] %v352
    %363 = vst [vmem:[#allocation2 + $0x8] sm:$0xf] %v358
    %364 = vst [vmem:[#allocation2 + $0x10] sm:$0xf] %v353
    %365 = vst [vmem:[#allocation2 + $0x18] sm:$0xf] %v359
    %vm366 = vcmask 60416
    %367 = vst.msk [vmem:[#allocation2 + $0x20] sm:$0xf] %vm366, %v354
    %v368 = vcombine.low %v352, %v352
    %v369 = vcombine.low %v353, %v353
    %v370 = vcombine.low %v354, %v354
    %371 = vrot.lane.b32.xlu0 %v368, 127
    %v372 = vpop.permute.xlu0 %371
    %373 = vrot.lane.b32.xlu0 %v352, 127
    %v374 = vpop.permute.xlu0 %373
    %375 = vrot.lane.b32.xlu0 %v369, 127
    %v376 = vpop.permute.xlu0 %375
    %377 = vrot.lane.b32.xlu0 %v353, 127
    %v378 = vpop.permute.xlu0 %377
    %379 = vrot.lane.b32.xlu0 %v370, 127
    %v380 = vpop.permute.xlu0 %379
    %vm381 = vcmask 1039360
    %v382 = vsel %vm381, %v372, %v374
    %v383 = vsel %vm381, %v374, %v376
    %v384 = vsel %vm381, %v376, %v378
    %v385 = vsel %vm381, %v378, %v380
    %391 = vst [vmem:[#allocation2] sm:$0xf0] %v382
    %392 = vst [vmem:[#allocation2 + $0x8] sm:$0xf0] %v383
    %393 = vst [vmem:[#allocation2 + $0x10] sm:$0xf0] %v384
    %394 = vst [vmem:[#allocation2 + $0x18] sm:$0xf0] %v385
    %vm395 = vcmask 64516
    %396 = vst.msk [vmem:[#allocation2 + $0x20] sm:$0xf0] %vm395, %v380
    %397 = vrot.lane.b32.xlu0 %v352, 126
    %v398 = vpop.permute.xlu0 %397
    %399 = vrot.lane.b32.xlu0 %v358, 126
    %v400 = vpop.permute.xlu0 %399
    %401 = vrot.lane.b32.xlu0 %v353, 126
    %v402 = vpop.permute.xlu0 %401
    %403 = vrot.lane.b32.xlu0 %v359, 126
    %v404 = vpop.permute.xlu0 %403
    %405 = vrot.lane.b32.xlu0 %v354, 126
    %v406 = vpop.permute.xlu0 %405
    %vm407 = vcmask 1031168
    %v408 = vsel %vm407, %v398, %v400
    %v409 = vsel %vm407, %v400, %v402
    %v410 = vsel %vm407, %v402, %v404
    %v411 = vsel %vm407, %v404, %v406
    %417 = vst [vmem:[#allocation2 + $0x28] sm:$0xf] %v408
    %418 = vst [vmem:[#allocation2 + $0x30] sm:$0xf] %v409
    %419 = vst [vmem:[#allocation2 + $0x38] sm:$0xf] %v410
    %420 = vst [vmem:[#allocation2 + $0x40] sm:$0xf] %v411
    %421 = vst.msk [vmem:[#allocation2 + $0x48] sm:$0xf] %vm366, %v406
    %422 = vrot.lane.b32.xlu0 %v368, 125
    %v423 = vpop.permute.xlu0 %422
    %424 = vrot.lane.b32.xlu0 %v352, 125
    %v425 = vpop.permute.xlu0 %424
    %426 = vrot.lane.b32.xlu0 %v369, 125
    %v427 = vpop.permute.xlu0 %426
    %428 = vrot.lane.b32.xlu0 %v353, 125
    %v429 = vpop.permute.xlu0 %428
    %430 = vrot.lane.b32.xlu0 %v370, 125
    %v431 = vpop.permute.xlu0 %430
    %vm432 = vcmask 1022976
    %v433 = vsel %vm432, %v423, %v425
    %v434 = vsel %vm432, %v425, %v427
    %v435 = vsel %vm432, %v427, %v429
    %v436 = vsel %vm432, %v429, %v431
    %442 = vst [vmem:[#allocation2 + $0x28] sm:$0xf0] %v433
    %443 = vst [vmem:[#allocation2 + $0x30] sm:$0xf0] %v434
    %444 = vst [vmem:[#allocation2 + $0x38] sm:$0xf0] %v435
    %445 = vst [vmem:[#allocation2 + $0x40] sm:$0xf0] %v436
    %446 = vst.msk [vmem:[#allocation2 + $0x48] sm:$0xf0] %vm395, %v431
    %447 = vrot.lane.b32.xlu0 %v352, 124
    %v448 = vpop.permute.xlu0 %447
    %449 = vrot.lane.b32.xlu0 %v358, 124
    %v450 = vpop.permute.xlu0 %449
    %451 = vrot.lane.b32.xlu0 %v353, 124
    %v452 = vpop.permute.xlu0 %451
    %453 = vrot.lane.b32.xlu0 %v359, 124
    %v454 = vpop.permute.xlu0 %453
    %455 = vrot.lane.b32.xlu0 %v354, 124
    %v456 = vpop.permute.xlu0 %455
    %vm457 = vcmask 1014784
    %v458 = vsel %vm457, %v448, %v450
    %v459 = vsel %vm457, %v450, %v452
    %v460 = vsel %vm457, %v452, %v454
    %v461 = vsel %vm457, %v454, %v456
    %467 = vst [vmem:[#allocation2 + $0x50] sm:$0xf] %v458
    %468 = vst [vmem:[#allocation2 + $0x58] sm:$0xf] %v459
    %469 = vst [vmem:[#allocation2 + $0x60] sm:$0xf] %v460
    %470 = vst [vmem:[#allocation2 + $0x68] sm:$0xf] %v461
    %471 = vst.msk [vmem:[#allocation2 + $0x70] sm:$0xf] %vm366, %v456
    %472 = vrot.lane.b32.xlu0 %v368, 123
    %v473 = vpop.permute.xlu0 %472
    %474 = vrot.lane.b32.xlu0 %v352, 123
    %v475 = vpop.permute.xlu0 %474
    %476 = vrot.lane.b32.xlu0 %v369, 123
    %v477 = vpop.permute.xlu0 %476
    %478 = vrot.lane.b32.xlu0 %v353, 123
    %v479 = vpop.permute.xlu0 %478
    %480 = vrot.lane.b32.xlu0 %v370, 123
    %v481 = vpop.permute.xlu0 %480
    %vm482 = vcmask 1006592
    %v483 = vsel %vm482, %v473, %v475
    %v484 = vsel %vm482, %v475, %v477
    %v485 = vsel %vm482, %v477, %v479
    %v486 = vsel %vm482, %v479, %v481
    %492 = vst [vmem:[#allocation2 + $0x50] sm:$0xf0] %v483
    %493 = vst [vmem:[#allocation2 + $0x58] sm:$0xf0] %v484
    %494 = vst [vmem:[#allocation2 + $0x60] sm:$0xf0] %v485
    %495 = vst [vmem:[#allocation2 + $0x68] sm:$0xf0] %v486
    %496 = vst.msk [vmem:[#allocation2 + $0x70] sm:$0xf0] %vm395, %v481
    %497 = vrot.lane.b32.xlu0 %v352, 122
    %v498 = vpop.permute.xlu0 %497
    %499 = vrot.lane.b32.xlu0 %v358, 122
    %v500 = vpop.permute.xlu0 %499
    %501 = vrot.lane.b32.xlu0 %v353, 122
    %v502 = vpop.permute.xlu0 %501
    %503 = vrot.lane.b32.xlu0 %v359, 122
    %v504 = vpop.permute.xlu0 %503
    %505 = vrot.lane.b32.xlu0 %v354, 122
    %v506 = vpop.permute.xlu0 %505
    %vm507 = vcmask 998400
    %v508 = vsel %vm507, %v498, %v500
    %v509 = vsel %vm507, %v500, %v502
    %v510 = vsel %vm507, %v502, %v504
    %v511 = vsel %vm507, %v504, %v506
    %517 = vst [vmem:[#allocation2 + $0x78] sm:$0xf] %v508
    %518 = vst [vmem:[#allocation2 + $0x80] sm:$0xf] %v509
    %519 = vst [vmem:[#allocation2 + $0x88] sm:$0xf] %v510
    %520 = vst [vmem:[#allocation2 + $0x90] sm:$0xf] %v511
    %521 = vst.msk [vmem:[#allocation2 + $0x98] sm:$0xf] %vm366, %v506
    %522 = vrot.lane.b32.xlu0 %v368, 121
    %v523 = vpop.permute.xlu0 %522
    %524 = vrot.lane.b32.xlu0 %v352, 121
    %v525 = vpop.permute.xlu0 %524
    %526 = vrot.lane.b32.xlu0 %v369, 121
    %v527 = vpop.permute.xlu0 %526
    %528 = vrot.lane.b32.xlu0 %v353, 121
    %v529 = vpop.permute.xlu0 %528
    %530 = vrot.lane.b32.xlu0 %v370, 121
    %v531 = vpop.permute.xlu0 %530
    %vm532 = vcmask 990208
    %v533 = vsel %vm532, %v523, %v525
    %v534 = vsel %vm532, %v525, %v527
    %v535 = vsel %vm532, %v527, %v529
    %v536 = vsel %vm532, %v529, %v531
    %542 = vst [vmem:[#allocation2 + $0x78] sm:$0xf0] %v533
    %543 = vst [vmem:[#allocation2 + $0x80] sm:$0xf0] %v534
    %544 = vst [vmem:[#allocation2 + $0x88] sm:$0xf0] %v535
    %545 = vst [vmem:[#allocation2 + $0x90] sm:$0xf0] %v536
    %546 = vst.msk [vmem:[#allocation2 + $0x98] sm:$0xf0] %vm395, %v531
    %547 = vrot.lane.b32.xlu0 %v352, 120
    %v548 = vpop.permute.xlu0 %547
    %549 = vrot.lane.b32.xlu0 %v358, 120
    %v550 = vpop.permute.xlu0 %549
    %551 = vrot.lane.b32.xlu0 %v353, 120
    %v552 = vpop.permute.xlu0 %551
    %553 = vrot.lane.b32.xlu0 %v359, 120
    %v554 = vpop.permute.xlu0 %553
    %555 = vrot.lane.b32.xlu0 %v354, 120
    %v556 = vpop.permute.xlu0 %555
    %vm557 = vcmask 982016
    %v558 = vsel %vm557, %v548, %v550
    %v559 = vsel %vm557, %v550, %v552
    %v560 = vsel %vm557, %v552, %v554
    %v561 = vsel %vm557, %v554, %v556
    %567 = vst [vmem:[#allocation2 + $0xa0] sm:$0xf] %v558
    %568 = vst [vmem:[#allocation2 + $0xa8] sm:$0xf] %v559
    %569 = vst [vmem:[#allocation2 + $0xb0] sm:$0xf] %v560
    %570 = vst [vmem:[#allocation2 + $0xb8] sm:$0xf] %v561
    %571 = vst.msk [vmem:[#allocation2 + $0xc0] sm:$0xf] %vm366, %v556
    %572 = vrot.lane.b32.xlu0 %v368, 119
    %v573 = vpop.permute.xlu0 %572
    %574 = vrot.lane.b32.xlu0 %v352, 119
    %v575 = vpop.permute.xlu0 %574
    %576 = vrot.lane.b32.xlu0 %v369, 119
    %v577 = vpop.permute.xlu0 %576
    %578 = vrot.lane.b32.xlu0 %v353, 119
    %v579 = vpop.permute.xlu0 %578
    %580 = vrot.lane.b32.xlu0 %v370, 119
    %v581 = vpop.permute.xlu0 %580
    %vm582 = vcmask 973824
    %v583 = vsel %vm582, %v573, %v575
    %v584 = vsel %vm582, %v575, %v577
    %v585 = vsel %vm582, %v577, %v579
    %v586 = vsel %vm582, %v579, %v581
    %592 = vst [vmem:[#allocation2 + $0xa0] sm:$0xf0] %v583
    %593 = vst [vmem:[#allocation2 + $0xa8] sm:$0xf0] %v584
    %594 = vst [vmem:[#allocation2 + $0xb0] sm:$0xf0] %v585
    %595 = vst [vmem:[#allocation2 + $0xb8] sm:$0xf0] %v586
    %596 = vst.msk [vmem:[#allocation2 + $0xc0] sm:$0xf0] %vm395, %v581
    %597 = vrot.lane.b32.xlu0 %v352, 118
    %v598 = vpop.permute.xlu0 %597
    %599 = vrot.lane.b32.xlu0 %v358, 118
    %v600 = vpop.permute.xlu0 %599
    %601 = vrot.lane.b32.xlu0 %v353, 118
    %v602 = vpop.permute.xlu0 %601
    %603 = vrot.lane.b32.xlu0 %v359, 118
    %v604 = vpop.permute.xlu0 %603
    %605 = vrot.lane.b32.xlu0 %v354, 118
    %v606 = vpop.permute.xlu0 %605
    %vm607 = vcmask 965632
    %v608 = vsel %vm607, %v598, %v600
    %v609 = vsel %vm607, %v600, %v602
    %v610 = vsel %vm607, %v602, %v604
    %v611 = vsel %vm607, %v604, %v606
    %617 = vst [vmem:[#allocation2 + $0xc8] sm:$0xf] %v608
    %618 = vst [vmem:[#allocation2 + $0xd0] sm:$0xf] %v609
    %619 = vst [vmem:[#allocation2 + $0xd8] sm:$0xf] %v610
    %620 = vst [vmem:[#allocation2 + $0xe0] sm:$0xf] %v611
    %621 = vst.msk [vmem:[#allocation2 + $0xe8] sm:$0xf] %vm366, %v606
    %622 = vrot.lane.b32.xlu0 %v368, 117
    %v623 = vpop.permute.xlu0 %622
    %624 = vrot.lane.b32.xlu0 %v352, 117
    %v625 = vpop.permute.xlu0 %624
    %626 = vrot.lane.b32.xlu0 %v369, 117
    %v627 = vpop.permute.xlu0 %626
    %628 = vrot.lane.b32.xlu0 %v353, 117
    %v629 = vpop.permute.xlu0 %628
    %630 = vrot.lane.b32.xlu0 %v370, 117
    %v631 = vpop.permute.xlu0 %630
    %vm632 = vcmask 957440
    %v633 = vsel %vm632, %v623, %v625
    %v634 = vsel %vm632, %v625, %v627
    %v635 = vsel %vm632, %v627, %v629
    %v636 = vsel %vm632, %v629, %v631
    %642 = vst [vmem:[#allocation2 + $0xc8] sm:$0xf0] %v633
    %643 = vst [vmem:[#allocation2 + $0xd0] sm:$0xf0] %v634
    %644 = vst [vmem:[#allocation2 + $0xd8] sm:$0xf0] %v635
    %645 = vst [vmem:[#allocation2 + $0xe0] sm:$0xf0] %v636
    %646 = vst.msk [vmem:[#allocation2 + $0xe8] sm:$0xf0] %vm395, %v631
    %647 = vrot.lane.b32.xlu0 %v352, 116
    %v648 = vpop.permute.xlu0 %647
    %649 = vrot.lane.b32.xlu0 %v358, 116
    %v650 = vpop.permute.xlu0 %649
    %651 = vrot.lane.b32.xlu0 %v353, 116
    %v652 = vpop.permute.xlu0 %651
    %653 = vrot.lane.b32.xlu0 %v359, 116
    %v654 = vpop.permute.xlu0 %653
    %655 = vrot.lane.b32.xlu0 %v354, 116
    %v656 = vpop.permute.xlu0 %655
    %vm657 = vcmask 949248
    %v658 = vsel %vm657, %v648, %v650
    %v659 = vsel %vm657, %v650, %v652
    %v660 = vsel %vm657, %v652, %v654
    %v661 = vsel %vm657, %v654, %v656
    %667 = vst [vmem:[#allocation2 + $0xf0] sm:$0xf] %v658
    %668 = vst [vmem:[#allocation2 + $0xf8] sm:$0xf] %v659
    %669 = vst [vmem:[#allocation2 + $0x100] sm:$0xf] %v660
    %670 = vst [vmem:[#allocation2 + $0x108] sm:$0xf] %v661
    %671 = vst.msk [vmem:[#allocation2 + $0x110] sm:$0xf] %vm366, %v656
    %672 = vrot.lane.b32.xlu0 %v368, 115
    %v673 = vpop.permute.xlu0 %672
    %674 = vrot.lane.b32.xlu0 %v352, 115
    %v675 = vpop.permute.xlu0 %674
    %676 = vrot.lane.b32.xlu0 %v369, 115
    %v677 = vpop.permute.xlu0 %676
    %678 = vrot.lane.b32.xlu0 %v353, 115
    %v679 = vpop.permute.xlu0 %678
    %680 = vrot.lane.b32.xlu0 %v370, 115
    %v681 = vpop.permute.xlu0 %680
    %vm682 = vcmask 941056
    %v683 = vsel %vm682, %v673, %v675
    %v684 = vsel %vm682, %v675, %v677
    %v685 = vsel %vm682, %v677, %v679
    %v686 = vsel %vm682, %v679, %v681
    %692 = vst [vmem:[#allocation2 + $0xf0] sm:$0xf0] %v683
    %693 = vst [vmem:[#allocation2 + $0xf8] sm:$0xf0] %v684
    %694 = vst [vmem:[#allocation2 + $0x100] sm:$0xf0] %v685
    %695 = vst [vmem:[#allocation2 + $0x108] sm:$0xf0] %v686
    %696 = vst.msk [vmem:[#allocation2 + $0x110] sm:$0xf0] %vm395, %v681
    %697 = vrot.lane.b32.xlu0 %v352, 114
    %v698 = vpop.permute.xlu0 %697
    %699 = vrot.lane.b32.xlu0 %v358, 114
    %v700 = vpop.permute.xlu0 %699
    %701 = vrot.lane.b32.xlu0 %v353, 114
    %v702 = vpop.permute.xlu0 %701
    %703 = vrot.lane.b32.xlu0 %v359, 114
    %v704 = vpop.permute.xlu0 %703
    %705 = vrot.lane.b32.xlu0 %v354, 114
    %v706 = vpop.permute.xlu0 %705
    %vm707 = vcmask 932864
    %v708 = vsel %vm707, %v698, %v700
    %v709 = vsel %vm707, %v700, %v702
    %v710 = vsel %vm707, %v702, %v704
    %v711 = vsel %vm707, %v704, %v706
    %717 = vst [vmem:[#allocation2 + $0x118] sm:$0xf] %v708
    %718 = vst [vmem:[#allocation2 + $0x120] sm:$0xf] %v709
    %719 = vst [vmem:[#allocation2 + $0x128] sm:$0xf] %v710
    %720 = vst [vmem:[#allocation2 + $0x130] sm:$0xf] %v711
    %721 = vst.msk [vmem:[#allocation2 + $0x138] sm:$0xf] %vm366, %v706
    %722 = vrot.lane.b32.xlu0 %v368, 113
    %v723 = vpop.permute.xlu0 %722
    %724 = vrot.lane.b32.xlu0 %v352, 113
    %v725 = vpop.permute.xlu0 %724
    %726 = vrot.lane.b32.xlu0 %v369, 113
    %v727 = vpop.permute.xlu0 %726
    %728 = vrot.lane.b32.xlu0 %v353, 113
    %v729 = vpop.permute.xlu0 %728
    %730 = vrot.lane.b32.xlu0 %v370, 113
    %v731 = vpop.permute.xlu0 %730
    %vm732 = vcmask 924672
    %v733 = vsel %vm732, %v723, %v725
    %v734 = vsel %vm732, %v725, %v727
    %v735 = vsel %vm732, %v727, %v729
    %v736 = vsel %vm732, %v729, %v731
    %742 = vst [vmem:[#allocation2 + $0x118] sm:$0xf0] %v733
    %743 = vst [vmem:[#allocation2 + $0x120] sm:$0xf0] %v734
    %744 = vst [vmem:[#allocation2 + $0x128] sm:$0xf0] %v735
    %745 = vst [vmem:[#allocation2 + $0x130] sm:$0xf0] %v736
    %746 = vst.msk [vmem:[#allocation2 + $0x138] sm:$0xf0] %vm395, %v731
    %747 = vrot.lane.b32.xlu0 %v352, 112
    %v748 = vpop.permute.xlu0 %747
    %749 = vrot.lane.b32.xlu0 %v358, 112
    %v750 = vpop.permute.xlu0 %749
    %751 = vrot.lane.b32.xlu0 %v353, 112
    %v752 = vpop.permute.xlu0 %751
    %753 = vrot.lane.b32.xlu0 %v359, 112
    %v754 = vpop.permute.xlu0 %753
    %755 = vrot.lane.b32.xlu0 %v354, 112
    %v756 = vpop.permute.xlu0 %755
    %vm757 = vcmask 916480
    %v758 = vsel %vm757, %v748, %v750
    %v759 = vsel %vm757, %v750, %v752
    %v760 = vsel %vm757, %v752, %v754
    %v761 = vsel %vm757, %v754, %v756
    %767 = vst [vmem:[#allocation2 + $0x140] sm:$0xf] %v758
    %768 = vst [vmem:[#allocation2 + $0x148] sm:$0xf] %v759
    %769 = vst [vmem:[#allocation2 + $0x150] sm:$0xf] %v760
    %770 = vst [vmem:[#allocation2 + $0x158] sm:$0xf] %v761
    %771 = vst.msk [vmem:[#allocation2 + $0x160] sm:$0xf] %vm366, %v756
    %772 = vrot.lane.b32.xlu0 %v368, 111
    %v773 = vpop.permute.xlu0 %772
    %774 = vrot.lane.b32.xlu0 %v352, 111
    %v775 = vpop.permute.xlu0 %774
    %776 = vrot.lane.b32.xlu0 %v369, 111
    %v777 = vpop.permute.xlu0 %776
    %778 = vrot.lane.b32.xlu0 %v353, 111
    %v779 = vpop.permute.xlu0 %778
    %780 = vrot.lane.b32.xlu0 %v370, 111
    %v781 = vpop.permute.xlu0 %780
    %vm782 = vcmask 908288
    %v783 = vsel %vm782, %v773, %v775
    %v784 = vsel %vm782, %v775, %v777
    %v785 = vsel %vm782, %v777, %v779
    %v786 = vsel %vm782, %v779, %v781
    %792 = vst [vmem:[#allocation2 + $0x140] sm:$0xf0] %v783
    %793 = vst [vmem:[#allocation2 + $0x148] sm:$0xf0] %v784
    %794 = vst [vmem:[#allocation2 + $0x150] sm:$0xf0] %v785
    %795 = vst [vmem:[#allocation2 + $0x158] sm:$0xf0] %v786
    %796 = vst.msk [vmem:[#allocation2 + $0x160] sm:$0xf0] %vm395, %v781
    %797 = vrot.lane.b32.xlu0 %v352, 110
    %v798 = vpop.permute.xlu0 %797
    %799 = vrot.lane.b32.xlu0 %v358, 110
    %v800 = vpop.permute.xlu0 %799
    %801 = vrot.lane.b32.xlu0 %v353, 110
    %v802 = vpop.permute.xlu0 %801
    %803 = vrot.lane.b32.xlu0 %v359, 110
    %v804 = vpop.permute.xlu0 %803
    %805 = vrot.lane.b32.xlu0 %v354, 110
    %v806 = vpop.permute.xlu0 %805
    %vm807 = vcmask 900096
    %v808 = vsel %vm807, %v798, %v800
    %v809 = vsel %vm807, %v800, %v802
    %v810 = vsel %vm807, %v802, %v804
    %v811 = vsel %vm807, %v804, %v806
    %817 = vst [vmem:[#allocation2 + $0x168] sm:$0xf] %v808
    %818 = vst [vmem:[#allocation2 + $0x170] sm:$0xf] %v809
    %819 = vst [vmem:[#allocation2 + $0x178] sm:$0xf] %v810
    %820 = vst [vmem:[#allocation2 + $0x180] sm:$0xf] %v811
    %821 = vst.msk [vmem:[#allocation2 + $0x188] sm:$0xf] %vm366, %v806
    %822 = vrot.lane.b32.xlu0 %v368, 109
    %v823 = vpop.permute.xlu0 %822
    %824 = vrot.lane.b32.xlu0 %v352, 109
    %v825 = vpop.permute.xlu0 %824
    %826 = vrot.lane.b32.xlu0 %v369, 109
    %v827 = vpop.permute.xlu0 %826
    %828 = vrot.lane.b32.xlu0 %v353, 109
    %v829 = vpop.permute.xlu0 %828
    %830 = vrot.lane.b32.xlu0 %v370, 109
    %v831 = vpop.permute.xlu0 %830
    %vm832 = vcmask 891904
    %v833 = vsel %vm832, %v823, %v825
    %v834 = vsel %vm832, %v825, %v827
    %v835 = vsel %vm832, %v827, %v829
    %v836 = vsel %vm832, %v829, %v831
    %842 = vst [vmem:[#allocation2 + $0x168] sm:$0xf0] %v833
    %843 = vst [vmem:[#allocation2 + $0x170] sm:$0xf0] %v834
    %844 = vst [vmem:[#allocation2 + $0x178] sm:$0xf0] %v835
    %845 = vst [vmem:[#allocation2 + $0x180] sm:$0xf0] %v836
    %846 = vst.msk [vmem:[#allocation2 + $0x188] sm:$0xf0] %vm395, %v831
    %847 = vrot.lane.b32.xlu0 %v352, 108
    %v848 = vpop.permute.xlu0 %847
    %849 = vrot.lane.b32.xlu0 %v358, 108
    %v850 = vpop.permute.xlu0 %849
    %851 = vrot.lane.b32.xlu0 %v353, 108
    %v852 = vpop.permute.xlu0 %851
    %853 = vrot.lane.b32.xlu0 %v359, 108
    %v854 = vpop.permute.xlu0 %853
    %855 = vrot.lane.b32.xlu0 %v354, 108
    %v856 = vpop.permute.xlu0 %855
    %vm857 = vcmask 883712
    %v858 = vsel %vm857, %v848, %v850
    %v859 = vsel %vm857, %v850, %v852
    %v860 = vsel %vm857, %v852, %v854
    %v861 = vsel %vm857, %v854, %v856
    %867 = vst [vmem:[#allocation2 + $0x190] sm:$0xf] %v858
    %868 = vst [vmem:[#allocation2 + $0x198] sm:$0xf] %v859
    %869 = vst [vmem:[#allocation2 + $0x1a0] sm:$0xf] %v860
    %870 = vst [vmem:[#allocation2 + $0x1a8] sm:$0xf] %v861
    %871 = vst.msk [vmem:[#allocation2 + $0x1b0] sm:$0xf] %vm366, %v856
    %872 = vrot.lane.b32.xlu0 %v368, 107
    %v873 = vpop.permute.xlu0 %872
    %874 = vrot.lane.b32.xlu0 %v352, 107
    %v875 = vpop.permute.xlu0 %874
    %876 = vrot.lane.b32.xlu0 %v369, 107
    %v877 = vpop.permute.xlu0 %876
    %878 = vrot.lane.b32.xlu0 %v353, 107
    %v879 = vpop.permute.xlu0 %878
    %880 = vrot.lane.b32.xlu0 %v370, 107
    %v881 = vpop.permute.xlu0 %880
    %vm882 = vcmask 875520
    %v883 = vsel %vm882, %v873, %v875
    %v884 = vsel %vm882, %v875, %v877
    %v885 = vsel %vm882, %v877, %v879
    %v886 = vsel %vm882, %v879, %v881
    %892 = vst [vmem:[#allocation2 + $0x190] sm:$0xf0] %v883
    %893 = vst [vmem:[#allocation2 + $0x198] sm:$0xf0] %v884
    %894 = vst [vmem:[#allocation2 + $0x1a0] sm:$0xf0] %v885
    %895 = vst [vmem:[#allocation2 + $0x1a8] sm:$0xf0] %v886
    %896 = vst.msk [vmem:[#allocation2 + $0x1b0] sm:$0xf0] %vm395, %v881
    %897 = vrot.lane.b32.xlu0 %v352, 106
    %v898 = vpop.permute.xlu0 %897
    %899 = vrot.lane.b32.xlu0 %v358, 106
    %v900 = vpop.permute.xlu0 %899
    %901 = vrot.lane.b32.xlu0 %v353, 106
    %v902 = vpop.permute.xlu0 %901
    %903 = vrot.lane.b32.xlu0 %v359, 106
    %v904 = vpop.permute.xlu0 %903
    %905 = vrot.lane.b32.xlu0 %v354, 106
    %v906 = vpop.permute.xlu0 %905
    %vm907 = vcmask 867328
    %v908 = vsel %vm907, %v898, %v900
    %v909 = vsel %vm907, %v900, %v902
    %v910 = vsel %vm907, %v902, %v904
    %v911 = vsel %vm907, %v904, %v906
    %917 = vst [vmem:[#allocation2 + $0x1b8] sm:$0xf] %v908
    %918 = vst [vmem:[#allocation2 + $0x1c0] sm:$0xf] %v909
    %919 = vst [vmem:[#allocation2 + $0x1c8] sm:$0xf] %v910
    %920 = vst [vmem:[#allocation2 + $0x1d0] sm:$0xf] %v911
    %921 = vst.msk [vmem:[#allocation2 + $0x1d8] sm:$0xf] %vm366, %v906
    %922 = vrot.lane.b32.xlu0 %v368, 105
    %v923 = vpop.permute.xlu0 %922
    %924 = vrot.lane.b32.xlu0 %v352, 105
    %v925 = vpop.permute.xlu0 %924
    %926 = vrot.lane.b32.xlu0 %v369, 105
    %v927 = vpop.permute.xlu0 %926
    %928 = vrot.lane.b32.xlu0 %v353, 105
    %v929 = vpop.permute.xlu0 %928
    %930 = vrot.lane.b32.xlu0 %v370, 105
    %v931 = vpop.permute.xlu0 %930
    %vm932 = vcmask 859136
    %v933 = vsel %vm932, %v923, %v925
    %v934 = vsel %vm932, %v925, %v927
    %v935 = vsel %vm932, %v927, %v929
    %v936 = vsel %vm932, %v929, %v931
    %942 = vst [vmem:[#allocation2 + $0x1b8] sm:$0xf0] %v933
    %943 = vst [vmem:[#allocation2 + $0x1c0] sm:$0xf0] %v934
    %944 = vst [vmem:[#allocation2 + $0x1c8] sm:$0xf0] %v935
    %945 = vst [vmem:[#allocation2 + $0x1d0] sm:$0xf0] %v936
    %946 = vst.msk [vmem:[#allocation2 + $0x1d8] sm:$0xf0] %vm395, %v931
    %947 = vrot.lane.b32.xlu0 %v352, 104
    %v948 = vpop.permute.xlu0 %947
    %949 = vrot.lane.b32.xlu0 %v358, 104
    %v950 = vpop.permute.xlu0 %949
    %951 = vrot.lane.b32.xlu0 %v353, 104
    %v952 = vpop.permute.xlu0 %951
    %953 = vrot.lane.b32.xlu0 %v359, 104
    %v954 = vpop.permute.xlu0 %953
    %955 = vrot.lane.b32.xlu0 %v354, 104
    %v956 = vpop.permute.xlu0 %955
    %vm957 = vcmask 850944
    %v958 = vsel %vm957, %v948, %v950
    %v959 = vsel %vm957, %v950, %v952
    %v960 = vsel %vm957, %v952, %v954
    %v961 = vsel %vm957, %v954, %v956
    %967 = vst [vmem:[#allocation2 + $0x1e0] sm:$0xf] %v958
    %968 = vst [vmem:[#allocation2 + $0x1e8] sm:$0xf] %v959
    %969 = vst [vmem:[#allocation2 + $0x1f0] sm:$0xf] %v960
    %970 = vst [vmem:[#allocation2 + $0x1f8] sm:$0xf] %v961
    %971 = vst.msk [vmem:[#allocation2 + $0x200] sm:$0xf] %vm366, %v956
    %v972 = vld [vmem:[#allocation2] sm:$0xff]
    %v973 = vld [vmem:[#allocation2 + $0x8] sm:$0xff]
    %v974 = vld [vmem:[#allocation2 + $0x10] sm:$0xff]
    %v975 = vld [vmem:[#allocation2 + $0x18] sm:$0xff]
    %v976 = vld [vmem:[#allocation2 + $0x20] sm:$0xff]
    %v977 = vld [vmem:[#allocation2 + $0x28] sm:$0xff]
    %v978 = vld [vmem:[#allocation2 + $0x30] sm:$0xff]
    %v979 = vld [vmem:[#allocation2 + $0x38] sm:$0xff]
    %v980 = vld [vmem:[#allocation2 + $0x40] sm:$0xff]
    %v981 = vld [vmem:[#allocation2 + $0x48] sm:$0xff]
    %v982 = vld [vmem:[#allocation2 + $0x50] sm:$0xff]
    %v983 = vld [vmem:[#allocation2 + $0x58] sm:$0xff]
    %v984 = vld [vmem:[#allocation2 + $0x60] sm:$0xff]
    %v985 = vld [vmem:[#allocation2 + $0x68] sm:$0xff]
    %v986 = vld [vmem:[#allocation2 + $0x70] sm:$0xff]
    %v987 = vld [vmem:[#allocation2 + $0x78] sm:$0xff]
    %v988 = vld [vmem:[#allocation2 + $0x80] sm:$0xff]
    %v989 = vld [vmem:[#allocation2 + $0x88] sm:$0xff]
    %v990 = vld [vmem:[#allocation2 + $0x90] sm:$0xff]
    %v991 = vld [vmem:[#allocation2 + $0x98] sm:$0xff]
    %v992 = vld [vmem:[#allocation2 + $0xa0] sm:$0xff]
    %v993 = vld [vmem:[#allocation2 + $0xa8] sm:$0xff]
    %v994 = vld [vmem:[#allocation2 + $0xb0] sm:$0xff]
    %v995 = vld [vmem:[#allocation2 + $0xb8] sm:$0xff]
    %v996 = vld [vmem:[#allocation2 + $0xc0] sm:$0xff]
    %v997 = vld [vmem:[#allocation2 + $0xc8] sm:$0xff]
    %v998 = vld [vmem:[#allocation2 + $0xd0] sm:$0xff]
    %v999 = vld [vmem:[#allocation2 + $0xd8] sm:$0xff]
    %v1000 = vld [vmem:[#allocation2 + $0xe0] sm:$0xff]
    %v1001 = vld [vmem:[#allocation2 + $0xe8] sm:$0xff]
    %v1002 = vld [vmem:[#allocation2 + $0xf0] sm:$0xff]
    %v1003 = vld [vmem:[#allocation2 + $0xf8] sm:$0xff]
    %v1004 = vld [vmem:[#allocation2 + $0x100] sm:$0xff]
    %v1005 = vld [vmem:[#allocation2 + $0x108] sm:$0xff]
    %v1006 = vld [vmem:[#allocation2 + $0x110] sm:$0xff]
    %v1007 = vld [vmem:[#allocation2 + $0x118] sm:$0xff]
    %v1008 = vld [vmem:[#allocation2 + $0x120] sm:$0xff]
    %v1009 = vld [vmem:[#allocation2 + $0x128] sm:$0xff]
    %v1010 = vld [vmem:[#allocation2 + $0x130] sm:$0xff]
    %v1011 = vld [vmem:[#allocation2 + $0x138] sm:$0xff]
    %v1012 = vld [vmem:[#allocation2 + $0x140] sm:$0xff]
    %v1013 = vld [vmem:[#allocation2 + $0x148] sm:$0xff]
    %v1014 = vld [vmem:[#allocation2 + $0x150] sm:$0xff]
    %v1015 = vld [vmem:[#allocation2 + $0x158] sm:$0xff]
    %v1016 = vld [vmem:[#allocation2 + $0x160] sm:$0xff]
    %v1017 = vld [vmem:[#allocation2 + $0x168] sm:$0xff]
    %v1018 = vld [vmem:[#allocation2 + $0x170] sm:$0xff]
    %v1019 = vld [vmem:[#allocation2 + $0x178] sm:$0xff]
    %v1020 = vld [vmem:[#allocation2 + $0x180] sm:$0xff]
    %v1021 = vld [vmem:[#allocation2 + $0x188] sm:$0xff]
    %v1022 = vld [vmem:[#allocation2 + $0x190] sm:$0xff]
    %v1023 = vld [vmem:[#allocation2 + $0x198] sm:$0xff]
    %v1024 = vld [vmem:[#allocation2 + $0x1a0] sm:$0xff]
    %v1025 = vld [vmem:[#allocation2 + $0x1a8] sm:$0xff]
    %v1026 = vld [vmem:[#allocation2 + $0x1b0] sm:$0xff]
    %v1027 = vld [vmem:[#allocation2 + $0x1b8] sm:$0xff]
    %v1028 = vld [vmem:[#allocation2 + $0x1c0] sm:$0xff]
    %v1029 = vld [vmem:[#allocation2 + $0x1c8] sm:$0xff]
    %v1030 = vld [vmem:[#allocation2 + $0x1d0] sm:$0xff]
    %v1031 = vld [vmem:[#allocation2 + $0x1d8] sm:$0xff]
    %v1032 = vld [vmem:[#allocation2 + $0x1e0] sm:$0xf]
    %v1033 = vld [vmem:[#allocation2 + $0x1e8] sm:$0xf]
    %v1034 = vld [vmem:[#allocation2 + $0x1f0] sm:$0xf]
    %v1035 = vld [vmem:[#allocation2 + $0x1f8] sm:$0xf]
    %v1036 = vld [vmem:[#allocation2 + $0x200] sm:$0xf]
    %1038 = vset.pattern.permute.xlu0 0
    %1039 = vperm.xlu0 %1038, %v81
    %v1040 = vpop.permute.xlu0 %1039
    %1043 = vset.pattern.permute.xlu0 0
    %1044 = vperm.xlu0 %1043, %v82
    %v1045 = vpop.permute.xlu0 %1044
    %1048 = vset.pattern.permute.xlu0 0
    %1049 = vperm.xlu0 %1048, %v83
    %v1050 = vpop.permute.xlu0 %1049
    %1053 = vset.pattern.permute.xlu0 0
    %1054 = vperm.xlu0 %1053, %v84
    %v1055 = vpop.permute.xlu0 %1054
    %1058 = vset.pattern.permute.xlu0 0
    %1059 = vperm.xlu0 %1058, %v85
    %v1060 = vpop.permute.xlu0 %1059
    %vm1062 = vcmask 818176
    %v1064 = vsel %vm1062, %v76, 0
    %v1067 = vsel %vm1062, %v77, 0
    %v1070 = vsel %vm1062, %v78, 0
    %v1073 = vsel %vm1062, %v79, 0
    %v1076 = vsel %vm1062, %v80, 0
    %vm1078 = vcmask 1043456
    %v1080 = vsel %vm1078, %v1032, 0
    %v1083 = vsel %vm1078, %v1033, 0
    %v1086 = vsel %vm1078, %v1034, 0
    %v1089 = vsel %vm1078, %v1035, 0
    %v1092 = vsel %vm1078, %v1036, 0
    %1094 = vmatprep.subr.mxu0 0.0
    %1095 = vmatpush1.msra.mxu0 0.0
    %1096 = vmatprep.subr.mxu0 0.0
    %1097 = vmatpush1.msra.mxu0 0.0
    %1098 = vmatprep.subr.mxu0 0.0
    %1099 = vmatpush1.msra.mxu0 0.0
    %1100 = vmatprep.subr.mxu0 %v1083
    %1101 = vmatpush1.msra.mxu0 %v1080
    %1102 = vmatprep.subr.mxu0 %v1028
    %1103 = vmatpush1.msra.mxu0 %v1027
    %1104 = vmatprep.subr.mxu0 %v1023
    %1105 = vmatpush1.msra.mxu0 %v1022
    %1106 = vmatprep.subr.mxu0 %v1018
    %1107 = vmatpush1.msra.mxu0 %v1017
    %1108 = vmatprep.subr.mxu0 %v1013
    %1109 = vmatpush1.msra.mxu0 %v1012
    %1110 = vmatprep.subr.mxu0 %v1008
    %1111 = vmatpush1.msra.mxu0 %v1007
    %1112 = vmatprep.subr.mxu0 %v1003
    %1113 = vmatpush1.msra.mxu0 %v1002
    %1114 = vmatprep.subr.mxu0 %v998
    %1115 = vmatpush1.msra.mxu0 %v997
    %1116 = vmatprep.subr.mxu0 %v993
    %1117 = vmatpush1.msra.mxu0 %v992
    %1118 = vmatprep.subr.mxu0 %v988
    %1119 = vmatpush1.msra.mxu0 %v987
    %1120 = vmatprep.subr.mxu0 %v983
    %1121 = vmatpush1.msra.mxu0 %v982
    %1122 = vmatprep.subr.mxu0 %v978
    %1123 = vmatpush1.msra.mxu0 %v977
    %1124 = vmatprep.subr.mxu0 %v973
    %1125 = vmatpush1.msra.mxu0 %v972
    %1126 = vmatprep.subr.mxu0 0.0
    %1127 = vmatpush2.msra.mxu0 0.0
    %1128 = vmatprep.subr.mxu0 0.0
    %1129 = vmatpush2.msra.mxu0 0.0
    %1130 = vmatprep.subr.mxu0 0.0
    %1131 = vmatpush2.msra.mxu0 0.0
    %1132 = vmatprep.subr.mxu0 0.0
    %1133 = vmatpush2.msra.mxu0 0.0
    %1134 = vmatprep.subr.mxu0 0.0
    %1135 = vmatpush2.msra.mxu0 0.0
    %1136 = vmatprep.subr.mxu0 0.0
    %1137 = vmatpush2.msra.mxu0 0.0
    %1138 = vmatprep.subr.mxu0 0.0
    %1139 = vmatpush2.msra.mxu0 0.0
    %1140 = vmatprep.subr.mxu0 0.0
    %1141 = vmatpush2.msra.mxu0 0.0
    %1142 = vmatprep.subr.mxu0 0.0
    %1143 = vmatpush2.msra.mxu0 0.0
    %1144 = vmatprep.subr.mxu0 0.0
    %1145 = vmatpush2.msra.mxu0 0.0
    %1146 = vmatprep.subr.mxu0 0.0
    %1147 = vmatpush2.msra.mxu0 0.0
    %1148 = vmatprep.subr.mxu0 0.0
    %1149 = vmatpush2.msra.mxu0 0.0
    %1150 = vmatprep.subr.mxu0 0.0
    %1151 = vmatpush2.msra.mxu0 0.0
    %1152 = vmatprep.subr.mxu0 0.0
    %1153 = vmatpush2.msra.mxu0 0.0
    %1154 = vmatprep.subr.mxu0 0.0
    %1155 = vmatpush2.msra.mxu0 0.0
    %1156 = vmatprep.subr.mxu0 0.0
    %1157 = vmatpush2.msra.mxu0 0.0
    %1158 = vmatprep.mubr.f32.mxu0 0.0
    %1159 = vmatmul.mubr.f32.gmra.mxu0 %v1064
    %v1160 = vpop.f32.mrf.mxu0
    %v1161 = vadd.f32 %v1040, %v1160
    %v1162 = vpop.f32.mrf.mxu0
    %v1163 = vadd.f32 %v1040, %v1162
    %1164 = vmatprep.mubr.f32.mxu0 0.0
    %1165 = vmatmul.mubr.f32.gmra.mxu0 %v1067
    %v1166 = vpop.f32.mrf.mxu0
    %v1167 = vadd.f32 %v1045, %v1166
    %v1168 = vpop.f32.mrf.mxu0
    %v1169 = vadd.f32 %v1045, %v1168
    %1170 = vmatprep.mubr.f32.mxu0 0.0
    %1171 = vmatmul.mubr.f32.gmra.mxu0 %v1070
    %v1172 = vpop.f32.mrf.mxu0
    %v1173 = vadd.f32 %v1050, %v1172
    %v1174 = vpop.f32.mrf.mxu0
    %v1175 = vadd.f32 %v1050, %v1174
    %1176 = vmatprep.mubr.f32.mxu0 0.0
    %1177 = vmatmul.mubr.f32.gmra.mxu0 %v1073
    %v1178 = vpop.f32.mrf.mxu0
    %v1179 = vadd.f32 %v1055, %v1178
    %v1180 = vpop.f32.mrf.mxu0
    %v1181 = vadd.f32 %v1055, %v1180
    %1182 = vmatprep.mubr.f32.mxu0 0.0
    %1183 = vmatmul.mubr.f32.gmra.mxu0 %v1076
    %v1184 = vpop.f32.mrf.mxu0
    %v1185 = vadd.f32 %v1060, %v1184
    %v1186 = vpop.f32.mrf.mxu0
    %v1187 = vadd.f32 %v1060, %v1186
    %1188 = vdwg.mxu0
    %1189 = vmatprep.subr.mxu0 0.0
    %1190 = vmatpush1.msra.mxu0 0.0
    %1191 = vmatprep.subr.mxu0 0.0
    %1192 = vmatpush1.msra.mxu0 0.0
    %1193 = vmatprep.subr.mxu0 0.0
    %1194 = vmatpush1.msra.mxu0 0.0
    %1195 = vmatprep.subr.mxu0 %v1089
    %1196 = vmatpush1.msra.mxu0 %v1086
    %1197 = vmatprep.subr.mxu0 %v1030
    %1198 = vmatpush1.msra.mxu0 %v1029
    %1199 = vmatprep.subr.mxu0 %v1025
    %1200 = vmatpush1.msra.mxu0 %v1024
    %1201 = vmatprep.subr.mxu0 %v1020
    %1202 = vmatpush1.msra.mxu0 %v1019
    %1203 = vmatprep.subr.mxu0 %v1015
    %1204 = vmatpush1.msra.mxu0 %v1014
    %1205 = vmatprep.subr.mxu0 %v1010
    %1206 = vmatpush1.msra.mxu0 %v1009
    %1207 = vmatprep.subr.mxu0 %v1005
    %1208 = vmatpush1.msra.mxu0 %v1004
    %1209 = vmatprep.subr.mxu0 %v1000
    %1210 = vmatpush1.msra.mxu0 %v999
    %1211 = vmatprep.subr.mxu0 %v995
    %1212 = vmatpush1.msra.mxu0 %v994
    %1213 = vmatprep.subr.mxu0 %v990
    %1214 = vmatpush1.msra.mxu0 %v989
    %1215 = vmatprep.subr.mxu0 %v985
    %1216 = vmatpush1.msra.mxu0 %v984
    %1217 = vmatprep.subr.mxu0 %v980
    %1218 = vmatpush1.msra.mxu0 %v979
    %1219 = vmatprep.subr.mxu0 %v975
    %1220 = vmatpush1.msra.mxu0 %v974
    %1221 = vmatprep.subr.mxu0 0.0
    %1222 = vmatpush2.msra.mxu0 0.0
    %1223 = vmatprep.subr.mxu0 0.0
    %1224 = vmatpush2.msra.mxu0 0.0
    %1225 = vmatprep.subr.mxu0 0.0
    %1226 = vmatpush2.msra.mxu0 0.0
    %1227 = vmatprep.subr.mxu0 0.0
    %1228 = vmatpush2.msra.mxu0 0.0
    %1229 = vmatprep.subr.mxu0 0.0
    %1230 = vmatpush2.msra.mxu0 0.0
    %1231 = vmatprep.subr.mxu0 0.0
    %1232 = vmatpush2.msra.mxu0 0.0
    %1233 = vmatprep.subr.mxu0 0.0
    %1234 = vmatpush2.msra.mxu0 0.0
    %1235 = vmatprep.subr.mxu0 0.0
    %1236 = vmatpush2.msra.mxu0 0.0
    %1237 = vmatprep.subr.mxu0 0.0
    %1238 = vmatpush2.msra.mxu0 0.0
    %1239 = vmatprep.subr.mxu0 0.0
    %1240 = vmatpush2.msra.mxu0 0.0
    %1241 = vmatprep.subr.mxu0 0.0
    %1242 = vmatpush2.msra.mxu0 0.0
    %1243 = vmatprep.subr.mxu0 0.0
    %1244 = vmatpush2.msra.mxu0 0.0
    %1245 = vmatprep.subr.mxu0 0.0
    %1246 = vmatpush2.msra.mxu0 0.0
    %1247 = vmatprep.subr.mxu0 0.0
    %1248 = vmatpush2.msra.mxu0 0.0
    %1249 = vmatprep.subr.mxu0 0.0
    %1250 = vmatpush2.msra.mxu0 0.0
    %1251 = vmatprep.subr.mxu0 0.0
    %1252 = vmatpush2.msra.mxu0 0.0
    %1253 = vmatprep.mubr.f32.mxu0 0.0
    %1254 = vmatmul.mubr.f32.gmra.mxu0 %v1064
    %v1255 = vpop.f32.mrf.mxu0
    %v1256 = vadd.f32 %v1040, %v1255
    %v1257 = vpop.f32.mrf.mxu0
    %v1258 = vadd.f32 %v1040, %v1257
    %1259 = vmatprep.mubr.f32.mxu0 0.0
    %1260 = vmatmul.mubr.f32.gmra.mxu0 %v1067
    %v1261 = vpop.f32.mrf.mxu0
    %v1262 = vadd.f32 %v1045, %v1261
    %v1263 = vpop.f32.mrf.mxu0
    %v1264 = vadd.f32 %v1045, %v1263
    %1265 = vmatprep.mubr.f32.mxu0 0.0
    %1266 = vmatmul.mubr.f32.gmra.mxu0 %v1070
    %v1267 = vpop.f32.mrf.mxu0
    %v1268 = vadd.f32 %v1050, %v1267
    %v1269 = vpop.f32.mrf.mxu0
    %v1270 = vadd.f32 %v1050, %v1269
    %1271 = vmatprep.mubr.f32.mxu0 0.0
    %1272 = vmatmul.mubr.f32.gmra.mxu0 %v1073
    %v1273 = vpop.f32.mrf.mxu0
    %v1274 = vadd.f32 %v1055, %v1273
    %v1275 = vpop.f32.mrf.mxu0
    %v1276 = vadd.f32 %v1055, %v1275
    %1277 = vmatprep.mubr.f32.mxu0 0.0
    %1278 = vmatmul.mubr.f32.gmra.mxu0 %v1076
    %v1279 = vpop.f32.mrf.mxu0
    %v1280 = vadd.f32 %v1060, %v1279
    %v1281 = vpop.f32.mrf.mxu0
    %v1282 = vadd.f32 %v1060, %v1281
    %1283 = vdwg.mxu0
    %1284 = vmatprep.subr.mxu0 0.0
    %1285 = vmatpush1.msra.mxu0 0.0
    %1286 = vmatprep.subr.mxu0 0.0
    %1287 = vmatpush1.msra.mxu0 0.0
    %1288 = vmatprep.subr.mxu0 0.0
    %1289 = vmatpush1.msra.mxu0 0.0
    %1290 = vmatprep.subr.mxu0 0.0
    %1291 = vmatpush1.msra.mxu0 %v1092
    %1292 = vmatprep.subr.mxu0 0.0
    %1293 = vmatpush1.msra.mxu0 %v1031
    %1294 = vmatprep.subr.mxu0 0.0
    %1295 = vmatpush1.msra.mxu0 %v1026
    %1296 = vmatprep.subr.mxu0 0.0
    %1297 = vmatpush1.msra.mxu0 %v1021
    %1298 = vmatprep.subr.mxu0 0.0
    %1299 = vmatpush1.msra.mxu0 %v1016
    %1300 = vmatprep.subr.mxu0 0.0
    %1301 = vmatpush1.msra.mxu0 %v1011
    %1302 = vmatprep.subr.mxu0 0.0
    %1303 = vmatpush1.msra.mxu0 %v1006
    %1304 = vmatprep.subr.mxu0 0.0
    %1305 = vmatpush1.msra.mxu0 %v1001
    %1306 = vmatprep.subr.mxu0 0.0
    %1307 = vmatpush1.msra.mxu0 %v996
    %1308 = vmatprep.subr.mxu0 0.0
    %1309 = vmatpush1.msra.mxu0 %v991
    %1310 = vmatprep.subr.mxu0 0.0
    %1311 = vmatpush1.msra.mxu0 %v986
    %1312 = vmatprep.subr.mxu0 0.0
    %1313 = vmatpush1.msra.mxu0 %v981
    %1314 = vmatprep.subr.mxu0 0.0
    %1315 = vmatpush1.msra.mxu0 %v976
    %1316 = vmatprep.subr.mxu0 0.0
    %1317 = vmatpush2.msra.mxu0 0.0
    %1318 = vmatprep.subr.mxu0 0.0
    %1319 = vmatpush2.msra.mxu0 0.0
    %1320 = vmatprep.subr.mxu0 0.0
    %1321 = vmatpush2.msra.mxu0 0.0
    %1322 = vmatprep.subr.mxu0 0.0
    %1323 = vmatpush2.msra.mxu0 0.0
    %1324 = vmatprep.subr.mxu0 0.0
    %1325 = vmatpush2.msra.mxu0 0.0
    %1326 = vmatprep.subr.mxu0 0.0
    %1327 = vmatpush2.msra.mxu0 0.0
    %1328 = vmatprep.subr.mxu0 0.0
    %1329 = vmatpush2.msra.mxu0 0.0
    %1330 = vmatprep.subr.mxu0 0.0
    %1331 = vmatpush2.msra.mxu0 0.0
    %1332 = vmatprep.subr.mxu0 0.0
    %1333 = vmatpush2.msra.mxu0 0.0
    %1334 = vmatprep.subr.mxu0 0.0
    %1335 = vmatpush2.msra.mxu0 0.0
    %1336 = vmatprep.subr.mxu0 0.0
    %1337 = vmatpush2.msra.mxu0 0.0
    %1338 = vmatprep.subr.mxu0 0.0
    %1339 = vmatpush2.msra.mxu0 0.0
    %1340 = vmatprep.subr.mxu0 0.0
    %1341 = vmatpush2.msra.mxu0 0.0
    %1342 = vmatprep.subr.mxu0 0.0
    %1343 = vmatpush2.msra.mxu0 0.0
    %1344 = vmatprep.subr.mxu0 0.0
    %1345 = vmatpush2.msra.mxu0 0.0
    %1346 = vmatprep.subr.mxu0 0.0
    %1347 = vmatpush2.msra.mxu0 0.0
    %1348 = vmatprep.mubr.f32.mxu0 0.0
    %1349 = vmatmul.mubr.f32.gmra.mxu0 %v1064
    %v1350 = vpop.f32.mrf.mxu0
    %v1351 = vadd.f32 %v1040, %v1350
    %v1352 = vpop.f32.mrf.mxu0
    %1353 = vmatprep.mubr.f32.mxu0 0.0
    %1354 = vmatmul.mubr.f32.gmra.mxu0 %v1067
    %v1355 = vpop.f32.mrf.mxu0
    %v1356 = vadd.f32 %v1045, %v1355
    %v1357 = vpop.f32.mrf.mxu0
    %1358 = vmatprep.mubr.f32.mxu0 0.0
    %1359 = vmatmul.mubr.f32.gmra.mxu0 %v1070
    %v1360 = vpop.f32.mrf.mxu0
    %v1361 = vadd.f32 %v1050, %v1360
    %v1362 = vpop.f32.mrf.mxu0
    %1363 = vmatprep.mubr.f32.mxu0 0.0
    %1364 = vmatmul.mubr.f32.gmra.mxu0 %v1073
    %v1365 = vpop.f32.mrf.mxu0
    %v1366 = vadd.f32 %v1055, %v1365
    %v1367 = vpop.f32.mrf.mxu0
    %1368 = vmatprep.mubr.f32.mxu0 0.0
    %1369 = vmatmul.mubr.f32.gmra.mxu0 %v1076
    %v1370 = vpop.f32.mrf.mxu0
    %v1371 = vadd.f32 %v1060, %v1370
    %v1372 = vpop.f32.mrf.mxu0
    %1373 = vdwg.mxu0
    %v1374 = vmul.f32 %v1161, %v1161
    %v1375 = vmul.f32 %v1163, %v1163
    %v1376 = vmul.f32 %v1256, %v1256
    %v1377 = vmul.f32 %v1258, %v1258
    %v1378 = vmul.f32 %v1351, %v1351
    %v1379 = vmul.f32 %v1167, %v1167
    %v1380 = vmul.f32 %v1169, %v1169
    %v1381 = vmul.f32 %v1262, %v1262
    %v1382 = vmul.f32 %v1264, %v1264
    %v1383 = vmul.f32 %v1356, %v1356
    %v1384 = vmul.f32 %v1173, %v1173
    %v1385 = vmul.f32 %v1175, %v1175
    %v1386 = vmul.f32 %v1268, %v1268
    %v1387 = vmul.f32 %v1270, %v1270
    %v1388 = vmul.f32 %v1361, %v1361
    %v1389 = vmul.f32 %v1179, %v1179
    %v1390 = vmul.f32 %v1181, %v1181
    %v1391 = vmul.f32 %v1274, %v1274
    %v1392 = vmul.f32 %v1276, %v1276
    %v1393 = vmul.f32 %v1366, %v1366
    %v1394 = vmul.f32 %v1185, %v1185
    %v1395 = vmul.f32 %v1187, %v1187
    %v1396 = vmul.f32 %v1280, %v1280
    %v1397 = vmul.f32 %v1282, %v1282
    %v1398 = vmul.f32 %v1371, %v1371
    %vm1399 = vcmask 64512
    %v1401 = vsel %vm1399, %v1378, 0
    %v1404 = vsel %vm1399, %v1383, 0
    %v1407 = vsel %vm1399, %v1388, 0
    %v1410 = vsel %vm1399, %v1393, 0
    %v1413 = vsel %vm1399, %v1398, 0
    %1415 = vmatprep.subr.mxu0 %v147
    %1416 = vmatpush1.msra.mxu0 %v146
    %1417 = vmatprep.subr.mxu0 %v143
    %1418 = vmatpush1.msra.mxu0 %v142
    %1419 = vmatprep.subr.mxu0 %v139
    %1420 = vmatpush1.msra.mxu0 %v138
    %1421 = vmatprep.subr.mxu0 %v135
    %1422 = vmatpush1.msra.mxu0 %v134
    %1423 = vmatprep.subr.mxu0 %v131
    %1424 = vmatpush1.msra.mxu0 %v130
    %1425 = vmatprep.subr.mxu0 %v127
    %1426 = vmatpush1.msra.mxu0 %v126
    %1427 = vmatprep.subr.mxu0 %v123
    %1428 = vmatpush1.msra.mxu0 %v122
    %1429 = vmatprep.subr.mxu0 %v119
    %1430 = vmatpush1.msra.mxu0 %v118
    %1431 = vmatprep.subr.mxu0 %v115
    %1432 = vmatpush1.msra.mxu0 %v114
    %1433 = vmatprep.subr.mxu0 %v111
    %1434 = vmatpush1.msra.mxu0 %v110
    %1435 = vmatprep.subr.mxu0 %v107
    %1436 = vmatpush1.msra.mxu0 %v106
    %1437 = vmatprep.subr.mxu0 %v103
    %1438 = vmatpush1.msra.mxu0 %v102
    %1439 = vmatprep.subr.mxu0 %v99
    %1440 = vmatpush1.msra.mxu0 %v98
    %1441 = vmatprep.subr.mxu0 %v95
    %1442 = vmatpush1.msra.mxu0 %v94
    %1443 = vmatprep.subr.mxu0 %v91
    %1444 = vmatpush1.msra.mxu0 %v90
    %1445 = vmatprep.subr.mxu0 %v87
    %1446 = vmatpush1.msra.mxu0 %v86
    %1447 = vmatprep.subr.mxu0 %v211
    %1448 = vmatpush2.msra.mxu0 %v210
    %1449 = vmatprep.subr.mxu0 %v207
    %1450 = vmatpush2.msra.mxu0 %v206
    %1451 = vmatprep.subr.mxu0 %v203
    %1452 = vmatpush2.msra.mxu0 %v202
    %1453 = vmatprep.subr.mxu0 %v199
    %1454 = vmatpush2.msra.mxu0 %v198
    %1455 = vmatprep.subr.mxu0 %v195
    %1456 = vmatpush2.msra.mxu0 %v194
    %1457 = vmatprep.subr.mxu0 %v191
    %1458 = vmatpush2.msra.mxu0 %v190
    %1459 = vmatprep.subr.mxu0 %v187
    %1460 = vmatpush2.msra.mxu0 %v186
    %1461 = vmatprep.subr.mxu0 %v183
    %1462 = vmatpush2.msra.mxu0 %v182
    %1463 = vmatprep.subr.mxu0 %v179
    %1464 = vmatpush2.msra.mxu0 %v178
    %1465 = vmatprep.subr.mxu0 %v175
    %1466 = vmatpush2.msra.mxu0 %v174
    %1467 = vmatprep.subr.mxu0 %v171
    %1468 = vmatpush2.msra.mxu0 %v170
    %1469 = vmatprep.subr.mxu0 %v167
    %1470 = vmatpush2.msra.mxu0 %v166
    %1471 = vmatprep.subr.mxu0 %v163
    %1472 = vmatpush2.msra.mxu0 %v162
    %1473 = vmatprep.subr.mxu0 %v159
    %1474 = vmatpush2.msra.mxu0 %v158
    %1475 = vmatprep.subr.mxu0 %v155
    %1476 = vmatpush2.msra.mxu0 %v154
    %1477 = vmatprep.subr.mxu0 %v151
    %1478 = vmatpush2.msra.mxu0 %v150
    %1479 = vmatprep.mubr.f32.mxu0 %v1375
    %1480 = vmatmul.mubr.f32.gmra.mxu0 %v1374
    %v1481 = vpop.f32.mrf.mxu0
    %v1482 = vadd.f32 0.0, %v1481
    %v1483 = vpop.f32.mrf.mxu0
    %v1484 = vadd.f32 0.0, %v1483
    %1485 = vmatprep.mubr.f32.mxu0 %v1380
    %1486 = vmatmul.mubr.f32.gmra.mxu0 %v1379
    %v1487 = vpop.f32.mrf.mxu0
    %v1488 = vadd.f32 0.0, %v1487
    %v1489 = vpop.f32.mrf.mxu0
    %v1490 = vadd.f32 0.0, %v1489
    %1491 = vmatprep.mubr.f32.mxu0 %v1385
    %1492 = vmatmul.mubr.f32.gmra.mxu0 %v1384
    %v1493 = vpop.f32.mrf.mxu0
    %v1494 = vadd.f32 0.0, %v1493
    %v1495 = vpop.f32.mrf.mxu0
    %v1496 = vadd.f32 0.0, %v1495
    %1497 = vmatprep.mubr.f32.mxu0 %v1390
    %1498 = vmatmul.mubr.f32.gmra.mxu0 %v1389
    %v1499 = vpop.f32.mrf.mxu0
    %v1500 = vadd.f32 0.0, %v1499
    %v1501 = vpop.f32.mrf.mxu0
    %v1502 = vadd.f32 0.0, %v1501
    %1503 = vmatprep.mubr.f32.mxu0 %v1395
    %1504 = vmatmul.mubr.f32.gmra.mxu0 %v1394
    %v1505 = vpop.f32.mrf.mxu0
    %v1506 = vadd.f32 0.0, %v1505
    %v1507 = vpop.f32.mrf.mxu0
    %v1508 = vadd.f32 0.0, %v1507
    %1509 = vdwg.mxu0
    %1510 = vmatprep.subr.mxu0 %v275
    %1511 = vmatpush1.msra.mxu0 %v274
    %1512 = vmatprep.subr.mxu0 %v271
    %1513 = vmatpush1.msra.mxu0 %v270
    %1514 = vmatprep.subr.mxu0 %v267
    %1515 = vmatpush1.msra.mxu0 %v266
    %1516 = vmatprep.subr.mxu0 %v263
    %1517 = vmatpush1.msra.mxu0 %v262
    %1518 = vmatprep.subr.mxu0 %v259
    %1519 = vmatpush1.msra.mxu0 %v258
    %1520 = vmatprep.subr.mxu0 %v255
    %1521 = vmatpush1.msra.mxu0 %v254
    %1522 = vmatprep.subr.mxu0 %v251
    %1523 = vmatpush1.msra.mxu0 %v250
    %1524 = vmatprep.subr.mxu0 %v247
    %1525 = vmatpush1.msra.mxu0 %v246
    %1526 = vmatprep.subr.mxu0 %v243
    %1527 = vmatpush1.msra.mxu0 %v242
    %1528 = vmatprep.subr.mxu0 %v239
    %1529 = vmatpush1.msra.mxu0 %v238
    %1530 = vmatprep.subr.mxu0 %v235
    %1531 = vmatpush1.msra.mxu0 %v234
    %1532 = vmatprep.subr.mxu0 %v231
    %1533 = vmatpush1.msra.mxu0 %v230
    %1534 = vmatprep.subr.mxu0 %v227
    %1535 = vmatpush1.msra.mxu0 %v226
    %1536 = vmatprep.subr.mxu0 %v223
    %1537 = vmatpush1.msra.mxu0 %v222
    %1538 = vmatprep.subr.mxu0 %v219
    %1539 = vmatpush1.msra.mxu0 %v218
    %1540 = vmatprep.subr.mxu0 %v215
    %1541 = vmatpush1.msra.mxu0 %v214
    %1542 = vmatprep.subr.mxu0 %v339
    %1543 = vmatpush2.msra.mxu0 %v338
    %1544 = vmatprep.subr.mxu0 %v335
    %1545 = vmatpush2.msra.mxu0 %v334
    %1546 = vmatprep.subr.mxu0 %v331
    %1547 = vmatpush2.msra.mxu0 %v330
    %1548 = vmatprep.subr.mxu0 %v327
    %1549 = vmatpush2.msra.mxu0 %v326
    %1550 = vmatprep.subr.mxu0 %v323
    %1551 = vmatpush2.msra.mxu0 %v322
    %1552 = vmatprep.subr.mxu0 %v319
    %1553 = vmatpush2.msra.mxu0 %v318
    %1554 = vmatprep.subr.mxu0 %v315
    %1555 = vmatpush2.msra.mxu0 %v314
    %1556 = vmatprep.subr.mxu0 %v311
    %1557 = vmatpush2.msra.mxu0 %v310
    %1558 = vmatprep.subr.mxu0 %v307
    %1559 = vmatpush2.msra.mxu0 %v306
    %1560 = vmatprep.subr.mxu0 %v303
    %1561 = vmatpush2.msra.mxu0 %v302
    %1562 = vmatprep.subr.mxu0 %v299
    %1563 = vmatpush2.msra.mxu0 %v298
    %1564 = vmatprep.subr.mxu0 %v295
    %1565 = vmatpush2.msra.mxu0 %v294
    %1566 = vmatprep.subr.mxu0 %v291
    %1567 = vmatpush2.msra.mxu0 %v290
    %1568 = vmatprep.subr.mxu0 %v287
    %1569 = vmatpush2.msra.mxu0 %v286
    %1570 = vmatprep.subr.mxu0 %v283
    %1571 = vmatpush2.msra.mxu0 %v282
    %1572 = vmatprep.subr.mxu0 %v279
    %1573 = vmatpush2.msra.mxu0 %v278
    %1574 = vmatprep.mubr.f32.mxu0 %v1377
    %1575 = vmatmul.mubr.f32.gmra.mxu0 %v1376
    %v1576 = vpop.f32.mrf.mxu0
    %v1577 = vadd.f32 %v1482, %v1576
    %v1578 = vpop.f32.mrf.mxu0
    %v1579 = vadd.f32 %v1484, %v1578
    %1580 = vmatprep.mubr.f32.mxu0 %v1382
    %1581 = vmatmul.mubr.f32.gmra.mxu0 %v1381
    %v1582 = vpop.f32.mrf.mxu0
    %v1583 = vadd.f32 %v1488, %v1582
    %v1584 = vpop.f32.mrf.mxu0
    %v1585 = vadd.f32 %v1490, %v1584
    %1586 = vmatprep.mubr.f32.mxu0 %v1387
    %1587 = vmatmul.mubr.f32.gmra.mxu0 %v1386
    %v1588 = vpop.f32.mrf.mxu0
    %v1589 = vadd.f32 %v1494, %v1588
    %v1590 = vpop.f32.mrf.mxu0
    %v1591 = vadd.f32 %v1496, %v1590
    %1592 = vmatprep.mubr.f32.mxu0 %v1392
    %1593 = vmatmul.mubr.f32.gmra.mxu0 %v1391
    %v1594 = vpop.f32.mrf.mxu0
    %v1595 = vadd.f32 %v1500, %v1594
    %v1596 = vpop.f32.mrf.mxu0
    %v1597 = vadd.f32 %v1502, %v1596
    %1598 = vmatprep.mubr.f32.mxu0 %v1397
    %1599 = vmatmul.mubr.f32.gmra.mxu0 %v1396
    %v1600 = vpop.f32.mrf.mxu0
    %v1601 = vadd.f32 %v1506, %v1600
    %v1602 = vpop.f32.mrf.mxu0
    %v1603 = vadd.f32 %v1508, %v1602
    %1604 = vdwg.mxu0
    %1605 = vmatprep.subr.mxu0 0.0
    %1606 = vmatpush1.msra.mxu0 0.0
    %1607 = vmatprep.subr.mxu0 0.0
    %1608 = vmatpush1.msra.mxu0 0.0
    %1609 = vmatprep.subr.mxu0 0.0
    %1610 = vmatpush1.msra.mxu0 0.0
    %1611 = vmatprep.subr.mxu0 0.0
    %1612 = vmatpush1.msra.mxu0 0.0
    %1613 = vmatprep.subr.mxu0 0.0
    %1614 = vmatpush1.msra.mxu0 0.0
    %1615 = vmatprep.subr.mxu0 0.0
    %1616 = vmatpush1.msra.mxu0 0.0
    %1617 = vmatprep.subr.mxu0 0.0
    %1618 = vmatpush1.msra.mxu0 0.0
    %1619 = vmatprep.subr.mxu0 0.0
    %1620 = vmatpush1.msra.mxu0 0.0
    %1621 = vmatprep.subr.mxu0 0.0
    %1622 = vmatpush1.msra.mxu0 0.0
    %1623 = vmatprep.subr.mxu0 0.0
    %1624 = vmatpush1.msra.mxu0 0.0
    %1625 = vmatprep.subr.mxu0 0.0
    %1626 = vmatpush1.msra.mxu0 0.0
    %1627 = vmatprep.subr.mxu0 0.0
    %1628 = vmatpush1.msra.mxu0 0.0
    %1629 = vmatprep.subr.mxu0 0.0
    %1630 = vmatpush1.msra.mxu0 0.0
    %1631 = vmatprep.subr.mxu0 0.0
    %1632 = vmatpush1.msra.mxu0 0.0
    %1633 = vmatprep.subr.mxu0 0.0
    %1634 = vmatpush1.msra.mxu0 0.0
    %1635 = vmatprep.subr.mxu0 %v343
    %1636 = vmatpush1.msra.mxu0 %v342
    %1637 = vmatprep.subr.mxu0 0.0
    %1638 = vmatpush2.msra.mxu0 0.0
    %1639 = vmatprep.subr.mxu0 0.0
    %1640 = vmatpush2.msra.mxu0 0.0
    %1641 = vmatprep.subr.mxu0 0.0
    %1642 = vmatpush2.msra.mxu0 0.0
    %1643 = vmatprep.subr.mxu0 0.0
    %1644 = vmatpush2.msra.mxu0 0.0
    %1645 = vmatprep.subr.mxu0 0.0
    %1646 = vmatpush2.msra.mxu0 0.0
    %1647 = vmatprep.subr.mxu0 0.0
    %1648 = vmatpush2.msra.mxu0 0.0
    %1649 = vmatprep.subr.mxu0 0.0
    %1650 = vmatpush2.msra.mxu0 0.0
    %1651 = vmatprep.subr.mxu0 0.0
    %1652 = vmatpush2.msra.mxu0 0.0
    %1653 = vmatprep.subr.mxu0 0.0
    %1654 = vmatpush2.msra.mxu0 0.0
    %1655 = vmatprep.subr.mxu0 0.0
    %1656 = vmatpush2.msra.mxu0 0.0
    %1657 = vmatprep.subr.mxu0 0.0
    %1658 = vmatpush2.msra.mxu0 0.0
    %1659 = vmatprep.subr.mxu0 0.0
    %1660 = vmatpush2.msra.mxu0 0.0
    %1661 = vmatprep.subr.mxu0 0.0
    %1662 = vmatpush2.msra.mxu0 0.0
    %1663 = vmatprep.subr.mxu0 0.0
    %1664 = vmatpush2.msra.mxu0 0.0
    %1665 = vmatprep.subr.mxu0 0.0
    %1666 = vmatpush2.msra.mxu0 0.0
    %1667 = vmatprep.subr.mxu0 0.0
    %1668 = vmatpush2.msra.mxu0 0.0
    %1669 = vmatprep.mubr.f32.mxu0 0.0
    %1670 = vmatmul.mubr.f32.gmra.mxu0 %v1401
    %v1671 = vpop.f32.mrf.mxu0
    %v1672 = vadd.f32 %v1577, %v1671
    %v1673 = vpop.f32.mrf.mxu0
    %v1674 = vadd.f32 %v1579, %v1673
    %1675 = vmatprep.mubr.f32.mxu0 0.0
    %1676 = vmatmul.mubr.f32.gmra.mxu0 %v1404
    %v1677 = vpop.f32.mrf.mxu0
    %v1678 = vadd.f32 %v1583, %v1677
    %v1679 = vpop.f32.mrf.mxu0
    %v1680 = vadd.f32 %v1585, %v1679
    %1681 = vmatprep.mubr.f32.mxu0 0.0
    %1682 = vmatmul.mubr.f32.gmra.mxu0 %v1407
    %v1683 = vpop.f32.mrf.mxu0
    %v1684 = vadd.f32 %v1589, %v1683
    %v1685 = vpop.f32.mrf.mxu0
    %v1686 = vadd.f32 %v1591, %v1685
    %1687 = vmatprep.mubr.f32.mxu0 0.0
    %1688 = vmatmul.mubr.f32.gmra.mxu0 %v1410
    %v1689 = vpop.f32.mrf.mxu0
    %v1690 = vadd.f32 %v1595, %v1689
    %v1691 = vpop.f32.mrf.mxu0
    %v1692 = vadd.f32 %v1597, %v1691
    %1693 = vmatprep.mubr.f32.mxu0 0.0
    %1694 = vmatmul.mubr.f32.gmra.mxu0 %v1413
    %v1695 = vpop.f32.mrf.mxu0
    %v1696 = vadd.f32 %v1601, %v1695
    %v1697 = vpop.f32.mrf.mxu0
    %v1698 = vadd.f32 %v1603, %v1697
    %1699 = vdwg.mxu0
    %1700 = vmatprep.subr.mxu0 %v149
    %1701 = vmatpush1.msra.mxu0 %v148
    %1702 = vmatprep.subr.mxu0 %v145
    %1703 = vmatpush1.msra.mxu0 %v144
    %1704 = vmatprep.subr.mxu0 %v141
    %1705 = vmatpush1.msra.mxu0 %v140
    %1706 = vmatprep.subr.mxu0 %v137
    %1707 = vmatpush1.msra.mxu0 %v136
    %1708 = vmatprep.subr.mxu0 %v133
    %1709 = vmatpush1.msra.mxu0 %v132
    %1710 = vmatprep.subr.mxu0 %v129
    %1711 = vmatpush1.msra.mxu0 %v128
    %1712 = vmatprep.subr.mxu0 %v125
    %1713 = vmatpush1.msra.mxu0 %v124
    %1714 = vmatprep.subr.mxu0 %v121
    %1715 = vmatpush1.msra.mxu0 %v120
    %1716 = vmatprep.subr.mxu0 %v117
    %1717 = vmatpush1.msra.mxu0 %v116
    %1718 = vmatprep.subr.mxu0 %v113
    %1719 = vmatpush1.msra.mxu0 %v112
    %1720 = vmatprep.subr.mxu0 %v109
    %1721 = vmatpush1.msra.mxu0 %v108
    %1722 = vmatprep.subr.mxu0 %v105
    %1723 = vmatpush1.msra.mxu0 %v104
    %1724 = vmatprep.subr.mxu0 %v101
    %1725 = vmatpush1.msra.mxu0 %v100
    %1726 = vmatprep.subr.mxu0 %v97
    %1727 = vmatpush1.msra.mxu0 %v96
    %1728 = vmatprep.subr.mxu0 %v93
    %1729 = vmatpush1.msra.mxu0 %v92
    %1730 = vmatprep.subr.mxu0 %v89
    %1731 = vmatpush1.msra.mxu0 %v88
    %1732 = vmatprep.subr.mxu0 %v213
    %1733 = vmatpush2.msra.mxu0 %v212
    %1734 = vmatprep.subr.mxu0 %v209
    %1735 = vmatpush2.msra.mxu0 %v208
    %1736 = vmatprep.subr.mxu0 %v205
    %1737 = vmatpush2.msra.mxu0 %v204
    %1738 = vmatprep.subr.mxu0 %v201
    %1739 = vmatpush2.msra.mxu0 %v200
    %1740 = vmatprep.subr.mxu0 %v197
    %1741 = vmatpush2.msra.mxu0 %v196
    %1742 = vmatprep.subr.mxu0 %v193
    %1743 = vmatpush2.msra.mxu0 %v192
    %1744 = vmatprep.subr.mxu0 %v189
    %1745 = vmatpush2.msra.mxu0 %v188
    %1746 = vmatprep.subr.mxu0 %v185
    %1747 = vmatpush2.msra.mxu0 %v184
    %1748 = vmatprep.subr.mxu0 %v181
    %1749 = vmatpush2.msra.mxu0 %v180
    %1750 = vmatprep.subr.mxu0 %v177
    %1751 = vmatpush2.msra.mxu0 %v176
    %1752 = vmatprep.subr.mxu0 %v173
    %1753 = vmatpush2.msra.mxu0 %v172
    %1754 = vmatprep.subr.mxu0 %v169
    %1755 = vmatpush2.msra.mxu0 %v168
    %1756 = vmatprep.subr.mxu0 %v165
    %1757 = vmatpush2.msra.mxu0 %v164
    %1758 = vmatprep.subr.mxu0 %v161
    %1759 = vmatpush2.msra.mxu0 %v160
    %1760 = vmatprep.subr.mxu0 %v157
    %1761 = vmatpush2.msra.mxu0 %v156
    %1762 = vmatprep.subr.mxu0 %v153
    %1763 = vmatpush2.msra.mxu0 %v152
    %1764 = vmatprep.mubr.f32.mxu0 %v1375
    %1765 = vmatmul.mubr.f32.gmra.mxu0 %v1374
    %v1766 = vpop.f32.mrf.mxu0
    %v1767 = vadd.f32 0.0, %v1766
    %v1768 = vpop.f32.mrf.mxu0
    %v1769 = vadd.f32 0.0, %v1768
    %1770 = vmatprep.mubr.f32.mxu0 %v1380
    %1771 = vmatmul.mubr.f32.gmra.mxu0 %v1379
    %v1772 = vpop.f32.mrf.mxu0
    %v1773 = vadd.f32 0.0, %v1772
    %v1774 = vpop.f32.mrf.mxu0
    %v1775 = vadd.f32 0.0, %v1774
    %1776 = vmatprep.mubr.f32.mxu0 %v1385
    %1777 = vmatmul.mubr.f32.gmra.mxu0 %v1384
    %v1778 = vpop.f32.mrf.mxu0
    %v1779 = vadd.f32 0.0, %v1778
    %v1780 = vpop.f32.mrf.mxu0
    %v1781 = vadd.f32 0.0, %v1780
    %1782 = vmatprep.mubr.f32.mxu0 %v1390
    %1783 = vmatmul.mubr.f32.gmra.mxu0 %v1389
    %v1784 = vpop.f32.mrf.mxu0
    %v1785 = vadd.f32 0.0, %v1784
    %v1786 = vpop.f32.mrf.mxu0
    %v1787 = vadd.f32 0.0, %v1786
    %1788 = vmatprep.mubr.f32.mxu0 %v1395
    %1789 = vmatmul.mubr.f32.gmra.mxu0 %v1394
    %v1790 = vpop.f32.mrf.mxu0
    %v1791 = vadd.f32 0.0, %v1790
    %v1792 = vpop.f32.mrf.mxu0
    %v1793 = vadd.f32 0.0, %v1792
    %1794 = vdwg.mxu0
    %1795 = vmatprep.subr.mxu0 %v277
    %1796 = vmatpush1.msra.mxu0 %v276
    %1797 = vmatprep.subr.mxu0 %v273
    %1798 = vmatpush1.msra.mxu0 %v272
    %1799 = vmatprep.subr.mxu0 %v269
    %1800 = vmatpush1.msra.mxu0 %v268
    %1801 = vmatprep.subr.mxu0 %v265
    %1802 = vmatpush1.msra.mxu0 %v264
    %1803 = vmatprep.subr.mxu0 %v261
    %1804 = vmatpush1.msra.mxu0 %v260
    %1805 = vmatprep.subr.mxu0 %v257
    %1806 = vmatpush1.msra.mxu0 %v256
    %1807 = vmatprep.subr.mxu0 %v253
    %1808 = vmatpush1.msra.mxu0 %v252
    %1809 = vmatprep.subr.mxu0 %v249
    %1810 = vmatpush1.msra.mxu0 %v248
    %1811 = vmatprep.subr.mxu0 %v245
    %1812 = vmatpush1.msra.mxu0 %v244
    %1813 = vmatprep.subr.mxu0 %v241
    %1814 = vmatpush1.msra.mxu0 %v240
    %1815 = vmatprep.subr.mxu0 %v237
    %1816 = vmatpush1.msra.mxu0 %v236
    %1817 = vmatprep.subr.mxu0 %v233
    %1818 = vmatpush1.msra.mxu0 %v232
    %1819 = vmatprep.subr.mxu0 %v229
    %1820 = vmatpush1.msra.mxu0 %v228
    %1821 = vmatprep.subr.mxu0 %v225
    %1822 = vmatpush1.msra.mxu0 %v224
    %1823 = vmatprep.subr.mxu0 %v221
    %1824 = vmatpush1.msra.mxu0 %v220
    %1825 = vmatprep.subr.mxu0 %v217
    %1826 = vmatpush1.msra.mxu0 %v216
    %1827 = vmatprep.subr.mxu0 %v341
    %1828 = vmatpush2.msra.mxu0 %v340
    %1829 = vmatprep.subr.mxu0 %v337
    %1830 = vmatpush2.msra.mxu0 %v336
    %1831 = vmatprep.subr.mxu0 %v333
    %1832 = vmatpush2.msra.mxu0 %v332
    %1833 = vmatprep.subr.mxu0 %v329
    %1834 = vmatpush2.msra.mxu0 %v328
    %1835 = vmatprep.subr.mxu0 %v325
    %1836 = vmatpush2.msra.mxu0 %v324
    %1837 = vmatprep.subr.mxu0 %v321
    %1838 = vmatpush2.msra.mxu0 %v320
    %1839 = vmatprep.subr.mxu0 %v317
    %1840 = vmatpush2.msra.mxu0 %v316
    %1841 = vmatprep.subr.mxu0 %v313
    %1842 = vmatpush2.msra.mxu0 %v312
    %1843 = vmatprep.subr.mxu0 %v309
    %1844 = vmatpush2.msra.mxu0 %v308
    %1845 = vmatprep.subr.mxu0 %v305
    %1846 = vmatpush2.msra.mxu0 %v304
    %1847 = vmatprep.subr.mxu0 %v301
    %1848 = vmatpush2.msra.mxu0 %v300
    %1849 = vmatprep.subr.mxu0 %v297
    %1850 = vmatpush2.msra.mxu0 %v296
    %1851 = vmatprep.subr.mxu0 %v293
    %1852 = vmatpush2.msra.mxu0 %v292
    %1853 = vmatprep.subr.mxu0 %v289
    %1854 = vmatpush2.msra.mxu0 %v288
    %1855 = vmatprep.subr.mxu0 %v285
    %1856 = vmatpush2.msra.mxu0 %v284
    %1857 = vmatprep.subr.mxu0 %v281
    %1858 = vmatpush2.msra.mxu0 %v280
    %1859 = vmatprep.mubr.f32.mxu0 %v1377
    %1860 = vmatmul.mubr.f32.gmra.mxu0 %v1376
    %v1861 = vpop.f32.mrf.mxu0
    %v1862 = vadd.f32 %v1767, %v1861
    %v1863 = vpop.f32.mrf.mxu0
    %v1864 = vadd.f32 %v1769, %v1863
    %1865 = vmatprep.mubr.f32.mxu0 %v1382
    %1866 = vmatmul.mubr.f32.gmra.mxu0 %v1381
    %v1867 = vpop.f32.mrf.mxu0
    %v1868 = vadd.f32 %v1773, %v1867
    %v1869 = vpop.f32.mrf.mxu0
    %v1870 = vadd.f32 %v1775, %v1869
    %1871 = vmatprep.mubr.f32.mxu0 %v1387
    %1872 = vmatmul.mubr.f32.gmra.mxu0 %v1386
    %v1873 = vpop.f32.mrf.mxu0
    %v1874 = vadd.f32 %v1779, %v1873
    %v1875 = vpop.f32.mrf.mxu0
    %v1876 = vadd.f32 %v1781, %v1875
    %1877 = vmatprep.mubr.f32.mxu0 %v1392
    %1878 = vmatmul.mubr.f32.gmra.mxu0 %v1391
    %v1879 = vpop.f32.mrf.mxu0
    %v1880 = vadd.f32 %v1785, %v1879
    %v1881 = vpop.f32.mrf.mxu0
    %v1882 = vadd.f32 %v1787, %v1881
    %1883 = vmatprep.mubr.f32.mxu0 %v1397
    %1884 = vmatmul.mubr.f32.gmra.mxu0 %v1396
    %v1885 = vpop.f32.mrf.mxu0
    %v1886 = vadd.f32 %v1791, %v1885
    %v1887 = vpop.f32.mrf.mxu0
    %v1888 = vadd.f32 %v1793, %v1887
    %1889 = vdwg.mxu0
    %1890 = vmatprep.subr.mxu0 0.0
    %1891 = vmatpush1.msra.mxu0 0.0
    %1892 = vmatprep.subr.mxu0 0.0
    %1893 = vmatpush1.msra.mxu0 0.0
    %1894 = vmatprep.subr.mxu0 0.0
    %1895 = vmatpush1.msra.mxu0 0.0
    %1896 = vmatprep.subr.mxu0 0.0
    %1897 = vmatpush1.msra.mxu0 0.0
    %1898 = vmatprep.subr.mxu0 0.0
    %1899 = vmatpush1.msra.mxu0 0.0
    %1900 = vmatprep.subr.mxu0 0.0
    %1901 = vmatpush1.msra.mxu0 0.0
    %1902 = vmatprep.subr.mxu0 0.0
    %1903 = vmatpush1.msra.mxu0 0.0
    %1904 = vmatprep.subr.mxu0 0.0
    %1905 = vmatpush1.msra.mxu0 0.0
    %1906 = vmatprep.subr.mxu0 0.0
    %1907 = vmatpush1.msra.mxu0 0.0
    %1908 = vmatprep.subr.mxu0 0.0
    %1909 = vmatpush1.msra.mxu0 0.0
    %1910 = vmatprep.subr.mxu0 0.0
    %1911 = vmatpush1.msra.mxu0 0.0
    %1912 = vmatprep.subr.mxu0 0.0
    %1913 = vmatpush1.msra.mxu0 0.0
    %1914 = vmatprep.subr.mxu0 0.0
    %1915 = vmatpush1.msra.mxu0 0.0
    %1916 = vmatprep.subr.mxu0 0.0
    %1917 = vmatpush1.msra.mxu0 0.0
    %1918 = vmatprep.subr.mxu0 0.0
    %1919 = vmatpush1.msra.mxu0 0.0
    %1920 = vmatprep.subr.mxu0 %v345
    %1921 = vmatpush1.msra.mxu0 %v344
    %1922 = vmatprep.subr.mxu0 0.0
    %1923 = vmatpush2.msra.mxu0 0.0
    %1924 = vmatprep.subr.mxu0 0.0
    %1925 = vmatpush2.msra.mxu0 0.0
    %1926 = vmatprep.subr.mxu0 0.0
    %1927 = vmatpush2.msra.mxu0 0.0
    %1928 = vmatprep.subr.mxu0 0.0
    %1929 = vmatpush2.msra.mxu0 0.0
    %1930 = vmatprep.subr.mxu0 0.0
    %1931 = vmatpush2.msra.mxu0 0.0
    %1932 = vmatprep.subr.mxu0 0.0
    %1933 = vmatpush2.msra.mxu0 0.0
    %1934 = vmatprep.subr.mxu0 0.0
    %1935 = vmatpush2.msra.mxu0 0.0
    %1936 = vmatprep.subr.mxu0 0.0
    %1937 = vmatpush2.msra.mxu0 0.0
    %1938 = vmatprep.subr.mxu0 0.0
    %1939 = vmatpush2.msra.mxu0 0.0
    %1940 = vmatprep.subr.mxu0 0.0
    %1941 = vmatpush2.msra.mxu0 0.0
    %1942 = vmatprep.subr.mxu0 0.0
    %1943 = vmatpush2.msra.mxu0 0.0
    %1944 = vmatprep.subr.mxu0 0.0
    %1945 = vmatpush2.msra.mxu0 0.0
    %1946 = vmatprep.subr.mxu0 0.0
    %1947 = vmatpush2.msra.mxu0 0.0
    %1948 = vmatprep.subr.mxu0 0.0
    %1949 = vmatpush2.msra.mxu0 0.0
    %1950 = vmatprep.subr.mxu0 0.0
    %1951 = vmatpush2.msra.mxu0 0.0
    %1952 = vmatprep.subr.mxu0 0.0
    %1953 = vmatpush2.msra.mxu0 0.0
    %1954 = vmatprep.mubr.f32.mxu0 0.0
    %1955 = vmatmul.mubr.f32.gmra.mxu0 %v1401
    %v1956 = vpop.f32.mrf.mxu0
    %v1957 = vadd.f32 %v1862, %v1956
    %v1958 = vpop.f32.mrf.mxu0
    %v1959 = vadd.f32 %v1864, %v1958
    %1960 = vmatprep.mubr.f32.mxu0 0.0
    %1961 = vmatmul.mubr.f32.gmra.mxu0 %v1404
    %v1962 = vpop.f32.mrf.mxu0
    %v1963 = vadd.f32 %v1868, %v1962
    %v1964 = vpop.f32.mrf.mxu0
    %v1965 = vadd.f32 %v1870, %v1964
    %1966 = vmatprep.mubr.f32.mxu0 0.0
    %1967 = vmatmul.mubr.f32.gmra.mxu0 %v1407
    %v1968 = vpop.f32.mrf.mxu0
    %v1969 = vadd.f32 %v1874, %v1968
    %v1970 = vpop.f32.mrf.mxu0
    %v1971 = vadd.f32 %v1876, %v1970
    %1972 = vmatprep.mubr.f32.mxu0 0.0
    %1973 = vmatmul.mubr.f32.gmra.mxu0 %v1410
    %v1974 = vpop.f32.mrf.mxu0
    %v1975 = vadd.f32 %v1880, %v1974
    %v1976 = vpop.f32.mrf.mxu0
    %v1977 = vadd.f32 %v1882, %v1976
    %1978 = vmatprep.mubr.f32.mxu0 0.0
    %1979 = vmatmul.mubr.f32.gmra.mxu0 %v1413
    %v1980 = vpop.f32.mrf.mxu0
    %v1981 = vadd.f32 %v1886, %v1980
    %v1982 = vpop.f32.mrf.mxu0
    %v1983 = vadd.f32 %v1888, %v1982
    %1984 = vdwg.mxu0
    %v1985 = vmul.f32 %v1672, 0.013333334
    %v1986 = vmul.f32 %v1674, 0.013333334
    %v1987 = vmul.f32 %v1957, 0.013333334
    %v1988 = vmul.f32 %v1959, 0.013333334
    %v1989 = vmul.f32 %v1678, 0.013333334
    %v1990 = vmul.f32 %v1680, 0.013333334
    %v1991 = vmul.f32 %v1963, 0.013333334
    %v1992 = vmul.f32 %v1965, 0.013333334
    %v1993 = vmul.f32 %v1684, 0.013333334
    %v1994 = vmul.f32 %v1686, 0.013333334
    %v1995 = vmul.f32 %v1969, 0.013333334
    %v1996 = vmul.f32 %v1971, 0.013333334
    %v1997 = vmul.f32 %v1690, 0.013333334
    %v1998 = vmul.f32 %v1692, 0.013333334
    %v1999 = vmul.f32 %v1975, 0.013333334
    %v2000 = vmul.f32 %v1977, 0.013333334
    %v2001 = vmul.f32 %v1696, 0.013333334
    %v2002 = vmul.f32 %v1698, 0.013333334
    %v2003 = vmul.f32 %v1981, 0.013333334
    %v2004 = vmul.f32 %v1983, 0.013333334
    %v2005 = vmax.f32 %v1985, 1e-06
    %v2006 = vmax.f32 %v1986, 1e-06
    %v2007 = vmax.f32 %v1987, 1e-06
    %v2008 = vmax.f32 %v1988, 1e-06
    %v2009 = vmax.f32 %v1989, 1e-06
    %v2010 = vmax.f32 %v1990, 1e-06
    %v2011 = vmax.f32 %v1991, 1e-06
    %v2012 = vmax.f32 %v1992, 1e-06
    %v2013 = vmax.f32 %v1993, 1e-06
    %v2014 = vmax.f32 %v1994, 1e-06
    %v2015 = vmax.f32 %v1995, 1e-06
    %v2016 = vmax.f32 %v1996, 1e-06
    %v2017 = vmax.f32 %v1997, 1e-06
    %v2018 = vmax.f32 %v1998, 1e-06
    %v2019 = vmax.f32 %v1999, 1e-06
    %v2020 = vmax.f32 %v2000, 1e-06
    %v2021 = vmax.f32 %v2001, 1e-06
    %v2022 = vmax.f32 %v2002, 1e-06
    %v2023 = vmax.f32 %v2003, 1e-06
    %v2024 = vmax.f32 %v2004, 1e-06
    %v2025 = vlog2.pop %v2005
    %v2026 = vmul.f32 %v2025, 0.6931472
    %v2027 = vlog2.pop %v2006
    %v2028 = vmul.f32 %v2027, 0.6931472
    %v2029 = vlog2.pop %v2007
    %v2030 = vmul.f32 %v2029, 0.6931472
    %v2031 = vlog2.pop %v2008
    %v2032 = vmul.f32 %v2031, 0.6931472
    %v2033 = vlog2.pop %v2009
    %v2034 = vmul.f32 %v2033, 0.6931472
    %v2035 = vlog2.pop %v2010
    %v2036 = vmul.f32 %v2035, 0.6931472
    %v2037 = vlog2.pop %v2011
    %v2038 = vmul.f32 %v2037, 0.6931472
    %v2039 = vlog2.pop %v2012
    %v2040 = vmul.f32 %v2039, 0.6931472
    %v2041 = vlog2.pop %v2013
    %v2042 = vmul.f32 %v2041, 0.6931472
    %v2043 = vlog2.pop %v2014
    %v2044 = vmul.f32 %v2043, 0.6931472
    %v2045 = vlog2.pop %v2015
    %v2046 = vmul.f32 %v2045, 0.6931472
    %v2047 = vlog2.pop %v2016
    %v2048 = vmul.f32 %v2047, 0.6931472
    %v2049 = vlog2.pop %v2017
    %v2050 = vmul.f32 %v2049, 0.6931472
    %v2051 = vlog2.pop %v2018
    %v2052 = vmul.f32 %v2051, 0.6931472
    %v2053 = vlog2.pop %v2019
    %v2054 = vmul.f32 %v2053, 0.6931472
    %v2055 = vlog2.pop %v2020
    %v2056 = vmul.f32 %v2055, 0.6931472
    %v2057 = vlog2.pop %v2021
    %v2058 = vmul.f32 %v2057, 0.6931472
    %v2059 = vlog2.pop %v2022
    %v2060 = vmul.f32 %v2059, 0.6931472
    %v2061 = vlog2.pop %v2023
    %v2062 = vmul.f32 %v2061, 0.6931472
    %v2063 = vlog2.pop %v2024
    %v2064 = vmul.f32 %v2063, 0.6931472
    %vm2065 = vcmask 89088
    %2066 = vst.msk [vmem:[#allocation3] sm:$0xff] %vm2065, %v2026
    %2067 = vst.msk [vmem:[#allocation3 + $0x8] sm:$0xff] %vm2065, %v2034
    %2068 = vst.msk [vmem:[#allocation3 + $0x10] sm:$0xff] %vm2065, %v2042
    %2069 = vst.msk [vmem:[#allocation3 + $0x18] sm:$0xff] %vm2065, %v2050
    %2070 = vst.msk [vmem:[#allocation3 + $0x20] sm:$0xff] %vm2065, %v2058
    %2076 = vrot.lane.b32.xlu0 %v2026, 113
    %v2077 = vpop.permute.xlu0 %2076
    %2078 = vrot.lane.b32.xlu0 %v2034, 113
    %v2079 = vpop.permute.xlu0 %2078
    %2080 = vrot.lane.b32.xlu0 %v2042, 113
    %v2081 = vpop.permute.xlu0 %2080
    %2082 = vrot.lane.b32.xlu0 %v2050, 113
    %v2083 = vpop.permute.xlu0 %2082
    %2084 = vrot.lane.b32.xlu0 %v2058, 113
    %v2085 = vpop.permute.xlu0 %2084
    %2091 = vst.msk [vmem:[#allocation3 + $0x28] sm:$0xff] %vm2065, %v2077
    %2092 = vst.msk [vmem:[#allocation3 + $0x30] sm:$0xff] %vm2065, %v2079
    %2093 = vst.msk [vmem:[#allocation3 + $0x38] sm:$0xff] %vm2065, %v2081
    %2094 = vst.msk [vmem:[#allocation3 + $0x40] sm:$0xff] %vm2065, %v2083
    %2095 = vst.msk [vmem:[#allocation3 + $0x48] sm:$0xff] %vm2065, %v2085
    %2096 = vrot.lane.b32.xlu0 %v2026, 98
    %v2097 = vpop.permute.xlu0 %2096
    %2098 = vrot.lane.b32.xlu0 %v2034, 98
    %v2099 = vpop.permute.xlu0 %2098
    %2100 = vrot.lane.b32.xlu0 %v2042, 98
    %v2101 = vpop.permute.xlu0 %2100
    %2102 = vrot.lane.b32.xlu0 %v2050, 98
    %v2103 = vpop.permute.xlu0 %2102
    %2104 = vrot.lane.b32.xlu0 %v2058, 98
    %v2105 = vpop.permute.xlu0 %2104
    %2111 = vst.msk [vmem:[#allocation3 + $0x50] sm:$0xff] %vm2065, %v2097
    %2112 = vst.msk [vmem:[#allocation3 + $0x58] sm:$0xff] %vm2065, %v2099
    %2113 = vst.msk [vmem:[#allocation3 + $0x60] sm:$0xff] %vm2065, %v2101
    %2114 = vst.msk [vmem:[#allocation3 + $0x68] sm:$0xff] %vm2065, %v2103
    %2115 = vst.msk [vmem:[#allocation3 + $0x70] sm:$0xff] %vm2065, %v2105
    %2116 = vrot.lane.b32.xlu0 %v2026, 83
    %v2117 = vpop.permute.xlu0 %2116
    %2118 = vrot.lane.b32.xlu0 %v2034, 83
    %v2119 = vpop.permute.xlu0 %2118
    %2120 = vrot.lane.b32.xlu0 %v2042, 83
    %v2121 = vpop.permute.xlu0 %2120
    %2122 = vrot.lane.b32.xlu0 %v2050, 83
    %v2123 = vpop.permute.xlu0 %2122
    %2124 = vrot.lane.b32.xlu0 %v2058, 83
    %v2125 = vpop.permute.xlu0 %2124
    %2131 = vst.msk [vmem:[#allocation3 + $0x78] sm:$0xff] %vm2065, %v2117
    %2132 = vst.msk [vmem:[#allocation3 + $0x80] sm:$0xff] %vm2065, %v2119
    %2133 = vst.msk [vmem:[#allocation3 + $0x88] sm:$0xff] %vm2065, %v2121
    %2134 = vst.msk [vmem:[#allocation3 + $0x90] sm:$0xff] %vm2065, %v2123
    %2135 = vst.msk [vmem:[#allocation3 + $0x98] sm:$0xff] %vm2065, %v2125
    %2136 = vrot.lane.b32.xlu0 %v2026, 68
    %v2137 = vpop.permute.xlu0 %2136
    %2138 = vrot.lane.b32.xlu0 %v2034, 68
    %v2139 = vpop.permute.xlu0 %2138
    %2140 = vrot.lane.b32.xlu0 %v2042, 68
    %v2141 = vpop.permute.xlu0 %2140
    %2142 = vrot.lane.b32.xlu0 %v2050, 68
    %v2143 = vpop.permute.xlu0 %2142
    %2144 = vrot.lane.b32.xlu0 %v2058, 68
    %v2145 = vpop.permute.xlu0 %2144
    %2151 = vst.msk [vmem:[#allocation3 + $0xa0] sm:$0xff] %vm2065, %v2137
    %2152 = vst.msk [vmem:[#allocation3 + $0xa8] sm:$0xff] %vm2065, %v2139
    %2153 = vst.msk [vmem:[#allocation3 + $0xb0] sm:$0xff] %vm2065, %v2141
    %2154 = vst.msk [vmem:[#allocation3 + $0xb8] sm:$0xff] %vm2065, %v2143
    %2155 = vst.msk [vmem:[#allocation3 + $0xc0] sm:$0xff] %vm2065, %v2145
    %2156 = vrot.lane.b32.xlu0 %v2026, 53
    %v2157 = vpop.permute.xlu0 %2156
    %2158 = vrot.lane.b32.xlu0 %v2034, 53
    %v2159 = vpop.permute.xlu0 %2158
    %2160 = vrot.lane.b32.xlu0 %v2042, 53
    %v2161 = vpop.permute.xlu0 %2160
    %2162 = vrot.lane.b32.xlu0 %v2050, 53
    %v2163 = vpop.permute.xlu0 %2162
    %2164 = vrot.lane.b32.xlu0 %v2058, 53
    %v2165 = vpop.permute.xlu0 %2164
    %2171 = vst.msk [vmem:[#allocation3 + $0xc8] sm:$0xff] %vm2065, %v2157
    %2172 = vst.msk [vmem:[#allocation3 + $0xd0] sm:$0xff] %vm2065, %v2159
    %2173 = vst.msk [vmem:[#allocation3 + $0xd8] sm:$0xff] %vm2065, %v2161
    %2174 = vst.msk [vmem:[#allocation3 + $0xe0] sm:$0xff] %vm2065, %v2163
    %2175 = vst.msk [vmem:[#allocation3 + $0xe8] sm:$0xff] %vm2065, %v2165
    %2176 = vrot.lane.b32.xlu0 %v2026, 38
    %v2177 = vpop.permute.xlu0 %2176
    %2178 = vrot.lane.b32.xlu0 %v2034, 38
    %v2179 = vpop.permute.xlu0 %2178
    %2180 = vrot.lane.b32.xlu0 %v2042, 38
    %v2181 = vpop.permute.xlu0 %2180
    %2182 = vrot.lane.b32.xlu0 %v2050, 38
    %v2183 = vpop.permute.xlu0 %2182
    %2184 = vrot.lane.b32.xlu0 %v2058, 38
    %v2185 = vpop.permute.xlu0 %2184
    %2191 = vst.msk [vmem:[#allocation3 + $0xf0] sm:$0xff] %vm2065, %v2177
    %2192 = vst.msk [vmem:[#allocation3 + $0xf8] sm:$0xff] %vm2065, %v2179
    %2193 = vst.msk [vmem:[#allocation3 + $0x100] sm:$0xff] %vm2065, %v2181
    %2194 = vst.msk [vmem:[#allocation3 + $0x108] sm:$0xff] %vm2065, %v2183
    %2195 = vst.msk [vmem:[#allocation3 + $0x110] sm:$0xff] %vm2065, %v2185
    %2196 = vrot.lane.b32.xlu0 %v2026, 23
    %v2197 = vpop.permute.xlu0 %2196
    %2198 = vrot.lane.b32.xlu0 %v2034, 23
    %v2199 = vpop.permute.xlu0 %2198
    %2200 = vrot.lane.b32.xlu0 %v2042, 23
    %v2201 = vpop.permute.xlu0 %2200
    %2202 = vrot.lane.b32.xlu0 %v2050, 23
    %v2203 = vpop.permute.xlu0 %2202
    %2204 = vrot.lane.b32.xlu0 %v2058, 23
    %v2205 = vpop.permute.xlu0 %2204
    %2211 = vst.msk [vmem:[#allocation3 + $0x118] sm:$0xff] %vm2065, %v2197
    %2212 = vst.msk [vmem:[#allocation3 + $0x120] sm:$0xff] %vm2065, %v2199
    %2213 = vst.msk [vmem:[#allocation3 + $0x128] sm:$0xff] %vm2065, %v2201
    %2214 = vst.msk [vmem:[#allocation3 + $0x130] sm:$0xff] %vm2065, %v2203
    %2215 = vst.msk [vmem:[#allocation3 + $0x138] sm:$0xff] %vm2065, %v2205
    %2221 = vrot.lane.b32.xlu0 %v2026, 8
    %v2222 = vpop.permute.xlu0 %2221
    %2223 = vrot.lane.b32.xlu0 %v2028, 8
    %v2224 = vpop.permute.xlu0 %2223
    %2225 = vrot.lane.b32.xlu0 %v2034, 8
    %v2226 = vpop.permute.xlu0 %2225
    %2227 = vrot.lane.b32.xlu0 %v2036, 8
    %v2228 = vpop.permute.xlu0 %2227
    %2229 = vrot.lane.b32.xlu0 %v2042, 8
    %v2230 = vpop.permute.xlu0 %2229
    %2231 = vrot.lane.b32.xlu0 %v2044, 8
    %v2232 = vpop.permute.xlu0 %2231
    %2233 = vrot.lane.b32.xlu0 %v2050, 8
    %v2234 = vpop.permute.xlu0 %2233
    %2235 = vrot.lane.b32.xlu0 %v2052, 8
    %v2236 = vpop.permute.xlu0 %2235
    %2237 = vrot.lane.b32.xlu0 %v2058, 8
    %v2238 = vpop.permute.xlu0 %2237
    %2239 = vrot.lane.b32.xlu0 %v2060, 8
    %v2240 = vpop.permute.xlu0 %2239
    %v2241 = vsel %vm1399, %v2222, %v2224
    %v2242 = vsel %vm1399, %v2226, %v2228
    %v2243 = vsel %vm1399, %v2230, %v2232
    %v2244 = vsel %vm1399, %v2234, %v2236
    %v2245 = vsel %vm1399, %v2238, %v2240
    %2251 = vst.msk [vmem:[#allocation3 + $0x140] sm:$0xff] %vm2065, %v2241
    %2252 = vst.msk [vmem:[#allocation3 + $0x148] sm:$0xff] %vm2065, %v2242
    %2253 = vst.msk [vmem:[#allocation3 + $0x150] sm:$0xff] %vm2065, %v2243
    %2254 = vst.msk [vmem:[#allocation3 + $0x158] sm:$0xff] %vm2065, %v2244
    %2255 = vst.msk [vmem:[#allocation3 + $0x160] sm:$0xff] %vm2065, %v2245
    %2256 = vrot.lane.b32.xlu0 %v2028, 121
    %v2257 = vpop.permute.xlu0 %2256
    %2258 = vrot.lane.b32.xlu0 %v2036, 121
    %v2259 = vpop.permute.xlu0 %2258
    %2260 = vrot.lane.b32.xlu0 %v2044, 121
    %v2261 = vpop.permute.xlu0 %2260
    %2262 = vrot.lane.b32.xlu0 %v2052, 121
    %v2263 = vpop.permute.xlu0 %2262
    %2264 = vrot.lane.b32.xlu0 %v2060, 121
    %v2265 = vpop.permute.xlu0 %2264
    %2271 = vst.msk [vmem:[#allocation3 + $0x168] sm:$0xff] %vm2065, %v2257
    %2272 = vst.msk [vmem:[#allocation3 + $0x170] sm:$0xff] %vm2065, %v2259
    %2273 = vst.msk [vmem:[#allocation3 + $0x178] sm:$0xff] %vm2065, %v2261
    %2274 = vst.msk [vmem:[#allocation3 + $0x180] sm:$0xff] %vm2065, %v2263
    %2275 = vst.msk [vmem:[#allocation3 + $0x188] sm:$0xff] %vm2065, %v2265
    %2276 = vrot.lane.b32.xlu0 %v2028, 106
    %v2277 = vpop.permute.xlu0 %2276
    %2278 = vrot.lane.b32.xlu0 %v2036, 106
    %v2279 = vpop.permute.xlu0 %2278
    %2280 = vrot.lane.b32.xlu0 %v2044, 106
    %v2281 = vpop.permute.xlu0 %2280
    %2282 = vrot.lane.b32.xlu0 %v2052, 106
    %v2283 = vpop.permute.xlu0 %2282
    %2284 = vrot.lane.b32.xlu0 %v2060, 106
    %v2285 = vpop.permute.xlu0 %2284
    %2291 = vst.msk [vmem:[#allocation3 + $0x190] sm:$0xff] %vm2065, %v2277
    %2292 = vst.msk [vmem:[#allocation3 + $0x198] sm:$0xff] %vm2065, %v2279
    %2293 = vst.msk [vmem:[#allocation3 + $0x1a0] sm:$0xff] %vm2065, %v2281
    %2294 = vst.msk [vmem:[#allocation3 + $0x1a8] sm:$0xff] %vm2065, %v2283
    %2295 = vst.msk [vmem:[#allocation3 + $0x1b0] sm:$0xff] %vm2065, %v2285
    %2296 = vrot.lane.b32.xlu0 %v2028, 91
    %v2297 = vpop.permute.xlu0 %2296
    %2298 = vrot.lane.b32.xlu0 %v2036, 91
    %v2299 = vpop.permute.xlu0 %2298
    %2300 = vrot.lane.b32.xlu0 %v2044, 91
    %v2301 = vpop.permute.xlu0 %2300
    %2302 = vrot.lane.b32.xlu0 %v2052, 91
    %v2303 = vpop.permute.xlu0 %2302
    %2304 = vrot.lane.b32.xlu0 %v2060, 91
    %v2305 = vpop.permute.xlu0 %2304
    %2311 = vst.msk [vmem:[#allocation3 + $0x1b8] sm:$0xff] %vm2065, %v2297
    %2312 = vst.msk [vmem:[#allocation3 + $0x1c0] sm:$0xff] %vm2065, %v2299
    %2313 = vst.msk [vmem:[#allocation3 + $0x1c8] sm:$0xff] %vm2065, %v2301
    %2314 = vst.msk [vmem:[#allocation3 + $0x1d0] sm:$0xff] %vm2065, %v2303
    %2315 = vst.msk [vmem:[#allocation3 + $0x1d8] sm:$0xff] %vm2065, %v2305
    %2316 = vrot.lane.b32.xlu0 %v2028, 76
    %v2317 = vpop.permute.xlu0 %2316
    %2318 = vrot.lane.b32.xlu0 %v2036, 76
    %v2319 = vpop.permute.xlu0 %2318
    %2320 = vrot.lane.b32.xlu0 %v2044, 76
    %v2321 = vpop.permute.xlu0 %2320
    %2322 = vrot.lane.b32.xlu0 %v2052, 76
    %v2323 = vpop.permute.xlu0 %2322
    %2324 = vrot.lane.b32.xlu0 %v2060, 76
    %v2325 = vpop.permute.xlu0 %2324
    %2331 = vst.msk [vmem:[#allocation3 + $0x1e0] sm:$0xff] %vm2065, %v2317
    %2332 = vst.msk [vmem:[#allocation3 + $0x1e8] sm:$0xff] %vm2065, %v2319
    %2333 = vst.msk [vmem:[#allocation3 + $0x1f0] sm:$0xff] %vm2065, %v2321
    %2334 = vst.msk [vmem:[#allocation3 + $0x1f8] sm:$0xff] %vm2065, %v2323
    %2335 = vst.msk [vmem:[#allocation3 + $0x200] sm:$0xff] %vm2065, %v2325
    %2336 = vrot.lane.b32.xlu0 %v2028, 61
    %v2337 = vpop.permute.xlu0 %2336
    %2338 = vrot.lane.b32.xlu0 %v2036, 61
    %v2339 = vpop.permute.xlu0 %2338
    %2340 = vrot.lane.b32.xlu0 %v2044, 61
    %v2341 = vpop.permute.xlu0 %2340
    %2342 = vrot.lane.b32.xlu0 %v2052, 61
    %v2343 = vpop.permute.xlu0 %2342
    %2344 = vrot.lane.b32.xlu0 %v2060, 61
    %v2345 = vpop.permute.xlu0 %2344
    %2351 = vst.msk [vmem:[#allocation3 + $0x208] sm:$0xff] %vm2065, %v2337
    %2352 = vst.msk [vmem:[#allocation3 + $0x210] sm:$0xff] %vm2065, %v2339
    %2353 = vst.msk [vmem:[#allocation3 + $0x218] sm:$0xff] %vm2065, %v2341
    %2354 = vst.msk [vmem:[#allocation3 + $0x220] sm:$0xff] %vm2065, %v2343
    %2355 = vst.msk [vmem:[#allocation3 + $0x228] sm:$0xff] %vm2065, %v2345
    %2356 = vrot.lane.b32.xlu0 %v2028, 46
    %v2357 = vpop.permute.xlu0 %2356
    %2358 = vrot.lane.b32.xlu0 %v2036, 46
    %v2359 = vpop.permute.xlu0 %2358
    %2360 = vrot.lane.b32.xlu0 %v2044, 46
    %v2361 = vpop.permute.xlu0 %2360
    %2362 = vrot.lane.b32.xlu0 %v2052, 46
    %v2363 = vpop.permute.xlu0 %2362
    %2364 = vrot.lane.b32.xlu0 %v2060, 46
    %v2365 = vpop.permute.xlu0 %2364
    %2371 = vst.msk [vmem:[#allocation3 + $0x230] sm:$0xff] %vm2065, %v2357
    %2372 = vst.msk [vmem:[#allocation3 + $0x238] sm:$0xff] %vm2065, %v2359
    %2373 = vst.msk [vmem:[#allocation3 + $0x240] sm:$0xff] %vm2065, %v2361
    %2374 = vst.msk [vmem:[#allocation3 + $0x248] sm:$0xff] %vm2065, %v2363
    %2375 = vst.msk [vmem:[#allocation3 + $0x250] sm:$0xff] %vm2065, %v2365
    %2376 = vrot.lane.b32.xlu0 %v2028, 31
    %v2377 = vpop.permute.xlu0 %2376
    %2378 = vrot.lane.b32.xlu0 %v2036, 31
    %v2379 = vpop.permute.xlu0 %2378
    %2380 = vrot.lane.b32.xlu0 %v2044, 31
    %v2381 = vpop.permute.xlu0 %2380
    %2382 = vrot.lane.b32.xlu0 %v2052, 31
    %v2383 = vpop.permute.xlu0 %2382
    %2384 = vrot.lane.b32.xlu0 %v2060, 31
    %v2385 = vpop.permute.xlu0 %2384
    %2391 = vst.msk [vmem:[#allocation3 + $0x258] sm:$0xff] %vm2065, %v2377
    %2392 = vst.msk [vmem:[#allocation3 + $0x260] sm:$0xff] %vm2065, %v2379
    %2393 = vst.msk [vmem:[#allocation3 + $0x268] sm:$0xff] %vm2065, %v2381
    %2394 = vst.msk [vmem:[#allocation3 + $0x270] sm:$0xff] %vm2065, %v2383
    %2395 = vst.msk [vmem:[#allocation3 + $0x278] sm:$0xff] %vm2065, %v2385
    %2396 = vrot.lane.b32.xlu0 %v2028, 16
    %v2397 = vpop.permute.xlu0 %2396
    %2398 = vrot.lane.b32.xlu0 %v2036, 16
    %v2399 = vpop.permute.xlu0 %2398
    %2400 = vrot.lane.b32.xlu0 %v2044, 16
    %v2401 = vpop.permute.xlu0 %2400
    %2402 = vrot.lane.b32.xlu0 %v2052, 16
    %v2403 = vpop.permute.xlu0 %2402
    %2404 = vrot.lane.b32.xlu0 %v2060, 16
    %v2405 = vpop.permute.xlu0 %2404
    %2411 = vst.msk [vmem:[#allocation3 + $0x280] sm:$0xff] %vm2065, %v2397
    %2412 = vst.msk [vmem:[#allocation3 + $0x288] sm:$0xff] %vm2065, %v2399
    %2413 = vst.msk [vmem:[#allocation3 + $0x290] sm:$0xff] %vm2065, %v2401
    %2414 = vst.msk [vmem:[#allocation3 + $0x298] sm:$0xff] %vm2065, %v2403
    %2415 = vst.msk [vmem:[#allocation3 + $0x2a0] sm:$0xff] %vm2065, %v2405
    %2421 = vrot.lane.b32.xlu0 %v2028, 1
    %v2422 = vpop.permute.xlu0 %2421
    %2423 = vrot.lane.b32.xlu0 %v2030, 1
    %v2424 = vpop.permute.xlu0 %2423
    %2425 = vrot.lane.b32.xlu0 %v2036, 1
    %v2426 = vpop.permute.xlu0 %2425
    %2427 = vrot.lane.b32.xlu0 %v2038, 1
    %v2428 = vpop.permute.xlu0 %2427
    %2429 = vrot.lane.b32.xlu0 %v2044, 1
    %v2430 = vpop.permute.xlu0 %2429
    %2431 = vrot.lane.b32.xlu0 %v2046, 1
    %v2432 = vpop.permute.xlu0 %2431
    %2433 = vrot.lane.b32.xlu0 %v2052, 1
    %v2434 = vpop.permute.xlu0 %2433
    %2435 = vrot.lane.b32.xlu0 %v2054, 1
    %v2436 = vpop.permute.xlu0 %2435
    %2437 = vrot.lane.b32.xlu0 %v2060, 1
    %v2438 = vpop.permute.xlu0 %2437
    %2439 = vrot.lane.b32.xlu0 %v2062, 1
    %v2440 = vpop.permute.xlu0 %2439
    %vm2441 = vcmask 7168
    %v2442 = vsel %vm2441, %v2422, %v2424
    %v2443 = vsel %vm2441, %v2426, %v2428
    %v2444 = vsel %vm2441, %v2430, %v2432
    %v2445 = vsel %vm2441, %v2434, %v2436
    %v2446 = vsel %vm2441, %v2438, %v2440
    %2452 = vst.msk [vmem:[#allocation3 + $0x2a8] sm:$0xff] %vm2065, %v2442
    %2453 = vst.msk [vmem:[#allocation3 + $0x2b0] sm:$0xff] %vm2065, %v2443
    %2454 = vst.msk [vmem:[#allocation3 + $0x2b8] sm:$0xff] %vm2065, %v2444
    %2455 = vst.msk [vmem:[#allocation3 + $0x2c0] sm:$0xff] %vm2065, %v2445
    %2456 = vst.msk [vmem:[#allocation3 + $0x2c8] sm:$0xff] %vm2065, %v2446
    %2457 = vrot.lane.b32.xlu0 %v2030, 114
    %v2458 = vpop.permute.xlu0 %2457
    %2459 = vrot.lane.b32.xlu0 %v2038, 114
    %v2460 = vpop.permute.xlu0 %2459
    %2461 = vrot.lane.b32.xlu0 %v2046, 114
    %v2462 = vpop.permute.xlu0 %2461
    %2463 = vrot.lane.b32.xlu0 %v2054, 114
    %v2464 = vpop.permute.xlu0 %2463
    %2465 = vrot.lane.b32.xlu0 %v2062, 114
    %v2466 = vpop.permute.xlu0 %2465
    %2472 = vst.msk [vmem:[#allocation3 + $0x2d0] sm:$0xff] %vm2065, %v2458
    %2473 = vst.msk [vmem:[#allocation3 + $0x2d8] sm:$0xff] %vm2065, %v2460
    %2474 = vst.msk [vmem:[#allocation3 + $0x2e0] sm:$0xff] %vm2065, %v2462
    %2475 = vst.msk [vmem:[#allocation3 + $0x2e8] sm:$0xff] %vm2065, %v2464
    %2476 = vst.msk [vmem:[#allocation3 + $0x2f0] sm:$0xff] %vm2065, %v2466
    %2477 = vrot.lane.b32.xlu0 %v2030, 99
    %v2478 = vpop.permute.xlu0 %2477
    %2479 = vrot.lane.b32.xlu0 %v2038, 99
    %v2480 = vpop.permute.xlu0 %2479
    %2481 = vrot.lane.b32.xlu0 %v2046, 99
    %v2482 = vpop.permute.xlu0 %2481
    %2483 = vrot.lane.b32.xlu0 %v2054, 99
    %v2484 = vpop.permute.xlu0 %2483
    %2485 = vrot.lane.b32.xlu0 %v2062, 99
    %v2486 = vpop.permute.xlu0 %2485
    %2492 = vst.msk [vmem:[#allocation3 + $0x2f8] sm:$0xff] %vm2065, %v2478
    %2493 = vst.msk [vmem:[#allocation3 + $0x300] sm:$0xff] %vm2065, %v2480
    %2494 = vst.msk [vmem:[#allocation3 + $0x308] sm:$0xff] %vm2065, %v2482
    %2495 = vst.msk [vmem:[#allocation3 + $0x310] sm:$0xff] %vm2065, %v2484
    %2496 = vst.msk [vmem:[#allocation3 + $0x318] sm:$0xff] %vm2065, %v2486
    %2497 = vrot.lane.b32.xlu0 %v2030, 84
    %v2498 = vpop.permute.xlu0 %2497
    %2499 = vrot.lane.b32.xlu0 %v2038, 84
    %v2500 = vpop.permute.xlu0 %2499
    %2501 = vrot.lane.b32.xlu0 %v2046, 84
    %v2502 = vpop.permute.xlu0 %2501
    %2503 = vrot.lane.b32.xlu0 %v2054, 84
    %v2504 = vpop.permute.xlu0 %2503
    %2505 = vrot.lane.b32.xlu0 %v2062, 84
    %v2506 = vpop.permute.xlu0 %2505
    %2512 = vst.msk [vmem:[#allocation3 + $0x320] sm:$0xff] %vm2065, %v2498
    %2513 = vst.msk [vmem:[#allocation3 + $0x328] sm:$0xff] %vm2065, %v2500
    %2514 = vst.msk [vmem:[#allocation3 + $0x330] sm:$0xff] %vm2065, %v2502
    %2515 = vst.msk [vmem:[#allocation3 + $0x338] sm:$0xff] %vm2065, %v2504
    %2516 = vst.msk [vmem:[#allocation3 + $0x340] sm:$0xff] %vm2065, %v2506
    %2517 = vrot.lane.b32.xlu0 %v2030, 69
    %v2518 = vpop.permute.xlu0 %2517
    %2519 = vrot.lane.b32.xlu0 %v2038, 69
    %v2520 = vpop.permute.xlu0 %2519
    %2521 = vrot.lane.b32.xlu0 %v2046, 69
    %v2522 = vpop.permute.xlu0 %2521
    %2523 = vrot.lane.b32.xlu0 %v2054, 69
    %v2524 = vpop.permute.xlu0 %2523
    %2525 = vrot.lane.b32.xlu0 %v2062, 69
    %v2526 = vpop.permute.xlu0 %2525
    %2532 = vst.msk [vmem:[#allocation3 + $0x348] sm:$0xff] %vm2065, %v2518
    %2533 = vst.msk [vmem:[#allocation3 + $0x350] sm:$0xff] %vm2065, %v2520
    %2534 = vst.msk [vmem:[#allocation3 + $0x358] sm:$0xff] %vm2065, %v2522
    %2535 = vst.msk [vmem:[#allocation3 + $0x360] sm:$0xff] %vm2065, %v2524
    %2536 = vst.msk [vmem:[#allocation3 + $0x368] sm:$0xff] %vm2065, %v2526
    %2537 = vrot.lane.b32.xlu0 %v2030, 54
    %v2538 = vpop.permute.xlu0 %2537
    %2539 = vrot.lane.b32.xlu0 %v2038, 54
    %v2540 = vpop.permute.xlu0 %2539
    %2541 = vrot.lane.b32.xlu0 %v2046, 54
    %v2542 = vpop.permute.xlu0 %2541
    %2543 = vrot.lane.b32.xlu0 %v2054, 54
    %v2544 = vpop.permute.xlu0 %2543
    %2545 = vrot.lane.b32.xlu0 %v2062, 54
    %v2546 = vpop.permute.xlu0 %2545
    %2552 = vst.msk [vmem:[#allocation3 + $0x370] sm:$0xff] %vm2065, %v2538
    %2553 = vst.msk [vmem:[#allocation3 + $0x378] sm:$0xff] %vm2065, %v2540
    %2554 = vst.msk [vmem:[#allocation3 + $0x380] sm:$0xff] %vm2065, %v2542
    %2555 = vst.msk [vmem:[#allocation3 + $0x388] sm:$0xff] %vm2065, %v2544
    %2556 = vst.msk [vmem:[#allocation3 + $0x390] sm:$0xff] %vm2065, %v2546
    %2557 = vrot.lane.b32.xlu0 %v2030, 39
    %v2558 = vpop.permute.xlu0 %2557
    %2559 = vrot.lane.b32.xlu0 %v2038, 39
    %v2560 = vpop.permute.xlu0 %2559
    %2561 = vrot.lane.b32.xlu0 %v2046, 39
    %v2562 = vpop.permute.xlu0 %2561
    %2563 = vrot.lane.b32.xlu0 %v2054, 39
    %v2564 = vpop.permute.xlu0 %2563
    %2565 = vrot.lane.b32.xlu0 %v2062, 39
    %v2566 = vpop.permute.xlu0 %2565
    %2572 = vst.msk [vmem:[#allocation3 + $0x398] sm:$0xff] %vm2065, %v2558
    %2573 = vst.msk [vmem:[#allocation3 + $0x3a0] sm:$0xff] %vm2065, %v2560
    %2574 = vst.msk [vmem:[#allocation3 + $0x3a8] sm:$0xff] %vm2065, %v2562
    %2575 = vst.msk [vmem:[#allocation3 + $0x3b0] sm:$0xff] %vm2065, %v2564
    %2576 = vst.msk [vmem:[#allocation3 + $0x3b8] sm:$0xff] %vm2065, %v2566
    %2577 = vrot.lane.b32.xlu0 %v2030, 24
    %v2578 = vpop.permute.xlu0 %2577
    %2579 = vrot.lane.b32.xlu0 %v2038, 24
    %v2580 = vpop.permute.xlu0 %2579
    %2581 = vrot.lane.b32.xlu0 %v2046, 24
    %v2582 = vpop.permute.xlu0 %2581
    %2583 = vrot.lane.b32.xlu0 %v2054, 24
    %v2584 = vpop.permute.xlu0 %2583
    %2585 = vrot.lane.b32.xlu0 %v2062, 24
    %v2586 = vpop.permute.xlu0 %2585
    %2592 = vst.msk [vmem:[#allocation3 + $0x3c0] sm:$0xff] %vm2065, %v2578
    %2593 = vst.msk [vmem:[#allocation3 + $0x3c8] sm:$0xff] %vm2065, %v2580
    %2594 = vst.msk [vmem:[#allocation3 + $0x3d0] sm:$0xff] %vm2065, %v2582
    %2595 = vst.msk [vmem:[#allocation3 + $0x3d8] sm:$0xff] %vm2065, %v2584
    %2596 = vst.msk [vmem:[#allocation3 + $0x3e0] sm:$0xff] %vm2065, %v2586
    %2602 = vrot.lane.b32.xlu0 %v2030, 9
    %v2603 = vpop.permute.xlu0 %2602
    %2604 = vrot.lane.b32.xlu0 %v2032, 9
    %v2605 = vpop.permute.xlu0 %2604
    %2606 = vrot.lane.b32.xlu0 %v2038, 9
    %v2607 = vpop.permute.xlu0 %2606
    %2608 = vrot.lane.b32.xlu0 %v2040, 9
    %v2609 = vpop.permute.xlu0 %2608
    %2610 = vrot.lane.b32.xlu0 %v2046, 9
    %v2611 = vpop.permute.xlu0 %2610
    %2612 = vrot.lane.b32.xlu0 %v2048, 9
    %v2613 = vpop.permute.xlu0 %2612
    %2614 = vrot.lane.b32.xlu0 %v2054, 9
    %v2615 = vpop.permute.xlu0 %2614
    %2616 = vrot.lane.b32.xlu0 %v2056, 9
    %v2617 = vpop.permute.xlu0 %2616
    %2618 = vrot.lane.b32.xlu0 %v2062, 9
    %v2619 = vpop.permute.xlu0 %2618
    %2620 = vrot.lane.b32.xlu0 %v2064, 9
    %v2621 = vpop.permute.xlu0 %2620
    %vm2622 = vcmask 72704
    %v2623 = vsel %vm2622, %v2603, %v2605
    %v2624 = vsel %vm2622, %v2607, %v2609
    %v2625 = vsel %vm2622, %v2611, %v2613
    %v2626 = vsel %vm2622, %v2615, %v2617
    %v2627 = vsel %vm2622, %v2619, %v2621
    %2633 = vst.msk [vmem:[#allocation3 + $0x3e8] sm:$0xff] %vm2065, %v2623
    %2634 = vst.msk [vmem:[#allocation3 + $0x3f0] sm:$0xff] %vm2065, %v2624
    %2635 = vst.msk [vmem:[#allocation3 + $0x3f8] sm:$0xff] %vm2065, %v2625
    %2636 = vst.msk [vmem:[#allocation3 + $0x400] sm:$0xff] %vm2065, %v2626
    %2637 = vst.msk [vmem:[#allocation3 + $0x408] sm:$0xff] %vm2065, %v2627
    %2638 = vrot.lane.b32.xlu0 %v2032, 122
    %v2639 = vpop.permute.xlu0 %2638
    %2640 = vrot.lane.b32.xlu0 %v2040, 122
    %v2641 = vpop.permute.xlu0 %2640
    %2642 = vrot.lane.b32.xlu0 %v2048, 122
    %v2643 = vpop.permute.xlu0 %2642
    %2644 = vrot.lane.b32.xlu0 %v2056, 122
    %v2645 = vpop.permute.xlu0 %2644
    %2646 = vrot.lane.b32.xlu0 %v2064, 122
    %v2647 = vpop.permute.xlu0 %2646
    %2653 = vst.msk [vmem:[#allocation3 + $0x410] sm:$0xff] %vm2065, %v2639
    %2654 = vst.msk [vmem:[#allocation3 + $0x418] sm:$0xff] %vm2065, %v2641
    %2655 = vst.msk [vmem:[#allocation3 + $0x420] sm:$0xff] %vm2065, %v2643
    %2656 = vst.msk [vmem:[#allocation3 + $0x428] sm:$0xff] %vm2065, %v2645
    %2657 = vst.msk [vmem:[#allocation3 + $0x430] sm:$0xff] %vm2065, %v2647
    %2658 = vrot.lane.b32.xlu0 %v2032, 107
    %v2659 = vpop.permute.xlu0 %2658
    %2660 = vrot.lane.b32.xlu0 %v2040, 107
    %v2661 = vpop.permute.xlu0 %2660
    %2662 = vrot.lane.b32.xlu0 %v2048, 107
    %v2663 = vpop.permute.xlu0 %2662
    %2664 = vrot.lane.b32.xlu0 %v2056, 107
    %v2665 = vpop.permute.xlu0 %2664
    %2666 = vrot.lane.b32.xlu0 %v2064, 107
    %v2667 = vpop.permute.xlu0 %2666
    %2673 = vst.msk [vmem:[#allocation3 + $0x438] sm:$0xff] %vm2065, %v2659
    %2674 = vst.msk [vmem:[#allocation3 + $0x440] sm:$0xff] %vm2065, %v2661
    %2675 = vst.msk [vmem:[#allocation3 + $0x448] sm:$0xff] %vm2065, %v2663
    %2676 = vst.msk [vmem:[#allocation3 + $0x450] sm:$0xff] %vm2065, %v2665
    %2677 = vst.msk [vmem:[#allocation3 + $0x458] sm:$0xff] %vm2065, %v2667
    %2678 = vrot.lane.b32.xlu0 %v2032, 92
    %v2679 = vpop.permute.xlu0 %2678
    %2680 = vrot.lane.b32.xlu0 %v2040, 92
    %v2681 = vpop.permute.xlu0 %2680
    %2682 = vrot.lane.b32.xlu0 %v2048, 92
    %v2683 = vpop.permute.xlu0 %2682
    %2684 = vrot.lane.b32.xlu0 %v2056, 92
    %v2685 = vpop.permute.xlu0 %2684
    %2686 = vrot.lane.b32.xlu0 %v2064, 92
    %v2687 = vpop.permute.xlu0 %2686
    %2693 = vst.msk [vmem:[#allocation3 + $0x460] sm:$0xff] %vm2065, %v2679
    %2694 = vst.msk [vmem:[#allocation3 + $0x468] sm:$0xff] %vm2065, %v2681
    %2695 = vst.msk [vmem:[#allocation3 + $0x470] sm:$0xff] %vm2065, %v2683
    %2696 = vst.msk [vmem:[#allocation3 + $0x478] sm:$0xff] %vm2065, %v2685
    %2697 = vst.msk [vmem:[#allocation3 + $0x480] sm:$0xff] %vm2065, %v2687
    %2698 = vrot.lane.b32.xlu0 %v2032, 77
    %v2699 = vpop.permute.xlu0 %2698
    %2700 = vrot.lane.b32.xlu0 %v2040, 77
    %v2701 = vpop.permute.xlu0 %2700
    %2702 = vrot.lane.b32.xlu0 %v2048, 77
    %v2703 = vpop.permute.xlu0 %2702
    %2704 = vrot.lane.b32.xlu0 %v2056, 77
    %v2705 = vpop.permute.xlu0 %2704
    %2706 = vrot.lane.b32.xlu0 %v2064, 77
    %v2707 = vpop.permute.xlu0 %2706
    %2713 = vst.msk [vmem:[#allocation3 + $0x488] sm:$0xff] %vm2065, %v2699
    %2714 = vst.msk [vmem:[#allocation3 + $0x490] sm:$0xff] %vm2065, %v2701
    %2715 = vst.msk [vmem:[#allocation3 + $0x498] sm:$0xff] %vm2065, %v2703
    %2716 = vst.msk [vmem:[#allocation3 + $0x4a0] sm:$0xff] %vm2065, %v2705
    %2717 = vst.msk [vmem:[#allocation3 + $0x4a8] sm:$0xff] %vm2065, %v2707
    %v2718 = vld [vmem:[#allocation3] sm:$0xff]
    %v2719 = vld [vmem:[#allocation3 + $0x8] sm:$0xff]
    %v2720 = vld [vmem:[#allocation3 + $0x10] sm:$0xff]
    %v2721 = vld [vmem:[#allocation3 + $0x18] sm:$0xff]
    %v2722 = vld [vmem:[#allocation3 + $0x20] sm:$0xff]
    %v2723 = vld [vmem:[#allocation3 + $0x28] sm:$0xff]
    %v2724 = vld [vmem:[#allocation3 + $0x30] sm:$0xff]
    %v2725 = vld [vmem:[#allocation3 + $0x38] sm:$0xff]
    %v2726 = vld [vmem:[#allocation3 + $0x40] sm:$0xff]
    %v2727 = vld [vmem:[#allocation3 + $0x48] sm:$0xff]
    %v2728 = vld [vmem:[#allocation3 + $0x50] sm:$0xff]
    %v2729 = vld [vmem:[#allocation3 + $0x58] sm:$0xff]
    %v2730 = vld [vmem:[#allocation3 + $0x60] sm:$0xff]
    %v2731 = vld [vmem:[#allocation3 + $0x68] sm:$0xff]
    %v2732 = vld [vmem:[#allocation3 + $0x70] sm:$0xff]
    %v2733 = vld [vmem:[#allocation3 + $0x78] sm:$0xff]
    %v2734 = vld [vmem:[#allocation3 + $0x80] sm:$0xff]
    %v2735 = vld [vmem:[#allocation3 + $0x88] sm:$0xff]
    %v2736 = vld [vmem:[#allocation3 + $0x90] sm:$0xff]
    %v2737 = vld [vmem:[#allocation3 + $0x98] sm:$0xff]
    %v2738 = vld [vmem:[#allocation3 + $0xa0] sm:$0xff]
    %v2739 = vld [vmem:[#allocation3 + $0xa8] sm:$0xff]
    %v2740 = vld [vmem:[#allocation3 + $0xb0] sm:$0xff]
    %v2741 = vld [vmem:[#allocation3 + $0xb8] sm:$0xff]
    %v2742 = vld [vmem:[#allocation3 + $0xc0] sm:$0xff]
    %v2743 = vld [vmem:[#allocation3 + $0xc8] sm:$0xff]
    %v2744 = vld [vmem:[#allocation3 + $0xd0] sm:$0xff]
    %v2745 = vld [vmem:[#allocation3 + $0xd8] sm:$0xff]
    %v2746 = vld [vmem:[#allocation3 + $0xe0] sm:$0xff]
    %v2747 = vld [vmem:[#allocation3 + $0xe8] sm:$0xff]
    %v2748 = vld [vmem:[#allocation3 + $0xf0] sm:$0xff]
    %v2749 = vld [vmem:[#allocation3 + $0xf8] sm:$0xff]
    %v2750 = vld [vmem:[#allocation3 + $0x100] sm:$0xff]
    %v2751 = vld [vmem:[#allocation3 + $0x108] sm:$0xff]
    %v2752 = vld [vmem:[#allocation3 + $0x110] sm:$0xff]
    %v2753 = vld [vmem:[#allocation3 + $0x118] sm:$0xff]
    %v2754 = vld [vmem:[#allocation3 + $0x120] sm:$0xff]
    %v2755 = vld [vmem:[#allocation3 + $0x128] sm:$0xff]
    %v2756 = vld [vmem:[#allocation3 + $0x130] sm:$0xff]
    %v2757 = vld [vmem:[#allocation3 + $0x138] sm:$0xff]
    %v2758 = vld [vmem:[#allocation3 + $0x140] sm:$0xff]
    %v2759 = vld [vmem:[#allocation3 + $0x148] sm:$0xff]
    %v2760 = vld [vmem:[#allocation3 + $0x150] sm:$0xff]
    %v2761 = vld [vmem:[#allocation3 + $0x158] sm:$0xff]
    %v2762 = vld [vmem:[#allocation3 + $0x160] sm:$0xff]
    %v2763 = vld [vmem:[#allocation3 + $0x168] sm:$0xff]
    %v2764 = vld [vmem:[#allocation3 + $0x170] sm:$0xff]
    %v2765 = vld [vmem:[#allocation3 + $0x178] sm:$0xff]
    %v2766 = vld [vmem:[#allocation3 + $0x180] sm:$0xff]
    %v2767 = vld [vmem:[#allocation3 + $0x188] sm:$0xff]
    %v2768 = vld [vmem:[#allocation3 + $0x190] sm:$0xff]
    %v2769 = vld [vmem:[#allocation3 + $0x198] sm:$0xff]
    %v2770 = vld [vmem:[#allocation3 + $0x1a0] sm:$0xff]
    %v2771 = vld [vmem:[#allocation3 + $0x1a8] sm:$0xff]
    %v2772 = vld [vmem:[#allocation3 + $0x1b0] sm:$0xff]
    %v2773 = vld [vmem:[#allocation3 + $0x1b8] sm:$0xff]
    %v2774 = vld [vmem:[#allocation3 + $0x1c0] sm:$0xff]
    %v2775 = vld [vmem:[#allocation3 + $0x1c8] sm:$0xff]
    %v2776 = vld [vmem:[#allocation3 + $0x1d0] sm:$0xff]
    %v2777 = vld [vmem:[#allocation3 + $0x1d8] sm:$0xff]
    %v2778 = vld [vmem:[#allocation3 + $0x1e0] sm:$0xff]
    %v2779 = vld [vmem:[#allocation3 + $0x1e8] sm:$0xff]
    %v2780 = vld [vmem:[#allocation3 + $0x1f0] sm:$0xff]
    %v2781 = vld [vmem:[#allocation3 + $0x1f8] sm:$0xff]
    %v2782 = vld [vmem:[#allocation3 + $0x200] sm:$0xff]
    %v2783 = vld [vmem:[#allocation3 + $0x208] sm:$0xff]
    %v2784 = vld [vmem:[#allocation3 + $0x210] sm:$0xff]
    %v2785 = vld [vmem:[#allocation3 + $0x218] sm:$0xff]
    %v2786 = vld [vmem:[#allocation3 + $0x220] sm:$0xff]
    %v2787 = vld [vmem:[#allocation3 + $0x228] sm:$0xff]
    %v2788 = vld [vmem:[#allocation3 + $0x230] sm:$0xff]
    %v2789 = vld [vmem:[#allocation3 + $0x238] sm:$0xff]
    %v2790 = vld [vmem:[#allocation3 + $0x240] sm:$0xff]
    %v2791 = vld [vmem:[#allocation3 + $0x248] sm:$0xff]
    %v2792 = vld [vmem:[#allocation3 + $0x250] sm:$0xff]
    %v2793 = vld [vmem:[#allocation3 + $0x258] sm:$0xff]
    %v2794 = vld [vmem:[#allocation3 + $0x260] sm:$0xff]
    %v2795 = vld [vmem:[#allocation3 + $0x268] sm:$0xff]
    %v2796 = vld [vmem:[#allocation3 + $0x270] sm:$0xff]
    %v2797 = vld [vmem:[#allocation3 + $0x278] sm:$0xff]
    %v2798 = vld [vmem:[#allocation3 + $0x280] sm:$0xff]
    %v2799 = vld [vmem:[#allocation3 + $0x288] sm:$0xff]
    %v2800 = vld [vmem:[#allocation3 + $0x290] sm:$0xff]
    %v2801 = vld [vmem:[#allocation3 + $0x298] sm:$0xff]
    %v2802 = vld [vmem:[#allocation3 + $0x2a0] sm:$0xff]
    %v2803 = vld [vmem:[#allocation3 + $0x2a8] sm:$0xff]
    %v2804 = vld [vmem:[#allocation3 + $0x2b0] sm:$0xff]
    %v2805 = vld [vmem:[#allocation3 + $0x2b8] sm:$0xff]
    %v2806 = vld [vmem:[#allocation3 + $0x2c0] sm:$0xff]
    %v2807 = vld [vmem:[#allocation3 + $0x2c8] sm:$0xff]
    %v2808 = vld [vmem:[#allocation3 + $0x2d0] sm:$0xff]
    %v2809 = vld [vmem:[#allocation3 + $0x2d8] sm:$0xff]
    %v2810 = vld [vmem:[#allocation3 + $0x2e0] sm:$0xff]
    %v2811 = vld [vmem:[#allocation3 + $0x2e8] sm:$0xff]
    %v2812 = vld [vmem:[#allocation3 + $0x2f0] sm:$0xff]
    %v2813 = vld [vmem:[#allocation3 + $0x2f8] sm:$0xff]
    %v2814 = vld [vmem:[#allocation3 + $0x300] sm:$0xff]
    %v2815 = vld [vmem:[#allocation3 + $0x308] sm:$0xff]
    %v2816 = vld [vmem:[#allocation3 + $0x310] sm:$0xff]
    %v2817 = vld [vmem:[#allocation3 + $0x318] sm:$0xff]
    %v2818 = vld [vmem:[#allocation3 + $0x320] sm:$0xff]
    %v2819 = vld [vmem:[#allocation3 + $0x328] sm:$0xff]
    %v2820 = vld [vmem:[#allocation3 + $0x330] sm:$0xff]
    %v2821 = vld [vmem:[#allocation3 + $0x338] sm:$0xff]
    %v2822 = vld [vmem:[#allocation3 + $0x340] sm:$0xff]
    %v2823 = vld [vmem:[#allocation3 + $0x348] sm:$0xff]
    %v2824 = vld [vmem:[#allocation3 + $0x350] sm:$0xff]
    %v2825 = vld [vmem:[#allocation3 + $0x358] sm:$0xff]
    %v2826 = vld [vmem:[#allocation3 + $0x360] sm:$0xff]
    %v2827 = vld [vmem:[#allocation3 + $0x368] sm:$0xff]
    %v2828 = vld [vmem:[#allocation3 + $0x370] sm:$0xff]
    %v2829 = vld [vmem:[#allocation3 + $0x378] sm:$0xff]
    %v2830 = vld [vmem:[#allocation3 + $0x380] sm:$0xff]
    %v2831 = vld [vmem:[#allocation3 + $0x388] sm:$0xff]
    %v2832 = vld [vmem:[#allocation3 + $0x390] sm:$0xff]
    %v2833 = vld [vmem:[#allocation3 + $0x398] sm:$0xff]
    %v2834 = vld [vmem:[#allocation3 + $0x3a0] sm:$0xff]
    %v2835 = vld [vmem:[#allocation3 + $0x3a8] sm:$0xff]
    %v2836 = vld [vmem:[#allocation3 + $0x3b0] sm:$0xff]
    %v2837 = vld [vmem:[#allocation3 + $0x3b8] sm:$0xff]
    %v2838 = vld [vmem:[#allocation3 + $0x3c0] sm:$0xff]
    %v2839 = vld [vmem:[#allocation3 + $0x3c8] sm:$0xff]
    %v2840 = vld [vmem:[#allocation3 + $0x3d0] sm:$0xff]
    %v2841 = vld [vmem:[#allocation3 + $0x3d8] sm:$0xff]
    %v2842 = vld [vmem:[#allocation3 + $0x3e0] sm:$0xff]
    %v2843 = vld [vmem:[#allocation3 + $0x3e8] sm:$0xff]
    %v2844 = vld [vmem:[#allocation3 + $0x3f0] sm:$0xff]
    %v2845 = vld [vmem:[#allocation3 + $0x3f8] sm:$0xff]
    %v2846 = vld [vmem:[#allocation3 + $0x400] sm:$0xff]
    %v2847 = vld [vmem:[#allocation3 + $0x408] sm:$0xff]
    %v2848 = vld [vmem:[#allocation3 + $0x410] sm:$0xff]
    %v2849 = vld [vmem:[#allocation3 + $0x418] sm:$0xff]
    %v2850 = vld [vmem:[#allocation3 + $0x420] sm:$0xff]
    %v2851 = vld [vmem:[#allocation3 + $0x428] sm:$0xff]
    %v2852 = vld [vmem:[#allocation3 + $0x430] sm:$0xff]
    %v2853 = vld [vmem:[#allocation3 + $0x438] sm:$0xff]
    %v2854 = vld [vmem:[#allocation3 + $0x440] sm:$0xff]
    %v2855 = vld [vmem:[#allocation3 + $0x448] sm:$0xff]
    %v2856 = vld [vmem:[#allocation3 + $0x450] sm:$0xff]
    %v2857 = vld [vmem:[#allocation3 + $0x458] sm:$0xff]
    %v2858 = vld [vmem:[#allocation3 + $0x460] sm:$0xff]
    %v2859 = vld [vmem:[#allocation3 + $0x468] sm:$0xff]
    %v2860 = vld [vmem:[#allocation3 + $0x470] sm:$0xff]
    %v2861 = vld [vmem:[#allocation3 + $0x478] sm:$0xff]
    %v2862 = vld [vmem:[#allocation3 + $0x480] sm:$0xff]
    %v2863 = vld [vmem:[#allocation3 + $0x488] sm:$0xff]
    %v2864 = vld [vmem:[#allocation3 + $0x490] sm:$0xff]
    %v2865 = vld [vmem:[#allocation3 + $0x498] sm:$0xff]
    %v2866 = vld [vmem:[#allocation3 + $0x4a0] sm:$0xff]
    %v2867 = vld [vmem:[#allocation3 + $0x4a8] sm:$0xff]
    %2869 = vset.pattern.permute.xlu0 0
    %2870 = vperm.xlu0 %2869, %v351
    %v2871 = vpop.permute.xlu0 %2870
    %v2878 = vcombine.high %v346, %v346
    %v2879 = vcombine.high %v347, %v347
    %v2880 = vcombine.high %v348, %v348
    %v2881 = vcombine.high %v349, %v349
    %v2882 = vcombine.high %v350, %v350
    %vm2887 = vcmask 392192
    %v2888 = vsel %vm2887, %v2882, 0
    %2890 = vmatprep.subr.mxu0 0.0
    %2891 = vmatpush1.msra.mxu0 %v2733
    %2892 = vmatprep.subr.mxu0 0.0
    %2893 = vmatpush1.msra.mxu0 %v2732
    %2894 = vmatprep.subr.mxu0 0.0
    %2895 = vmatpush1.msra.mxu0 %v2731
    %2896 = vmatprep.subr.mxu0 0.0
    %2897 = vmatpush1.msra.mxu0 %v2730
    %2898 = vmatprep.subr.mxu0 0.0
    %2899 = vmatpush1.msra.mxu0 %v2729
    %2900 = vmatprep.subr.mxu0 0.0
    %2901 = vmatpush1.msra.mxu0 %v2728
    %2902 = vmatprep.subr.mxu0 0.0
    %2903 = vmatpush1.msra.mxu0 %v2727
    %2904 = vmatprep.subr.mxu0 0.0
    %2905 = vmatpush1.msra.mxu0 %v2726
    %2906 = vmatprep.subr.mxu0 0.0
    %2907 = vmatpush1.msra.mxu0 %v2725
    %2908 = vmatprep.subr.mxu0 0.0
    %2909 = vmatpush1.msra.mxu0 %v2724
    %2910 = vmatprep.subr.mxu0 0.0
    %2911 = vmatpush1.msra.mxu0 %v2723
    %2912 = vmatprep.subr.mxu0 0.0
    %2913 = vmatpush1.msra.mxu0 %v2722
    %2914 = vmatprep.subr.mxu0 0.0
    %2915 = vmatpush1.msra.mxu0 %v2721
    %2916 = vmatprep.subr.mxu0 0.0
    %2917 = vmatpush1.msra.mxu0 %v2720
    %2918 = vmatprep.subr.mxu0 0.0
    %2919 = vmatpush1.msra.mxu0 %v2719
    %2920 = vmatprep.subr.mxu0 0.0
    %2921 = vmatpush1.msra.mxu0 %v2718
    %2922 = vmatprep.subr.mxu0 0.0
    %2923 = vmatpush2.msra.mxu0 %v2749
    %2924 = vmatprep.subr.mxu0 0.0
    %2925 = vmatpush2.msra.mxu0 %v2748
    %2926 = vmatprep.subr.mxu0 0.0
    %2927 = vmatpush2.msra.mxu0 %v2747
    %2928 = vmatprep.subr.mxu0 0.0
    %2929 = vmatpush2.msra.mxu0 %v2746
    %2930 = vmatprep.subr.mxu0 0.0
    %2931 = vmatpush2.msra.mxu0 %v2745
    %2932 = vmatprep.subr.mxu0 0.0
    %2933 = vmatpush2.msra.mxu0 %v2744
    %2934 = vmatprep.subr.mxu0 0.0
    %2935 = vmatpush2.msra.mxu0 %v2743
    %2936 = vmatprep.subr.mxu0 0.0
    %2937 = vmatpush2.msra.mxu0 %v2742
    %2938 = vmatprep.subr.mxu0 0.0
    %2939 = vmatpush2.msra.mxu0 %v2741
    %2940 = vmatprep.subr.mxu0 0.0
    %2941 = vmatpush2.msra.mxu0 %v2740
    %2942 = vmatprep.subr.mxu0 0.0
    %2943 = vmatpush2.msra.mxu0 %v2739
    %2944 = vmatprep.subr.mxu0 0.0
    %2945 = vmatpush2.msra.mxu0 %v2738
    %2946 = vmatprep.subr.mxu0 0.0
    %2947 = vmatpush2.msra.mxu0 %v2737
    %2948 = vmatprep.subr.mxu0 0.0
    %2949 = vmatpush2.msra.mxu0 %v2736
    %2950 = vmatprep.subr.mxu0 0.0
    %2951 = vmatpush2.msra.mxu0 %v2735
    %2952 = vmatprep.subr.mxu0 0.0
    %2953 = vmatpush2.msra.mxu0 %v2734
    %2954 = vmatprep.mubr.f32.mxu0 %v2878
    %2955 = vmatmul.mubr.f32.gmra.mxu0 %v346
    %v2956 = vpop.f32.mrf.mxu0
    %v2957 = vadd.f32 %v2871, %v2956
    %v2958 = vpop.f32.mrf.mxu0
    %2959 = vdwg.mxu0
    %2960 = vmatprep.subr.mxu0 0.0
    %2961 = vmatpush1.msra.mxu0 %v2765
    %2962 = vmatprep.subr.mxu0 0.0
    %2963 = vmatpush1.msra.mxu0 %v2764
    %2964 = vmatprep.subr.mxu0 0.0
    %2965 = vmatpush1.msra.mxu0 %v2763
    %2966 = vmatprep.subr.mxu0 0.0
    %2967 = vmatpush1.msra.mxu0 %v2762
    %2968 = vmatprep.subr.mxu0 0.0
    %2969 = vmatpush1.msra.mxu0 %v2761
    %2970 = vmatprep.subr.mxu0 0.0
    %2971 = vmatpush1.msra.mxu0 %v2760
    %2972 = vmatprep.subr.mxu0 0.0
    %2973 = vmatpush1.msra.mxu0 %v2759
    %2974 = vmatprep.subr.mxu0 0.0
    %2975 = vmatpush1.msra.mxu0 %v2758
    %2976 = vmatprep.subr.mxu0 0.0
    %2977 = vmatpush1.msra.mxu0 %v2757
    %2978 = vmatprep.subr.mxu0 0.0
    %2979 = vmatpush1.msra.mxu0 %v2756
    %2980 = vmatprep.subr.mxu0 0.0
    %2981 = vmatpush1.msra.mxu0 %v2755
    %2982 = vmatprep.subr.mxu0 0.0
    %2983 = vmatpush1.msra.mxu0 %v2754
    %2984 = vmatprep.subr.mxu0 0.0
    %2985 = vmatpush1.msra.mxu0 %v2753
    %2986 = vmatprep.subr.mxu0 0.0
    %2987 = vmatpush1.msra.mxu0 %v2752
    %2988 = vmatprep.subr.mxu0 0.0
    %2989 = vmatpush1.msra.mxu0 %v2751
    %2990 = vmatprep.subr.mxu0 0.0
    %2991 = vmatpush1.msra.mxu0 %v2750
    %2992 = vmatprep.subr.mxu0 0.0
    %2993 = vmatpush2.msra.mxu0 %v2781
    %2994 = vmatprep.subr.mxu0 0.0
    %2995 = vmatpush2.msra.mxu0 %v2780
    %2996 = vmatprep.subr.mxu0 0.0
    %2997 = vmatpush2.msra.mxu0 %v2779
    %2998 = vmatprep.subr.mxu0 0.0
    %2999 = vmatpush2.msra.mxu0 %v2778
    %3000 = vmatprep.subr.mxu0 0.0
    %3001 = vmatpush2.msra.mxu0 %v2777
    %3002 = vmatprep.subr.mxu0 0.0
    %3003 = vmatpush2.msra.mxu0 %v2776
    %3004 = vmatprep.subr.mxu0 0.0
    %3005 = vmatpush2.msra.mxu0 %v2775
    %3006 = vmatprep.subr.mxu0 0.0
    %3007 = vmatpush2.msra.mxu0 %v2774
    %3008 = vmatprep.subr.mxu0 0.0
    %3009 = vmatpush2.msra.mxu0 %v2773
    %3010 = vmatprep.subr.mxu0 0.0
    %3011 = vmatpush2.msra.mxu0 %v2772
    %3012 = vmatprep.subr.mxu0 0.0
    %3013 = vmatpush2.msra.mxu0 %v2771
    %3014 = vmatprep.subr.mxu0 0.0
    %3015 = vmatpush2.msra.mxu0 %v2770
    %3016 = vmatprep.subr.mxu0 0.0
    %3017 = vmatpush2.msra.mxu0 %v2769
    %3018 = vmatprep.subr.mxu0 0.0
    %3019 = vmatpush2.msra.mxu0 %v2768
    %3020 = vmatprep.subr.mxu0 0.0
    %3021 = vmatpush2.msra.mxu0 %v2767
    %3022 = vmatprep.subr.mxu0 0.0
    %3023 = vmatpush2.msra.mxu0 %v2766
    %3024 = vmatprep.mubr.f32.mxu0 %v2879
    %3025 = vmatmul.mubr.f32.gmra.mxu0 %v347
    %v3026 = vpop.f32.mrf.mxu0
    %v3027 = vadd.f32 %v2957, %v3026
    %v3028 = vpop.f32.mrf.mxu0
    %3029 = vdwg.mxu0
    %3030 = vmatprep.subr.mxu0 0.0
    %3031 = vmatpush1.msra.mxu0 %v2797
    %3032 = vmatprep.subr.mxu0 0.0
    %3033 = vmatpush1.msra.mxu0 %v2796
    %3034 = vmatprep.subr.mxu0 0.0
    %3035 = vmatpush1.msra.mxu0 %v2795
    %3036 = vmatprep.subr.mxu0 0.0
    %3037 = vmatpush1.msra.mxu0 %v2794
    %3038 = vmatprep.subr.mxu0 0.0
    %3039 = vmatpush1.msra.mxu0 %v2793
    %3040 = vmatprep.subr.mxu0 0.0
    %3041 = vmatpush1.msra.mxu0 %v2792
    %3042 = vmatprep.subr.mxu0 0.0
    %3043 = vmatpush1.msra.mxu0 %v2791
    %3044 = vmatprep.subr.mxu0 0.0
    %3045 = vmatpush1.msra.mxu0 %v2790
    %3046 = vmatprep.subr.mxu0 0.0
    %3047 = vmatpush1.msra.mxu0 %v2789
    %3048 = vmatprep.subr.mxu0 0.0
    %3049 = vmatpush1.msra.mxu0 %v2788
    %3050 = vmatprep.subr.mxu0 0.0
    %3051 = vmatpush1.msra.mxu0 %v2787
    %3052 = vmatprep.subr.mxu0 0.0
    %3053 = vmatpush1.msra.mxu0 %v2786
    %3054 = vmatprep.subr.mxu0 0.0
    %3055 = vmatpush1.msra.mxu0 %v2785
    %3056 = vmatprep.subr.mxu0 0.0
    %3057 = vmatpush1.msra.mxu0 %v2784
    %3058 = vmatprep.subr.mxu0 0.0
    %3059 = vmatpush1.msra.mxu0 %v2783
    %3060 = vmatprep.subr.mxu0 0.0
    %3061 = vmatpush1.msra.mxu0 %v2782
    %3062 = vmatprep.subr.mxu0 0.0
    %3063 = vmatpush2.msra.mxu0 %v2813
    %3064 = vmatprep.subr.mxu0 0.0
    %3065 = vmatpush2.msra.mxu0 %v2812
    %3066 = vmatprep.subr.mxu0 0.0
    %3067 = vmatpush2.msra.mxu0 %v2811
    %3068 = vmatprep.subr.mxu0 0.0
    %3069 = vmatpush2.msra.mxu0 %v2810
    %3070 = vmatprep.subr.mxu0 0.0
    %3071 = vmatpush2.msra.mxu0 %v2809
    %3072 = vmatprep.subr.mxu0 0.0
    %3073 = vmatpush2.msra.mxu0 %v2808
    %3074 = vmatprep.subr.mxu0 0.0
    %3075 = vmatpush2.msra.mxu0 %v2807
    %3076 = vmatprep.subr.mxu0 0.0
    %3077 = vmatpush2.msra.mxu0 %v2806
    %3078 = vmatprep.subr.mxu0 0.0
    %3079 = vmatpush2.msra.mxu0 %v2805
    %3080 = vmatprep.subr.mxu0 0.0
    %3081 = vmatpush2.msra.mxu0 %v2804
    %3082 = vmatprep.subr.mxu0 0.0
    %3083 = vmatpush2.msra.mxu0 %v2803
    %3084 = vmatprep.subr.mxu0 0.0
    %3085 = vmatpush2.msra.mxu0 %v2802
    %3086 = vmatprep.subr.mxu0 0.0
    %3087 = vmatpush2.msra.mxu0 %v2801
    %3088 = vmatprep.subr.mxu0 0.0
    %3089 = vmatpush2.msra.mxu0 %v2800
    %3090 = vmatprep.subr.mxu0 0.0
    %3091 = vmatpush2.msra.mxu0 %v2799
    %3092 = vmatprep.subr.mxu0 0.0
    %3093 = vmatpush2.msra.mxu0 %v2798
    %3094 = vmatprep.mubr.f32.mxu0 %v2880
    %3095 = vmatmul.mubr.f32.gmra.mxu0 %v348
    %v3096 = vpop.f32.mrf.mxu0
    %v3097 = vadd.f32 %v3027, %v3096
    %v3098 = vpop.f32.mrf.mxu0
    %3099 = vdwg.mxu0
    %3100 = vmatprep.subr.mxu0 0.0
    %3101 = vmatpush1.msra.mxu0 %v2829
    %3102 = vmatprep.subr.mxu0 0.0
    %3103 = vmatpush1.msra.mxu0 %v2828
    %3104 = vmatprep.subr.mxu0 0.0
    %3105 = vmatpush1.msra.mxu0 %v2827
    %3106 = vmatprep.subr.mxu0 0.0
    %3107 = vmatpush1.msra.mxu0 %v2826
    %3108 = vmatprep.subr.mxu0 0.0
    %3109 = vmatpush1.msra.mxu0 %v2825
    %3110 = vmatprep.subr.mxu0 0.0
    %3111 = vmatpush1.msra.mxu0 %v2824
    %3112 = vmatprep.subr.mxu0 0.0
    %3113 = vmatpush1.msra.mxu0 %v2823
    %3114 = vmatprep.subr.mxu0 0.0
    %3115 = vmatpush1.msra.mxu0 %v2822
    %3116 = vmatprep.subr.mxu0 0.0
    %3117 = vmatpush1.msra.mxu0 %v2821
    %3118 = vmatprep.subr.mxu0 0.0
    %3119 = vmatpush1.msra.mxu0 %v2820
    %3120 = vmatprep.subr.mxu0 0.0
    %3121 = vmatpush1.msra.mxu0 %v2819
    %3122 = vmatprep.subr.mxu0 0.0
    %3123 = vmatpush1.msra.mxu0 %v2818
    %3124 = vmatprep.subr.mxu0 0.0
    %3125 = vmatpush1.msra.mxu0 %v2817
    %3126 = vmatprep.subr.mxu0 0.0
    %3127 = vmatpush1.msra.mxu0 %v2816
    %3128 = vmatprep.subr.mxu0 0.0
    %3129 = vmatpush1.msra.mxu0 %v2815
    %3130 = vmatprep.subr.mxu0 0.0
    %3131 = vmatpush1.msra.mxu0 %v2814
    %3132 = vmatprep.subr.mxu0 0.0
    %3133 = vmatpush2.msra.mxu0 %v2845
    %3134 = vmatprep.subr.mxu0 0.0
    %3135 = vmatpush2.msra.mxu0 %v2844
    %3136 = vmatprep.subr.mxu0 0.0
    %3137 = vmatpush2.msra.mxu0 %v2843
    %3138 = vmatprep.subr.mxu0 0.0
    %3139 = vmatpush2.msra.mxu0 %v2842
    %3140 = vmatprep.subr.mxu0 0.0
    %3141 = vmatpush2.msra.mxu0 %v2841
    %3142 = vmatprep.subr.mxu0 0.0
    %3143 = vmatpush2.msra.mxu0 %v2840
    %3144 = vmatprep.subr.mxu0 0.0
    %3145 = vmatpush2.msra.mxu0 %v2839
    %3146 = vmatprep.subr.mxu0 0.0
    %3147 = vmatpush2.msra.mxu0 %v2838
    %3148 = vmatprep.subr.mxu0 0.0
    %3149 = vmatpush2.msra.mxu0 %v2837
    %3150 = vmatprep.subr.mxu0 0.0
    %3151 = vmatpush2.msra.mxu0 %v2836
    %3152 = vmatprep.subr.mxu0 0.0
    %3153 = vmatpush2.msra.mxu0 %v2835
    %3154 = vmatprep.subr.mxu0 0.0
    %3155 = vmatpush2.msra.mxu0 %v2834
    %3156 = vmatprep.subr.mxu0 0.0
    %3157 = vmatpush2.msra.mxu0 %v2833
    %3158 = vmatprep.subr.mxu0 0.0
    %3159 = vmatpush2.msra.mxu0 %v2832
    %3160 = vmatprep.subr.mxu0 0.0
    %3161 = vmatpush2.msra.mxu0 %v2831
    %3162 = vmatprep.subr.mxu0 0.0
    %3163 = vmatpush2.msra.mxu0 %v2830
    %3164 = vmatprep.mubr.f32.mxu0 %v2881
    %3165 = vmatmul.mubr.f32.gmra.mxu0 %v349
    %v3166 = vpop.f32.mrf.mxu0
    %v3167 = vadd.f32 %v3097, %v3166
    %v3168 = vpop.f32.mrf.mxu0
    %3169 = vdwg.mxu0
    %3170 = vmatprep.subr.mxu0 0.0
    %3171 = vmatpush1.msra.mxu0 %v2861
    %3172 = vmatprep.subr.mxu0 0.0
    %3173 = vmatpush1.msra.mxu0 %v2860
    %3174 = vmatprep.subr.mxu0 0.0
    %3175 = vmatpush1.msra.mxu0 %v2859
    %3176 = vmatprep.subr.mxu0 0.0
    %3177 = vmatpush1.msra.mxu0 %v2858
    %3178 = vmatprep.subr.mxu0 0.0
    %3179 = vmatpush1.msra.mxu0 %v2857
    %3180 = vmatprep.subr.mxu0 0.0
    %3181 = vmatpush1.msra.mxu0 %v2856
    %3182 = vmatprep.subr.mxu0 0.0
    %3183 = vmatpush1.msra.mxu0 %v2855
    %3184 = vmatprep.subr.mxu0 0.0
    %3185 = vmatpush1.msra.mxu0 %v2854
    %3186 = vmatprep.subr.mxu0 0.0
    %3187 = vmatpush1.msra.mxu0 %v2853
    %3188 = vmatprep.subr.mxu0 0.0
    %3189 = vmatpush1.msra.mxu0 %v2852
    %3190 = vmatprep.subr.mxu0 0.0
    %3191 = vmatpush1.msra.mxu0 %v2851
    %3192 = vmatprep.subr.mxu0 0.0
    %3193 = vmatpush1.msra.mxu0 %v2850
    %3194 = vmatprep.subr.mxu0 0.0
    %3195 = vmatpush1.msra.mxu0 %v2849
    %3196 = vmatprep.subr.mxu0 0.0
    %3197 = vmatpush1.msra.mxu0 %v2848
    %3198 = vmatprep.subr.mxu0 0.0
    %3199 = vmatpush1.msra.mxu0 %v2847
    %3200 = vmatprep.subr.mxu0 0.0
    %3201 = vmatpush1.msra.mxu0 %v2846
    %3202 = vmatprep.subr.mxu0 0.0
    %3203 = vmatpush2.msra.mxu0 0.0
    %3204 = vmatprep.subr.mxu0 0.0
    %3205 = vmatpush2.msra.mxu0 0.0
    %3206 = vmatprep.subr.mxu0 0.0
    %3207 = vmatpush2.msra.mxu0 0.0
    %3208 = vmatprep.subr.mxu0 0.0
    %3209 = vmatpush2.msra.mxu0 0.0
    %3210 = vmatprep.subr.mxu0 0.0
    %3211 = vmatpush2.msra.mxu0 0.0
    %3212 = vmatprep.subr.mxu0 0.0
    %3213 = vmatpush2.msra.mxu0 0.0
    %3214 = vmatprep.subr.mxu0 0.0
    %3215 = vmatpush2.msra.mxu0 0.0
    %3216 = vmatprep.subr.mxu0 0.0
    %3217 = vmatpush2.msra.mxu0 0.0
    %3218 = vmatprep.subr.mxu0 0.0
    %3219 = vmatpush2.msra.mxu0 0.0
    %3220 = vmatprep.subr.mxu0 0.0
    %3221 = vmatpush2.msra.mxu0 0.0
    %3222 = vmatprep.subr.mxu0 0.0
    %3223 = vmatpush2.msra.mxu0 %v2867
    %3224 = vmatprep.subr.mxu0 0.0
    %3225 = vmatpush2.msra.mxu0 %v2866
    %3226 = vmatprep.subr.mxu0 0.0
    %3227 = vmatpush2.msra.mxu0 %v2865
    %3228 = vmatprep.subr.mxu0 0.0
    %3229 = vmatpush2.msra.mxu0 %v2864
    %3230 = vmatprep.subr.mxu0 0.0
    %3231 = vmatpush2.msra.mxu0 %v2863
    %3232 = vmatprep.subr.mxu0 0.0
    %3233 = vmatpush2.msra.mxu0 %v2862
    %3234 = vmatprep.mubr.f32.mxu0 %v2888
    %3235 = vmatmul.mubr.f32.gmra.mxu0 %v350
    %v3236 = vpop.f32.mrf.mxu0
    %v3237 = vadd.f32 %v3167, %v3236
    %v3238 = vpop.f32.mrf.mxu0
    %3239 = vdwg.mxu0
    %vm3240 = vcmask 83968
    %v3241 = vsel %vm3240, %v3237, -inf
    %v3242 = vrot.slane %v3241, 4
    %v3243 = vmax.f32 %v3241, %v3242
    %v3244 = vrot.slane %v3243, 2
    %v3245 = vmax.f32 %v3243, %v3244
    %v3246 = vrot.slane %v3245, 1
    %v3247 = vmax.f32 %v3245, %v3246
    %v3248 = vsub.f32 %v3237, %v3247
    %v3249 = vmul.f32 %v3248, 1.442695
    %v3250 = vpow.pop %v3249
    %v3251 = vsel %vm3240, %v3250, 0.0
    %v3252 = vrot.slane %v3251, 4
    %v3253 = vadd.f32 %v3251, %v3252
    %v3254 = vrot.slane %v3253, 2
    %v3255 = vadd.f32 %v3253, %v3254
    %v3256 = vrot.slane %v3255, 1
    %v3257 = vadd.f32 %v3255, %v3256
    %v3258 = vlog2.pop %v3257
    %v3259 = vmul.f32 %v3258, 0.6931472
    %v3260 = vsub.f32 %v3248, %v3259
    %3261 = vst.msk [vmem:[%s6] sm:$0x7] %vm3240, %v3260
    %s3262 = scalar_lea.vmem [#allocation4], 20
    %v3263 = vld [vmem:[%s3262] sm:$0xff]
    %v3264 = vld [vmem:[%s3262 + $0x8] sm:$0xff]
    %v3265 = vld [vmem:[%s3262 + $0x10] sm:$0xf]
    %v3269 = vcombine.high %v3263, %v3263
    %v3270 = vcombine.high %v3264, %v3264
    %3273 = vst [vmem:[#allocation2] sm:$0xf] %v3263
    %3274 = vst [vmem:[#allocation2 + $0x8] sm:$0xf] %v3269
    %3275 = vst [vmem:[#allocation2 + $0x10] sm:$0xf] %v3264
    %3276 = vst [vmem:[#allocation2 + $0x18] sm:$0xf] %v3270
    %3277 = vst.msk [vmem:[#allocation2 + $0x20] sm:$0xf] %vm366, %v3265
    %v3278 = vcombine.low %v3263, %v3263
    %v3279 = vcombine.low %v3264, %v3264
    %v3280 = vcombine.low %v3265, %v3265
    %3281 = vrot.lane.b32.xlu0 %v3278, 127
    %v3282 = vpop.permute.xlu0 %3281
    %3283 = vrot.lane.b32.xlu0 %v3263, 127
    %v3284 = vpop.permute.xlu0 %3283
    %3285 = vrot.lane.b32.xlu0 %v3279, 127
    %v3286 = vpop.permute.xlu0 %3285
    %3287 = vrot.lane.b32.xlu0 %v3264, 127
    %v3288 = vpop.permute.xlu0 %3287
    %3289 = vrot.lane.b32.xlu0 %v3280, 127
    %v3290 = vpop.permute.xlu0 %3289
    %v3291 = vsel %vm381, %v3282, %v3284
    %v3292 = vsel %vm381, %v3284, %v3286
    %v3293 = vsel %vm381, %v3286, %v3288
    %v3294 = vsel %vm381, %v3288, %v3290
    %3300 = vst [vmem:[#allocation2] sm:$0xf0] %v3291
    %3301 = vst [vmem:[#allocation2 + $0x8] sm:$0xf0] %v3292
    %3302 = vst [vmem:[#allocation2 + $0x10] sm:$0xf0] %v3293
    %3303 = vst [vmem:[#allocation2 + $0x18] sm:$0xf0] %v3294
    %3304 = vst.msk [vmem:[#allocation2 + $0x20] sm:$0xf0] %vm395, %v3290
    %3305 = vrot.lane.b32.xlu0 %v3263, 126
    %v3306 = vpop.permute.xlu0 %3305
    %3307 = vrot.lane.b32.xlu0 %v3269, 126
    %v3308 = vpop.permute.xlu0 %3307
    %3309 = vrot.lane.b32.xlu0 %v3264, 126
    %v3310 = vpop.permute.xlu0 %3309
    %3311 = vrot.lane.b32.xlu0 %v3270, 126
    %v3312 = vpop.permute.xlu0 %3311
    %3313 = vrot.lane.b32.xlu0 %v3265, 126
    %v3314 = vpop.permute.xlu0 %3313
    %v3315 = vsel %vm407, %v3306, %v3308
    %v3316 = vsel %vm407, %v3308, %v3310
    %v3317 = vsel %vm407, %v3310, %v3312
    %v3318 = vsel %vm407, %v3312, %v3314
    %3324 = vst [vmem:[#allocation2 + $0x28] sm:$0xf] %v3315
    %3325 = vst [vmem:[#allocation2 + $0x30] sm:$0xf] %v3316
    %3326 = vst [vmem:[#allocation2 + $0x38] sm:$0xf] %v3317
    %3327 = vst [vmem:[#allocation2 + $0x40] sm:$0xf] %v3318
    %3328 = vst.msk [vmem:[#allocation2 + $0x48] sm:$0xf] %vm366, %v3314
    %3329 = vrot.lane.b32.xlu0 %v3278, 125
    %v3330 = vpop.permute.xlu0 %3329
    %3331 = vrot.lane.b32.xlu0 %v3263, 125
    %v3332 = vpop.permute.xlu0 %3331
    %3333 = vrot.lane.b32.xlu0 %v3279, 125
    %v3334 = vpop.permute.xlu0 %3333
    %3335 = vrot.lane.b32.xlu0 %v3264, 125
    %v3336 = vpop.permute.xlu0 %3335
    %3337 = vrot.lane.b32.xlu0 %v3280, 125
    %v3338 = vpop.permute.xlu0 %3337
    %v3339 = vsel %vm432, %v3330, %v3332
    %v3340 = vsel %vm432, %v3332, %v3334
    %v3341 = vsel %vm432, %v3334, %v3336
    %v3342 = vsel %vm432, %v3336, %v3338
    %3348 = vst [vmem:[#allocation2 + $0x28] sm:$0xf0] %v3339
    %3349 = vst [vmem:[#allocation2 + $0x30] sm:$0xf0] %v3340
    %3350 = vst [vmem:[#allocation2 + $0x38] sm:$0xf0] %v3341
    %3351 = vst [vmem:[#allocation2 + $0x40] sm:$0xf0] %v3342
    %3352 = vst.msk [vmem:[#allocation2 + $0x48] sm:$0xf0] %vm395, %v3338
    %3353 = vrot.lane.b32.xlu0 %v3263, 124
    %v3354 = vpop.permute.xlu0 %3353
    %3355 = vrot.lane.b32.xlu0 %v3269, 124
    %v3356 = vpop.permute.xlu0 %3355
    %3357 = vrot.lane.b32.xlu0 %v3264, 124
    %v3358 = vpop.permute.xlu0 %3357
    %3359 = vrot.lane.b32.xlu0 %v3270, 124
    %v3360 = vpop.permute.xlu0 %3359
    %3361 = vrot.lane.b32.xlu0 %v3265, 124
    %v3362 = vpop.permute.xlu0 %3361
    %v3363 = vsel %vm457, %v3354, %v3356
    %v3364 = vsel %vm457, %v3356, %v3358
    %v3365 = vsel %vm457, %v3358, %v3360
    %v3366 = vsel %vm457, %v3360, %v3362
    %3372 = vst [vmem:[#allocation2 + $0x50] sm:$0xf] %v3363
    %3373 = vst [vmem:[#allocation2 + $0x58] sm:$0xf] %v3364
    %3374 = vst [vmem:[#allocation2 + $0x60] sm:$0xf] %v3365
    %3375 = vst [vmem:[#allocation2 + $0x68] sm:$0xf] %v3366
    %3376 = vst.msk [vmem:[#allocation2 + $0x70] sm:$0xf] %vm366, %v3362
    %3377 = vrot.lane.b32.xlu0 %v3278, 123
    %v3378 = vpop.permute.xlu0 %3377
    %3379 = vrot.lane.b32.xlu0 %v3263, 123
    %v3380 = vpop.permute.xlu0 %3379
    %3381 = vrot.lane.b32.xlu0 %v3279, 123
    %v3382 = vpop.permute.xlu0 %3381
    %3383 = vrot.lane.b32.xlu0 %v3264, 123
    %v3384 = vpop.permute.xlu0 %3383
    %3385 = vrot.lane.b32.xlu0 %v3280, 123
    %v3386 = vpop.permute.xlu0 %3385
    %v3387 = vsel %vm482, %v3378, %v3380
    %v3388 = vsel %vm482, %v3380, %v3382
    %v3389 = vsel %vm482, %v3382, %v3384
    %v3390 = vsel %vm482, %v3384, %v3386
    %3396 = vst [vmem:[#allocation2 + $0x50] sm:$0xf0] %v3387
    %3397 = vst [vmem:[#allocation2 + $0x58] sm:$0xf0] %v3388
    %3398 = vst [vmem:[#allocation2 + $0x60] sm:$0xf0] %v3389
    %3399 = vst [vmem:[#allocation2 + $0x68] sm:$0xf0] %v3390
    %3400 = vst.msk [vmem:[#allocation2 + $0x70] sm:$0xf0] %vm395, %v3386
    %3401 = vrot.lane.b32.xlu0 %v3263, 122
    %v3402 = vpop.permute.xlu0 %3401
    %3403 = vrot.lane.b32.xlu0 %v3269, 122
    %v3404 = vpop.permute.xlu0 %3403
    %3405 = vrot.lane.b32.xlu0 %v3264, 122
    %v3406 = vpop.permute.xlu0 %3405
    %3407 = vrot.lane.b32.xlu0 %v3270, 122
    %v3408 = vpop.permute.xlu0 %3407
    %3409 = vrot.lane.b32.xlu0 %v3265, 122
    %v3410 = vpop.permute.xlu0 %3409
    %v3411 = vsel %vm507, %v3402, %v3404
    %v3412 = vsel %vm507, %v3404, %v3406
    %v3413 = vsel %vm507, %v3406, %v3408
    %v3414 = vsel %vm507, %v3408, %v3410
    %3420 = vst [vmem:[#allocation2 + $0x78] sm:$0xf] %v3411
    %3421 = vst [vmem:[#allocation2 + $0x80] sm:$0xf] %v3412
    %3422 = vst [vmem:[#allocation2 + $0x88] sm:$0xf] %v3413
    %3423 = vst [vmem:[#allocation2 + $0x90] sm:$0xf] %v3414
    %3424 = vst.msk [vmem:[#allocation2 + $0x98] sm:$0xf] %vm366, %v3410
    %3425 = vrot.lane.b32.xlu0 %v3278, 121
    %v3426 = vpop.permute.xlu0 %3425
    %3427 = vrot.lane.b32.xlu0 %v3263, 121
    %v3428 = vpop.permute.xlu0 %3427
    %3429 = vrot.lane.b32.xlu0 %v3279, 121
    %v3430 = vpop.permute.xlu0 %3429
    %3431 = vrot.lane.b32.xlu0 %v3264, 121
    %v3432 = vpop.permute.xlu0 %3431
    %3433 = vrot.lane.b32.xlu0 %v3280, 121
    %v3434 = vpop.permute.xlu0 %3433
    %v3435 = vsel %vm532, %v3426, %v3428
    %v3436 = vsel %vm532, %v3428, %v3430
    %v3437 = vsel %vm532, %v3430, %v3432
    %v3438 = vsel %vm532, %v3432, %v3434
    %3444 = vst [vmem:[#allocation2 + $0x78] sm:$0xf0] %v3435
    %3445 = vst [vmem:[#allocation2 + $0x80] sm:$0xf0] %v3436
    %3446 = vst [vmem:[#allocation2 + $0x88] sm:$0xf0] %v3437
    %3447 = vst [vmem:[#allocation2 + $0x90] sm:$0xf0] %v3438
    %3448 = vst.msk [vmem:[#allocation2 + $0x98] sm:$0xf0] %vm395, %v3434
    %3449 = vrot.lane.b32.xlu0 %v3263, 120
    %v3450 = vpop.permute.xlu0 %3449
    %3451 = vrot.lane.b32.xlu0 %v3269, 120
    %v3452 = vpop.permute.xlu0 %3451
    %3453 = vrot.lane.b32.xlu0 %v3264, 120
    %v3454 = vpop.permute.xlu0 %3453
    %3455 = vrot.lane.b32.xlu0 %v3270, 120
    %v3456 = vpop.permute.xlu0 %3455
    %3457 = vrot.lane.b32.xlu0 %v3265, 120
    %v3458 = vpop.permute.xlu0 %3457
    %v3459 = vsel %vm557, %v3450, %v3452
    %v3460 = vsel %vm557, %v3452, %v3454
    %v3461 = vsel %vm557, %v3454, %v3456
    %v3462 = vsel %vm557, %v3456, %v3458
    %3468 = vst [vmem:[#allocation2 + $0xa0] sm:$0xf] %v3459
    %3469 = vst [vmem:[#allocation2 + $0xa8] sm:$0xf] %v3460
    %3470 = vst [vmem:[#allocation2 + $0xb0] sm:$0xf] %v3461
    %3471 = vst [vmem:[#allocation2 + $0xb8] sm:$0xf] %v3462
    %3472 = vst.msk [vmem:[#allocation2 + $0xc0] sm:$0xf] %vm366, %v3458
    %3473 = vrot.lane.b32.xlu0 %v3278, 119
    %v3474 = vpop.permute.xlu0 %3473
    %3475 = vrot.lane.b32.xlu0 %v3263, 119
    %v3476 = vpop.permute.xlu0 %3475
    %3477 = vrot.lane.b32.xlu0 %v3279, 119
    %v3478 = vpop.permute.xlu0 %3477
    %3479 = vrot.lane.b32.xlu0 %v3264, 119
    %v3480 = vpop.permute.xlu0 %3479
    %3481 = vrot.lane.b32.xlu0 %v3280, 119
    %v3482 = vpop.permute.xlu0 %3481
    %v3483 = vsel %vm582, %v3474, %v3476
    %v3484 = vsel %vm582, %v3476, %v3478
    %v3485 = vsel %vm582, %v3478, %v3480
    %v3486 = vsel %vm582, %v3480, %v3482
    %3492 = vst [vmem:[#allocation2 + $0xa0] sm:$0xf0] %v3483
    %3493 = vst [vmem:[#allocation2 + $0xa8] sm:$0xf0] %v3484
    %3494 = vst [vmem:[#allocation2 + $0xb0] sm:$0xf0] %v3485
    %3495 = vst [vmem:[#allocation2 + $0xb8] sm:$0xf0] %v3486
    %3496 = vst.msk [vmem:[#allocation2 + $0xc0] sm:$0xf0] %vm395, %v3482
    %3497 = vrot.lane.b32.xlu0 %v3263, 118
    %v3498 = vpop.permute.xlu0 %3497
    %3499 = vrot.lane.b32.xlu0 %v3269, 118
    %v3500 = vpop.permute.xlu0 %3499
    %3501 = vrot.lane.b32.xlu0 %v3264, 118
    %v3502 = vpop.permute.xlu0 %3501
    %3503 = vrot.lane.b32.xlu0 %v3270, 118
    %v3504 = vpop.permute.xlu0 %3503
    %3505 = vrot.lane.b32.xlu0 %v3265, 118
    %v3506 = vpop.permute.xlu0 %3505
    %v3507 = vsel %vm607, %v3498, %v3500
    %v3508 = vsel %vm607, %v3500, %v3502
    %v3509 = vsel %vm607, %v3502, %v3504
    %v3510 = vsel %vm607, %v3504, %v3506
    %3516 = vst [vmem:[#allocation2 + $0xc8] sm:$0xf] %v3507
    %3517 = vst [vmem:[#allocation2 + $0xd0] sm:$0xf] %v3508
    %3518 = vst [vmem:[#allocation2 + $0xd8] sm:$0xf] %v3509
    %3519 = vst [vmem:[#allocation2 + $0xe0] sm:$0xf] %v3510
    %3520 = vst.msk [vmem:[#allocation2 + $0xe8] sm:$0xf] %vm366, %v3506
    %3521 = vrot.lane.b32.xlu0 %v3278, 117
    %v3522 = vpop.permute.xlu0 %3521
    %3523 = vrot.lane.b32.xlu0 %v3263, 117
    %v3524 = vpop.permute.xlu0 %3523
    %3525 = vrot.lane.b32.xlu0 %v3279, 117
    %v3526 = vpop.permute.xlu0 %3525
    %3527 = vrot.lane.b32.xlu0 %v3264, 117
    %v3528 = vpop.permute.xlu0 %3527
    %3529 = vrot.lane.b32.xlu0 %v3280, 117
    %v3530 = vpop.permute.xlu0 %3529
    %v3531 = vsel %vm632, %v3522, %v3524
    %v3532 = vsel %vm632, %v3524, %v3526
    %v3533 = vsel %vm632, %v3526, %v3528
    %v3534 = vsel %vm632, %v3528, %v3530
    %3540 = vst [vmem:[#allocation2 + $0xc8] sm:$0xf0] %v3531
    %3541 = vst [vmem:[#allocation2 + $0xd0] sm:$0xf0] %v3532
    %3542 = vst [vmem:[#allocation2 + $0xd8] sm:$0xf0] %v3533
    %3543 = vst [vmem:[#allocation2 + $0xe0] sm:$0xf0] %v3534
    %3544 = vst.msk [vmem:[#allocation2 + $0xe8] sm:$0xf0] %vm395, %v3530
    %3545 = vrot.lane.b32.xlu0 %v3263, 116
    %v3546 = vpop.permute.xlu0 %3545
    %3547 = vrot.lane.b32.xlu0 %v3269, 116
    %v3548 = vpop.permute.xlu0 %3547
    %3549 = vrot.lane.b32.xlu0 %v3264, 116
    %v3550 = vpop.permute.xlu0 %3549
    %3551 = vrot.lane.b32.xlu0 %v3270, 116
    %v3552 = vpop.permute.xlu0 %3551
    %3553 = vrot.lane.b32.xlu0 %v3265, 116
    %v3554 = vpop.permute.xlu0 %3553
    %v3555 = vsel %vm657, %v3546, %v3548
    %v3556 = vsel %vm657, %v3548, %v3550
    %v3557 = vsel %vm657, %v3550, %v3552
    %v3558 = vsel %vm657, %v3552, %v3554
    %3564 = vst [vmem:[#allocation2 + $0xf0] sm:$0xf] %v3555
    %3565 = vst [vmem:[#allocation2 + $0xf8] sm:$0xf] %v3556
    %3566 = vst [vmem:[#allocation2 + $0x100] sm:$0xf] %v3557
    %3567 = vst [vmem:[#allocation2 + $0x108] sm:$0xf] %v3558
    %3568 = vst.msk [vmem:[#allocation2 + $0x110] sm:$0xf] %vm366, %v3554
    %3569 = vrot.lane.b32.xlu0 %v3278, 115
    %v3570 = vpop.permute.xlu0 %3569
    %3571 = vrot.lane.b32.xlu0 %v3263, 115
    %v3572 = vpop.permute.xlu0 %3571
    %3573 = vrot.lane.b32.xlu0 %v3279, 115
    %v3574 = vpop.permute.xlu0 %3573
    %3575 = vrot.lane.b32.xlu0 %v3264, 115
    %v3576 = vpop.permute.xlu0 %3575
    %3577 = vrot.lane.b32.xlu0 %v3280, 115
    %v3578 = vpop.permute.xlu0 %3577
    %v3579 = vsel %vm682, %v3570, %v3572
    %v3580 = vsel %vm682, %v3572, %v3574
    %v3581 = vsel %vm682, %v3574, %v3576
    %v3582 = vsel %vm682, %v3576, %v3578
    %3588 = vst [vmem:[#allocation2 + $0xf0] sm:$0xf0] %v3579
    %3589 = vst [vmem:[#allocation2 + $0xf8] sm:$0xf0] %v3580
    %3590 = vst [vmem:[#allocation2 + $0x100] sm:$0xf0] %v3581
    %3591 = vst [vmem:[#allocation2 + $0x108] sm:$0xf0] %v3582
    %3592 = vst.msk [vmem:[#allocation2 + $0x110] sm:$0xf0] %vm395, %v3578
    %3593 = vrot.lane.b32.xlu0 %v3263, 114
    %v3594 = vpop.permute.xlu0 %3593
    %3595 = vrot.lane.b32.xlu0 %v3269, 114
    %v3596 = vpop.permute.xlu0 %3595
    %3597 = vrot.lane.b32.xlu0 %v3264, 114
    %v3598 = vpop.permute.xlu0 %3597
    %3599 = vrot.lane.b32.xlu0 %v3270, 114
    %v3600 = vpop.permute.xlu0 %3599
    %3601 = vrot.lane.b32.xlu0 %v3265, 114
    %v3602 = vpop.permute.xlu0 %3601
    %v3603 = vsel %vm707, %v3594, %v3596
    %v3604 = vsel %vm707, %v3596, %v3598
    %v3605 = vsel %vm707, %v3598, %v3600
    %v3606 = vsel %vm707, %v3600, %v3602
    %3612 = vst [vmem:[#allocation2 + $0x118] sm:$0xf] %v3603
    %3613 = vst [vmem:[#allocation2 + $0x120] sm:$0xf] %v3604
    %3614 = vst [vmem:[#allocation2 + $0x128] sm:$0xf] %v3605
    %3615 = vst [vmem:[#allocation2 + $0x130] sm:$0xf] %v3606
    %3616 = vst.msk [vmem:[#allocation2 + $0x138] sm:$0xf] %vm366, %v3602
    %3617 = vrot.lane.b32.xlu0 %v3278, 113
    %v3618 = vpop.permute.xlu0 %3617
    %3619 = vrot.lane.b32.xlu0 %v3263, 113
    %v3620 = vpop.permute.xlu0 %3619
    %3621 = vrot.lane.b32.xlu0 %v3279, 113
    %v3622 = vpop.permute.xlu0 %3621
    %3623 = vrot.lane.b32.xlu0 %v3264, 113
    %v3624 = vpop.permute.xlu0 %3623
    %3625 = vrot.lane.b32.xlu0 %v3280, 113
    %v3626 = vpop.permute.xlu0 %3625
    %v3627 = vsel %vm732, %v3618, %v3620
    %v3628 = vsel %vm732, %v3620, %v3622
    %v3629 = vsel %vm732, %v3622, %v3624
    %v3630 = vsel %vm732, %v3624, %v3626
    %3636 = vst [vmem:[#allocation2 + $0x118] sm:$0xf0] %v3627
    %3637 = vst [vmem:[#allocation2 + $0x120] sm:$0xf0] %v3628
    %3638 = vst [vmem:[#allocation2 + $0x128] sm:$0xf0] %v3629
    %3639 = vst [vmem:[#allocation2 + $0x130] sm:$0xf0] %v3630
    %3640 = vst.msk [vmem:[#allocation2 + $0x138] sm:$0xf0] %vm395, %v3626
    %3641 = vrot.lane.b32.xlu0 %v3263, 112
    %v3642 = vpop.permute.xlu0 %3641
    %3643 = vrot.lane.b32.xlu0 %v3269, 112
    %v3644 = vpop.permute.xlu0 %3643
    %3645 = vrot.lane.b32.xlu0 %v3264, 112
    %v3646 = vpop.permute.xlu0 %3645
    %3647 = vrot.lane.b32.xlu0 %v3270, 112
    %v3648 = vpop.permute.xlu0 %3647
    %3649 = vrot.lane.b32.xlu0 %v3265, 112
    %v3650 = vpop.permute.xlu0 %3649
    %v3651 = vsel %vm757, %v3642, %v3644
    %v3652 = vsel %vm757, %v3644, %v3646
    %v3653 = vsel %vm757, %v3646, %v3648
    %v3654 = vsel %vm757, %v3648, %v3650
    %3660 = vst [vmem:[#allocation2 + $0x140] sm:$0xf] %v3651
    %3661 = vst [vmem:[#allocation2 + $0x148] sm:$0xf] %v3652
    %3662 = vst [vmem:[#allocation2 + $0x150] sm:$0xf] %v3653
    %3663 = vst [vmem:[#allocation2 + $0x158] sm:$0xf] %v3654
    %3664 = vst.msk [vmem:[#allocation2 + $0x160] sm:$0xf] %vm366, %v3650
    %3665 = vrot.lane.b32.xlu0 %v3278, 111
    %v3666 = vpop.permute.xlu0 %3665
    %3667 = vrot.lane.b32.xlu0 %v3263, 111
    %v3668 = vpop.permute.xlu0 %3667
    %3669 = vrot.lane.b32.xlu0 %v3279, 111
    %v3670 = vpop.permute.xlu0 %3669
    %3671 = vrot.lane.b32.xlu0 %v3264, 111
    %v3672 = vpop.permute.xlu0 %3671
    %3673 = vrot.lane.b32.xlu0 %v3280, 111
    %v3674 = vpop.permute.xlu0 %3673
    %v3675 = vsel %vm782, %v3666, %v3668
    %v3676 = vsel %vm782, %v3668, %v3670
    %v3677 = vsel %vm782, %v3670, %v3672
    %v3678 = vsel %vm782, %v3672, %v3674
    %3684 = vst [vmem:[#allocation2 + $0x140] sm:$0xf0] %v3675
    %3685 = vst [vmem:[#allocation2 + $0x148] sm:$0xf0] %v3676
    %3686 = vst [vmem:[#allocation2 + $0x150] sm:$0xf0] %v3677
    %3687 = vst [vmem:[#allocation2 + $0x158] sm:$0xf0] %v3678
    %3688 = vst.msk [vmem:[#allocation2 + $0x160] sm:$0xf0] %vm395, %v3674
    %3689 = vrot.lane.b32.xlu0 %v3263, 110
    %v3690 = vpop.permute.xlu0 %3689
    %3691 = vrot.lane.b32.xlu0 %v3269, 110
    %v3692 = vpop.permute.xlu0 %3691
    %3693 = vrot.lane.b32.xlu0 %v3264, 110
    %v3694 = vpop.permute.xlu0 %3693
    %3695 = vrot.lane.b32.xlu0 %v3270, 110
    %v3696 = vpop.permute.xlu0 %3695
    %3697 = vrot.lane.b32.xlu0 %v3265, 110
    %v3698 = vpop.permute.xlu0 %3697
    %v3699 = vsel %vm807, %v3690, %v3692
    %v3700 = vsel %vm807, %v3692, %v3694
    %v3701 = vsel %vm807, %v3694, %v3696
    %v3702 = vsel %vm807, %v3696, %v3698
    %3708 = vst [vmem:[#allocation2 + $0x168] sm:$0xf] %v3699
    %3709 = vst [vmem:[#allocation2 + $0x170] sm:$0xf] %v3700
    %3710 = vst [vmem:[#allocation2 + $0x178] sm:$0xf] %v3701
    %3711 = vst [vmem:[#allocation2 + $0x180] sm:$0xf] %v3702
    %3712 = vst.msk [vmem:[#allocation2 + $0x188] sm:$0xf] %vm366, %v3698
    %3713 = vrot.lane.b32.xlu0 %v3278, 109
    %v3714 = vpop.permute.xlu0 %3713
    %3715 = vrot.lane.b32.xlu0 %v3263, 109
    %v3716 = vpop.permute.xlu0 %3715
    %3717 = vrot.lane.b32.xlu0 %v3279, 109
    %v3718 = vpop.permute.xlu0 %3717
    %3719 = vrot.lane.b32.xlu0 %v3264, 109
    %v3720 = vpop.permute.xlu0 %3719
    %3721 = vrot.lane.b32.xlu0 %v3280, 109
    %v3722 = vpop.permute.xlu0 %3721
    %v3723 = vsel %vm832, %v3714, %v3716
    %v3724 = vsel %vm832, %v3716, %v3718
    %v3725 = vsel %vm832, %v3718, %v3720
    %v3726 = vsel %vm832, %v3720, %v3722
    %3732 = vst [vmem:[#allocation2 + $0x168] sm:$0xf0] %v3723
    %3733 = vst [vmem:[#allocation2 + $0x170] sm:$0xf0] %v3724
    %3734 = vst [vmem:[#allocation2 + $0x178] sm:$0xf0] %v3725
    %3735 = vst [vmem:[#allocation2 + $0x180] sm:$0xf0] %v3726
    %3736 = vst.msk [vmem:[#allocation2 + $0x188] sm:$0xf0] %vm395, %v3722
    %3737 = vrot.lane.b32.xlu0 %v3263, 108
    %v3738 = vpop.permute.xlu0 %3737
    %3739 = vrot.lane.b32.xlu0 %v3269, 108
    %v3740 = vpop.permute.xlu0 %3739
    %3741 = vrot.lane.b32.xlu0 %v3264, 108
    %v3742 = vpop.permute.xlu0 %3741
    %3743 = vrot.lane.b32.xlu0 %v3270, 108
    %v3744 = vpop.permute.xlu0 %3743
    %3745 = vrot.lane.b32.xlu0 %v3265, 108
    %v3746 = vpop.permute.xlu0 %3745
    %v3747 = vsel %vm857, %v3738, %v3740
    %v3748 = vsel %vm857, %v3740, %v3742
    %v3749 = vsel %vm857, %v3742, %v3744
    %v3750 = vsel %vm857, %v3744, %v3746
    %3756 = vst [vmem:[#allocation2 + $0x190] sm:$0xf] %v3747
    %3757 = vst [vmem:[#allocation2 + $0x198] sm:$0xf] %v3748
    %3758 = vst [vmem:[#allocation2 + $0x1a0] sm:$0xf] %v3749
    %3759 = vst [vmem:[#allocation2 + $0x1a8] sm:$0xf] %v3750
    %3760 = vst.msk [vmem:[#allocation2 + $0x1b0] sm:$0xf] %vm366, %v3746
    %3761 = vrot.lane.b32.xlu0 %v3278, 107
    %v3762 = vpop.permute.xlu0 %3761
    %3763 = vrot.lane.b32.xlu0 %v3263, 107
    %v3764 = vpop.permute.xlu0 %3763
    %3765 = vrot.lane.b32.xlu0 %v3279, 107
    %v3766 = vpop.permute.xlu0 %3765
    %3767 = vrot.lane.b32.xlu0 %v3264, 107
    %v3768 = vpop.permute.xlu0 %3767
    %3769 = vrot.lane.b32.xlu0 %v3280, 107
    %v3770 = vpop.permute.xlu0 %3769
    %v3771 = vsel %vm882, %v3762, %v3764
    %v3772 = vsel %vm882, %v3764, %v3766
    %v3773 = vsel %vm882, %v3766, %v3768
    %v3774 = vsel %vm882, %v3768, %v3770
    %3780 = vst [vmem:[#allocation2 + $0x190] sm:$0xf0] %v3771
    %3781 = vst [vmem:[#allocation2 + $0x198] sm:$0xf0] %v3772
    %3782 = vst [vmem:[#allocation2 + $0x1a0] sm:$0xf0] %v3773
    %3783 = vst [vmem:[#allocation2 + $0x1a8] sm:$0xf0] %v3774
    %3784 = vst.msk [vmem:[#allocation2 + $0x1b0] sm:$0xf0] %vm395, %v3770
    %3785 = vrot.lane.b32.xlu0 %v3263, 106
    %v3786 = vpop.permute.xlu0 %3785
    %3787 = vrot.lane.b32.xlu0 %v3269, 106
    %v3788 = vpop.permute.xlu0 %3787
    %3789 = vrot.lane.b32.xlu0 %v3264, 106
    %v3790 = vpop.permute.xlu0 %3789
    %3791 = vrot.lane.b32.xlu0 %v3270, 106
    %v3792 = vpop.permute.xlu0 %3791
    %3793 = vrot.lane.b32.xlu0 %v3265, 106
    %v3794 = vpop.permute.xlu0 %3793
    %v3795 = vsel %vm907, %v3786, %v3788
    %v3796 = vsel %vm907, %v3788, %v3790
    %v3797 = vsel %vm907, %v3790, %v3792
    %v3798 = vsel %vm907, %v3792, %v3794
    %3804 = vst [vmem:[#allocation2 + $0x1b8] sm:$0xf] %v3795
    %3805 = vst [vmem:[#allocation2 + $0x1c0] sm:$0xf] %v3796
    %3806 = vst [vmem:[#allocation2 + $0x1c8] sm:$0xf] %v3797
    %3807 = vst [vmem:[#allocation2 + $0x1d0] sm:$0xf] %v3798
    %3808 = vst.msk [vmem:[#allocation2 + $0x1d8] sm:$0xf] %vm366, %v3794
    %3809 = vrot.lane.b32.xlu0 %v3278, 105
    %v3810 = vpop.permute.xlu0 %3809
    %3811 = vrot.lane.b32.xlu0 %v3263, 105
    %v3812 = vpop.permute.xlu0 %3811
    %3813 = vrot.lane.b32.xlu0 %v3279, 105
    %v3814 = vpop.permute.xlu0 %3813
    %3815 = vrot.lane.b32.xlu0 %v3264, 105
    %v3816 = vpop.permute.xlu0 %3815
    %3817 = vrot.lane.b32.xlu0 %v3280, 105
    %v3818 = vpop.permute.xlu0 %3817
    %v3819 = vsel %vm932, %v3810, %v3812
    %v3820 = vsel %vm932, %v3812, %v3814
    %v3821 = vsel %vm932, %v3814, %v3816
    %v3822 = vsel %vm932, %v3816, %v3818
    %3828 = vst [vmem:[#allocation2 + $0x1b8] sm:$0xf0] %v3819
    %3829 = vst [vmem:[#allocation2 + $0x1c0] sm:$0xf0] %v3820
    %3830 = vst [vmem:[#allocation2 + $0x1c8] sm:$0xf0] %v3821
    %3831 = vst [vmem:[#allocation2 + $0x1d0] sm:$0xf0] %v3822
    %3832 = vst.msk [vmem:[#allocation2 + $0x1d8] sm:$0xf0] %vm395, %v3818
    %3833 = vrot.lane.b32.xlu0 %v3263, 104
    %v3834 = vpop.permute.xlu0 %3833
    %3835 = vrot.lane.b32.xlu0 %v3269, 104
    %v3836 = vpop.permute.xlu0 %3835
    %3837 = vrot.lane.b32.xlu0 %v3264, 104
    %v3838 = vpop.permute.xlu0 %3837
    %3839 = vrot.lane.b32.xlu0 %v3270, 104
    %v3840 = vpop.permute.xlu0 %3839
    %3841 = vrot.lane.b32.xlu0 %v3265, 104
    %v3842 = vpop.permute.xlu0 %3841
    %v3843 = vsel %vm957, %v3834, %v3836
    %v3844 = vsel %vm957, %v3836, %v3838
    %v3845 = vsel %vm957, %v3838, %v3840
    %v3846 = vsel %vm957, %v3840, %v3842
    %3852 = vst [vmem:[#allocation2 + $0x1e0] sm:$0xf] %v3843
    %3853 = vst [vmem:[#allocation2 + $0x1e8] sm:$0xf] %v3844
    %3854 = vst [vmem:[#allocation2 + $0x1f0] sm:$0xf] %v3845
    %3855 = vst [vmem:[#allocation2 + $0x1f8] sm:$0xf] %v3846
    %3856 = vst.msk [vmem:[#allocation2 + $0x200] sm:$0xf] %vm366, %v3842
    %v3857 = vld [vmem:[#allocation2] sm:$0xff]
    %v3858 = vld [vmem:[#allocation2 + $0x8] sm:$0xff]
    %v3859 = vld [vmem:[#allocation2 + $0x10] sm:$0xff]
    %v3860 = vld [vmem:[#allocation2 + $0x18] sm:$0xff]
    %v3861 = vld [vmem:[#allocation2 + $0x20] sm:$0xff]
    %v3862 = vld [vmem:[#allocation2 + $0x28] sm:$0xff]
    %v3863 = vld [vmem:[#allocation2 + $0x30] sm:$0xff]
    %v3864 = vld [vmem:[#allocation2 + $0x38] sm:$0xff]
    %v3865 = vld [vmem:[#allocation2 + $0x40] sm:$0xff]
    %v3866 = vld [vmem:[#allocation2 + $0x48] sm:$0xff]
    %v3867 = vld [vmem:[#allocation2 + $0x50] sm:$0xff]
    %v3868 = vld [vmem:[#allocation2 + $0x58] sm:$0xff]
    %v3869 = vld [vmem:[#allocation2 + $0x60] sm:$0xff]
    %v3870 = vld [vmem:[#allocation2 + $0x68] sm:$0xff]
    %v3871 = vld [vmem:[#allocation2 + $0x70] sm:$0xff]
    %v3872 = vld [vmem:[#allocation2 + $0x78] sm:$0xff]
    %v3873 = vld [vmem:[#allocation2 + $0x80] sm:$0xff]
    %v3874 = vld [vmem:[#allocation2 + $0x88] sm:$0xff]
    %v3875 = vld [vmem:[#allocation2 + $0x90] sm:$0xff]
    %v3876 = vld [vmem:[#allocation2 + $0x98] sm:$0xff]
    %v3877 = vld [vmem:[#allocation2 + $0xa0] sm:$0xff]
    %v3878 = vld [vmem:[#allocation2 + $0xa8] sm:$0xff]
    %v3879 = vld [vmem:[#allocation2 + $0xb0] sm:$0xff]
    %v3880 = vld [vmem:[#allocation2 + $0xb8] sm:$0xff]
    %v3881 = vld [vmem:[#allocation2 + $0xc0] sm:$0xff]
    %v3882 = vld [vmem:[#allocation2 + $0xc8] sm:$0xff]
    %v3883 = vld [vmem:[#allocation2 + $0xd0] sm:$0xff]
    %v3884 = vld [vmem:[#allocation2 + $0xd8] sm:$0xff]
    %v3885 = vld [vmem:[#allocation2 + $0xe0] sm:$0xff]
    %v3886 = vld [vmem:[#allocation2 + $0xe8] sm:$0xff]
    %v3887 = vld [vmem:[#allocation2 + $0xf0] sm:$0xff]
    %v3888 = vld [vmem:[#allocation2 + $0xf8] sm:$0xff]
    %v3889 = vld [vmem:[#allocation2 + $0x100] sm:$0xff]
    %v3890 = vld [vmem:[#allocation2 + $0x108] sm:$0xff]
    %v3891 = vld [vmem:[#allocation2 + $0x110] sm:$0xff]
    %v3892 = vld [vmem:[#allocation2 + $0x118] sm:$0xff]
    %v3893 = vld [vmem:[#allocation2 + $0x120] sm:$0xff]
    %v3894 = vld [vmem:[#allocation2 + $0x128] sm:$0xff]
    %v3895 = vld [vmem:[#allocation2 + $0x130] sm:$0xff]
    %v3896 = vld [vmem:[#allocation2 + $0x138] sm:$0xff]
    %v3897 = vld [vmem:[#allocation2 + $0x140] sm:$0xff]
    %v3898 = vld [vmem:[#allocation2 + $0x148] sm:$0xff]
    %v3899 = vld [vmem:[#allocation2 + $0x150] sm:$0xff]
    %v3900 = vld [vmem:[#allocation2 + $0x158] sm:$0xff]
    %v3901 = vld [vmem:[#allocation2 + $0x160] sm:$0xff]
    %v3902 = vld [vmem:[#allocation2 + $0x168] sm:$0xff]
    %v3903 = vld [vmem:[#allocation2 + $0x170] sm:$0xff]
    %v3904 = vld [vmem:[#allocation2 + $0x178] sm:$0xff]
    %v3905 = vld [vmem:[#allocation2 + $0x180] sm:$0xff]
    %v3906 = vld [vmem:[#allocation2 + $0x188] sm:$0xff]
    %v3907 = vld [vmem:[#allocation2 + $0x190] sm:$0xff]
    %v3908 = vld [vmem:[#allocation2 + $0x198] sm:$0xff]
    %v3909 = vld [vmem:[#allocation2 + $0x1a0] sm:$0xff]
    %v3910 = vld [vmem:[#allocation2 + $0x1a8] sm:$0xff]
    %v3911 = vld [vmem:[#allocation2 + $0x1b0] sm:$0xff]
    %v3912 = vld [vmem:[#allocation2 + $0x1b8] sm:$0xff]
    %v3913 = vld [vmem:[#allocation2 + $0x1c0] sm:$0xff]
    %v3914 = vld [vmem:[#allocation2 + $0x1c8] sm:$0xff]
    %v3915 = vld [vmem:[#allocation2 + $0x1d0] sm:$0xff]
    %v3916 = vld [vmem:[#allocation2 + $0x1d8] sm:$0xff]
    %v3917 = vld [vmem:[#allocation2 + $0x1e0] sm:$0xf]
    %v3918 = vld [vmem:[#allocation2 + $0x1e8] sm:$0xf]
    %v3919 = vld [vmem:[#allocation2 + $0x1f0] sm:$0xf]
    %v3920 = vld [vmem:[#allocation2 + $0x1f8] sm:$0xf]
    %v3921 = vld [vmem:[#allocation2 + $0x200] sm:$0xf]
    %v3923 = vsel %vm1078, %v3917, 0
    %v3926 = vsel %vm1078, %v3918, 0
    %v3929 = vsel %vm1078, %v3919, 0
    %v3932 = vsel %vm1078, %v3920, 0
    %v3935 = vsel %vm1078, %v3921, 0
    %3937 = vmatprep.subr.mxu0 0.0
    %3938 = vmatpush1.msra.mxu0 0.0
    %3939 = vmatprep.subr.mxu0 0.0
    %3940 = vmatpush1.msra.mxu0 0.0
    %3941 = vmatprep.subr.mxu0 0.0
    %3942 = vmatpush1.msra.mxu0 0.0
    %3943 = vmatprep.subr.mxu0 %v3926
    %3944 = vmatpush1.msra.mxu0 %v3923
    %3945 = vmatprep.subr.mxu0 %v3913
    %3946 = vmatpush1.msra.mxu0 %v3912
    %3947 = vmatprep.subr.mxu0 %v3908
    %3948 = vmatpush1.msra.mxu0 %v3907
    %3949 = vmatprep.subr.mxu0 %v3903
    %3950 = vmatpush1.msra.mxu0 %v3902
    %3951 = vmatprep.subr.mxu0 %v3898
    %3952 = vmatpush1.msra.mxu0 %v3897
    %3953 = vmatprep.subr.mxu0 %v3893
    %3954 = vmatpush1.msra.mxu0 %v3892
    %3955 = vmatprep.subr.mxu0 %v3888
    %3956 = vmatpush1.msra.mxu0 %v3887
    %3957 = vmatprep.subr.mxu0 %v3883
    %3958 = vmatpush1.msra.mxu0 %v3882
    %3959 = vmatprep.subr.mxu0 %v3878
    %3960 = vmatpush1.msra.mxu0 %v3877
    %3961 = vmatprep.subr.mxu0 %v3873
    %3962 = vmatpush1.msra.mxu0 %v3872
    %3963 = vmatprep.subr.mxu0 %v3868
    %3964 = vmatpush1.msra.mxu0 %v3867
    %3965 = vmatprep.subr.mxu0 %v3863
    %3966 = vmatpush1.msra.mxu0 %v3862
    %3967 = vmatprep.subr.mxu0 %v3858
    %3968 = vmatpush1.msra.mxu0 %v3857
    %3969 = vmatprep.subr.mxu0 0.0
    %3970 = vmatpush2.msra.mxu0 0.0
    %3971 = vmatprep.subr.mxu0 0.0
    %3972 = vmatpush2.msra.mxu0 0.0
    %3973 = vmatprep.subr.mxu0 0.0
    %3974 = vmatpush2.msra.mxu0 0.0
    %3975 = vmatprep.subr.mxu0 0.0
    %3976 = vmatpush2.msra.mxu0 0.0
    %3977 = vmatprep.subr.mxu0 0.0
    %3978 = vmatpush2.msra.mxu0 0.0
    %3979 = vmatprep.subr.mxu0 0.0
    %3980 = vmatpush2.msra.mxu0 0.0
    %3981 = vmatprep.subr.mxu0 0.0
    %3982 = vmatpush2.msra.mxu0 0.0
    %3983 = vmatprep.subr.mxu0 0.0
    %3984 = vmatpush2.msra.mxu0 0.0
    %3985 = vmatprep.subr.mxu0 0.0
    %3986 = vmatpush2.msra.mxu0 0.0
    %3987 = vmatprep.subr.mxu0 0.0
    %3988 = vmatpush2.msra.mxu0 0.0
    %3989 = vmatprep.subr.mxu0 0.0
    %3990 = vmatpush2.msra.mxu0 0.0
    %3991 = vmatprep.subr.mxu0 0.0
    %3992 = vmatpush2.msra.mxu0 0.0
    %3993 = vmatprep.subr.mxu0 0.0
    %3994 = vmatpush2.msra.mxu0 0.0
    %3995 = vmatprep.subr.mxu0 0.0
    %3996 = vmatpush2.msra.mxu0 0.0
    %3997 = vmatprep.subr.mxu0 0.0
    %3998 = vmatpush2.msra.mxu0 0.0
    %3999 = vmatprep.subr.mxu0 0.0
    %4000 = vmatpush2.msra.mxu0 0.0
    %4001 = vmatprep.mubr.f32.mxu0 0.0
    %4002 = vmatmul.mubr.f32.gmra.mxu0 %v1064
    %v4003 = vpop.f32.mrf.mxu0
    %v4004 = vadd.f32 %v1040, %v4003
    %v4005 = vpop.f32.mrf.mxu0
    %v4006 = vadd.f32 %v1040, %v4005
    %4007 = vmatprep.mubr.f32.mxu0 0.0
    %4008 = vmatmul.mubr.f32.gmra.mxu0 %v1067
    %v4009 = vpop.f32.mrf.mxu0
    %v4010 = vadd.f32 %v1045, %v4009
    %v4011 = vpop.f32.mrf.mxu0
    %v4012 = vadd.f32 %v1045, %v4011
    %4013 = vmatprep.mubr.f32.mxu0 0.0
    %4014 = vmatmul.mubr.f32.gmra.mxu0 %v1070
    %v4015 = vpop.f32.mrf.mxu0
    %v4016 = vadd.f32 %v1050, %v4015
    %v4017 = vpop.f32.mrf.mxu0
    %v4018 = vadd.f32 %v1050, %v4017
    %4019 = vmatprep.mubr.f32.mxu0 0.0
    %4020 = vmatmul.mubr.f32.gmra.mxu0 %v1073
    %v4021 = vpop.f32.mrf.mxu0
    %v4022 = vadd.f32 %v1055, %v4021
    %v4023 = vpop.f32.mrf.mxu0
    %v4024 = vadd.f32 %v1055, %v4023
    %4025 = vmatprep.mubr.f32.mxu0 0.0
    %4026 = vmatmul.mubr.f32.gmra.mxu0 %v1076
    %v4027 = vpop.f32.mrf.mxu0
    %v4028 = vadd.f32 %v1060, %v4027
    %v4029 = vpop.f32.mrf.mxu0
    %v4030 = vadd.f32 %v1060, %v4029
    %4031 = vdwg.mxu0
    %4032 = vmatprep.subr.mxu0 0.0
    %4033 = vmatpush1.msra.mxu0 0.0
    %4034 = vmatprep.subr.mxu0 0.0
    %4035 = vmatpush1.msra.mxu0 0.0
    %4036 = vmatprep.subr.mxu0 0.0
    %4037 = vmatpush1.msra.mxu0 0.0
    %4038 = vmatprep.subr.mxu0 %v3932
    %4039 = vmatpush1.msra.mxu0 %v3929
    %4040 = vmatprep.subr.mxu0 %v3915
    %4041 = vmatpush1.msra.mxu0 %v3914
    %4042 = vmatprep.subr.mxu0 %v3910
    %4043 = vmatpush1.msra.mxu0 %v3909
    %4044 = vmatprep.subr.mxu0 %v3905
    %4045 = vmatpush1.msra.mxu0 %v3904
    %4046 = vmatprep.subr.mxu0 %v3900
    %4047 = vmatpush1.msra.mxu0 %v3899
    %4048 = vmatprep.subr.mxu0 %v3895
    %4049 = vmatpush1.msra.mxu0 %v3894
    %4050 = vmatprep.subr.mxu0 %v3890
    %4051 = vmatpush1.msra.mxu0 %v3889
    %4052 = vmatprep.subr.mxu0 %v3885
    %4053 = vmatpush1.msra.mxu0 %v3884
    %4054 = vmatprep.subr.mxu0 %v3880
    %4055 = vmatpush1.msra.mxu0 %v3879
    %4056 = vmatprep.subr.mxu0 %v3875
    %4057 = vmatpush1.msra.mxu0 %v3874
    %4058 = vmatprep.subr.mxu0 %v3870
    %4059 = vmatpush1.msra.mxu0 %v3869
    %4060 = vmatprep.subr.mxu0 %v3865
    %4061 = vmatpush1.msra.mxu0 %v3864
    %4062 = vmatprep.subr.mxu0 %v3860
    %4063 = vmatpush1.msra.mxu0 %v3859
    %4064 = vmatprep.subr.mxu0 0.0
    %4065 = vmatpush2.msra.mxu0 0.0
    %4066 = vmatprep.subr.mxu0 0.0
    %4067 = vmatpush2.msra.mxu0 0.0
    %4068 = vmatprep.subr.mxu0 0.0
    %4069 = vmatpush2.msra.mxu0 0.0
    %4070 = vmatprep.subr.mxu0 0.0
    %4071 = vmatpush2.msra.mxu0 0.0
    %4072 = vmatprep.subr.mxu0 0.0
    %4073 = vmatpush2.msra.mxu0 0.0
    %4074 = vmatprep.subr.mxu0 0.0
    %4075 = vmatpush2.msra.mxu0 0.0
    %4076 = vmatprep.subr.mxu0 0.0
    %4077 = vmatpush2.msra.mxu0 0.0
    %4078 = vmatprep.subr.mxu0 0.0
    %4079 = vmatpush2.msra.mxu0 0.0
    %4080 = vmatprep.subr.mxu0 0.0
    %4081 = vmatpush2.msra.mxu0 0.0
    %4082 = vmatprep.subr.mxu0 0.0
    %4083 = vmatpush2.msra.mxu0 0.0
    %4084 = vmatprep.subr.mxu0 0.0
    %4085 = vmatpush2.msra.mxu0 0.0
    %4086 = vmatprep.subr.mxu0 0.0
    %4087 = vmatpush2.msra.mxu0 0.0
    %4088 = vmatprep.subr.mxu0 0.0
    %4089 = vmatpush2.msra.mxu0 0.0
    %4090 = vmatprep.subr.mxu0 0.0
    %4091 = vmatpush2.msra.mxu0 0.0
    %4092 = vmatprep.subr.mxu0 0.0
    %4093 = vmatpush2.msra.mxu0 0.0
    %4094 = vmatprep.subr.mxu0 0.0
    %4095 = vmatpush2.msra.mxu0 0.0
    %4096 = vmatprep.mubr.f32.mxu0 0.0
    %4097 = vmatmul.mubr.f32.gmra.mxu0 %v1064
    %v4098 = vpop.f32.mrf.mxu0
    %v4099 = vadd.f32 %v1040, %v4098
    %v4100 = vpop.f32.mrf.mxu0
    %v4101 = vadd.f32 %v1040, %v4100
    %4102 = vmatprep.mubr.f32.mxu0 0.0
    %4103 = vmatmul.mubr.f32.gmra.mxu0 %v1067
    %v4104 = vpop.f32.mrf.mxu0
    %v4105 = vadd.f32 %v1045, %v4104
    %v4106 = vpop.f32.mrf.mxu0
    %v4107 = vadd.f32 %v1045, %v4106
    %4108 = vmatprep.mubr.f32.mxu0 0.0
    %4109 = vmatmul.mubr.f32.gmra.mxu0 %v1070
    %v4110 = vpop.f32.mrf.mxu0
    %v4111 = vadd.f32 %v1050, %v4110
    %v4112 = vpop.f32.mrf.mxu0
    %v4113 = vadd.f32 %v1050, %v4112
    %4114 = vmatprep.mubr.f32.mxu0 0.0
    %4115 = vmatmul.mubr.f32.gmra.mxu0 %v1073
    %v4116 = vpop.f32.mrf.mxu0
    %v4117 = vadd.f32 %v1055, %v4116
    %v4118 = vpop.f32.mrf.mxu0
    %v4119 = vadd.f32 %v1055, %v4118
    %4120 = vmatprep.mubr.f32.mxu0 0.0
    %4121 = vmatmul.mubr.f32.gmra.mxu0 %v1076
    %v4122 = vpop.f32.mrf.mxu0
    %v4123 = vadd.f32 %v1060, %v4122
    %v4124 = vpop.f32.mrf.mxu0
    %v4125 = vadd.f32 %v1060, %v4124
    %4126 = vdwg.mxu0
    %4127 = vmatprep.subr.mxu0 0.0
    %4128 = vmatpush1.msra.mxu0 0.0
    %4129 = vmatprep.subr.mxu0 0.0
    %4130 = vmatpush1.msra.mxu0 0.0
    %4131 = vmatprep.subr.mxu0 0.0
    %4132 = vmatpush1.msra.mxu0 0.0
    %4133 = vmatprep.subr.mxu0 0.0
    %4134 = vmatpush1.msra.mxu0 %v3935
    %4135 = vmatprep.subr.mxu0 0.0
    %4136 = vmatpush1.msra.mxu0 %v3916
    %4137 = vmatprep.subr.mxu0 0.0
    %4138 = vmatpush1.msra.mxu0 %v3911
    %4139 = vmatprep.subr.mxu0 0.0
    %4140 = vmatpush1.msra.mxu0 %v3906
    %4141 = vmatprep.subr.mxu0 0.0
    %4142 = vmatpush1.msra.mxu0 %v3901
    %4143 = vmatprep.subr.mxu0 0.0
    %4144 = vmatpush1.msra.mxu0 %v3896
    %4145 = vmatprep.subr.mxu0 0.0
    %4146 = vmatpush1.msra.mxu0 %v3891
    %4147 = vmatprep.subr.mxu0 0.0
    %4148 = vmatpush1.msra.mxu0 %v3886
    %4149 = vmatprep.subr.mxu0 0.0
    %4150 = vmatpush1.msra.mxu0 %v3881
    %4151 = vmatprep.subr.mxu0 0.0
    %4152 = vmatpush1.msra.mxu0 %v3876
    %4153 = vmatprep.subr.mxu0 0.0
    %4154 = vmatpush1.msra.mxu0 %v3871
    %4155 = vmatprep.subr.mxu0 0.0
    %4156 = vmatpush1.msra.mxu0 %v3866
    %4157 = vmatprep.subr.mxu0 0.0
    %4158 = vmatpush1.msra.mxu0 %v3861
    %4159 = vmatprep.subr.mxu0 0.0
    %4160 = vmatpush2.msra.mxu0 0.0
    %4161 = vmatprep.subr.mxu0 0.0
    %4162 = vmatpush2.msra.mxu0 0.0
    %4163 = vmatprep.subr.mxu0 0.0
    %4164 = vmatpush2.msra.mxu0 0.0
    %4165 = vmatprep.subr.mxu0 0.0
    %4166 = vmatpush2.msra.mxu0 0.0
    %4167 = vmatprep.subr.mxu0 0.0
    %4168 = vmatpush2.msra.mxu0 0.0
    %4169 = vmatprep.subr.mxu0 0.0
    %4170 = vmatpush2.msra.mxu0 0.0
    %4171 = vmatprep.subr.mxu0 0.0
    %4172 = vmatpush2.msra.mxu0 0.0
    %4173 = vmatprep.subr.mxu0 0.0
    %4174 = vmatpush2.msra.mxu0 0.0
    %4175 = vmatprep.subr.mxu0 0.0
    %4176 = vmatpush2.msra.mxu0 0.0
    %4177 = vmatprep.subr.mxu0 0.0
    %4178 = vmatpush2.msra.mxu0 0.0
    %4179 = vmatprep.subr.mxu0 0.0
    %4180 = vmatpush2.msra.mxu0 0.0
    %4181 = vmatprep.subr.mxu0 0.0
    %4182 = vmatpush2.msra.mxu0 0.0
    %4183 = vmatprep.subr.mxu0 0.0
    %4184 = vmatpush2.msra.mxu0 0.0
    %4185 = vmatprep.subr.mxu0 0.0
    %4186 = vmatpush2.msra.mxu0 0.0
    %4187 = vmatprep.subr.mxu0 0.0
    %4188 = vmatpush2.msra.mxu0 0.0
    %4189 = vmatprep.subr.mxu0 0.0
    %4190 = vmatpush2.msra.mxu0 0.0
    %4191 = vmatprep.mubr.f32.mxu0 0.0
    %4192 = vmatmul.mubr.f32.gmra.mxu0 %v1064
    %v4193 = vpop.f32.mrf.mxu0
    %v4194 = vadd.f32 %v1040, %v4193
    %v4195 = vpop.f32.mrf.mxu0
    %4196 = vmatprep.mubr.f32.mxu0 0.0
    %4197 = vmatmul.mubr.f32.gmra.mxu0 %v1067
    %v4198 = vpop.f32.mrf.mxu0
    %v4199 = vadd.f32 %v1045, %v4198
    %v4200 = vpop.f32.mrf.mxu0
    %4201 = vmatprep.mubr.f32.mxu0 0.0
    %4202 = vmatmul.mubr.f32.gmra.mxu0 %v1070
    %v4203 = vpop.f32.mrf.mxu0
    %v4204 = vadd.f32 %v1050, %v4203
    %v4205 = vpop.f32.mrf.mxu0
    %4206 = vmatprep.mubr.f32.mxu0 0.0
    %4207 = vmatmul.mubr.f32.gmra.mxu0 %v1073
    %v4208 = vpop.f32.mrf.mxu0
    %v4209 = vadd.f32 %v1055, %v4208
    %v4210 = vpop.f32.mrf.mxu0
    %4211 = vmatprep.mubr.f32.mxu0 0.0
    %4212 = vmatmul.mubr.f32.gmra.mxu0 %v1076
    %v4213 = vpop.f32.mrf.mxu0
    %v4214 = vadd.f32 %v1060, %v4213
    %v4215 = vpop.f32.mrf.mxu0
    %4216 = vdwg.mxu0
    %v4217 = vmul.f32 %v4004, %v4004
    %v4218 = vmul.f32 %v4006, %v4006
    %v4219 = vmul.f32 %v4099, %v4099
    %v4220 = vmul.f32 %v4101, %v4101
    %v4221 = vmul.f32 %v4194, %v4194
    %v4222 = vmul.f32 %v4010, %v4010
    %v4223 = vmul.f32 %v4012, %v4012
    %v4224 = vmul.f32 %v4105, %v4105
    %v4225 = vmul.f32 %v4107, %v4107
    %v4226 = vmul.f32 %v4199, %v4199
    %v4227 = vmul.f32 %v4016, %v4016
    %v4228 = vmul.f32 %v4018, %v4018
    %v4229 = vmul.f32 %v4111, %v4111
    %v4230 = vmul.f32 %v4113, %v4113
    %v4231 = vmul.f32 %v4204, %v4204
    %v4232 = vmul.f32 %v4022, %v4022
    %v4233 = vmul.f32 %v4024, %v4024
    %v4234 = vmul.f32 %v4117, %v4117
    %v4235 = vmul.f32 %v4119, %v4119
    %v4236 = vmul.f32 %v4209, %v4209
    %v4237 = vmul.f32 %v4028, %v4028
    %v4238 = vmul.f32 %v4030, %v4030
    %v4239 = vmul.f32 %v4123, %v4123
    %v4240 = vmul.f32 %v4125, %v4125
    %v4241 = vmul.f32 %v4214, %v4214
    %v4243 = vsel %vm1399, %v4221, 0
    %v4246 = vsel %vm1399, %v4226, 0
    %v4249 = vsel %vm1399, %v4231, 0
    %v4252 = vsel %vm1399, %v4236, 0
    %v4255 = vsel %vm1399, %v4241, 0
    %4257 = vmatprep.subr.mxu0 %v147
    %4258 = vmatpush1.msra.mxu0 %v146
    %4259 = vmatprep.subr.mxu0 %v143
    %4260 = vmatpush1.msra.mxu0 %v142
    %4261 = vmatprep.subr.mxu0 %v139
    %4262 = vmatpush1.msra.mxu0 %v138
    %4263 = vmatprep.subr.mxu0 %v135
    %4264 = vmatpush1.msra.mxu0 %v134
    %4265 = vmatprep.subr.mxu0 %v131
    %4266 = vmatpush1.msra.mxu0 %v130
    %4267 = vmatprep.subr.mxu0 %v127
    %4268 = vmatpush1.msra.mxu0 %v126
    %4269 = vmatprep.subr.mxu0 %v123
    %4270 = vmatpush1.msra.mxu0 %v122
    %4271 = vmatprep.subr.mxu0 %v119
    %4272 = vmatpush1.msra.mxu0 %v118
    %4273 = vmatprep.subr.mxu0 %v115
    %4274 = vmatpush1.msra.mxu0 %v114
    %4275 = vmatprep.subr.mxu0 %v111
    %4276 = vmatpush1.msra.mxu0 %v110
    %4277 = vmatprep.subr.mxu0 %v107
    %4278 = vmatpush1.msra.mxu0 %v106
    %4279 = vmatprep.subr.mxu0 %v103
    %4280 = vmatpush1.msra.mxu0 %v102
    %4281 = vmatprep.subr.mxu0 %v99
    %4282 = vmatpush1.msra.mxu0 %v98
    %4283 = vmatprep.subr.mxu0 %v95
    %4284 = vmatpush1.msra.mxu0 %v94
    %4285 = vmatprep.subr.mxu0 %v91
    %4286 = vmatpush1.msra.mxu0 %v90
    %4287 = vmatprep.subr.mxu0 %v87
    %4288 = vmatpush1.msra.mxu0 %v86
    %4289 = vmatprep.subr.mxu0 %v211
    %4290 = vmatpush2.msra.mxu0 %v210
    %4291 = vmatprep.subr.mxu0 %v207
    %4292 = vmatpush2.msra.mxu0 %v206
    %4293 = vmatprep.subr.mxu0 %v203
    %4294 = vmatpush2.msra.mxu0 %v202
    %4295 = vmatprep.subr.mxu0 %v199
    %4296 = vmatpush2.msra.mxu0 %v198
    %4297 = vmatprep.subr.mxu0 %v195
    %4298 = vmatpush2.msra.mxu0 %v194
    %4299 = vmatprep.subr.mxu0 %v191
    %4300 = vmatpush2.msra.mxu0 %v190
    %4301 = vmatprep.subr.mxu0 %v187
    %4302 = vmatpush2.msra.mxu0 %v186
    %4303 = vmatprep.subr.mxu0 %v183
    %4304 = vmatpush2.msra.mxu0 %v182
    %4305 = vmatprep.subr.mxu0 %v179
    %4306 = vmatpush2.msra.mxu0 %v178
    %4307 = vmatprep.subr.mxu0 %v175
    %4308 = vmatpush2.msra.mxu0 %v174
    %4309 = vmatprep.subr.mxu0 %v171
    %4310 = vmatpush2.msra.mxu0 %v170
    %4311 = vmatprep.subr.mxu0 %v167
    %4312 = vmatpush2.msra.mxu0 %v166
    %4313 = vmatprep.subr.mxu0 %v163
    %4314 = vmatpush2.msra.mxu0 %v162
    %4315 = vmatprep.subr.mxu0 %v159
    %4316 = vmatpush2.msra.mxu0 %v158
    %4317 = vmatprep.subr.mxu0 %v155
    %4318 = vmatpush2.msra.mxu0 %v154
    %4319 = vmatprep.subr.mxu0 %v151
    %4320 = vmatpush2.msra.mxu0 %v150
    %4321 = vmatprep.mubr.f32.mxu0 %v4218
    %4322 = vmatmul.mubr.f32.gmra.mxu0 %v4217
    %v4323 = vpop.f32.mrf.mxu0
    %v4324 = vadd.f32 0.0, %v4323
    %v4325 = vpop.f32.mrf.mxu0
    %v4326 = vadd.f32 0.0, %v4325
    %4327 = vmatprep.mubr.f32.mxu0 %v4223
    %4328 = vmatmul.mubr.f32.gmra.mxu0 %v4222
    %v4329 = vpop.f32.mrf.mxu0
    %v4330 = vadd.f32 0.0, %v4329
    %v4331 = vpop.f32.mrf.mxu0
    %v4332 = vadd.f32 0.0, %v4331
    %4333 = vmatprep.mubr.f32.mxu0 %v4228
    %4334 = vmatmul.mubr.f32.gmra.mxu0 %v4227
    %v4335 = vpop.f32.mrf.mxu0
    %v4336 = vadd.f32 0.0, %v4335
    %v4337 = vpop.f32.mrf.mxu0
    %v4338 = vadd.f32 0.0, %v4337
    %4339 = vmatprep.mubr.f32.mxu0 %v4233
    %4340 = vmatmul.mubr.f32.gmra.mxu0 %v4232
    %v4341 = vpop.f32.mrf.mxu0
    %v4342 = vadd.f32 0.0, %v4341
    %v4343 = vpop.f32.mrf.mxu0
    %v4344 = vadd.f32 0.0, %v4343
    %4345 = vmatprep.mubr.f32.mxu0 %v4238
    %4346 = vmatmul.mubr.f32.gmra.mxu0 %v4237
    %v4347 = vpop.f32.mrf.mxu0
    %v4348 = vadd.f32 0.0, %v4347
    %v4349 = vpop.f32.mrf.mxu0
    %v4350 = vadd.f32 0.0, %v4349
    %4351 = vdwg.mxu0
    %4352 = vmatprep.subr.mxu0 %v275
    %4353 = vmatpush1.msra.mxu0 %v274
    %4354 = vmatprep.subr.mxu0 %v271
    %4355 = vmatpush1.msra.mxu0 %v270
    %4356 = vmatprep.subr.mxu0 %v267
    %4357 = vmatpush1.msra.mxu0 %v266
    %4358 = vmatprep.subr.mxu0 %v263
    %4359 = vmatpush1.msra.mxu0 %v262
    %4360 = vmatprep.subr.mxu0 %v259
    %4361 = vmatpush1.msra.mxu0 %v258
    %4362 = vmatprep.subr.mxu0 %v255
    %4363 = vmatpush1.msra.mxu0 %v254
    %4364 = vmatprep.subr.mxu0 %v251
    %4365 = vmatpush1.msra.mxu0 %v250
    %4366 = vmatprep.subr.mxu0 %v247
    %4367 = vmatpush1.msra.mxu0 %v246
    %4368 = vmatprep.subr.mxu0 %v243
    %4369 = vmatpush1.msra.mxu0 %v242
    %4370 = vmatprep.subr.mxu0 %v239
    %4371 = vmatpush1.msra.mxu0 %v238
    %4372 = vmatprep.subr.mxu0 %v235
    %4373 = vmatpush1.msra.mxu0 %v234
    %4374 = vmatprep.subr.mxu0 %v231
    %4375 = vmatpush1.msra.mxu0 %v230
    %4376 = vmatprep.subr.mxu0 %v227
    %4377 = vmatpush1.msra.mxu0 %v226
    %4378 = vmatprep.subr.mxu0 %v223
    %4379 = vmatpush1.msra.mxu0 %v222
    %4380 = vmatprep.subr.mxu0 %v219
    %4381 = vmatpush1.msra.mxu0 %v218
    %4382 = vmatprep.subr.mxu0 %v215
    %4383 = vmatpush1.msra.mxu0 %v214
    %4384 = vmatprep.subr.mxu0 %v339
    %4385 = vmatpush2.msra.mxu0 %v338
    %4386 = vmatprep.subr.mxu0 %v335
    %4387 = vmatpush2.msra.mxu0 %v334
    %4388 = vmatprep.subr.mxu0 %v331
    %4389 = vmatpush2.msra.mxu0 %v330
    %4390 = vmatprep.subr.mxu0 %v327
    %4391 = vmatpush2.msra.mxu0 %v326
    %4392 = vmatprep.subr.mxu0 %v323
    %4393 = vmatpush2.msra.mxu0 %v322
    %4394 = vmatprep.subr.mxu0 %v319
    %4395 = vmatpush2.msra.mxu0 %v318
    %4396 = vmatprep.subr.mxu0 %v315
    %4397 = vmatpush2.msra.mxu0 %v314
    %4398 = vmatprep.subr.mxu0 %v311
    %4399 = vmatpush2.msra.mxu0 %v310
    %4400 = vmatprep.subr.mxu0 %v307
    %4401 = vmatpush2.msra.mxu0 %v306
    %4402 = vmatprep.subr.mxu0 %v303
    %4403 = vmatpush2.msra.mxu0 %v302
    %4404 = vmatprep.subr.mxu0 %v299
    %4405 = vmatpush2.msra.mxu0 %v298
    %4406 = vmatprep.subr.mxu0 %v295
    %4407 = vmatpush2.msra.mxu0 %v294
    %4408 = vmatprep.subr.mxu0 %v291
    %4409 = vmatpush2.msra.mxu0 %v290
    %4410 = vmatprep.subr.mxu0 %v287
    %4411 = vmatpush2.msra.mxu0 %v286
    %4412 = vmatprep.subr.mxu0 %v283
    %4413 = vmatpush2.msra.mxu0 %v282
    %4414 = vmatprep.subr.mxu0 %v279
    %4415 = vmatpush2.msra.mxu0 %v278
    %4416 = vmatprep.mubr.f32.mxu0 %v4220
    %4417 = vmatmul.mubr.f32.gmra.mxu0 %v4219
    %v4418 = vpop.f32.mrf.mxu0
    %v4419 = vadd.f32 %v4324, %v4418
    %v4420 = vpop.f32.mrf.mxu0
    %v4421 = vadd.f32 %v4326, %v4420
    %4422 = vmatprep.mubr.f32.mxu0 %v4225
    %4423 = vmatmul.mubr.f32.gmra.mxu0 %v4224
    %v4424 = vpop.f32.mrf.mxu0
    %v4425 = vadd.f32 %v4330, %v4424
    %v4426 = vpop.f32.mrf.mxu0
    %v4427 = vadd.f32 %v4332, %v4426
    %4428 = vmatprep.mubr.f32.mxu0 %v4230
    %4429 = vmatmul.mubr.f32.gmra.mxu0 %v4229
    %v4430 = vpop.f32.mrf.mxu0
    %v4431 = vadd.f32 %v4336, %v4430
    %v4432 = vpop.f32.mrf.mxu0
    %v4433 = vadd.f32 %v4338, %v4432
    %4434 = vmatprep.mubr.f32.mxu0 %v4235
    %4435 = vmatmul.mubr.f32.gmra.mxu0 %v4234
    %v4436 = vpop.f32.mrf.mxu0
    %v4437 = vadd.f32 %v4342, %v4436
    %v4438 = vpop.f32.mrf.mxu0
    %v4439 = vadd.f32 %v4344, %v4438
    %4440 = vmatprep.mubr.f32.mxu0 %v4240
    %4441 = vmatmul.mubr.f32.gmra.mxu0 %v4239
    %v4442 = vpop.f32.mrf.mxu0
    %v4443 = vadd.f32 %v4348, %v4442
    %v4444 = vpop.f32.mrf.mxu0
    %v4445 = vadd.f32 %v4350, %v4444
    %4446 = vdwg.mxu0
    %4447 = vmatprep.subr.mxu0 0.0
    %4448 = vmatpush1.msra.mxu0 0.0
    %4449 = vmatprep.subr.mxu0 0.0
    %4450 = vmatpush1.msra.mxu0 0.0
    %4451 = vmatprep.subr.mxu0 0.0
    %4452 = vmatpush1.msra.mxu0 0.0
    %4453 = vmatprep.subr.mxu0 0.0
    %4454 = vmatpush1.msra.mxu0 0.0
    %4455 = vmatprep.subr.mxu0 0.0
    %4456 = vmatpush1.msra.mxu0 0.0
    %4457 = vmatprep.subr.mxu0 0.0
    %4458 = vmatpush1.msra.mxu0 0.0
    %4459 = vmatprep.subr.mxu0 0.0
    %4460 = vmatpush1.msra.mxu0 0.0
    %4461 = vmatprep.subr.mxu0 0.0
    %4462 = vmatpush1.msra.mxu0 0.0
    %4463 = vmatprep.subr.mxu0 0.0
    %4464 = vmatpush1.msra.mxu0 0.0
    %4465 = vmatprep.subr.mxu0 0.0
    %4466 = vmatpush1.msra.mxu0 0.0
    %4467 = vmatprep.subr.mxu0 0.0
    %4468 = vmatpush1.msra.mxu0 0.0
    %4469 = vmatprep.subr.mxu0 0.0
    %4470 = vmatpush1.msra.mxu0 0.0
    %4471 = vmatprep.subr.mxu0 0.0
    %4472 = vmatpush1.msra.mxu0 0.0
    %4473 = vmatprep.subr.mxu0 0.0
    %4474 = vmatpush1.msra.mxu0 0.0
    %4475 = vmatprep.subr.mxu0 0.0
    %4476 = vmatpush1.msra.mxu0 0.0
    %4477 = vmatprep.subr.mxu0 %v343
    %4478 = vmatpush1.msra.mxu0 %v342
    %4479 = vmatprep.subr.mxu0 0.0
    %4480 = vmatpush2.msra.mxu0 0.0
    %4481 = vmatprep.subr.mxu0 0.0
    %4482 = vmatpush2.msra.mxu0 0.0
    %4483 = vmatprep.subr.mxu0 0.0
    %4484 = vmatpush2.msra.mxu0 0.0
    %4485 = vmatprep.subr.mxu0 0.0
    %4486 = vmatpush2.msra.mxu0 0.0
    %4487 = vmatprep.subr.mxu0 0.0
    %4488 = vmatpush2.msra.mxu0 0.0
    %4489 = vmatprep.subr.mxu0 0.0
    %4490 = vmatpush2.msra.mxu0 0.0
    %4491 = vmatprep.subr.mxu0 0.0
    %4492 = vmatpush2.msra.mxu0 0.0
    %4493 = vmatprep.subr.mxu0 0.0
    %4494 = vmatpush2.msra.mxu0 0.0
    %4495 = vmatprep.subr.mxu0 0.0
    %4496 = vmatpush2.msra.mxu0 0.0
    %4497 = vmatprep.subr.mxu0 0.0
    %4498 = vmatpush2.msra.mxu0 0.0
    %4499 = vmatprep.subr.mxu0 0.0
    %4500 = vmatpush2.msra.mxu0 0.0
    %4501 = vmatprep.subr.mxu0 0.0
    %4502 = vmatpush2.msra.mxu0 0.0
    %4503 = vmatprep.subr.mxu0 0.0
    %4504 = vmatpush2.msra.mxu0 0.0
    %4505 = vmatprep.subr.mxu0 0.0
    %4506 = vmatpush2.msra.mxu0 0.0
    %4507 = vmatprep.subr.mxu0 0.0
    %4508 = vmatpush2.msra.mxu0 0.0
    %4509 = vmatprep.subr.mxu0 0.0
    %4510 = vmatpush2.msra.mxu0 0.0
    %4511 = vmatprep.mubr.f32.mxu0 0.0
    %4512 = vmatmul.mubr.f32.gmra.mxu0 %v4243
    %v4513 = vpop.f32.mrf.mxu0
    %v4514 = vadd.f32 %v4419, %v4513
    %v4515 = vpop.f32.mrf.mxu0
    %v4516 = vadd.f32 %v4421, %v4515
    %4517 = vmatprep.mubr.f32.mxu0 0.0
    %4518 = vmatmul.mubr.f32.gmra.mxu0 %v4246
    %v4519 = vpop.f32.mrf.mxu0
    %v4520 = vadd.f32 %v4425, %v4519
    %v4521 = vpop.f32.mrf.mxu0
    %v4522 = vadd.f32 %v4427, %v4521
    %4523 = vmatprep.mubr.f32.mxu0 0.0
    %4524 = vmatmul.mubr.f32.gmra.mxu0 %v4249
    %v4525 = vpop.f32.mrf.mxu0
    %v4526 = vadd.f32 %v4431, %v4525
    %v4527 = vpop.f32.mrf.mxu0
    %v4528 = vadd.f32 %v4433, %v4527
    %4529 = vmatprep.mubr.f32.mxu0 0.0
    %4530 = vmatmul.mubr.f32.gmra.mxu0 %v4252
    %v4531 = vpop.f32.mrf.mxu0
    %v4532 = vadd.f32 %v4437, %v4531
    %v4533 = vpop.f32.mrf.mxu0
    %v4534 = vadd.f32 %v4439, %v4533
    %4535 = vmatprep.mubr.f32.mxu0 0.0
    %4536 = vmatmul.mubr.f32.gmra.mxu0 %v4255
    %v4537 = vpop.f32.mrf.mxu0
    %v4538 = vadd.f32 %v4443, %v4537
    %v4539 = vpop.f32.mrf.mxu0
    %v4540 = vadd.f32 %v4445, %v4539
    %4541 = vdwg.mxu0
    %4542 = vmatprep.subr.mxu0 %v149
    %4543 = vmatpush1.msra.mxu0 %v148
    %4544 = vmatprep.subr.mxu0 %v145
    %4545 = vmatpush1.msra.mxu0 %v144
    %4546 = vmatprep.subr.mxu0 %v141
    %4547 = vmatpush1.msra.mxu0 %v140
    %4548 = vmatprep.subr.mxu0 %v137
    %4549 = vmatpush1.msra.mxu0 %v136
    %4550 = vmatprep.subr.mxu0 %v133
    %4551 = vmatpush1.msra.mxu0 %v132
    %4552 = vmatprep.subr.mxu0 %v129
    %4553 = vmatpush1.msra.mxu0 %v128
    %4554 = vmatprep.subr.mxu0 %v125
    %4555 = vmatpush1.msra.mxu0 %v124
    %4556 = vmatprep.subr.mxu0 %v121
    %4557 = vmatpush1.msra.mxu0 %v120
    %4558 = vmatprep.subr.mxu0 %v117
    %4559 = vmatpush1.msra.mxu0 %v116
    %4560 = vmatprep.subr.mxu0 %v113
    %4561 = vmatpush1.msra.mxu0 %v112
    %4562 = vmatprep.subr.mxu0 %v109
    %4563 = vmatpush1.msra.mxu0 %v108
    %4564 = vmatprep.subr.mxu0 %v105
    %4565 = vmatpush1.msra.mxu0 %v104
    %4566 = vmatprep.subr.mxu0 %v101
    %4567 = vmatpush1.msra.mxu0 %v100
    %4568 = vmatprep.subr.mxu0 %v97
    %4569 = vmatpush1.msra.mxu0 %v96
    %4570 = vmatprep.subr.mxu0 %v93
    %4571 = vmatpush1.msra.mxu0 %v92
    %4572 = vmatprep.subr.mxu0 %v89
    %4573 = vmatpush1.msra.mxu0 %v88
    %4574 = vmatprep.subr.mxu0 %v213
    %4575 = vmatpush2.msra.mxu0 %v212
    %4576 = vmatprep.subr.mxu0 %v209
    %4577 = vmatpush2.msra.mxu0 %v208
    %4578 = vmatprep.subr.mxu0 %v205
    %4579 = vmatpush2.msra.mxu0 %v204
    %4580 = vmatprep.subr.mxu0 %v201
    %4581 = vmatpush2.msra.mxu0 %v200
    %4582 = vmatprep.subr.mxu0 %v197
    %4583 = vmatpush2.msra.mxu0 %v196
    %4584 = vmatprep.subr.mxu0 %v193
    %4585 = vmatpush2.msra.mxu0 %v192
    %4586 = vmatprep.subr.mxu0 %v189
    %4587 = vmatpush2.msra.mxu0 %v188
    %4588 = vmatprep.subr.mxu0 %v185
    %4589 = vmatpush2.msra.mxu0 %v184
    %4590 = vmatprep.subr.mxu0 %v181
    %4591 = vmatpush2.msra.mxu0 %v180
    %4592 = vmatprep.subr.mxu0 %v177
    %4593 = vmatpush2.msra.mxu0 %v176
    %4594 = vmatprep.subr.mxu0 %v173
    %4595 = vmatpush2.msra.mxu0 %v172
    %4596 = vmatprep.subr.mxu0 %v169
    %4597 = vmatpush2.msra.mxu0 %v168
    %4598 = vmatprep.subr.mxu0 %v165
    %4599 = vmatpush2.msra.mxu0 %v164
    %4600 = vmatprep.subr.mxu0 %v161
    %4601 = vmatpush2.msra.mxu0 %v160
    %4602 = vmatprep.subr.mxu0 %v157
    %4603 = vmatpush2.msra.mxu0 %v156
    %4604 = vmatprep.subr.mxu0 %v153
    %4605 = vmatpush2.msra.mxu0 %v152
    %4606 = vmatprep.mubr.f32.mxu0 %v4218
    %4607 = vmatmul.mubr.f32.gmra.mxu0 %v4217
    %v4608 = vpop.f32.mrf.mxu0
    %v4609 = vadd.f32 0.0, %v4608
    %v4610 = vpop.f32.mrf.mxu0
    %v4611 = vadd.f32 0.0, %v4610
    %4612 = vmatprep.mubr.f32.mxu0 %v4223
    %4613 = vmatmul.mubr.f32.gmra.mxu0 %v4222
    %v4614 = vpop.f32.mrf.mxu0
    %v4615 = vadd.f32 0.0, %v4614
    %v4616 = vpop.f32.mrf.mxu0
    %v4617 = vadd.f32 0.0, %v4616
    %4618 = vmatprep.mubr.f32.mxu0 %v4228
    %4619 = vmatmul.mubr.f32.gmra.mxu0 %v4227
    %v4620 = vpop.f32.mrf.mxu0
    %v4621 = vadd.f32 0.0, %v4620
    %v4622 = vpop.f32.mrf.mxu0
    %v4623 = vadd.f32 0.0, %v4622
    %4624 = vmatprep.mubr.f32.mxu0 %v4233
    %4625 = vmatmul.mubr.f32.gmra.mxu0 %v4232
    %v4626 = vpop.f32.mrf.mxu0
    %v4627 = vadd.f32 0.0, %v4626
    %v4628 = vpop.f32.mrf.mxu0
    %v4629 = vadd.f32 0.0, %v4628
    %4630 = vmatprep.mubr.f32.mxu0 %v4238
    %4631 = vmatmul.mubr.f32.gmra.mxu0 %v4237
    %v4632 = vpop.f32.mrf.mxu0
    %v4633 = vadd.f32 0.0, %v4632
    %v4634 = vpop.f32.mrf.mxu0
    %v4635 = vadd.f32 0.0, %v4634
    %4636 = vdwg.mxu0
    %4637 = vmatprep.subr.mxu0 %v277
    %4638 = vmatpush1.msra.mxu0 %v276
    %4639 = vmatprep.subr.mxu0 %v273
    %4640 = vmatpush1.msra.mxu0 %v272
    %4641 = vmatprep.subr.mxu0 %v269
    %4642 = vmatpush1.msra.mxu0 %v268
    %4643 = vmatprep.subr.mxu0 %v265
    %4644 = vmatpush1.msra.mxu0 %v264
    %4645 = vmatprep.subr.mxu0 %v261
    %4646 = vmatpush1.msra.mxu0 %v260
    %4647 = vmatprep.subr.mxu0 %v257
    %4648 = vmatpush1.msra.mxu0 %v256
    %4649 = vmatprep.subr.mxu0 %v253
    %4650 = vmatpush1.msra.mxu0 %v252
    %4651 = vmatprep.subr.mxu0 %v249
    %4652 = vmatpush1.msra.mxu0 %v248
    %4653 = vmatprep.subr.mxu0 %v245
    %4654 = vmatpush1.msra.mxu0 %v244
    %4655 = vmatprep.subr.mxu0 %v241
    %4656 = vmatpush1.msra.mxu0 %v240
    %4657 = vmatprep.subr.mxu0 %v237
    %4658 = vmatpush1.msra.mxu0 %v236
    %4659 = vmatprep.subr.mxu0 %v233
    %4660 = vmatpush1.msra.mxu0 %v232
    %4661 = vmatprep.subr.mxu0 %v229
    %4662 = vmatpush1.msra.mxu0 %v228
    %4663 = vmatprep.subr.mxu0 %v225
    %4664 = vmatpush1.msra.mxu0 %v224
    %4665 = vmatprep.subr.mxu0 %v221
    %4666 = vmatpush1.msra.mxu0 %v220
    %4667 = vmatprep.subr.mxu0 %v217
    %4668 = vmatpush1.msra.mxu0 %v216
    %4669 = vmatprep.subr.mxu0 %v341
    %4670 = vmatpush2.msra.mxu0 %v340
    %4671 = vmatprep.subr.mxu0 %v337
    %4672 = vmatpush2.msra.mxu0 %v336
    %4673 = vmatprep.subr.mxu0 %v333
    %4674 = vmatpush2.msra.mxu0 %v332
    %4675 = vmatprep.subr.mxu0 %v329
    %4676 = vmatpush2.msra.mxu0 %v328
    %4677 = vmatprep.subr.mxu0 %v325
    %4678 = vmatpush2.msra.mxu0 %v324
    %4679 = vmatprep.subr.mxu0 %v321
    %4680 = vmatpush2.msra.mxu0 %v320
    %4681 = vmatprep.subr.mxu0 %v317
    %4682 = vmatpush2.msra.mxu0 %v316
    %4683 = vmatprep.subr.mxu0 %v313
    %4684 = vmatpush2.msra.mxu0 %v312
    %4685 = vmatprep.subr.mxu0 %v309
    %4686 = vmatpush2.msra.mxu0 %v308
    %4687 = vmatprep.subr.mxu0 %v305
    %4688 = vmatpush2.msra.mxu0 %v304
    %4689 = vmatprep.subr.mxu0 %v301
    %4690 = vmatpush2.msra.mxu0 %v300
    %4691 = vmatprep.subr.mxu0 %v297
    %4692 = vmatpush2.msra.mxu0 %v296
    %4693 = vmatprep.subr.mxu0 %v293
    %4694 = vmatpush2.msra.mxu0 %v292
    %4695 = vmatprep.subr.mxu0 %v289
    %4696 = vmatpush2.msra.mxu0 %v288
    %4697 = vmatprep.subr.mxu0 %v285
    %4698 = vmatpush2.msra.mxu0 %v284
    %4699 = vmatprep.subr.mxu0 %v281
    %4700 = vmatpush2.msra.mxu0 %v280
    %4701 = vmatprep.mubr.f32.mxu0 %v4220
    %4702 = vmatmul.mubr.f32.gmra.mxu0 %v4219
    %v4703 = vpop.f32.mrf.mxu0
    %v4704 = vadd.f32 %v4609, %v4703
    %v4705 = vpop.f32.mrf.mxu0
    %v4706 = vadd.f32 %v4611, %v4705
    %4707 = vmatprep.mubr.f32.mxu0 %v4225
    %4708 = vmatmul.mubr.f32.gmra.mxu0 %v4224
    %v4709 = vpop.f32.mrf.mxu0
    %v4710 = vadd.f32 %v4615, %v4709
    %v4711 = vpop.f32.mrf.mxu0
    %v4712 = vadd.f32 %v4617, %v4711
    %4713 = vmatprep.mubr.f32.mxu0 %v4230
    %4714 = vmatmul.mubr.f32.gmra.mxu0 %v4229
    %v4715 = vpop.f32.mrf.mxu0
    %v4716 = vadd.f32 %v4621, %v4715
    %v4717 = vpop.f32.mrf.mxu0
    %v4718 = vadd.f32 %v4623, %v4717
    %4719 = vmatprep.mubr.f32.mxu0 %v4235
    %4720 = vmatmul.mubr.f32.gmra.mxu0 %v4234
    %v4721 = vpop.f32.mrf.mxu0
    %v4722 = vadd.f32 %v4627, %v4721
    %v4723 = vpop.f32.mrf.mxu0
    %v4724 = vadd.f32 %v4629, %v4723
    %4725 = vmatprep.mubr.f32.mxu0 %v4240
    %4726 = vmatmul.mubr.f32.gmra.mxu0 %v4239
    %v4727 = vpop.f32.mrf.mxu0
    %v4728 = vadd.f32 %v4633, %v4727
    %v4729 = vpop.f32.mrf.mxu0
    %v4730 = vadd.f32 %v4635, %v4729
    %4731 = vdwg.mxu0
    %4732 = vmatprep.subr.mxu0 0.0
    %4733 = vmatpush1.msra.mxu0 0.0
    %4734 = vmatprep.subr.mxu0 0.0
    %4735 = vmatpush1.msra.mxu0 0.0
    %4736 = vmatprep.subr.mxu0 0.0
    %4737 = vmatpush1.msra.mxu0 0.0
    %4738 = vmatprep.subr.mxu0 0.0
    %4739 = vmatpush1.msra.mxu0 0.0
    %4740 = vmatprep.subr.mxu0 0.0
    %4741 = vmatpush1.msra.mxu0 0.0
    %4742 = vmatprep.subr.mxu0 0.0
    %4743 = vmatpush1.msra.mxu0 0.0
    %4744 = vmatprep.subr.mxu0 0.0
    %4745 = vmatpush1.msra.mxu0 0.0
    %4746 = vmatprep.subr.mxu0 0.0
    %4747 = vmatpush1.msra.mxu0 0.0
    %4748 = vmatprep.subr.mxu0 0.0
    %4749 = vmatpush1.msra.mxu0 0.0
    %4750 = vmatprep.subr.mxu0 0.0
    %4751 = vmatpush1.msra.mxu0 0.0
    %4752 = vmatprep.subr.mxu0 0.0
    %4753 = vmatpush1.msra.mxu0 0.0
    %4754 = vmatprep.subr.mxu0 0.0
    %4755 = vmatpush1.msra.mxu0 0.0
    %4756 = vmatprep.subr.mxu0 0.0
    %4757 = vmatpush1.msra.mxu0 0.0
    %4758 = vmatprep.subr.mxu0 0.0
    %4759 = vmatpush1.msra.mxu0 0.0
    %4760 = vmatprep.subr.mxu0 0.0
    %4761 = vmatpush1.msra.mxu0 0.0
    %4762 = vmatprep.subr.mxu0 %v345
    %4763 = vmatpush1.msra.mxu0 %v344
    %4764 = vmatprep.subr.mxu0 0.0
    %4765 = vmatpush2.msra.mxu0 0.0
    %4766 = vmatprep.subr.mxu0 0.0
    %4767 = vmatpush2.msra.mxu0 0.0
    %4768 = vmatprep.subr.mxu0 0.0
    %4769 = vmatpush2.msra.mxu0 0.0
    %4770 = vmatprep.subr.mxu0 0.0
    %4771 = vmatpush2.msra.mxu0 0.0
    %4772 = vmatprep.subr.mxu0 0.0
    %4773 = vmatpush2.msra.mxu0 0.0
    %4774 = vmatprep.subr.mxu0 0.0
    %4775 = vmatpush2.msra.mxu0 0.0
    %4776 = vmatprep.subr.mxu0 0.0
    %4777 = vmatpush2.msra.mxu0 0.0
    %4778 = vmatprep.subr.mxu0 0.0
    %4779 = vmatpush2.msra.mxu0 0.0
    %4780 = vmatprep.subr.mxu0 0.0
    %4781 = vmatpush2.msra.mxu0 0.0
    %4782 = vmatprep.subr.mxu0 0.0
    %4783 = vmatpush2.msra.mxu0 0.0
    %4784 = vmatprep.subr.mxu0 0.0
    %4785 = vmatpush2.msra.mxu0 0.0
    %4786 = vmatprep.subr.mxu0 0.0
    %4787 = vmatpush2.msra.mxu0 0.0
    %4788 = vmatprep.subr.mxu0 0.0
    %4789 = vmatpush2.msra.mxu0 0.0
    %4790 = vmatprep.subr.mxu0 0.0
    %4791 = vmatpush2.msra.mxu0 0.0
    %4792 = vmatprep.subr.mxu0 0.0
    %4793 = vmatpush2.msra.mxu0 0.0
    %4794 = vmatprep.subr.mxu0 0.0
    %4795 = vmatpush2.msra.mxu0 0.0
    %4796 = vmatprep.mubr.f32.mxu0 0.0
    %4797 = vmatmul.mubr.f32.gmra.mxu0 %v4243
    %v4798 = vpop.f32.mrf.mxu0
    %v4799 = vadd.f32 %v4704, %v4798
    %v4800 = vpop.f32.mrf.mxu0
    %v4801 = vadd.f32 %v4706, %v4800
    %4802 = vmatprep.mubr.f32.mxu0 0.0
    %4803 = vmatmul.mubr.f32.gmra.mxu0 %v4246
    %v4804 = vpop.f32.mrf.mxu0
    %v4805 = vadd.f32 %v4710, %v4804
    %v4806 = vpop.f32.mrf.mxu0
    %v4807 = vadd.f32 %v4712, %v4806
    %4808 = vmatprep.mubr.f32.mxu0 0.0
    %4809 = vmatmul.mubr.f32.gmra.mxu0 %v4249
    %v4810 = vpop.f32.mrf.mxu0
    %v4811 = vadd.f32 %v4716, %v4810
    %v4812 = vpop.f32.mrf.mxu0
    %v4813 = vadd.f32 %v4718, %v4812
    %4814 = vmatprep.mubr.f32.mxu0 0.0
    %4815 = vmatmul.mubr.f32.gmra.mxu0 %v4252
    %v4816 = vpop.f32.mrf.mxu0
    %v4817 = vadd.f32 %v4722, %v4816
    %v4818 = vpop.f32.mrf.mxu0
    %v4819 = vadd.f32 %v4724, %v4818
    %4820 = vmatprep.mubr.f32.mxu0 0.0
    %4821 = vmatmul.mubr.f32.gmra.mxu0 %v4255
    %v4822 = vpop.f32.mrf.mxu0
    %v4823 = vadd.f32 %v4728, %v4822
    %v4824 = vpop.f32.mrf.mxu0
    %v4825 = vadd.f32 %v4730, %v4824
    %4826 = vdwg.mxu0
    %v4827 = vmul.f32 %v4514, 0.013333334
    %v4828 = vmul.f32 %v4516, 0.013333334
    %v4829 = vmul.f32 %v4799, 0.013333334
    %v4830 = vmul.f32 %v4801, 0.013333334
    %v4831 = vmul.f32 %v4520, 0.013333334
    %v4832 = vmul.f32 %v4522, 0.013333334
    %v4833 = vmul.f32 %v4805, 0.013333334
    %v4834 = vmul.f32 %v4807, 0.013333334
    %v4835 = vmul.f32 %v4526, 0.013333334
    %v4836 = vmul.f32 %v4528, 0.013333334
    %v4837 = vmul.f32 %v4811, 0.013333334
    %v4838 = vmul.f32 %v4813, 0.013333334
    %v4839 = vmul.f32 %v4532, 0.013333334
    %v4840 = vmul.f32 %v4534, 0.013333334
    %v4841 = vmul.f32 %v4817, 0.013333334
    %v4842 = vmul.f32 %v4819, 0.013333334
    %v4843 = vmul.f32 %v4538, 0.013333334
    %v4844 = vmul.f32 %v4540, 0.013333334
    %v4845 = vmul.f32 %v4823, 0.013333334
    %v4846 = vmul.f32 %v4825, 0.013333334
    %v4847 = vmax.f32 %v4827, 1e-06
    %v4848 = vmax.f32 %v4828, 1e-06
    %v4849 = vmax.f32 %v4829, 1e-06
    %v4850 = vmax.f32 %v4830, 1e-06
    %v4851 = vmax.f32 %v4831, 1e-06
    %v4852 = vmax.f32 %v4832, 1e-06
    %v4853 = vmax.f32 %v4833, 1e-06
    %v4854 = vmax.f32 %v4834, 1e-06
    %v4855 = vmax.f32 %v4835, 1e-06
    %v4856 = vmax.f32 %v4836, 1e-06
    %v4857 = vmax.f32 %v4837, 1e-06
    %v4858 = vmax.f32 %v4838, 1e-06
    %v4859 = vmax.f32 %v4839, 1e-06
    %v4860 = vmax.f32 %v4840, 1e-06
    %v4861 = vmax.f32 %v4841, 1e-06
    %v4862 = vmax.f32 %v4842, 1e-06
    %v4863 = vmax.f32 %v4843, 1e-06
    %v4864 = vmax.f32 %v4844, 1e-06
    %v4865 = vmax.f32 %v4845, 1e-06
    %v4866 = vmax.f32 %v4846, 1e-06
    %v4867 = vlog2.pop %v4847
    %v4868 = vmul.f32 %v4867, 0.6931472
    %v4869 = vlog2.pop %v4848
    %v4870 = vmul.f32 %v4869, 0.6931472
    %v4871 = vlog2.pop %v4849
    %v4872 = vmul.f32 %v4871, 0.6931472
    %v4873 = vlog2.pop %v4850
    %v4874 = vmul.f32 %v4873, 0.6931472
    %v4875 = vlog2.pop %v4851
    %v4876 = vmul.f32 %v4875, 0.6931472
    %v4877 = vlog2.pop %v4852
    %v4878 = vmul.f32 %v4877, 0.6931472
    %v4879 = vlog2.pop %v4853
    %v4880 = vmul.f32 %v4879, 0.6931472
    %v4881 = vlog2.pop %v4854
    %v4882 = vmul.f32 %v4881, 0.6931472
    %v4883 = vlog2.pop %v4855
    %v4884 = vmul.f32 %v4883, 0.6931472
    %v4885 = vlog2.pop %v4856
    %v4886 = vmul.f32 %v4885, 0.6931472
    %v4887 = vlog2.pop %v4857
    %v4888 = vmul.f32 %v4887, 0.6931472
    %v4889 = vlog2.pop %v4858
    %v4890 = vmul.f32 %v4889, 0.6931472
    %v4891 = vlog2.pop %v4859
    %v4892 = vmul.f32 %v4891, 0.6931472
    %v4893 = vlog2.pop %v4860
    %v4894 = vmul.f32 %v4893, 0.6931472
    %v4895 = vlog2.pop %v4861
    %v4896 = vmul.f32 %v4895, 0.6931472
    %v4897 = vlog2.pop %v4862
    %v4898 = vmul.f32 %v4897, 0.6931472
    %v4899 = vlog2.pop %v4863
    %v4900 = vmul.f32 %v4899, 0.6931472
    %v4901 = vlog2.pop %v4864
    %v4902 = vmul.f32 %v4901, 0.6931472
    %v4903 = vlog2.pop %v4865
    %v4904 = vmul.f32 %v4903, 0.6931472
    %v4905 = vlog2.pop %v4866
    %v4906 = vmul.f32 %v4905, 0.6931472
    %4907 = vst.msk [vmem:[#allocation3] sm:$0xff] %vm2065, %v4868
    %4908 = vst.msk [vmem:[#allocation3 + $0x8] sm:$0xff] %vm2065, %v4876
    %4909 = vst.msk [vmem:[#allocation3 + $0x10] sm:$0xff] %vm2065, %v4884
    %4910 = vst.msk [vmem:[#allocation3 + $0x18] sm:$0xff] %vm2065, %v4892
    %4911 = vst.msk [vmem:[#allocation3 + $0x20] sm:$0xff] %vm2065, %v4900
    %4917 = vrot.lane.b32.xlu0 %v4868, 113
    %v4918 = vpop.permute.xlu0 %4917
    %4919 = vrot.lane.b32.xlu0 %v4876, 113
    %v4920 = vpop.permute.xlu0 %4919
    %4921 = vrot.lane.b32.xlu0 %v4884, 113
    %v4922 = vpop.permute.xlu0 %4921
    %4923 = vrot.lane.b32.xlu0 %v4892, 113
    %v4924 = vpop.permute.xlu0 %4923
    %4925 = vrot.lane.b32.xlu0 %v4900, 113
    %v4926 = vpop.permute.xlu0 %4925
    %4932 = vst.msk [vmem:[#allocation3 + $0x28] sm:$0xff] %vm2065, %v4918
    %4933 = vst.msk [vmem:[#allocation3 + $0x30] sm:$0xff] %vm2065, %v4920
    %4934 = vst.msk [vmem:[#allocation3 + $0x38] sm:$0xff] %vm2065, %v4922
    %4935 = vst.msk [vmem:[#allocation3 + $0x40] sm:$0xff] %vm2065, %v4924
    %4936 = vst.msk [vmem:[#allocation3 + $0x48] sm:$0xff] %vm2065, %v4926
    %4937 = vrot.lane.b32.xlu0 %v4868, 98
    %v4938 = vpop.permute.xlu0 %4937
    %4939 = vrot.lane.b32.xlu0 %v4876, 98
    %v4940 = vpop.permute.xlu0 %4939
    %4941 = vrot.lane.b32.xlu0 %v4884, 98
    %v4942 = vpop.permute.xlu0 %4941
    %4943 = vrot.lane.b32.xlu0 %v4892, 98
    %v4944 = vpop.permute.xlu0 %4943
    %4945 = vrot.lane.b32.xlu0 %v4900, 98
    %v4946 = vpop.permute.xlu0 %4945
    %4952 = vst.msk [vmem:[#allocation3 + $0x50] sm:$0xff] %vm2065, %v4938
    %4953 = vst.msk [vmem:[#allocation3 + $0x58] sm:$0xff] %vm2065, %v4940
    %4954 = vst.msk [vmem:[#allocation3 + $0x60] sm:$0xff] %vm2065, %v4942
    %4955 = vst.msk [vmem:[#allocation3 + $0x68] sm:$0xff] %vm2065, %v4944
    %4956 = vst.msk [vmem:[#allocation3 + $0x70] sm:$0xff] %vm2065, %v4946
    %4957 = vrot.lane.b32.xlu0 %v4868, 83
    %v4958 = vpop.permute.xlu0 %4957
    %4959 = vrot.lane.b32.xlu0 %v4876, 83
    %v4960 = vpop.permute.xlu0 %4959
    %4961 = vrot.lane.b32.xlu0 %v4884, 83
    %v4962 = vpop.permute.xlu0 %4961
    %4963 = vrot.lane.b32.xlu0 %v4892, 83
    %v4964 = vpop.permute.xlu0 %4963
    %4965 = vrot.lane.b32.xlu0 %v4900, 83
    %v4966 = vpop.permute.xlu0 %4965
    %4972 = vst.msk [vmem:[#allocation3 + $0x78] sm:$0xff] %vm2065, %v4958
    %4973 = vst.msk [vmem:[#allocation3 + $0x80] sm:$0xff] %vm2065, %v4960
    %4974 = vst.msk [vmem:[#allocation3 + $0x88] sm:$0xff] %vm2065, %v4962
    %4975 = vst.msk [vmem:[#allocation3 + $0x90] sm:$0xff] %vm2065, %v4964
    %4976 = vst.msk [vmem:[#allocation3 + $0x98] sm:$0xff] %vm2065, %v4966
    %4977 = vrot.lane.b32.xlu0 %v4868, 68
    %v4978 = vpop.permute.xlu0 %4977
    %4979 = vrot.lane.b32.xlu0 %v4876, 68
    %v4980 = vpop.permute.xlu0 %4979
    %4981 = vrot.lane.b32.xlu0 %v4884, 68
    %v4982 = vpop.permute.xlu0 %4981
    %4983 = vrot.lane.b32.xlu0 %v4892, 68
    %v4984 = vpop.permute.xlu0 %4983
    %4985 = vrot.lane.b32.xlu0 %v4900, 68
    %v4986 = vpop.permute.xlu0 %4985
    %4992 = vst.msk [vmem:[#allocation3 + $0xa0] sm:$0xff] %vm2065, %v4978
    %4993 = vst.msk [vmem:[#allocation3 + $0xa8] sm:$0xff] %vm2065, %v4980
    %4994 = vst.msk [vmem:[#allocation3 + $0xb0] sm:$0xff] %vm2065, %v4982
    %4995 = vst.msk [vmem:[#allocation3 + $0xb8] sm:$0xff] %vm2065, %v4984
    %4996 = vst.msk [vmem:[#allocation3 + $0xc0] sm:$0xff] %vm2065, %v4986
    %4997 = vrot.lane.b32.xlu0 %v4868, 53
    %v4998 = vpop.permute.xlu0 %4997
    %4999 = vrot.lane.b32.xlu0 %v4876, 53
    %v5000 = vpop.permute.xlu0 %4999
    %5001 = vrot.lane.b32.xlu0 %v4884, 53
    %v5002 = vpop.permute.xlu0 %5001
    %5003 = vrot.lane.b32.xlu0 %v4892, 53
    %v5004 = vpop.permute.xlu0 %5003
    %5005 = vrot.lane.b32.xlu0 %v4900, 53
    %v5006 = vpop.permute.xlu0 %5005
    %5012 = vst.msk [vmem:[#allocation3 + $0xc8] sm:$0xff] %vm2065, %v4998
    %5013 = vst.msk [vmem:[#allocation3 + $0xd0] sm:$0xff] %vm2065, %v5000
    %5014 = vst.msk [vmem:[#allocation3 + $0xd8] sm:$0xff] %vm2065, %v5002
    %5015 = vst.msk [vmem:[#allocation3 + $0xe0] sm:$0xff] %vm2065, %v5004
    %5016 = vst.msk [vmem:[#allocation3 + $0xe8] sm:$0xff] %vm2065, %v5006
    %5017 = vrot.lane.b32.xlu0 %v4868, 38
    %v5018 = vpop.permute.xlu0 %5017
    %5019 = vrot.lane.b32.xlu0 %v4876, 38
    %v5020 = vpop.permute.xlu0 %5019
    %5021 = vrot.lane.b32.xlu0 %v4884, 38
    %v5022 = vpop.permute.xlu0 %5021
    %5023 = vrot.lane.b32.xlu0 %v4892, 38
    %v5024 = vpop.permute.xlu0 %5023
    %5025 = vrot.lane.b32.xlu0 %v4900, 38
    %v5026 = vpop.permute.xlu0 %5025
    %5032 = vst.msk [vmem:[#allocation3 + $0xf0] sm:$0xff] %vm2065, %v5018
    %5033 = vst.msk [vmem:[#allocation3 + $0xf8] sm:$0xff] %vm2065, %v5020
    %5034 = vst.msk [vmem:[#allocation3 + $0x100] sm:$0xff] %vm2065, %v5022
    %5035 = vst.msk [vmem:[#allocation3 + $0x108] sm:$0xff] %vm2065, %v5024
    %5036 = vst.msk [vmem:[#allocation3 + $0x110] sm:$0xff] %vm2065, %v5026
    %5037 = vrot.lane.b32.xlu0 %v4868, 23
    %v5038 = vpop.permute.xlu0 %5037
    %5039 = vrot.lane.b32.xlu0 %v4876, 23
    %v5040 = vpop.permute.xlu0 %5039
    %5041 = vrot.lane.b32.xlu0 %v4884, 23
    %v5042 = vpop.permute.xlu0 %5041
    %5043 = vrot.lane.b32.xlu0 %v4892, 23
    %v5044 = vpop.permute.xlu0 %5043
    %5045 = vrot.lane.b32.xlu0 %v4900, 23
    %v5046 = vpop.permute.xlu0 %5045
    %5052 = vst.msk [vmem:[#allocation3 + $0x118] sm:$0xff] %vm2065, %v5038
    %5053 = vst.msk [vmem:[#allocation3 + $0x120] sm:$0xff] %vm2065, %v5040
    %5054 = vst.msk [vmem:[#allocation3 + $0x128] sm:$0xff] %vm2065, %v5042
    %5055 = vst.msk [vmem:[#allocation3 + $0x130] sm:$0xff] %vm2065, %v5044
    %5056 = vst.msk [vmem:[#allocation3 + $0x138] sm:$0xff] %vm2065, %v5046
    %5062 = vrot.lane.b32.xlu0 %v4868, 8
    %v5063 = vpop.permute.xlu0 %5062
    %5064 = vrot.lane.b32.xlu0 %v4870, 8
    %v5065 = vpop.permute.xlu0 %5064
    %5066 = vrot.lane.b32.xlu0 %v4876, 8
    %v5067 = vpop.permute.xlu0 %5066
    %5068 = vrot.lane.b32.xlu0 %v4878, 8
    %v5069 = vpop.permute.xlu0 %5068
    %5070 = vrot.lane.b32.xlu0 %v4884, 8
    %v5071 = vpop.permute.xlu0 %5070
    %5072 = vrot.lane.b32.xlu0 %v4886, 8
    %v5073 = vpop.permute.xlu0 %5072
    %5074 = vrot.lane.b32.xlu0 %v4892, 8
    %v5075 = vpop.permute.xlu0 %5074
    %5076 = vrot.lane.b32.xlu0 %v4894, 8
    %v5077 = vpop.permute.xlu0 %5076
    %5078 = vrot.lane.b32.xlu0 %v4900, 8
    %v5079 = vpop.permute.xlu0 %5078
    %5080 = vrot.lane.b32.xlu0 %v4902, 8
    %v5081 = vpop.permute.xlu0 %5080
    %v5082 = vsel %vm1399, %v5063, %v5065
    %v5083 = vsel %vm1399, %v5067, %v5069
    %v5084 = vsel %vm1399, %v5071, %v5073
    %v5085 = vsel %vm1399, %v5075, %v5077
    %v5086 = vsel %vm1399, %v5079, %v5081
    %5092 = vst.msk [vmem:[#allocation3 + $0x140] sm:$0xff] %vm2065, %v5082
    %5093 = vst.msk [vmem:[#allocation3 + $0x148] sm:$0xff] %vm2065, %v5083
    %5094 = vst.msk [vmem:[#allocation3 + $0x150] sm:$0xff] %vm2065, %v5084
    %5095 = vst.msk [vmem:[#allocation3 + $0x158] sm:$0xff] %vm2065, %v5085
    %5096 = vst.msk [vmem:[#allocation3 + $0x160] sm:$0xff] %vm2065, %v5086
    %5097 = vrot.lane.b32.xlu0 %v4870, 121
    %v5098 = vpop.permute.xlu0 %5097
    %5099 = vrot.lane.b32.xlu0 %v4878, 121
    %v5100 = vpop.permute.xlu0 %5099
    %5101 = vrot.lane.b32.xlu0 %v4886, 121
    %v5102 = vpop.permute.xlu0 %5101
    %5103 = vrot.lane.b32.xlu0 %v4894, 121
    %v5104 = vpop.permute.xlu0 %5103
    %5105 = vrot.lane.b32.xlu0 %v4902, 121
    %v5106 = vpop.permute.xlu0 %5105
    %5112 = vst.msk [vmem:[#allocation3 + $0x168] sm:$0xff] %vm2065, %v5098
    %5113 = vst.msk [vmem:[#allocation3 + $0x170] sm:$0xff] %vm2065, %v5100
    %5114 = vst.msk [vmem:[#allocation3 + $0x178] sm:$0xff] %vm2065, %v5102
    %5115 = vst.msk [vmem:[#allocation3 + $0x180] sm:$0xff] %vm2065, %v5104
    %5116 = vst.msk [vmem:[#allocation3 + $0x188] sm:$0xff] %vm2065, %v5106
    %5117 = vrot.lane.b32.xlu0 %v4870, 106
    %v5118 = vpop.permute.xlu0 %5117
    %5119 = vrot.lane.b32.xlu0 %v4878, 106
    %v5120 = vpop.permute.xlu0 %5119
    %5121 = vrot.lane.b32.xlu0 %v4886, 106
    %v5122 = vpop.permute.xlu0 %5121
    %5123 = vrot.lane.b32.xlu0 %v4894, 106
    %v5124 = vpop.permute.xlu0 %5123
    %5125 = vrot.lane.b32.xlu0 %v4902, 106
    %v5126 = vpop.permute.xlu0 %5125
    %5132 = vst.msk [vmem:[#allocation3 + $0x190] sm:$0xff] %vm2065, %v5118
    %5133 = vst.msk [vmem:[#allocation3 + $0x198] sm:$0xff] %vm2065, %v5120
    %5134 = vst.msk [vmem:[#allocation3 + $0x1a0] sm:$0xff] %vm2065, %v5122
    %5135 = vst.msk [vmem:[#allocation3 + $0x1a8] sm:$0xff] %vm2065, %v5124
    %5136 = vst.msk [vmem:[#allocation3 + $0x1b0] sm:$0xff] %vm2065, %v5126
    %5137 = vrot.lane.b32.xlu0 %v4870, 91
    %v5138 = vpop.permute.xlu0 %5137
    %5139 = vrot.lane.b32.xlu0 %v4878, 91
    %v5140 = vpop.permute.xlu0 %5139
    %5141 = vrot.lane.b32.xlu0 %v4886, 91
    %v5142 = vpop.permute.xlu0 %5141
    %5143 = vrot.lane.b32.xlu0 %v4894, 91
    %v5144 = vpop.permute.xlu0 %5143
    %5145 = vrot.lane.b32.xlu0 %v4902, 91
    %v5146 = vpop.permute.xlu0 %5145
    %5152 = vst.msk [vmem:[#allocation3 + $0x1b8] sm:$0xff] %vm2065, %v5138
    %5153 = vst.msk [vmem:[#allocation3 + $0x1c0] sm:$0xff] %vm2065, %v5140
    %5154 = vst.msk [vmem:[#allocation3 + $0x1c8] sm:$0xff] %vm2065, %v5142
    %5155 = vst.msk [vmem:[#allocation3 + $0x1d0] sm:$0xff] %vm2065, %v5144
    %5156 = vst.msk [vmem:[#allocation3 + $0x1d8] sm:$0xff] %vm2065, %v5146
    %5157 = vrot.lane.b32.xlu0 %v4870, 76
    %v5158 = vpop.permute.xlu0 %5157
    %5159 = vrot.lane.b32.xlu0 %v4878, 76
    %v5160 = vpop.permute.xlu0 %5159
    %5161 = vrot.lane.b32.xlu0 %v4886, 76
    %v5162 = vpop.permute.xlu0 %5161
    %5163 = vrot.lane.b32.xlu0 %v4894, 76
    %v5164 = vpop.permute.xlu0 %5163
    %5165 = vrot.lane.b32.xlu0 %v4902, 76
    %v5166 = vpop.permute.xlu0 %5165
    %5172 = vst.msk [vmem:[#allocation3 + $0x1e0] sm:$0xff] %vm2065, %v5158
    %5173 = vst.msk [vmem:[#allocation3 + $0x1e8] sm:$0xff] %vm2065, %v5160
    %5174 = vst.msk [vmem:[#allocation3 + $0x1f0] sm:$0xff] %vm2065, %v5162
    %5175 = vst.msk [vmem:[#allocation3 + $0x1f8] sm:$0xff] %vm2065, %v5164
    %5176 = vst.msk [vmem:[#allocation3 + $0x200] sm:$0xff] %vm2065, %v5166
    %5177 = vrot.lane.b32.xlu0 %v4870, 61
    %v5178 = vpop.permute.xlu0 %5177
    %5179 = vrot.lane.b32.xlu0 %v4878, 61
    %v5180 = vpop.permute.xlu0 %5179
    %5181 = vrot.lane.b32.xlu0 %v4886, 61
    %v5182 = vpop.permute.xlu0 %5181
    %5183 = vrot.lane.b32.xlu0 %v4894, 61
    %v5184 = vpop.permute.xlu0 %5183
    %5185 = vrot.lane.b32.xlu0 %v4902, 61
    %v5186 = vpop.permute.xlu0 %5185
    %5192 = vst.msk [vmem:[#allocation3 + $0x208] sm:$0xff] %vm2065, %v5178
    %5193 = vst.msk [vmem:[#allocation3 + $0x210] sm:$0xff] %vm2065, %v5180
    %5194 = vst.msk [vmem:[#allocation3 + $0x218] sm:$0xff] %vm2065, %v5182
    %5195 = vst.msk [vmem:[#allocation3 + $0x220] sm:$0xff] %vm2065, %v5184
    %5196 = vst.msk [vmem:[#allocation3 + $0x228] sm:$0xff] %vm2065, %v5186
    %5197 = vrot.lane.b32.xlu0 %v4870, 46
    %v5198 = vpop.permute.xlu0 %5197
    %5199 = vrot.lane.b32.xlu0 %v4878, 46
    %v5200 = vpop.permute.xlu0 %5199
    %5201 = vrot.lane.b32.xlu0 %v4886, 46
    %v5202 = vpop.permute.xlu0 %5201
    %5203 = vrot.lane.b32.xlu0 %v4894, 46
    %v5204 = vpop.permute.xlu0 %5203
    %5205 = vrot.lane.b32.xlu0 %v4902, 46
    %v5206 = vpop.permute.xlu0 %5205
    %5212 = vst.msk [vmem:[#allocation3 + $0x230] sm:$0xff] %vm2065, %v5198
    %5213 = vst.msk [vmem:[#allocation3 + $0x238] sm:$0xff] %vm2065, %v5200
    %5214 = vst.msk [vmem:[#allocation3 + $0x240] sm:$0xff] %vm2065, %v5202
    %5215 = vst.msk [vmem:[#allocation3 + $0x248] sm:$0xff] %vm2065, %v5204
    %5216 = vst.msk [vmem:[#allocation3 + $0x250] sm:$0xff] %vm2065, %v5206
    %5217 = vrot.lane.b32.xlu0 %v4870, 31
    %v5218 = vpop.permute.xlu0 %5217
    %5219 = vrot.lane.b32.xlu0 %v4878, 31
    %v5220 = vpop.permute.xlu0 %5219
    %5221 = vrot.lane.b32.xlu0 %v4886, 31
    %v5222 = vpop.permute.xlu0 %5221
    %5223 = vrot.lane.b32.xlu0 %v4894, 31
    %v5224 = vpop.permute.xlu0 %5223
    %5225 = vrot.lane.b32.xlu0 %v4902, 31
    %v5226 = vpop.permute.xlu0 %5225
    %5232 = vst.msk [vmem:[#allocation3 + $0x258] sm:$0xff] %vm2065, %v5218
    %5233 = vst.msk [vmem:[#allocation3 + $0x260] sm:$0xff] %vm2065, %v5220
    %5234 = vst.msk [vmem:[#allocation3 + $0x268] sm:$0xff] %vm2065, %v5222
    %5235 = vst.msk [vmem:[#allocation3 + $0x270] sm:$0xff] %vm2065, %v5224
    %5236 = vst.msk [vmem:[#allocation3 + $0x278] sm:$0xff] %vm2065, %v5226
    %5237 = vrot.lane.b32.xlu0 %v4870, 16
    %v5238 = vpop.permute.xlu0 %5237
    %5239 = vrot.lane.b32.xlu0 %v4878, 16
    %v5240 = vpop.permute.xlu0 %5239
    %5241 = vrot.lane.b32.xlu0 %v4886, 16
    %v5242 = vpop.permute.xlu0 %5241
    %5243 = vrot.lane.b32.xlu0 %v4894, 16
    %v5244 = vpop.permute.xlu0 %5243
    %5245 = vrot.lane.b32.xlu0 %v4902, 16
    %v5246 = vpop.permute.xlu0 %5245
    %5252 = vst.msk [vmem:[#allocation3 + $0x280] sm:$0xff] %vm2065, %v5238
    %5253 = vst.msk [vmem:[#allocation3 + $0x288] sm:$0xff] %vm2065, %v5240
    %5254 = vst.msk [vmem:[#allocation3 + $0x290] sm:$0xff] %vm2065, %v5242
    %5255 = vst.msk [vmem:[#allocation3 + $0x298] sm:$0xff] %vm2065, %v5244
    %5256 = vst.msk [vmem:[#allocation3 + $0x2a0] sm:$0xff] %vm2065, %v5246
    %5262 = vrot.lane.b32.xlu0 %v4870, 1
    %v5263 = vpop.permute.xlu0 %5262
    %5264 = vrot.lane.b32.xlu0 %v4872, 1
    %v5265 = vpop.permute.xlu0 %5264
    %5266 = vrot.lane.b32.xlu0 %v4878, 1
    %v5267 = vpop.permute.xlu0 %5266
    %5268 = vrot.lane.b32.xlu0 %v4880, 1
    %v5269 = vpop.permute.xlu0 %5268
    %5270 = vrot.lane.b32.xlu0 %v4886, 1
    %v5271 = vpop.permute.xlu0 %5270
    %5272 = vrot.lane.b32.xlu0 %v4888, 1
    %v5273 = vpop.permute.xlu0 %5272
    %5274 = vrot.lane.b32.xlu0 %v4894, 1
    %v5275 = vpop.permute.xlu0 %5274
    %5276 = vrot.lane.b32.xlu0 %v4896, 1
    %v5277 = vpop.permute.xlu0 %5276
    %5278 = vrot.lane.b32.xlu0 %v4902, 1
    %v5279 = vpop.permute.xlu0 %5278
    %5280 = vrot.lane.b32.xlu0 %v4904, 1
    %v5281 = vpop.permute.xlu0 %5280
    %v5282 = vsel %vm2441, %v5263, %v5265
    %v5283 = vsel %vm2441, %v5267, %v5269
    %v5284 = vsel %vm2441, %v5271, %v5273
    %v5285 = vsel %vm2441, %v5275, %v5277
    %v5286 = vsel %vm2441, %v5279, %v5281
    %5292 = vst.msk [vmem:[#allocation3 + $0x2a8] sm:$0xff] %vm2065, %v5282
    %5293 = vst.msk [vmem:[#allocation3 + $0x2b0] sm:$0xff] %vm2065, %v5283
    %5294 = vst.msk [vmem:[#allocation3 + $0x2b8] sm:$0xff] %vm2065, %v5284
    %5295 = vst.msk [vmem:[#allocation3 + $0x2c0] sm:$0xff] %vm2065, %v5285
    %5296 = vst.msk [vmem:[#allocation3 + $0x2c8] sm:$0xff] %vm2065, %v5286
    %5297 = vrot.lane.b32.xlu0 %v4872, 114
    %v5298 = vpop.permute.xlu0 %5297
    %5299 = vrot.lane.b32.xlu0 %v4880, 114
    %v5300 = vpop.permute.xlu0 %5299
    %5301 = vrot.lane.b32.xlu0 %v4888, 114
    %v5302 = vpop.permute.xlu0 %5301
    %5303 = vrot.lane.b32.xlu0 %v4896, 114
    %v5304 = vpop.permute.xlu0 %5303
    %5305 = vrot.lane.b32.xlu0 %v4904, 114
    %v5306 = vpop.permute.xlu0 %5305
    %5312 = vst.msk [vmem:[#allocation3 + $0x2d0] sm:$0xff] %vm2065, %v5298
    %5313 = vst.msk [vmem:[#allocation3 + $0x2d8] sm:$0xff] %vm2065, %v5300
    %5314 = vst.msk [vmem:[#allocation3 + $0x2e0] sm:$0xff] %vm2065, %v5302
    %5315 = vst.msk [vmem:[#allocation3 + $0x2e8] sm:$0xff] %vm2065, %v5304
    %5316 = vst.msk [vmem:[#allocation3 + $0x2f0] sm:$0xff] %vm2065, %v5306
    %5317 = vrot.lane.b32.xlu0 %v4872, 99
    %v5318 = vpop.permute.xlu0 %5317
    %5319 = vrot.lane.b32.xlu0 %v4880, 99
    %v5320 = vpop.permute.xlu0 %5319
    %5321 = vrot.lane.b32.xlu0 %v4888, 99
    %v5322 = vpop.permute.xlu0 %5321
    %5323 = vrot.lane.b32.xlu0 %v4896, 99
    %v5324 = vpop.permute.xlu0 %5323
    %5325 = vrot.lane.b32.xlu0 %v4904, 99
    %v5326 = vpop.permute.xlu0 %5325
    %5332 = vst.msk [vmem:[#allocation3 + $0x2f8] sm:$0xff] %vm2065, %v5318
    %5333 = vst.msk [vmem:[#allocation3 + $0x300] sm:$0xff] %vm2065, %v5320
    %5334 = vst.msk [vmem:[#allocation3 + $0x308] sm:$0xff] %vm2065, %v5322
    %5335 = vst.msk [vmem:[#allocation3 + $0x310] sm:$0xff] %vm2065, %v5324
    %5336 = vst.msk [vmem:[#allocation3 + $0x318] sm:$0xff] %vm2065, %v5326
    %5337 = vrot.lane.b32.xlu0 %v4872, 84
    %v5338 = vpop.permute.xlu0 %5337
    %5339 = vrot.lane.b32.xlu0 %v4880, 84
    %v5340 = vpop.permute.xlu0 %5339
    %5341 = vrot.lane.b32.xlu0 %v4888, 84
    %v5342 = vpop.permute.xlu0 %5341
    %5343 = vrot.lane.b32.xlu0 %v4896, 84
    %v5344 = vpop.permute.xlu0 %5343
    %5345 = vrot.lane.b32.xlu0 %v4904, 84
    %v5346 = vpop.permute.xlu0 %5345
    %5352 = vst.msk [vmem:[#allocation3 + $0x320] sm:$0xff] %vm2065, %v5338
    %5353 = vst.msk [vmem:[#allocation3 + $0x328] sm:$0xff] %vm2065, %v5340
    %5354 = vst.msk [vmem:[#allocation3 + $0x330] sm:$0xff] %vm2065, %v5342
    %5355 = vst.msk [vmem:[#allocation3 + $0x338] sm:$0xff] %vm2065, %v5344
    %5356 = vst.msk [vmem:[#allocation3 + $0x340] sm:$0xff] %vm2065, %v5346
    %5357 = vrot.lane.b32.xlu0 %v4872, 69
    %v5358 = vpop.permute.xlu0 %5357
    %5359 = vrot.lane.b32.xlu0 %v4880, 69
    %v5360 = vpop.permute.xlu0 %5359
    %5361 = vrot.lane.b32.xlu0 %v4888, 69
    %v5362 = vpop.permute.xlu0 %5361
    %5363 = vrot.lane.b32.xlu0 %v4896, 69
    %v5364 = vpop.permute.xlu0 %5363
    %5365 = vrot.lane.b32.xlu0 %v4904, 69
    %v5366 = vpop.permute.xlu0 %5365
    %5372 = vst.msk [vmem:[#allocation3 + $0x348] sm:$0xff] %vm2065, %v5358
    %5373 = vst.msk [vmem:[#allocation3 + $0x350] sm:$0xff] %vm2065, %v5360
    %5374 = vst.msk [vmem:[#allocation3 + $0x358] sm:$0xff] %vm2065, %v5362
    %5375 = vst.msk [vmem:[#allocation3 + $0x360] sm:$0xff] %vm2065, %v5364
    %5376 = vst.msk [vmem:[#allocation3 + $0x368] sm:$0xff] %vm2065, %v5366
    %5377 = vrot.lane.b32.xlu0 %v4872, 54
    %v5378 = vpop.permute.xlu0 %5377
    %5379 = vrot.lane.b32.xlu0 %v4880, 54
    %v5380 = vpop.permute.xlu0 %5379
    %5381 = vrot.lane.b32.xlu0 %v4888, 54
    %v5382 = vpop.permute.xlu0 %5381
    %5383 = vrot.lane.b32.xlu0 %v4896, 54
    %v5384 = vpop.permute.xlu0 %5383
    %5385 = vrot.lane.b32.xlu0 %v4904, 54
    %v5386 = vpop.permute.xlu0 %5385
    %5392 = vst.msk [vmem:[#allocation3 + $0x370] sm:$0xff] %vm2065, %v5378
    %5393 = vst.msk [vmem:[#allocation3 + $0x378] sm:$0xff] %vm2065, %v5380
    %5394 = vst.msk [vmem:[#allocation3 + $0x380] sm:$0xff] %vm2065, %v5382
    %5395 = vst.msk [vmem:[#allocation3 + $0x388] sm:$0xff] %vm2065, %v5384
    %5396 = vst.msk [vmem:[#allocation3 + $0x390] sm:$0xff] %vm2065, %v5386
    %5397 = vrot.lane.b32.xlu0 %v4872, 39
    %v5398 = vpop.permute.xlu0 %5397
    %5399 = vrot.lane.b32.xlu0 %v4880, 39
    %v5400 = vpop.permute.xlu0 %5399
    %5401 = vrot.lane.b32.xlu0 %v4888, 39
    %v5402 = vpop.permute.xlu0 %5401
    %5403 = vrot.lane.b32.xlu0 %v4896, 39
    %v5404 = vpop.permute.xlu0 %5403
    %5405 = vrot.lane.b32.xlu0 %v4904, 39
    %v5406 = vpop.permute.xlu0 %5405
    %5412 = vst.msk [vmem:[#allocation3 + $0x398] sm:$0xff] %vm2065, %v5398
    %5413 = vst.msk [vmem:[#allocation3 + $0x3a0] sm:$0xff] %vm2065, %v5400
    %5414 = vst.msk [vmem:[#allocation3 + $0x3a8] sm:$0xff] %vm2065, %v5402
    %5415 = vst.msk [vmem:[#allocation3 + $0x3b0] sm:$0xff] %vm2065, %v5404
    %5416 = vst.msk [vmem:[#allocation3 + $0x3b8] sm:$0xff] %vm2065, %v5406
    %5417 = vrot.lane.b32.xlu0 %v4872, 24
    %v5418 = vpop.permute.xlu0 %5417
    %5419 = vrot.lane.b32.xlu0 %v4880, 24
    %v5420 = vpop.permute.xlu0 %5419
    %5421 = vrot.lane.b32.xlu0 %v4888, 24
    %v5422 = vpop.permute.xlu0 %5421
    %5423 = vrot.lane.b32.xlu0 %v4896, 24
    %v5424 = vpop.permute.xlu0 %5423
    %5425 = vrot.lane.b32.xlu0 %v4904, 24
    %v5426 = vpop.permute.xlu0 %5425
    %5432 = vst.msk [vmem:[#allocation3 + $0x3c0] sm:$0xff] %vm2065, %v5418
    %5433 = vst.msk [vmem:[#allocation3 + $0x3c8] sm:$0xff] %vm2065, %v5420
    %5434 = vst.msk [vmem:[#allocation3 + $0x3d0] sm:$0xff] %vm2065, %v5422
    %5435 = vst.msk [vmem:[#allocation3 + $0x3d8] sm:$0xff] %vm2065, %v5424
    %5436 = vst.msk [vmem:[#allocation3 + $0x3e0] sm:$0xff] %vm2065, %v5426
    %5442 = vrot.lane.b32.xlu0 %v4872, 9
    %v5443 = vpop.permute.xlu0 %5442
    %5444 = vrot.lane.b32.xlu0 %v4874, 9
    %v5445 = vpop.permute.xlu0 %5444
    %5446 = vrot.lane.b32.xlu0 %v4880, 9
    %v5447 = vpop.permute.xlu0 %5446
    %5448 = vrot.lane.b32.xlu0 %v4882, 9
    %v5449 = vpop.permute.xlu0 %5448
    %5450 = vrot.lane.b32.xlu0 %v4888, 9
    %v5451 = vpop.permute.xlu0 %5450
    %5452 = vrot.lane.b32.xlu0 %v4890, 9
    %v5453 = vpop.permute.xlu0 %5452
    %5454 = vrot.lane.b32.xlu0 %v4896, 9
    %v5455 = vpop.permute.xlu0 %5454
    %5456 = vrot.lane.b32.xlu0 %v4898, 9
    %v5457 = vpop.permute.xlu0 %5456
    %5458 = vrot.lane.b32.xlu0 %v4904, 9
    %v5459 = vpop.permute.xlu0 %5458
    %5460 = vrot.lane.b32.xlu0 %v4906, 9
    %v5461 = vpop.permute.xlu0 %5460
    %v5462 = vsel %vm2622, %v5443, %v5445
    %v5463 = vsel %vm2622, %v5447, %v5449
    %v5464 = vsel %vm2622, %v5451, %v5453
    %v5465 = vsel %vm2622, %v5455, %v5457
    %v5466 = vsel %vm2622, %v5459, %v5461
    %5472 = vst.msk [vmem:[#allocation3 + $0x3e8] sm:$0xff] %vm2065, %v5462
    %5473 = vst.msk [vmem:[#allocation3 + $0x3f0] sm:$0xff] %vm2065, %v5463
    %5474 = vst.msk [vmem:[#allocation3 + $0x3f8] sm:$0xff] %vm2065, %v5464
    %5475 = vst.msk [vmem:[#allocation3 + $0x400] sm:$0xff] %vm2065, %v5465
    %5476 = vst.msk [vmem:[#allocation3 + $0x408] sm:$0xff] %vm2065, %v5466
    %5477 = vrot.lane.b32.xlu0 %v4874, 122
    %v5478 = vpop.permute.xlu0 %5477
    %5479 = vrot.lane.b32.xlu0 %v4882, 122
    %v5480 = vpop.permute.xlu0 %5479
    %5481 = vrot.lane.b32.xlu0 %v4890, 122
    %v5482 = vpop.permute.xlu0 %5481
    %5483 = vrot.lane.b32.xlu0 %v4898, 122
    %v5484 = vpop.permute.xlu0 %5483
    %5485 = vrot.lane.b32.xlu0 %v4906, 122
    %v5486 = vpop.permute.xlu0 %5485
    %5492 = vst.msk [vmem:[#allocation3 + $0x410] sm:$0xff] %vm2065, %v5478
    %5493 = vst.msk [vmem:[#allocation3 + $0x418] sm:$0xff] %vm2065, %v5480
    %5494 = vst.msk [vmem:[#allocation3 + $0x420] sm:$0xff] %vm2065, %v5482
    %5495 = vst.msk [vmem:[#allocation3 + $0x428] sm:$0xff] %vm2065, %v5484
    %5496 = vst.msk [vmem:[#allocation3 + $0x430] sm:$0xff] %vm2065, %v5486
    %5497 = vrot.lane.b32.xlu0 %v4874, 107
    %v5498 = vpop.permute.xlu0 %5497
    %5499 = vrot.lane.b32.xlu0 %v4882, 107
    %v5500 = vpop.permute.xlu0 %5499
    %5501 = vrot.lane.b32.xlu0 %v4890, 107
    %v5502 = vpop.permute.xlu0 %5501
    %5503 = vrot.lane.b32.xlu0 %v4898, 107
    %v5504 = vpop.permute.xlu0 %5503
    %5505 = vrot.lane.b32.xlu0 %v4906, 107
    %v5506 = vpop.permute.xlu0 %5505
    %5512 = vst.msk [vmem:[#allocation3 + $0x438] sm:$0xff] %vm2065, %v5498
    %5513 = vst.msk [vmem:[#allocation3 + $0x440] sm:$0xff] %vm2065, %v5500
    %5514 = vst.msk [vmem:[#allocation3 + $0x448] sm:$0xff] %vm2065, %v5502
    %5515 = vst.msk [vmem:[#allocation3 + $0x450] sm:$0xff] %vm2065, %v5504
    %5516 = vst.msk [vmem:[#allocation3 + $0x458] sm:$0xff] %vm2065, %v5506
    %5517 = vrot.lane.b32.xlu0 %v4874, 92
    %v5518 = vpop.permute.xlu0 %5517
    %5519 = vrot.lane.b32.xlu0 %v4882, 92
    %v5520 = vpop.permute.xlu0 %5519
    %5521 = vrot.lane.b32.xlu0 %v4890, 92
    %v5522 = vpop.permute.xlu0 %5521
    %5523 = vrot.lane.b32.xlu0 %v4898, 92
    %v5524 = vpop.permute.xlu0 %5523
    %5525 = vrot.lane.b32.xlu0 %v4906, 92
    %v5526 = vpop.permute.xlu0 %5525
    %5532 = vst.msk [vmem:[#allocation3 + $0x460] sm:$0xff] %vm2065, %v5518
    %5533 = vst.msk [vmem:[#allocation3 + $0x468] sm:$0xff] %vm2065, %v5520
    %5534 = vst.msk [vmem:[#allocation3 + $0x470] sm:$0xff] %vm2065, %v5522
    %5535 = vst.msk [vmem:[#allocation3 + $0x478] sm:$0xff] %vm2065, %v5524
    %5536 = vst.msk [vmem:[#allocation3 + $0x480] sm:$0xff] %vm2065, %v5526
    %5537 = vrot.lane.b32.xlu0 %v4874, 77
    %v5538 = vpop.permute.xlu0 %5537
    %5539 = vrot.lane.b32.xlu0 %v4882, 77
    %v5540 = vpop.permute.xlu0 %5539
    %5541 = vrot.lane.b32.xlu0 %v4890, 77
    %v5542 = vpop.permute.xlu0 %5541
    %5543 = vrot.lane.b32.xlu0 %v4898, 77
    %v5544 = vpop.permute.xlu0 %5543
    %5545 = vrot.lane.b32.xlu0 %v4906, 77
    %v5546 = vpop.permute.xlu0 %5545
    %5552 = vst.msk [vmem:[#allocation3 + $0x488] sm:$0xff] %vm2065, %v5538
    %5553 = vst.msk [vmem:[#allocation3 + $0x490] sm:$0xff] %vm2065, %v5540
    %5554 = vst.msk [vmem:[#allocation3 + $0x498] sm:$0xff] %vm2065, %v5542
    %5555 = vst.msk [vmem:[#allocation3 + $0x4a0] sm:$0xff] %vm2065, %v5544
    %5556 = vst.msk [vmem:[#allocation3 + $0x4a8] sm:$0xff] %vm2065, %v5546
    %v5557 = vld [vmem:[#allocation3] sm:$0xff]
    %v5558 = vld [vmem:[#allocation3 + $0x8] sm:$0xff]
    %v5559 = vld [vmem:[#allocation3 + $0x10] sm:$0xff]
    %v5560 = vld [vmem:[#allocation3 + $0x18] sm:$0xff]
    %v5561 = vld [vmem:[#allocation3 + $0x20] sm:$0xff]
    %v5562 = vld [vmem:[#allocation3 + $0x28] sm:$0xff]
    %v5563 = vld [vmem:[#allocation3 + $0x30] sm:$0xff]
    %v5564 = vld [vmem:[#allocation3 + $0x38] sm:$0xff]
    %v5565 = vld [vmem:[#allocation3 + $0x40] sm:$0xff]
    %v5566 = vld [vmem:[#allocation3 + $0x48] sm:$0xff]
    %v5567 = vld [vmem:[#allocation3 + $0x50] sm:$0xff]
    %v5568 = vld [vmem:[#allocation3 + $0x58] sm:$0xff]
    %v5569 = vld [vmem:[#allocation3 + $0x60] sm:$0xff]
    %v5570 = vld [vmem:[#allocation3 + $0x68] sm:$0xff]
    %v5571 = vld [vmem:[#allocation3 + $0x70] sm:$0xff]
    %v5572 = vld [vmem:[#allocation3 + $0x78] sm:$0xff]
    %v5573 = vld [vmem:[#allocation3 + $0x80] sm:$0xff]
    %v5574 = vld [vmem:[#allocation3 + $0x88] sm:$0xff]
    %v5575 = vld [vmem:[#allocation3 + $0x90] sm:$0xff]
    %v5576 = vld [vmem:[#allocation3 + $0x98] sm:$0xff]
    %v5577 = vld [vmem:[#allocation3 + $0xa0] sm:$0xff]
    %v5578 = vld [vmem:[#allocation3 + $0xa8] sm:$0xff]
    %v5579 = vld [vmem:[#allocation3 + $0xb0] sm:$0xff]
    %v5580 = vld [vmem:[#allocation3 + $0xb8] sm:$0xff]
    %v5581 = vld [vmem:[#allocation3 + $0xc0] sm:$0xff]
    %v5582 = vld [vmem:[#allocation3 + $0xc8] sm:$0xff]
    %v5583 = vld [vmem:[#allocation3 + $0xd0] sm:$0xff]
    %v5584 = vld [vmem:[#allocation3 + $0xd8] sm:$0xff]
    %v5585 = vld [vmem:[#allocation3 + $0xe0] sm:$0xff]
    %v5586 = vld [vmem:[#allocation3 + $0xe8] sm:$0xff]
    %v5587 = vld [vmem:[#allocation3 + $0xf0] sm:$0xff]
    %v5588 = vld [vmem:[#allocation3 + $0xf8] sm:$0xff]
    %v5589 = vld [vmem:[#allocation3 + $0x100] sm:$0xff]
    %v5590 = vld [vmem:[#allocation3 + $0x108] sm:$0xff]
    %v5591 = vld [vmem:[#allocation3 + $0x110] sm:$0xff]
    %v5592 = vld [vmem:[#allocation3 + $0x118] sm:$0xff]
    %v5593 = vld [vmem:[#allocation3 + $0x120] sm:$0xff]
    %v5594 = vld [vmem:[#allocation3 + $0x128] sm:$0xff]
    %v5595 = vld [vmem:[#allocation3 + $0x130] sm:$0xff]
    %v5596 = vld [vmem:[#allocation3 + $0x138] sm:$0xff]
    %v5597 = vld [vmem:[#allocation3 + $0x140] sm:$0xff]
    %v5598 = vld [vmem:[#allocation3 + $0x148] sm:$0xff]
    %v5599 = vld [vmem:[#allocation3 + $0x150] sm:$0xff]
    %v5600 = vld [vmem:[#allocation3 + $0x158] sm:$0xff]
    %v5601 = vld [vmem:[#allocation3 + $0x160] sm:$0xff]
    %v5602 = vld [vmem:[#allocation3 + $0x168] sm:$0xff]
    %v5603 = vld [vmem:[#allocation3 + $0x170] sm:$0xff]
    %v5604 = vld [vmem:[#allocation3 + $0x178] sm:$0xff]
    %v5605 = vld [vmem:[#allocation3 + $0x180] sm:$0xff]
    %v5606 = vld [vmem:[#allocation3 + $0x188] sm:$0xff]
    %v5607 = vld [vmem:[#allocation3 + $0x190] sm:$0xff]
    %v5608 = vld [vmem:[#allocation3 + $0x198] sm:$0xff]
    %v5609 = vld [vmem:[#allocation3 + $0x1a0] sm:$0xff]
    %v5610 = vld [vmem:[#allocation3 + $0x1a8] sm:$0xff]
    %v5611 = vld [vmem:[#allocation3 + $0x1b0] sm:$0xff]
    %v5612 = vld [vmem:[#allocation3 + $0x1b8] sm:$0xff]
    %v5613 = vld [vmem:[#allocation3 + $0x1c0] sm:$0xff]
    %v5614 = vld [vmem:[#allocation3 + $0x1c8] sm:$0xff]
    %v5615 = vld [vmem:[#allocation3 + $0x1d0] sm:$0xff]
    %v5616 = vld [vmem:[#allocation3 + $0x1d8] sm:$0xff]
    %v5617 = vld [vmem:[#allocation3 + $0x1e0] sm:$0xff]
    %v5618 = vld [vmem:[#allocation3 + $0x1e8] sm:$0xff]
    %v5619 = vld [vmem:[#allocation3 + $0x1f0] sm:$0xff]
    %v5620 = vld [vmem:[#allocation3 + $0x1f8] sm:$0xff]
    %v5621 = vld [vmem:[#allocation3 + $0x200] sm:$0xff]
    %v5622 = vld [vmem:[#allocation3 + $0x208] sm:$0xff]
    %v5623 = vld [vmem:[#allocation3 + $0x210] sm:$0xff]
    %v5624 = vld [vmem:[#allocation3 + $0x218] sm:$0xff]
    %v5625 = vld [vmem:[#allocation3 + $0x220] sm:$0xff]
    %v5626 = vld [vmem:[#allocation3 + $0x228] sm:$0xff]
    %v5627 = vld [vmem:[#allocation3 + $0x230] sm:$0xff]
    %v5628 = vld [vmem:[#allocation3 + $0x238] sm:$0xff]
    %v5629 = vld [vmem:[#allocation3 + $0x240] sm:$0xff]
    %v5630 = vld [vmem:[#allocation3 + $0x248] sm:$0xff]
    %v5631 = vld [vmem:[#allocation3 + $0x250] sm:$0xff]
    %v5632 = vld [vmem:[#allocation3 + $0x258] sm:$0xff]
    %v5633 = vld [vmem:[#allocation3 + $0x260] sm:$0xff]
    %v5634 = vld [vmem:[#allocation3 + $0x268] sm:$0xff]
    %v5635 = vld [vmem:[#allocation3 + $0x270] sm:$0xff]
    %v5636 = vld [vmem:[#allocation3 + $0x278] sm:$0xff]
    %v5637 = vld [vmem:[#allocation3 + $0x280] sm:$0xff]
    %v5638 = vld [vmem:[#allocation3 + $0x288] sm:$0xff]
    %v5639 = vld [vmem:[#allocation3 + $0x290] sm:$0xff]
    %v5640 = vld [vmem:[#allocation3 + $0x298] sm:$0xff]
    %v5641 = vld [vmem:[#allocation3 + $0x2a0] sm:$0xff]
    %v5642 = vld [vmem:[#allocation3 + $0x2a8] sm:$0xff]
    %v5643 = vld [vmem:[#allocation3 + $0x2b0] sm:$0xff]
    %v5644 = vld [vmem:[#allocation3 + $0x2b8] sm:$0xff]
    %v5645 = vld [vmem:[#allocation3 + $0x2c0] sm:$0xff]
    %v5646 = vld [vmem:[#allocation3 + $0x2c8] sm:$0xff]
    %v5647 = vld [vmem:[#allocation3 + $0x2d0] sm:$0xff]
    %v5648 = vld [vmem:[#allocation3 + $0x2d8] sm:$0xff]
    %v5649 = vld [vmem:[#allocation3 + $0x2e0] sm:$0xff]
    %v5650 = vld [vmem:[#allocation3 + $0x2e8] sm:$0xff]
    %v5651 = vld [vmem:[#allocation3 + $0x2f0] sm:$0xff]
    %v5652 = vld [vmem:[#allocation3 + $0x2f8] sm:$0xff]
    %v5653 = vld [vmem:[#allocation3 + $0x300] sm:$0xff]
    %v5654 = vld [vmem:[#allocation3 + $0x308] sm:$0xff]
    %v5655 = vld [vmem:[#allocation3 + $0x310] sm:$0xff]
    %v5656 = vld [vmem:[#allocation3 + $0x318] sm:$0xff]
    %v5657 = vld [vmem:[#allocation3 + $0x320] sm:$0xff]
    %v5658 = vld [vmem:[#allocation3 + $0x328] sm:$0xff]
    %v5659 = vld [vmem:[#allocation3 + $0x330] sm:$0xff]
    %v5660 = vld [vmem:[#allocation3 + $0x338] sm:$0xff]
    %v5661 = vld [vmem:[#allocation3 + $0x340] sm:$0xff]
    %v5662 = vld [vmem:[#allocation3 + $0x348] sm:$0xff]
    %v5663 = vld [vmem:[#allocation3 + $0x350] sm:$0xff]
    %v5664 = vld [vmem:[#allocation3 + $0x358] sm:$0xff]
    %v5665 = vld [vmem:[#allocation3 + $0x360] sm:$0xff]
    %v5666 = vld [vmem:[#allocation3 + $0x368] sm:$0xff]
    %v5667 = vld [vmem:[#allocation3 + $0x370] sm:$0xff]
    %v5668 = vld [vmem:[#allocation3 + $0x378] sm:$0xff]
    %v5669 = vld [vmem:[#allocation3 + $0x380] sm:$0xff]
    %v5670 = vld [vmem:[#allocation3 + $0x388] sm:$0xff]
    %v5671 = vld [vmem:[#allocation3 + $0x390] sm:$0xff]
    %v5672 = vld [vmem:[#allocation3 + $0x398] sm:$0xff]
    %v5673 = vld [vmem:[#allocation3 + $0x3a0] sm:$0xff]
    %v5674 = vld [vmem:[#allocation3 + $0x3a8] sm:$0xff]
    %v5675 = vld [vmem:[#allocation3 + $0x3b0] sm:$0xff]
    %v5676 = vld [vmem:[#allocation3 + $0x3b8] sm:$0xff]
    %v5677 = vld [vmem:[#allocation3 + $0x3c0] sm:$0xff]
    %v5678 = vld [vmem:[#allocation3 + $0x3c8] sm:$0xff]
    %v5679 = vld [vmem:[#allocation3 + $0x3d0] sm:$0xff]
    %v5680 = vld [vmem:[#allocation3 + $0x3d8] sm:$0xff]
    %v5681 = vld [vmem:[#allocation3 + $0x3e0] sm:$0xff]
    %v5682 = vld [vmem:[#allocation3 + $0x3e8] sm:$0xff]
    %v5683 = vld [vmem:[#allocation3 + $0x3f0] sm:$0xff]
    %v5684 = vld [vmem:[#allocation3 + $0x3f8] sm:$0xff]
    %v5685 = vld [vmem:[#allocation3 + $0x400] sm:$0xff]
    %v5686 = vld [vmem:[#allocation3 + $0x408] sm:$0xff]
    %v5687 = vld [vmem:[#allocation3 + $0x410] sm:$0xff]
    %v5688 = vld [vmem:[#allocation3 + $0x418] sm:$0xff]
    %v5689 = vld [vmem:[#allocation3 + $0x420] sm:$0xff]
    %v5690 = vld [vmem:[#allocation3 + $0x428] sm:$0xff]
    %v5691 = vld [vmem:[#allocation3 + $0x430] sm:$0xff]
    %v5692 = vld [vmem:[#allocation3 + $0x438] sm:$0xff]
    %v5693 = vld [vmem:[#allocation3 + $0x440] sm:$0xff]
    %v5694 = vld [vmem:[#allocation3 + $0x448] sm:$0xff]
    %v5695 = vld [vmem:[#allocation3 + $0x450] sm:$0xff]
    %v5696 = vld [vmem:[#allocation3 + $0x458] sm:$0xff]
    %v5697 = vld [vmem:[#allocation3 + $0x460] sm:$0xff]
    %v5698 = vld [vmem:[#allocation3 + $0x468] sm:$0xff]
    %v5699 = vld [vmem:[#allocation3 + $0x470] sm:$0xff]
    %v5700 = vld [vmem:[#allocation3 + $0x478] sm:$0xff]
    %v5701 = vld [vmem:[#allocation3 + $0x480] sm:$0xff]
    %v5702 = vld [vmem:[#allocation3 + $0x488] sm:$0xff]
    %v5703 = vld [vmem:[#allocation3 + $0x490] sm:$0xff]
    %v5704 = vld [vmem:[#allocation3 + $0x498] sm:$0xff]
    %v5705 = vld [vmem:[#allocation3 + $0x4a0] sm:$0xff]
    %v5706 = vld [vmem:[#allocation3 + $0x4a8] sm:$0xff]
    %5707 = vmatprep.subr.mxu0 0.0
    %5708 = vmatpush1.msra.mxu0 %v5572
    %5709 = vmatprep.subr.mxu0 0.0
    %5710 = vmatpush1.msra.mxu0 %v5571
    %5711 = vmatprep.subr.mxu0 0.0
    %5712 = vmatpush1.msra.mxu0 %v5570
    %5713 = vmatprep.subr.mxu0 0.0
    %5714 = vmatpush1.msra.mxu0 %v5569
    %5715 = vmatprep.subr.mxu0 0.0
    %5716 = vmatpush1.msra.mxu0 %v5568
    %5717 = vmatprep.subr.mxu0 0.0
    %5718 = vmatpush1.msra.mxu0 %v5567
    %5719 = vmatprep.subr.mxu0 0.0
    %5720 = vmatpush1.msra.mxu0 %v5566
    %5721 = vmatprep.subr.mxu0 0.0
    %5722 = vmatpush1.msra.mxu0 %v5565
    %5723 = vmatprep.subr.mxu0 0.0
    %5724 = vmatpush1.msra.mxu0 %v5564
    %5725 = vmatprep.subr.mxu0 0.0
    %5726 = vmatpush1.msra.mxu0 %v5563
    %5727 = vmatprep.subr.mxu0 0.0
    %5728 = vmatpush1.msra.mxu0 %v5562
    %5729 = vmatprep.subr.mxu0 0.0
    %5730 = vmatpush1.msra.mxu0 %v5561
    %5731 = vmatprep.subr.mxu0 0.0
    %5732 = vmatpush1.msra.mxu0 %v5560
    %5733 = vmatprep.subr.mxu0 0.0
    %5734 = vmatpush1.msra.mxu0 %v5559
    %5735 = vmatprep.subr.mxu0 0.0
    %5736 = vmatpush1.msra.mxu0 %v5558
    %5737 = vmatprep.subr.mxu0 0.0
    %5738 = vmatpush1.msra.mxu0 %v5557
    %5739 = vmatprep.subr.mxu0 0.0
    %5740 = vmatpush2.msra.mxu0 %v5588
    %5741 = vmatprep.subr.mxu0 0.0
    %5742 = vmatpush2.msra.mxu0 %v5587
    %5743 = vmatprep.subr.mxu0 0.0
    %5744 = vmatpush2.msra.mxu0 %v5586
    %5745 = vmatprep.subr.mxu0 0.0
    %5746 = vmatpush2.msra.mxu0 %v5585
    %5747 = vmatprep.subr.mxu0 0.0
    %5748 = vmatpush2.msra.mxu0 %v5584
    %5749 = vmatprep.subr.mxu0 0.0
    %5750 = vmatpush2.msra.mxu0 %v5583
    %5751 = vmatprep.subr.mxu0 0.0
    %5752 = vmatpush2.msra.mxu0 %v5582
    %5753 = vmatprep.subr.mxu0 0.0
    %5754 = vmatpush2.msra.mxu0 %v5581
    %5755 = vmatprep.subr.mxu0 0.0
    %5756 = vmatpush2.msra.mxu0 %v5580
    %5757 = vmatprep.subr.mxu0 0.0
    %5758 = vmatpush2.msra.mxu0 %v5579
    %5759 = vmatprep.subr.mxu0 0.0
    %5760 = vmatpush2.msra.mxu0 %v5578
    %5761 = vmatprep.subr.mxu0 0.0
    %5762 = vmatpush2.msra.mxu0 %v5577
    %5763 = vmatprep.subr.mxu0 0.0
    %5764 = vmatpush2.msra.mxu0 %v5576
    %5765 = vmatprep.subr.mxu0 0.0
    %5766 = vmatpush2.msra.mxu0 %v5575
    %5767 = vmatprep.subr.mxu0 0.0
    %5768 = vmatpush2.msra.mxu0 %v5574
    %5769 = vmatprep.subr.mxu0 0.0
    %5770 = vmatpush2.msra.mxu0 %v5573
    %5771 = vmatprep.mubr.f32.mxu0 %v2878
    %5772 = vmatmul.mubr.f32.gmra.mxu0 %v346
    %v5773 = vpop.f32.mrf.mxu0
    %v5774 = vadd.f32 %v2871, %v5773
    %v5775 = vpop.f32.mrf.mxu0
    %5776 = vdwg.mxu0
    %5777 = vmatprep.subr.mxu0 0.0
    %5778 = vmatpush1.msra.mxu0 %v5604
    %5779 = vmatprep.subr.mxu0 0.0
    %5780 = vmatpush1.msra.mxu0 %v5603
    %5781 = vmatprep.subr.mxu0 0.0
    %5782 = vmatpush1.msra.mxu0 %v5602
    %5783 = vmatprep.subr.mxu0 0.0
    %5784 = vmatpush1.msra.mxu0 %v5601
    %5785 = vmatprep.subr.mxu0 0.0
    %5786 = vmatpush1.msra.mxu0 %v5600
    %5787 = vmatprep.subr.mxu0 0.0
    %5788 = vmatpush1.msra.mxu0 %v5599
    %5789 = vmatprep.subr.mxu0 0.0
    %5790 = vmatpush1.msra.mxu0 %v5598
    %5791 = vmatprep.subr.mxu0 0.0
    %5792 = vmatpush1.msra.mxu0 %v5597
    %5793 = vmatprep.subr.mxu0 0.0
    %5794 = vmatpush1.msra.mxu0 %v5596
    %5795 = vmatprep.subr.mxu0 0.0
    %5796 = vmatpush1.msra.mxu0 %v5595
    %5797 = vmatprep.subr.mxu0 0.0
    %5798 = vmatpush1.msra.mxu0 %v5594
    %5799 = vmatprep.subr.mxu0 0.0
    %5800 = vmatpush1.msra.mxu0 %v5593
    %5801 = vmatprep.subr.mxu0 0.0
    %5802 = vmatpush1.msra.mxu0 %v5592
    %5803 = vmatprep.subr.mxu0 0.0
    %5804 = vmatpush1.msra.mxu0 %v5591
    %5805 = vmatprep.subr.mxu0 0.0
    %5806 = vmatpush1.msra.mxu0 %v5590
    %5807 = vmatprep.subr.mxu0 0.0
    %5808 = vmatpush1.msra.mxu0 %v5589
    %5809 = vmatprep.subr.mxu0 0.0
    %5810 = vmatpush2.msra.mxu0 %v5620
    %5811 = vmatprep.subr.mxu0 0.0
    %5812 = vmatpush2.msra.mxu0 %v5619
    %5813 = vmatprep.subr.mxu0 0.0
    %5814 = vmatpush2.msra.mxu0 %v5618
    %5815 = vmatprep.subr.mxu0 0.0
    %5816 = vmatpush2.msra.mxu0 %v5617
    %5817 = vmatprep.subr.mxu0 0.0
    %5818 = vmatpush2.msra.mxu0 %v5616
    %5819 = vmatprep.subr.mxu0 0.0
    %5820 = vmatpush2.msra.mxu0 %v5615
    %5821 = vmatprep.subr.mxu0 0.0
    %5822 = vmatpush2.msra.mxu0 %v5614
    %5823 = vmatprep.subr.mxu0 0.0
    %5824 = vmatpush2.msra.mxu0 %v5613
    %5825 = vmatprep.subr.mxu0 0.0
    %5826 = vmatpush2.msra.mxu0 %v5612
    %5827 = vmatprep.subr.mxu0 0.0
    %5828 = vmatpush2.msra.mxu0 %v5611
    %5829 = vmatprep.subr.mxu0 0.0
    %5830 = vmatpush2.msra.mxu0 %v5610
    %5831 = vmatprep.subr.mxu0 0.0
    %5832 = vmatpush2.msra.mxu0 %v5609
    %5833 = vmatprep.subr.mxu0 0.0
    %5834 = vmatpush2.msra.mxu0 %v5608
    %5835 = vmatprep.subr.mxu0 0.0
    %5836 = vmatpush2.msra.mxu0 %v5607
    %5837 = vmatprep.subr.mxu0 0.0
    %5838 = vmatpush2.msra.mxu0 %v5606
    %5839 = vmatprep.subr.mxu0 0.0
    %5840 = vmatpush2.msra.mxu0 %v5605
    %5841 = vmatprep.mubr.f32.mxu0 %v2879
    %5842 = vmatmul.mubr.f32.gmra.mxu0 %v347
    %v5843 = vpop.f32.mrf.mxu0
    %v5844 = vadd.f32 %v5774, %v5843
    %v5845 = vpop.f32.mrf.mxu0
    %5846 = vdwg.mxu0
    %5847 = vmatprep.subr.mxu0 0.0
    %5848 = vmatpush1.msra.mxu0 %v5636
    %5849 = vmatprep.subr.mxu0 0.0
    %5850 = vmatpush1.msra.mxu0 %v5635
    %5851 = vmatprep.subr.mxu0 0.0
    %5852 = vmatpush1.msra.mxu0 %v5634
    %5853 = vmatprep.subr.mxu0 0.0
    %5854 = vmatpush1.msra.mxu0 %v5633
    %5855 = vmatprep.subr.mxu0 0.0
    %5856 = vmatpush1.msra.mxu0 %v5632
    %5857 = vmatprep.subr.mxu0 0.0
    %5858 = vmatpush1.msra.mxu0 %v5631
    %5859 = vmatprep.subr.mxu0 0.0
    %5860 = vmatpush1.msra.mxu0 %v5630
    %5861 = vmatprep.subr.mxu0 0.0
    %5862 = vmatpush1.msra.mxu0 %v5629
    %5863 = vmatprep.subr.mxu0 0.0
    %5864 = vmatpush1.msra.mxu0 %v5628
    %5865 = vmatprep.subr.mxu0 0.0
    %5866 = vmatpush1.msra.mxu0 %v5627
    %5867 = vmatprep.subr.mxu0 0.0
    %5868 = vmatpush1.msra.mxu0 %v5626
    %5869 = vmatprep.subr.mxu0 0.0
    %5870 = vmatpush1.msra.mxu0 %v5625
    %5871 = vmatprep.subr.mxu0 0.0
    %5872 = vmatpush1.msra.mxu0 %v5624
    %5873 = vmatprep.subr.mxu0 0.0
    %5874 = vmatpush1.msra.mxu0 %v5623
    %5875 = vmatprep.subr.mxu0 0.0
    %5876 = vmatpush1.msra.mxu0 %v5622
    %5877 = vmatprep.subr.mxu0 0.0
    %5878 = vmatpush1.msra.mxu0 %v5621
    %5879 = vmatprep.subr.mxu0 0.0
    %5880 = vmatpush2.msra.mxu0 %v5652
    %5881 = vmatprep.subr.mxu0 0.0
    %5882 = vmatpush2.msra.mxu0 %v5651
    %5883 = vmatprep.subr.mxu0 0.0
    %5884 = vmatpush2.msra.mxu0 %v5650
    %5885 = vmatprep.subr.mxu0 0.0
    %5886 = vmatpush2.msra.mxu0 %v5649
    %5887 = vmatprep.subr.mxu0 0.0
    %5888 = vmatpush2.msra.mxu0 %v5648
    %5889 = vmatprep.subr.mxu0 0.0
    %5890 = vmatpush2.msra.mxu0 %v5647
    %5891 = vmatprep.subr.mxu0 0.0
    %5892 = vmatpush2.msra.mxu0 %v5646
    %5893 = vmatprep.subr.mxu0 0.0
    %5894 = vmatpush2.msra.mxu0 %v5645
    %5895 = vmatprep.subr.mxu0 0.0
    %5896 = vmatpush2.msra.mxu0 %v5644
    %5897 = vmatprep.subr.mxu0 0.0
    %5898 = vmatpush2.msra.mxu0 %v5643
    %5899 = vmatprep.subr.mxu0 0.0
    %5900 = vmatpush2.msra.mxu0 %v5642
    %5901 = vmatprep.subr.mxu0 0.0
    %5902 = vmatpush2.msra.mxu0 %v5641
    %5903 = vmatprep.subr.mxu0 0.0
    %5904 = vmatpush2.msra.mxu0 %v5640
    %5905 = vmatprep.subr.mxu0 0.0
    %5906 = vmatpush2.msra.mxu0 %v5639
    %5907 = vmatprep.subr.mxu0 0.0
    %5908 = vmatpush2.msra.mxu0 %v5638
    %5909 = vmatprep.subr.mxu0 0.0
    %5910 = vmatpush2.msra.mxu0 %v5637
    %5911 = vmatprep.mubr.f32.mxu0 %v2880
    %5912 = vmatmul.mubr.f32.gmra.mxu0 %v348
    %v5913 = vpop.f32.mrf.mxu0
    %v5914 = vadd.f32 %v5844, %v5913
    %v5915 = vpop.f32.mrf.mxu0
    %5916 = vdwg.mxu0
    %5917 = vmatprep.subr.mxu0 0.0
    %5918 = vmatpush1.msra.mxu0 %v5668
    %5919 = vmatprep.subr.mxu0 0.0
    %5920 = vmatpush1.msra.mxu0 %v5667
    %5921 = vmatprep.subr.mxu0 0.0
    %5922 = vmatpush1.msra.mxu0 %v5666
    %5923 = vmatprep.subr.mxu0 0.0
    %5924 = vmatpush1.msra.mxu0 %v5665
    %5925 = vmatprep.subr.mxu0 0.0
    %5926 = vmatpush1.msra.mxu0 %v5664
    %5927 = vmatprep.subr.mxu0 0.0
    %5928 = vmatpush1.msra.mxu0 %v5663
    %5929 = vmatprep.subr.mxu0 0.0
    %5930 = vmatpush1.msra.mxu0 %v5662
    %5931 = vmatprep.subr.mxu0 0.0
    %5932 = vmatpush1.msra.mxu0 %v5661
    %5933 = vmatprep.subr.mxu0 0.0
    %5934 = vmatpush1.msra.mxu0 %v5660
    %5935 = vmatprep.subr.mxu0 0.0
    %5936 = vmatpush1.msra.mxu0 %v5659
    %5937 = vmatprep.subr.mxu0 0.0
    %5938 = vmatpush1.msra.mxu0 %v5658
    %5939 = vmatprep.subr.mxu0 0.0
    %5940 = vmatpush1.msra.mxu0 %v5657
    %5941 = vmatprep.subr.mxu0 0.0
    %5942 = vmatpush1.msra.mxu0 %v5656
    %5943 = vmatprep.subr.mxu0 0.0
    %5944 = vmatpush1.msra.mxu0 %v5655
    %5945 = vmatprep.subr.mxu0 0.0
    %5946 = vmatpush1.msra.mxu0 %v5654
    %5947 = vmatprep.subr.mxu0 0.0
    %5948 = vmatpush1.msra.mxu0 %v5653
    %5949 = vmatprep.subr.mxu0 0.0
    %5950 = vmatpush2.msra.mxu0 %v5684
    %5951 = vmatprep.subr.mxu0 0.0
    %5952 = vmatpush2.msra.mxu0 %v5683
    %5953 = vmatprep.subr.mxu0 0.0
    %5954 = vmatpush2.msra.mxu0 %v5682
    %5955 = vmatprep.subr.mxu0 0.0
    %5956 = vmatpush2.msra.mxu0 %v5681
    %5957 = vmatprep.subr.mxu0 0.0
    %5958 = vmatpush2.msra.mxu0 %v5680
    %5959 = vmatprep.subr.mxu0 0.0
    %5960 = vmatpush2.msra.mxu0 %v5679
    %5961 = vmatprep.subr.mxu0 0.0
    %5962 = vmatpush2.msra.mxu0 %v5678
    %5963 = vmatprep.subr.mxu0 0.0
    %5964 = vmatpush2.msra.mxu0 %v5677
    %5965 = vmatprep.subr.mxu0 0.0
    %5966 = vmatpush2.msra.mxu0 %v5676
    %5967 = vmatprep.subr.mxu0 0.0
    %5968 = vmatpush2.msra.mxu0 %v5675
    %5969 = vmatprep.subr.mxu0 0.0
    %5970 = vmatpush2.msra.mxu0 %v5674
    %5971 = vmatprep.subr.mxu0 0.0
    %5972 = vmatpush2.msra.mxu0 %v5673
    %5973 = vmatprep.subr.mxu0 0.0
    %5974 = vmatpush2.msra.mxu0 %v5672
    %5975 = vmatprep.subr.mxu0 0.0
    %5976 = vmatpush2.msra.mxu0 %v5671
    %5977 = vmatprep.subr.mxu0 0.0
    %5978 = vmatpush2.msra.mxu0 %v5670
    %5979 = vmatprep.subr.mxu0 0.0
    %5980 = vmatpush2.msra.mxu0 %v5669
    %5981 = vmatprep.mubr.f32.mxu0 %v2881
    %5982 = vmatmul.mubr.f32.gmra.mxu0 %v349
    %v5983 = vpop.f32.mrf.mxu0
    %v5984 = vadd.f32 %v5914, %v5983
    %v5985 = vpop.f32.mrf.mxu0
    %5986 = vdwg.mxu0
    %5987 = vmatprep.subr.mxu0 0.0
    %5988 = vmatpush1.msra.mxu0 %v5700
    %5989 = vmatprep.subr.mxu0 0.0
    %5990 = vmatpush1.msra.mxu0 %v5699
    %5991 = vmatprep.subr.mxu0 0.0
    %5992 = vmatpush1.msra.mxu0 %v5698
    %5993 = vmatprep.subr.mxu0 0.0
    %5994 = vmatpush1.msra.mxu0 %v5697
    %5995 = vmatprep.subr.mxu0 0.0
    %5996 = vmatpush1.msra.mxu0 %v5696
    %5997 = vmatprep.subr.mxu0 0.0
    %5998 = vmatpush1.msra.mxu0 %v5695
    %5999 = vmatprep.subr.mxu0 0.0
    %6000 = vmatpush1.msra.mxu0 %v5694
    %6001 = vmatprep.subr.mxu0 0.0
    %6002 = vmatpush1.msra.mxu0 %v5693
    %6003 = vmatprep.subr.mxu0 0.0
    %6004 = vmatpush1.msra.mxu0 %v5692
    %6005 = vmatprep.subr.mxu0 0.0
    %6006 = vmatpush1.msra.mxu0 %v5691
    %6007 = vmatprep.subr.mxu0 0.0
    %6008 = vmatpush1.msra.mxu0 %v5690
    %6009 = vmatprep.subr.mxu0 0.0
    %6010 = vmatpush1.msra.mxu0 %v5689
    %6011 = vmatprep.subr.mxu0 0.0
    %6012 = vmatpush1.msra.mxu0 %v5688
    %6013 = vmatprep.subr.mxu0 0.0
    %6014 = vmatpush1.msra.mxu0 %v5687
    %6015 = vmatprep.subr.mxu0 0.0
    %6016 = vmatpush1.msra.mxu0 %v5686
    %6017 = vmatprep.subr.mxu0 0.0
    %6018 = vmatpush1.msra.mxu0 %v5685
    %6019 = vmatprep.subr.mxu0 0.0
    %6020 = vmatpush2.msra.mxu0 0.0
    %6021 = vmatprep.subr.mxu0 0.0
    %6022 = vmatpush2.msra.mxu0 0.0
    %6023 = vmatprep.subr.mxu0 0.0
    %6024 = vmatpush2.msra.mxu0 0.0
    %6025 = vmatprep.subr.mxu0 0.0
    %6026 = vmatpush2.msra.mxu0 0.0
    %6027 = vmatprep.subr.mxu0 0.0
    %6028 = vmatpush2.msra.mxu0 0.0
    %6029 = vmatprep.subr.mxu0 0.0
    %6030 = vmatpush2.msra.mxu0 0.0
    %6031 = vmatprep.subr.mxu0 0.0
    %6032 = vmatpush2.msra.mxu0 0.0
    %6033 = vmatprep.subr.mxu0 0.0
    %6034 = vmatpush2.msra.mxu0 0.0
    %6035 = vmatprep.subr.mxu0 0.0
    %6036 = vmatpush2.msra.mxu0 0.0
    %6037 = vmatprep.subr.mxu0 0.0
    %6038 = vmatpush2.msra.mxu0 0.0
    %6039 = vmatprep.subr.mxu0 0.0
    %6040 = vmatpush2.msra.mxu0 %v5706
    %6041 = vmatprep.subr.mxu0 0.0
    %6042 = vmatpush2.msra.mxu0 %v5705
    %6043 = vmatprep.subr.mxu0 0.0
    %6044 = vmatpush2.msra.mxu0 %v5704
    %6045 = vmatprep.subr.mxu0 0.0
    %6046 = vmatpush2.msra.mxu0 %v5703
    %6047 = vmatprep.subr.mxu0 0.0
    %6048 = vmatpush2.msra.mxu0 %v5702
    %6049 = vmatprep.subr.mxu0 0.0
    %6050 = vmatpush2.msra.mxu0 %v5701
    %6051 = vmatprep.mubr.f32.mxu0 %v2888
    %6052 = vmatmul.mubr.f32.gmra.mxu0 %v350
    %v6053 = vpop.f32.mrf.mxu0
    %v6054 = vadd.f32 %v5984, %v6053
    %v6055 = vpop.f32.mrf.mxu0
    %6056 = vdwg.mxu0
    %v6057 = vsel %vm3240, %v6054, -inf
    %v6058 = vrot.slane %v6057, 4
    %v6059 = vmax.f32 %v6057, %v6058
    %v6060 = vrot.slane %v6059, 2
    %v6061 = vmax.f32 %v6059, %v6060
    %v6062 = vrot.slane %v6061, 1
    %v6063 = vmax.f32 %v6061, %v6062
    %v6064 = vsub.f32 %v6054, %v6063
    %v6065 = vmul.f32 %v6064, 1.442695
    %v6066 = vpow.pop %v6065
    %v6067 = vsel %vm3240, %v6066, 0.0
    %v6068 = vrot.slane %v6067, 4
    %v6069 = vadd.f32 %v6067, %v6068
    %v6070 = vrot.slane %v6069, 2
    %v6071 = vadd.f32 %v6069, %v6070
    %v6072 = vrot.slane %v6071, 1
    %v6073 = vadd.f32 %v6071, %v6072
    %v6074 = vlog2.pop %v6073
    %v6075 = vmul.f32 %v6074, 0.6931472
    %v6076 = vsub.f32 %v6064, %v6075
    %s6077 = scalar_lea.vmem %s6, 4
    %6078 = vst.msk [vmem:[%s6077] sm:$0x7] %vm3240, %v6076
    // Predicated region
    $region42: #{tpu_custom_call.1} parent=1 // pred_check
      _
    $region43: #{tpu_custom_call.1} parent=1 // pred_check_branch
      %6080 = sbr.rel (0) target = $region45
    $region44: #{tpu_custom_call.1} parent=1 // pred_region
      _
    $region45: #{tpu_custom_call.1} parent=1 // pred_fallthru
      _
    // Predicated region
    $region46: #{tpu_custom_call.1} parent=1 // pred_check
      _
    $region47: #{tpu_custom_call.1} parent=1 // pred_check_branch
      %6082 = sbr.rel (0) target = $region49
    $region48: #{tpu_custom_call.1} parent=1 // pred_region
      _
    $region49: #{tpu_custom_call.1} parent=1 // pred_fallthru
      _
    %6083 = vsyncpa [#allocation5], 1
    %6084 = vsyncpa [#allocation7], 1
    %6085 = vsyncpa [#allocation10], 1

</llo_original>
